<compile_context>
chip_gen: v6e
topology: v6e:2x2x1
jax: 0.10.0
libtpu: 0.0.40
codegen_flags: <defaults>
</compile_context>

<pallas_src>
import jax
import jax.numpy as jnp
from jax.experimental import pallas as pl
from jax.experimental.pallas import tpu as pltpu

_VMEM_LIMIT = 32 * 1024 * 1024  # safe on v5e/v6e (128 MiB) and v7x (64 MiB physical)


def _round_up(x, m):
    return (x + m - 1) // m * m


def _tile_rows(m):
    """Row-tile size and padded row count for the M (rows) axis of the GEMMs."""
    tm = 512 if m >= 512 else _round_up(m, 8)
    return tm, _round_up(m, tm)


# ---------------------------------------------------------------------------
# Pallas kernels
# ---------------------------------------------------------------------------
def _gemm_stats_kernel(p_ref, w_ref, y_ref, sum_ref, ssq_ref):
    """One (parity, M-tile) GEMM step; accumulates per-channel sum / sum-of-squares."""

    @pl.when((pl.program_id(0) == 0) & (pl.program_id(1) == 0))
    def _init():
        sum_ref[...] = jnp.zeros_like(sum_ref)
        ssq_ref[...] = jnp.zeros_like(ssq_ref)

    y = jnp.dot(p_ref[0], w_ref[0], preferred_element_type=jnp.float32)  # f32 acc on MXU
    y_ref[0] = y.astype(y_ref.dtype)                                     # bf16 store
    sum_ref[...] += jnp.sum(y, axis=0, keepdims=True)
    ssq_ref[...] += jnp.sum(y * y, axis=0, keepdims=True)


def _gemm_tanh_kernel(p_ref, w_ref, o_ref):
    """Final layer: GEMM with tanh fused into the epilogue (no BatchNorm)."""
    y = jnp.dot(p_ref[0], w_ref[0], preferred_element_type=jnp.float32)
    o_ref[0] = jnp.tanh(y)


def _bn_relu_kernel(y_ref, s_ref, b_ref, o_ref):
    """Fused per-channel affine (BatchNorm) + ReLU; f32 arithmetic, bf16 store."""
    y = y_ref[0].astype(jnp.float32) * s_ref[...] + b_ref[...]
    o_ref[0] = jnp.maximum(y, 0.0).astype(o_ref.dtype)


# ---------------------------------------------------------------------------
# pallas_call wrappers
# ---------------------------------------------------------------------------
def gemm_bn_stats(patches, wmats, tm):
    P, Mp, K = patches.shape
    OC = wmats.shape[-1]
    return pl.pallas_call(
        _gemm_stats_kernel,
        out_shape=(
            jax.ShapeDtypeStruct((P, Mp, OC), jnp.bfloat16),
            jax.ShapeDtypeStruct((1, OC), jnp.float32),
            jax.ShapeDtypeStruct((1, OC), jnp.float32),
        ),
        grid_spec=pltpu.PrefetchScalarGridSpec(
            num_scalar_prefetch=0,
            grid=(P, Mp // tm),
            in_specs=[
                pl.BlockSpec((1, tm, K), lambda par, i: (par, i, 0)),
                pl.BlockSpec((1, K, OC), lambda par, i: (par, 0, 0)),
            ],
            out_specs=(
                pl.BlockSpec((1, tm, OC), lambda par, i: (par, i, 0)),
                pl.BlockSpec((1, OC), lambda par, i: (0, 0)),
                pl.BlockSpec((1, OC), lambda par, i: (0, 0)),
            ),
        ),
        compiler_params=pltpu.CompilerParams(
            # Stats accumulate across the whole grid -> both axes sequential.
            dimension_semantics=("arbitrary", "arbitrary"),
            vmem_limit_bytes=_VMEM_LIMIT,
        ),
    )(patches, wmats)


def gemm_tanh(patches, wmats, tm):
    P, Mp, K = patches.shape
    OC = wmats.shape[-1]
    return pl.pallas_call(
        _gemm_tanh_kernel,
        out_shape=jax.ShapeDtypeStruct((P, Mp, OC), jnp.float32),
        grid_spec=pltpu.PrefetchScalarGridSpec(
            num_scalar_prefetch=0,
            grid=(P, Mp // tm),
            in_specs=[
                pl.BlockSpec((1, tm, K), lambda par, i: (par, i, 0)),
                pl.BlockSpec((1, K, OC), lambda par, i: (par, 0, 0)),
            ],
            out_specs=pl.BlockSpec((1, tm, OC), lambda par, i: (par, i, 0)),
        ),
        compiler_params=pltpu.CompilerParams(
            dimension_semantics=("parallel", "parallel"),
            vmem_limit_bytes=_VMEM_LIMIT,
        ),
    )(patches, wmats)


def bn_relu(y, scale, bias, tm):
    P, Mp, OC = y.shape
    return pl.pallas_call(
        _bn_relu_kernel,
        out_shape=jax.ShapeDtypeStruct((P, Mp, OC), jnp.bfloat16),
        grid_spec=pltpu.PrefetchScalarGridSpec(
            num_scalar_prefetch=0,
            grid=(P, Mp // tm),
            in_specs=[
                pl.BlockSpec((1, tm, OC), lambda par, i: (par, i, 0)),
                pl.BlockSpec((1, OC), lambda par, i: (0, 0)),
                pl.BlockSpec((1, OC), lambda par, i: (0, 0)),
            ],
            out_specs=pl.BlockSpec((1, tm, OC), lambda par, i: (par, i, 0)),
        ),
        compiler_params=pltpu.CompilerParams(
            dimension_semantics=("parallel", "parallel"),
            vmem_limit_bytes=_VMEM_LIMIT,
        ),
    )(y, scale, bias)


# ---------------------------------------------------------------------------
# ConvTranspose2d(k=4, s=2, p=1) -> sub-pixel GEMM glue (plain JAX)
# ---------------------------------------------------------------------------
def _subpixel_inputs(h, w):
    """h: [N, H, W, IC] channels-last; w: [IC, OC, 4, 4] (PyTorch layout).

    Output parity (r, c):
        y[:, 2i+r, 2j+c, :] = sum_{dh,dw in {0,1}} x[:, i-1+r+dh, j-1+c+dw, :]
                                                   @ w[:, :, 3-r-2*dh, 3-c-2*dw]
    Returns patches [4, N*H*W, 4*IC] and weights [4, 4*IC, OC], parity-major (r*2+c).
    """
    N, H, W, IC = h.shape
    OC = w.shape[1]
    xp = jnp.pad(h, ((0, 0), (1, 1), (1, 1), (0, 0)))
    pats, wms = [], []
    for r in range(2):
        for c in range(2):
            taps = [xp[:, r + dh:r + dh + H, c + dw:c + dw + W, :]
                    for dh in range(2) for dw in range(2)]
            pats.append(jnp.stack(taps, axis=3).reshape(N * H * W, 4 * IC))
            wms.append(jnp.stack(
                [w[:, :, 3 - r - 2 * dh, 3 - c - 2 * dw]
                 for dh in range(2) for dw in range(2)], axis=0).reshape(4 * IC, OC))
    return jnp.stack(pats, 0), jnp.stack(wms, 0)


def _interleave(y, N, H, W):
    """[4, N*H*W, OC] parity-major -> [N, 2H, 2W, OC]."""
    OC = y.shape[-1]
    y = y.reshape(2, 2, N, H, W, OC)
    return y.transpose(2, 3, 0, 4, 1, 5).reshape(N, 2 * H, 2 * W, OC)


def _bn_scale_bias(s, ss, count, gamma, beta, eps):
    mean = s / count
    var = jnp.maximum(ss / count - mean * mean, 0.0)  # biased (training-mode) variance
    inv = gamma * jax.lax.rsqrt(var + eps)
    return inv, beta - mean * inv


# ---------------------------------------------------------------------------
# Generator forward
# ---------------------------------------------------------------------------
def generator_forward(x, params, eps=1e-5):
    """x: [N, nz, 1, 1] (NCHW, like PyTorch); returns [N, nc, 64, 64] float32."""
    N, nz, hin, win = x.shape
    assert hin == 1 and win == 1, "DCGAN generator expects a 1x1 latent input"
    # TODO(synk): general (H>1) stride-1 ConvTranspose path not needed for DCGAN latents.

    # ---- layer 1: ConvTranspose(nz, 8*ngf, 4, 1, 0) on a 1x1 input is a plain GEMM ----
    p0 = params[0]
    oc0 = p0["w"].shape[1]
    lhs = x.reshape(N, nz)[None].astype(jnp.bfloat16)                  # [1, N, nz]
    w0 = p0["w"].transpose(0, 2, 3, 1).reshape(nz, 16 * oc0)           # [nz, (kh,kw,oc)]
    w0 = w0[None].astype(jnp.bfloat16)
    tm, mp = _tile_rows(N)
    if mp > N:
        lhs = jnp.pad(lhs, ((0, 0), (0, mp - N), (0, 0)))
    y, s, ss = gemm_bn_stats(lhs, w0, tm)                              # [1, mp, 16*oc0]
    s = s[0].reshape(16, oc0).sum(0)
    ss = ss[0].reshape(16, oc0).sum(0)
    scale, bias = _bn_scale_bias(s, ss, N * 16, p0["gamma"], p0["beta"], eps)
    a = bn_relu(y, jnp.tile(scale, 16)[None], jnp.tile(bias, 16)[None], tm)
    h = a[0, :N].reshape(N, 4, 4, oc0)                                 # channels-last bf16

    # ---- layers 2..5: ConvTranspose(k=4, stride=2, padding=1) via sub-pixel GEMMs ----
    for p in params[1:]:
        N, H, W, IC = h.shape
        OC = p["w"].shape[1]
        patches, wmats = _subpixel_inputs(h, p["w"])
        patches = patches.astype(jnp.bfloat16)
        M = N * H * W
        tm, mp = _tile_rows(M)
        if mp > M:
            patches = jnp.pad(patches, ((0, 0), (0, mp - M), (0, 0)))
        if p["bn"]:
            y, s, ss = gemm_bn_stats(patches, wmats.astype(jnp.bfloat16), tm)
            scale, bias = _bn_scale_bias(s[0], ss[0], 4 * M, p["gamma"], p["beta"], eps)
            a = bn_relu(y, scale[None], bias[None], tm)[:, :M]
        else:
            # Final tanh layer: pad OC (=3) up to a lane-dense 128, fuse tanh in-kernel.
            ocp = _round_up(OC, 128)
            wpad = jnp.pad(wmats, ((0, 0), (0, 0), (0, ocp - OC))).astype(jnp.bfloat16)
            a = gemm_tanh(patches, wpad, tm)[:, :M, :OC]
        h = _interleave(a, N, H, W)

    return h.transpose(0, 3, 1, 2)  # channels-last -> NCHW at the model boundary


def init_params(key, nz, ngf, nc):
    """DCGAN 'normal' init: conv weights ~ N(0, 0.02); BN gamma ~ N(1, 0.02), beta = 0."""
    chans = [nz, ngf * 8, ngf * 4, ngf * 2, ngf, nc]
    params = []
    for i in range(5):
        key, kw, kg = jax.random.split(key, 3)
        ic, oc = chans[i], chans[i + 1]
        w = 0.02 * jax.random.normal(kw, (ic, oc, 4, 4), jnp.float32)
        bn = i < 4
        p = {"w": w, "bn": bn}
        if bn:
            p["gamma"] = 1.0 + 0.02 * jax.random.normal(kg, (oc,), jnp.float32)
            p["beta"] = jnp.zeros((oc,), jnp.float32)
        params.append(p)
    return params


if __name__ == "__main__":
    # Small config: latent_vector=8, num_features=4, num_image_channels=3, batch=2.
    nz, ngf, nc, batch = 8, 4, 3, 2
    key = jax.random.PRNGKey(0)
    k_params, k_noise = jax.random.split(key)
    params = init_params(k_params, nz, ngf, nc)

    # Same as Generator.generate_image: noise of shape [B, nz, 1, 1].
    noise = jax.random.normal(k_noise, (batch, nz, 1, 1), jnp.float32)

    fwd = jax.jit(lambda z: generator_forward(z, params))
    out = jax.block_until_ready(fwd(noise))

    assert out.shape == (batch, nc, 64, 64), out.shape
    assert bool(jnp.all(jnp.isfinite(out)))
    assert bool(jnp.all(jnp.abs(out) <= 1.0 + 1e-6))  # tanh output range
    print("KERNEL_OK")
</pallas_src>

<mosaic_0001>
module attributes {stable_mosaic.version = 11 : i64} {
  func.func @_gemm_stats_kernel(%arg0: i32, %arg1: i32, %arg2: memref<1x8x8xbf16, #tpu.memory_space<vmem>>, %arg3: memref<1x8x512xbf16, #tpu.memory_space<vmem>>, %arg4: memref<1x8x512xbf16, #tpu.memory_space<vmem>>, %arg5: memref<1x512xf32, #tpu.memory_space<vmem>>, %arg6: memref<1x512xf32, #tpu.memory_space<vmem>>) attributes {dimension_semantics = [#tpu.dimension_semantics<arbitrary>, #tpu.dimension_semantics<arbitrary>], iteration_bounds = array<i64: 1, 1>, scalar_prefetch = 0 : i64, scratch_operands = 0 : i64, tpu.core_type = #tpu.core_type<tc>, window_params = [{transform_indices = @transform_0, window_bounds = array<i64: 1, 8, 8>}, {transform_indices = @transform_1, window_bounds = array<i64: 1, 8, 512>}, {transform_indices = @transform_2, window_bounds = array<i64: 1, 8, 512>}, {pipeline_mode = #tpu.pipeline_mode<synchronous>, transform_indices = @transform_3, window_bounds = array<i64: 1, 512>}, {pipeline_mode = #tpu.pipeline_mode<synchronous>, transform_indices = @transform_4, window_bounds = array<i64: 1, 512>}]} {
    %c0_i32 = arith.constant 0 : i32
    %0 = arith.cmpi eq, %arg0, %c0_i32 : i32
    %c0_i32_0 = arith.constant 0 : i32
    %1 = arith.cmpi eq, %arg1, %c0_i32_0 : i32
    %2 = arith.andi %0, %1 : i1
    %3 = arith.extui %2 : i1 to i32
    %c0_i32_1 = arith.constant 0 : i32
    %4 = arith.cmpi ne, %3, %c0_i32_1 : i32
    scf.if %4 {
      %cst_20 = arith.constant 0.000000e+00 : f32
      %25 = vector.broadcast %cst_20 : f32 to vector<1x512xf32>
      %c0_21 = arith.constant 0 : index
      %c0_22 = arith.constant 0 : index
      %26 = vector.load %arg5[%c0_21, %c0_22] : memref<1x512xf32, #tpu.memory_space<vmem>>, vector<1x512xf32>
      tpu.vector_store %arg5[%c0_21, %c0_22], %25 {strides = array<i32>} : memref<1x512xf32, #tpu.memory_space<vmem>>, vector<1x512xf32>,
      %cst_23 = arith.constant 0.000000e+00 : f32
      %27 = vector.broadcast %cst_23 : f32 to vector<1x512xf32>
      %c0_24 = arith.constant 0 : index
      %c0_25 = arith.constant 0 : index
      %28 = vector.load %arg6[%c0_24, %c0_25] : memref<1x512xf32, #tpu.memory_space<vmem>>, vector<1x512xf32>
      tpu.vector_store %arg6[%c0_24, %c0_25], %27 {strides = array<i32>} : memref<1x512xf32, #tpu.memory_space<vmem>>, vector<1x512xf32>,
    } else {
    }
    %c0 = arith.constant 0 : index
    %c0_2 = arith.constant 0 : index
    %c0_3 = arith.constant 0 : index
    %5 = vector.load %arg2[%c0, %c0_2, %c0_3] : memref<1x8x8xbf16, #tpu.memory_space<vmem>>, vector<1x8x8xbf16>
    %6 = vector.shape_cast %5 : vector<1x8x8xbf16> to vector<8x8xbf16>
    %c0_4 = arith.constant 0 : index
    %c0_5 = arith.constant 0 : index
    %c0_6 = arith.constant 0 : index
    %7 = vector.load %arg3[%c0_4, %c0_5, %c0_6] : memref<1x8x512xbf16, #tpu.memory_space<vmem>>, vector<1x8x512xbf16>
    %8 = vector.shape_cast %7 : vector<1x8x512xbf16> to vector<8x512xbf16>
    %cst = arith.constant dense<0.000000e+00> : vector<8x512xf32>
    %9 = tpu.matmul %6, %8, %cst {dimension_numbers = #tpu.dot_dimension_numbers<[1], [0], [0], [1], [0, 0, 1, 1], [], []>} : vector<8x8xbf16>, vector<8x512xbf16>, vector<8x512xf32> -> vector<8x512xf32>
    %10 = arith.truncf %9 : vector<8x512xf32> to vector<8x512xbf16>
    %c0_7 = arith.constant 0 : index
    %c0_8 = arith.constant 0 : index
    %c0_9 = arith.constant 0 : index
    %11 = vector.load %arg4[%c0_7, %c0_8, %c0_9] : memref<1x8x512xbf16, #tpu.memory_space<vmem>>, vector<1x8x512xbf16>
    %12 = vector.shape_cast %11 : vector<1x8x512xbf16> to vector<8x512xbf16>
    %13 = vector.shape_cast %10 : vector<8x512xbf16> to vector<1x8x512xbf16>
    tpu.vector_store %arg4[%c0_7, %c0_8, %c0_9], %13 {strides = array<i32>} : memref<1x8x512xbf16, #tpu.memory_space<vmem>>, vector<1x8x512xbf16>,
    %c0_10 = arith.constant 0 : index
    %c0_11 = arith.constant 0 : index
    %14 = vector.load %arg5[%c0_10, %c0_11] : memref<1x512xf32, #tpu.memory_space<vmem>>, vector<1x512xf32>
    %cst_12 = arith.constant dense<0.000000e+00> : vector<512xf32>
    %15 = vector.multi_reduction <add>, %9, %cst_12 [0] : vector<8x512xf32> to vector<512xf32>
    %16 = vector.shape_cast %15 : vector<512xf32> to vector<1x512xf32>
    %17 = arith.addf %14, %16 : vector<1x512xf32>
    %c0_13 = arith.constant 0 : index
    %c0_14 = arith.constant 0 : index
    %18 = vector.load %arg5[%c0_13, %c0_14] : memref<1x512xf32, #tpu.memory_space<vmem>>, vector<1x512xf32>
    tpu.vector_store %arg5[%c0_13, %c0_14], %17 {strides = array<i32>} : memref<1x512xf32, #tpu.memory_space<vmem>>, vector<1x512xf32>,
    %c0_15 = arith.constant 0 : index
    %c0_16 = arith.constant 0 : index
    %19 = vector.load %arg6[%c0_15, %c0_16] : memref<1x512xf32, #tpu.memory_space<vmem>>, vector<1x512xf32>
    %20 = arith.mulf %9, %9 : vector<8x512xf32>
    %cst_17 = arith.constant dense<0.000000e+00> : vector<512xf32>
    %21 = vector.multi_reduction <add>, %20, %cst_17 [0] : vector<8x512xf32> to vector<512xf32>
    %22 = vector.shape_cast %21 : vector<512xf32> to vector<1x512xf32>
    %23 = arith.addf %19, %22 : vector<1x512xf32>
    %c0_18 = arith.constant 0 : index
    %c0_19 = arith.constant 0 : index
    %24 = vector.load %arg6[%c0_18, %c0_19] : memref<1x512xf32, #tpu.memory_space<vmem>>, vector<1x512xf32>
    tpu.vector_store %arg6[%c0_18, %c0_19], %23 {strides = array<i32>} : memref<1x512xf32, #tpu.memory_space<vmem>>, vector<1x512xf32>,
    return
  }
  func.func @transform_0(%arg0: i32, %arg1: i32) -> (i32, i32, i32) {
    %c0_i32 = arith.constant 0 : i32
    %c0_i32_0 = arith.constant 0 : i32
    return %arg0, %arg1, %c0_i32 : i32, i32, i32
  }
  func.func @transform_1(%arg0: i32, %arg1: i32) -> (i32, i32, i32) {
    %c0_i32 = arith.constant 0 : i32
    %c0_i32_0 = arith.constant 0 : i32
    %c0_i32_1 = arith.constant 0 : i32
    return %arg0, %c0_i32, %c0_i32_0 : i32, i32, i32
  }
  func.func @transform_2(%arg0: i32, %arg1: i32) -> (i32, i32, i32) {
    %c0_i32 = arith.constant 0 : i32
    %c0_i32_0 = arith.constant 0 : i32
    return %arg0, %arg1, %c0_i32 : i32, i32, i32
  }
  func.func @transform_3(%arg0: i32, %arg1: i32) -> (i32, i32) {
    %c0_i32 = arith.constant 0 : i32
    %c0_i32_0 = arith.constant 0 : i32
    %c0_i32_1 = arith.constant 0 : i32
    return %c0_i32, %c0_i32_0 : i32, i32
  }
  func.func @transform_4(%arg0: i32, %arg1: i32) -> (i32, i32) {
    %c0_i32 = arith.constant 0 : i32
    %c0_i32_0 = arith.constant 0 : i32
    %c0_i32_1 = arith.constant 0 : i32
    return %c0_i32, %c0_i32_0 : i32, i32
  }
}

module attributes {stable_mosaic.version = 11 : i64} {
  func.func @_bn_relu_kernel(%arg0: i32, %arg1: i32, %arg2: memref<1x8x512xbf16, #tpu.memory_space<vmem>>, %arg3: memref<1x512xf32, #tpu.memory_space<vmem>>, %arg4: memref<1x512xf32, #tpu.memory_space<vmem>>, %arg5: memref<1x8x512xbf16, #tpu.memory_space<vmem>>) attributes {dimension_semantics = [#tpu.dimension_semantics<parallel>, #tpu.dimension_semantics<parallel>], iteration_bounds = array<i64: 1, 1>, scalar_prefetch = 0 : i64, scratch_operands = 0 : i64, tpu.core_type = #tpu.core_type<tc>, window_params = [{transform_indices = @transform_0, window_bounds = array<i64: 1, 8, 512>}, {pipeline_mode = #tpu.pipeline_mode<synchronous>, transform_indices = @transform_1, window_bounds = array<i64: 1, 512>}, {pipeline_mode = #tpu.pipeline_mode<synchronous>, transform_indices = @transform_2, window_bounds = array<i64: 1, 512>}, {transform_indices = @transform_3, window_bounds = array<i64: 1, 8, 512>}]} {
    %c0 = arith.constant 0 : index
    %c0_0 = arith.constant 0 : index
    %c0_1 = arith.constant 0 : index
    %0 = vector.load %arg2[%c0, %c0_0, %c0_1] : memref<1x8x512xbf16, #tpu.memory_space<vmem>>, vector<1x8x512xbf16>
    %1 = vector.shape_cast %0 : vector<1x8x512xbf16> to vector<8x512xbf16>
    %2 = arith.extf %1 : vector<8x512xbf16> to vector<8x512xf32>
    %c0_2 = arith.constant 0 : index
    %c0_3 = arith.constant 0 : index
    %3 = vector.load %arg3[%c0_2, %c0_3] : memref<1x512xf32, #tpu.memory_space<vmem>>, vector<1x512xf32>
    %4 = vector.broadcast %3 : vector<1x512xf32> to vector<8x512xf32>
    %5 = arith.mulf %2, %4 : vector<8x512xf32>
    %c0_4 = arith.constant 0 : index
    %c0_5 = arith.constant 0 : index
    %6 = vector.load %arg4[%c0_4, %c0_5] : memref<1x512xf32, #tpu.memory_space<vmem>>, vector<1x512xf32>
    %7 = vector.broadcast %6 : vector<1x512xf32> to vector<8x512xf32>
    %8 = arith.addf %5, %7 : vector<8x512xf32>
    %cst = arith.constant 0.000000e+00 : f32
    %9 = vector.broadcast %cst : f32 to vector<8x512xf32>
    %10 = arith.maximumf %8, %9 : vector<8x512xf32>
    %11 = arith.truncf %10 : vector<8x512xf32> to vector<8x512xbf16>
    %c0_6 = arith.constant 0 : index
    %c0_7 = arith.constant 0 : index
    %c0_8 = arith.constant 0 : index
    %12 = vector.load %arg5[%c0_6, %c0_7, %c0_8] : memref<1x8x512xbf16, #tpu.memory_space<vmem>>, vector<1x8x512xbf16>
    %13 = vector.shape_cast %12 : vector<1x8x512xbf16> to vector<8x512xbf16>
    %14 = vector.shape_cast %11 : vector<8x512xbf16> to vector<1x8x512xbf16>
    tpu.vector_store %arg5[%c0_6, %c0_7, %c0_8], %14 {strides = array<i32>} : memref<1x8x512xbf16, #tpu.memory_space<vmem>>, vector<1x8x512xbf16>,
    return
  }
  func.func @transform_0(%arg0: i32, %arg1: i32) -> (i32, i32, i32) {
    %c0_i32 = arith.constant 0 : i32
    %c0_i32_0 = arith.constant 0 : i32
    return %arg0, %arg1, %c0_i32 : i32, i32, i32
  }
  func.func @transform_1(%arg0: i32, %arg1: i32) -> (i32, i32) {
    %c0_i32 = arith.constant 0 : i32
    %c0_i32_0 = arith.constant 0 : i32
    %c0_i32_1 = arith.constant 0 : i32
    return %c0_i32, %c0_i32_0 : i32, i32
  }
  func.func @transform_2(%arg0: i32, %arg1: i32) -> (i32, i32) {
    %c0_i32 = arith.constant 0 : i32
    %c0_i32_0 = arith.constant 0 : i32
    %c0_i32_1 = arith.constant 0 : i32
    return %c0_i32, %c0_i32_0 : i32, i32
  }
  func.func @transform_3(%arg0: i32, %arg1: i32) -> (i32, i32, i32) {
    %c0_i32 = arith.constant 0 : i32
    %c0_i32_0 = arith.constant 0 : i32
    return %arg0, %arg1, %c0_i32 : i32, i32, i32
  }
}

module attributes {stable_mosaic.version = 11 : i64} {
  func.func @_gemm_stats_kernel(%arg0: i32, %arg1: i32, %arg2: memref<1x32x128xbf16, #tpu.memory_space<vmem>>, %arg3: memref<1x128x16xbf16, #tpu.memory_space<vmem>>, %arg4: memref<1x32x16xbf16, #tpu.memory_space<vmem>>, %arg5: memref<1x16xf32, #tpu.memory_space<vmem>>, %arg6: memref<1x16xf32, #tpu.memory_space<vmem>>) attributes {dimension_semantics = [#tpu.dimension_semantics<arbitrary>, #tpu.dimension_semantics<arbitrary>], iteration_bounds = array<i64: 4, 1>, scalar_prefetch = 0 : i64, scratch_operands = 0 : i64, tpu.core_type = #tpu.core_type<tc>, window_params = [{transform_indices = @transform_0, window_bounds = array<i64: 1, 32, 128>}, {transform_indices = @transform_1, window_bounds = array<i64: 1, 128, 16>}, {transform_indices = @transform_2, window_bounds = array<i64: 1, 32, 16>}, {pipeline_mode = #tpu.pipeline_mode<synchronous>, transform_indices = @transform_3, window_bounds = array<i64: 1, 16>}, {pipeline_mode = #tpu.pipeline_mode<synchronous>, transform_indices = @transform_4, window_bounds = array<i64: 1, 16>}]} {
    %c0_i32 = arith.constant 0 : i32
    %0 = arith.cmpi eq, %arg0, %c0_i32 : i32
    %c0_i32_0 = arith.constant 0 : i32
    %1 = arith.cmpi eq, %arg1, %c0_i32_0 : i32
    %2 = arith.andi %0, %1 : i1
    %3 = arith.extui %2 : i1 to i32
    %c0_i32_1 = arith.constant 0 : i32
    %4 = arith.cmpi ne, %3, %c0_i32_1 : i32
    scf.if %4 {
      %cst_20 = arith.constant 0.000000e+00 : f32
      %25 = vector.broadcast %cst_20 : f32 to vector<1x16xf32>
      %c0_21 = arith.constant 0 : index
      %c0_22 = arith.constant 0 : index
      %26 = vector.load %arg5[%c0_21, %c0_22] : memref<1x16xf32, #tpu.memory_space<vmem>>, vector<1x16xf32>
      tpu.vector_store %arg5[%c0_21, %c0_22], %25 {strides = array<i32>} : memref<1x16xf32, #tpu.memory_space<vmem>>, vector<1x16xf32>,
      %cst_23 = arith.constant 0.000000e+00 : f32
      %27 = vector.broadcast %cst_23 : f32 to vector<1x16xf32>
      %c0_24 = arith.constant 0 : index
      %c0_25 = arith.constant 0 : index
      %28 = vector.load %arg6[%c0_24, %c0_25] : memref<1x16xf32, #tpu.memory_space<vmem>>, vector<1x16xf32>
      tpu.vector_store %arg6[%c0_24, %c0_25], %27 {strides = array<i32>} : memref<1x16xf32, #tpu.memory_space<vmem>>, vector<1x16xf32>,
    } else {
    }
    %c0 = arith.constant 0 : index
    %c0_2 = arith.constant 0 : index
    %c0_3 = arith.constant 0 : index
    %5 = vector.load %arg2[%c0, %c0_2, %c0_3] : memref<1x32x128xbf16, #tpu.memory_space<vmem>>, vector<1x32x128xbf16>
    %6 = vector.shape_cast %5 : vector<1x32x128xbf16> to vector<32x128xbf16>
    %c0_4 = arith.constant 0 : index
    %c0_5 = arith.constant 0 : index
    %c0_6 = arith.constant 0 : index
    %7 = vector.load %arg3[%c0_4, %c0_5, %c0_6] : memref<1x128x16xbf16, #tpu.memory_space<vmem>>, vector<1x128x16xbf16>
    %8 = vector.shape_cast %7 : vector<1x128x16xbf16> to vector<128x16xbf16>
    %cst = arith.constant dense<0.000000e+00> : vector<32x16xf32>
    %9 = tpu.matmul %6, %8, %cst {dimension_numbers = #tpu.dot_dimension_numbers<[1], [0], [0], [1], [0, 0, 1, 1], [], []>} : vector<32x128xbf16>, vector<128x16xbf16>, vector<32x16xf32> -> vector<32x16xf32>
    %10 = arith.truncf %9 : vector<32x16xf32> to vector<32x16xbf16>
    %c0_7 = arith.constant 0 : index
    %c0_8 = arith.constant 0 : index
    %c0_9 = arith.constant 0 : index
    %11 = vector.load %arg4[%c0_7, %c0_8, %c0_9] : memref<1x32x16xbf16, #tpu.memory_space<vmem>>, vector<1x32x16xbf16>
    %12 = vector.shape_cast %11 : vector<1x32x16xbf16> to vector<32x16xbf16>
    %13 = vector.shape_cast %10 : vector<32x16xbf16> to vector<1x32x16xbf16>
    tpu.vector_store %arg4[%c0_7, %c0_8, %c0_9], %13 {strides = array<i32>} : memref<1x32x16xbf16, #tpu.memory_space<vmem>>, vector<1x32x16xbf16>,
    %c0_10 = arith.constant 0 : index
    %c0_11 = arith.constant 0 : index
    %14 = vector.load %arg5[%c0_10, %c0_11] : memref<1x16xf32, #tpu.memory_space<vmem>>, vector<1x16xf32>
    %cst_12 = arith.constant dense<0.000000e+00> : vector<16xf32>
    %15 = vector.multi_reduction <add>, %9, %cst_12 [0] : vector<32x16xf32> to vector<16xf32>
    %16 = vector.shape_cast %15 : vector<16xf32> to vector<1x16xf32>
    %17 = arith.addf %14, %16 : vector<1x16xf32>
    %c0_13 = arith.constant 0 : index
    %c0_14 = arith.constant 0 : index
    %18 = vector.load %arg5[%c0_13, %c0_14] : memref<1x16xf32, #tpu.memory_space<vmem>>, vector<1x16xf32>
    tpu.vector_store %arg5[%c0_13, %c0_14], %17 {strides = array<i32>} : memref<1x16xf32, #tpu.memory_space<vmem>>, vector<1x16xf32>,
    %c0_15 = arith.constant 0 : index
    %c0_16 = arith.constant 0 : index
    %19 = vector.load %arg6[%c0_15, %c0_16] : memref<1x16xf32, #tpu.memory_space<vmem>>, vector<1x16xf32>
    %20 = arith.mulf %9, %9 : vector<32x16xf32>
    %cst_17 = arith.constant dense<0.000000e+00> : vector<16xf32>
    %21 = vector.multi_reduction <add>, %20, %cst_17 [0] : vector<32x16xf32> to vector<16xf32>
    %22 = vector.shape_cast %21 : vector<16xf32> to vector<1x16xf32>
    %23 = arith.addf %19, %22 : vector<1x16xf32>
    %c0_18 = arith.constant 0 : index
    %c0_19 = arith.constant 0 : index
    %24 = vector.load %arg6[%c0_18, %c0_19] : memref<1x16xf32, #tpu.memory_space<vmem>>, vector<1x16xf32>
    tpu.vector_store %arg6[%c0_18, %c0_19], %23 {strides = array<i32>} : memref<1x16xf32, #tpu.memory_space<vmem>>, vector<1x16xf32>,
    return
  }
  func.func @transform_0(%arg0: i32, %arg1: i32) -> (i32, i32, i32) {
    %c0_i32 = arith.constant 0 : i32
    %c0_i32_0 = arith.constant 0 : i32
    return %arg0, %arg1, %c0_i32 : i32, i32, i32
  }
  func.func @transform_1(%arg0: i32, %arg1: i32) -> (i32, i32, i32) {
    %c0_i32 = arith.constant 0 : i32
    %c0_i32_0 = arith.constant 0 : i32
    %c0_i32_1 = arith.constant 0 : i32
    return %arg0, %c0_i32, %c0_i32_0 : i32, i32, i32
  }
  func.func @transform_2(%arg0: i32, %arg1: i32) -> (i32, i32, i32) {
    %c0_i32 = arith.constant 0 : i32
    %c0_i32_0 = arith.constant 0 : i32
    return %arg0, %arg1, %c0_i32 : i32, i32, i32
  }
  func.func @transform_3(%arg0: i32, %arg1: i32) -> (i32, i32) {
    %c0_i32 = arith.constant 0 : i32
    %c0_i32_0 = arith.constant 0 : i32
    %c0_i32_1 = arith.constant 0 : i32
    return %c0_i32, %c0_i32_0 : i32, i32
  }
  func.func @transform_4(%arg0: i32, %arg1: i32) -> (i32, i32) {
    %c0_i32 = arith.constant 0 : i32
    %c0_i32_0 = arith.constant 0 : i32
    %c0_i32_1 = arith.constant 0 : i32
    return %c0_i32, %c0_i32_0 : i32, i32
  }
}

module attributes {stable_mosaic.version = 11 : i64} {
  func.func @_bn_relu_kernel(%arg0: i32, %arg1: i32, %arg2: memref<1x32x16xbf16, #tpu.memory_space<vmem>>, %arg3: memref<1x16xf32, #tpu.memory_space<vmem>>, %arg4: memref<1x16xf32, #tpu.memory_space<vmem>>, %arg5: memref<1x32x16xbf16, #tpu.memory_space<vmem>>) attributes {dimension_semantics = [#tpu.dimension_semantics<parallel>, #tpu.dimension_semantics<parallel>], iteration_bounds = array<i64: 4, 1>, scalar_prefetch = 0 : i64, scratch_operands = 0 : i64, tpu.core_type = #tpu.core_type<tc>, window_params = [{transform_indices = @transform_0, window_bounds = array<i64: 1, 32, 16>}, {pipeline_mode = #tpu.pipeline_mode<synchronous>, transform_indices = @transform_1, window_bounds = array<i64: 1, 16>}, {pipeline_mode = #tpu.pipeline_mode<synchronous>, transform_indices = @transform_2, window_bounds = array<i64: 1, 16>}, {transform_indices = @transform_3, window_bounds = array<i64: 1, 32, 16>}]} {
    %c0 = arith.constant 0 : index
    %c0_0 = arith.constant 0 : index
    %c0_1 = arith.constant 0 : index
    %0 = vector.load %arg2[%c0, %c0_0, %c0_1] : memref<1x32x16xbf16, #tpu.memory_space<vmem>>, vector<1x32x16xbf16>
    %1 = vector.shape_cast %0 : vector<1x32x16xbf16> to vector<32x16xbf16>
    %2 = arith.extf %1 : vector<32x16xbf16> to vector<32x16xf32>
    %c0_2 = arith.constant 0 : index
    %c0_3 = arith.constant 0 : index
    %3 = vector.load %arg3[%c0_2, %c0_3] : memref<1x16xf32, #tpu.memory_space<vmem>>, vector<1x16xf32>
    %4 = vector.broadcast %3 : vector<1x16xf32> to vector<32x16xf32>
    %5 = arith.mulf %2, %4 : vector<32x16xf32>
    %c0_4 = arith.constant 0 : index
    %c0_5 = arith.constant 0 : index
    %6 = vector.load %arg4[%c0_4, %c0_5] : memref<1x16xf32, #tpu.memory_space<vmem>>, vector<1x16xf32>
    %7 = vector.broadcast %6 : vector<1x16xf32> to vector<32x16xf32>
    %8 = arith.addf %5, %7 : vector<32x16xf32>
    %cst = arith.constant 0.000000e+00 : f32
    %9 = vector.broadcast %cst : f32 to vector<32x16xf32>
    %10 = arith.maximumf %8, %9 : vector<32x16xf32>
    %11 = arith.truncf %10 : vector<32x16xf32> to vector<32x16xbf16>
    %c0_6 = arith.constant 0 : index
    %c0_7 = arith.constant 0 : index
    %c0_8 = arith.constant 0 : index
    %12 = vector.load %arg5[%c0_6, %c0_7, %c0_8] : memref<1x32x16xbf16, #tpu.memory_space<vmem>>, vector<1x32x16xbf16>
    %13 = vector.shape_cast %12 : vector<1x32x16xbf16> to vector<32x16xbf16>
    %14 = vector.shape_cast %11 : vector<32x16xbf16> to vector<1x32x16xbf16>
    tpu.vector_store %arg5[%c0_6, %c0_7, %c0_8], %14 {strides = array<i32>} : memref<1x32x16xbf16, #tpu.memory_space<vmem>>, vector<1x32x16xbf16>,
    return
  }
  func.func @transform_0(%arg0: i32, %arg1: i32) -> (i32, i32, i32) {
    %c0_i32 = arith.constant 0 : i32
    %c0_i32_0 = arith.constant 0 : i32
    return %arg0, %arg1, %c0_i32 : i32, i32, i32
  }
  func.func @transform_1(%arg0: i32, %arg1: i32) -> (i32, i32) {
    %c0_i32 = arith.constant 0 : i32
    %c0_i32_0 = arith.constant 0 : i32
    %c0_i32_1 = arith.constant 0 : i32
    return %c0_i32, %c0_i32_0 : i32, i32
  }
  func.func @transform_2(%arg0: i32, %arg1: i32) -> (i32, i32) {
    %c0_i32 = arith.constant 0 : i32
    %c0_i32_0 = arith.constant 0 : i32
    %c0_i32_1 = arith.constant 0 : i32
    return %c0_i32, %c0_i32_0 : i32, i32
  }
  func.func @transform_3(%arg0: i32, %arg1: i32) -> (i32, i32, i32) {
    %c0_i32 = arith.constant 0 : i32
    %c0_i32_0 = arith.constant 0 : i32
    return %arg0, %arg1, %c0_i32 : i32, i32, i32
  }
}

module attributes {stable_mosaic.version = 11 : i64} {
  func.func @_gemm_stats_kernel(%arg0: i32, %arg1: i32, %arg2: memref<1x128x64xbf16, #tpu.memory_space<vmem>>, %arg3: memref<1x64x8xbf16, #tpu.memory_space<vmem>>, %arg4: memref<1x128x8xbf16, #tpu.memory_space<vmem>>, %arg5: memref<1x8xf32, #tpu.memory_space<vmem>>, %arg6: memref<1x8xf32, #tpu.memory_space<vmem>>) attributes {dimension_semantics = [#tpu.dimension_semantics<arbitrary>, #tpu.dimension_semantics<arbitrary>], iteration_bounds = array<i64: 4, 1>, scalar_prefetch = 0 : i64, scratch_operands = 0 : i64, tpu.core_type = #tpu.core_type<tc>, window_params = [{transform_indices = @transform_0, window_bounds = array<i64: 1, 128, 64>}, {transform_indices = @transform_1, window_bounds = array<i64: 1, 64, 8>}, {transform_indices = @transform_2, window_bounds = array<i64: 1, 128, 8>}, {pipeline_mode = #tpu.pipeline_mode<synchronous>, transform_indices = @transform_3, window_bounds = array<i64: 1, 8>}, {pipeline_mode = #tpu.pipeline_mode<synchronous>, transform_indices = @transform_4, window_bounds = array<i64: 1, 8>}]} {
    %c0_i32 = arith.constant 0 : i32
    %0 = arith.cmpi eq, %arg0, %c0_i32 : i32
    %c0_i32_0 = arith.constant 0 : i32
    %1 = arith.cmpi eq, %arg1, %c0_i32_0 : i32
    %2 = arith.andi %0, %1 : i1
    %3 = arith.extui %2 : i1 to i32
    %c0_i32_1 = arith.constant 0 : i32
    %4 = arith.cmpi ne, %3, %c0_i32_1 : i32
    scf.if %4 {
      %cst_20 = arith.constant 0.000000e+00 : f32
      %25 = vector.broadcast %cst_20 : f32 to vector<1x8xf32>
      %c0_21 = arith.constant 0 : index
      %c0_22 = arith.constant 0 : index
      %26 = vector.load %arg5[%c0_21, %c0_22] : memref<1x8xf32, #tpu.memory_space<vmem>>, vector<1x8xf32>
      tpu.vector_store %arg5[%c0_21, %c0_22], %25 {strides = array<i32>} : memref<1x8xf32, #tpu.memory_space<vmem>>, vector<1x8xf32>,
      %cst_23 = arith.constant 0.000000e+00 : f32
      %27 = vector.broadcast %cst_23 : f32 to vector<1x8xf32>
      %c0_24 = arith.constant 0 : index
      %c0_25 = arith.constant 0 : index
      %28 = vector.load %arg6[%c0_24, %c0_25] : memref<1x8xf32, #tpu.memory_space<vmem>>, vector<1x8xf32>
      tpu.vector_store %arg6[%c0_24, %c0_25], %27 {strides = array<i32>} : memref<1x8xf32, #tpu.memory_space<vmem>>, vector<1x8xf32>,
    } else {
    }
    %c0 = arith.constant 0 : index
    %c0_2 = arith.constant 0 : index
    %c0_3 = arith.constant 0 : index
    %5 = vector.load %arg2[%c0, %c0_2, %c0_3] : memref<1x128x64xbf16, #tpu.memory_space<vmem>>, vector<1x128x64xbf16>
    %6 = vector.shape_cast %5 : vector<1x128x64xbf16> to vector<128x64xbf16>
    %c0_4 = arith.constant 0 : index
    %c0_5 = arith.constant 0 : index
    %c0_6 = arith.constant 0 : index
    %7 = vector.load %arg3[%c0_4, %c0_5, %c0_6] : memref<1x64x8xbf16, #tpu.memory_space<vmem>>, vector<1x64x8xbf16>
    %8 = vector.shape_cast %7 : vector<1x64x8xbf16> to vector<64x8xbf16>
    %cst = arith.constant dense<0.000000e+00> : vector<128x8xf32>
    %9 = tpu.matmul %6, %8, %cst {dimension_numbers = #tpu.dot_dimension_numbers<[1], [0], [0], [1], [0, 0, 1, 1], [], []>} : vector<128x64xbf16>, vector<64x8xbf16>, vector<128x8xf32> -> vector<128x8xf32>
    %10 = arith.truncf %9 : vector<128x8xf32> to vector<128x8xbf16>
    %c0_7 = arith.constant 0 : index
    %c0_8 = arith.constant 0 : index
    %c0_9 = arith.constant 0 : index
    %11 = vector.load %arg4[%c0_7, %c0_8, %c0_9] : memref<1x128x8xbf16, #tpu.memory_space<vmem>>, vector<1x128x8xbf16>
    %12 = vector.shape_cast %11 : vector<1x128x8xbf16> to vector<128x8xbf16>
    %13 = vector.shape_cast %10 : vector<128x8xbf16> to vector<1x128x8xbf16>
    tpu.vector_store %arg4[%c0_7, %c0_8, %c0_9], %13 {strides = array<i32>} : memref<1x128x8xbf16, #tpu.memory_space<vmem>>, vector<1x128x8xbf16>,
    %c0_10 = arith.constant 0 : index
    %c0_11 = arith.constant 0 : index
    %14 = vector.load %arg5[%c0_10, %c0_11] : memref<1x8xf32, #tpu.memory_space<vmem>>, vector<1x8xf32>
    %cst_12 = arith.constant dense<0.000000e+00> : vector<8xf32>
    %15 = vector.multi_reduction <add>, %9, %cst_12 [0] : vector<128x8xf32> to vector<8xf32>
    %16 = vector.shape_cast %15 : vector<8xf32> to vector<1x8xf32>
    %17 = arith.addf %14, %16 : vector<1x8xf32>
    %c0_13 = arith.constant 0 : index
    %c0_14 = arith.constant 0 : index
    %18 = vector.load %arg5[%c0_13, %c0_14] : memref<1x8xf32, #tpu.memory_space<vmem>>, vector<1x8xf32>
    tpu.vector_store %arg5[%c0_13, %c0_14], %17 {strides = array<i32>} : memref<1x8xf32, #tpu.memory_space<vmem>>, vector<1x8xf32>,
    %c0_15 = arith.constant 0 : index
    %c0_16 = arith.constant 0 : index
    %19 = vector.load %arg6[%c0_15, %c0_16] : memref<1x8xf32, #tpu.memory_space<vmem>>, vector<1x8xf32>
    %20 = arith.mulf %9, %9 : vector<128x8xf32>
    %cst_17 = arith.constant dense<0.000000e+00> : vector<8xf32>
    %21 = vector.multi_reduction <add>, %20, %cst_17 [0] : vector<128x8xf32> to vector<8xf32>
    %22 = vector.shape_cast %21 : vector<8xf32> to vector<1x8xf32>
    %23 = arith.addf %19, %22 : vector<1x8xf32>
    %c0_18 = arith.constant 0 : index
    %c0_19 = arith.constant 0 : index
    %24 = vector.load %arg6[%c0_18, %c0_19] : memref<1x8xf32, #tpu.memory_space<vmem>>, vector<1x8xf32>
    tpu.vector_store %arg6[%c0_18, %c0_19], %23 {strides = array<i32>} : memref<1x8xf32, #tpu.memory_space<vmem>>, vector<1x8xf32>,
    return
  }
  func.func @transform_0(%arg0: i32, %arg1: i32) -> (i32, i32, i32) {
    %c0_i32 = arith.constant 0 : i32
    %c0_i32_0 = arith.constant 0 : i32
    return %arg0, %arg1, %c0_i32 : i32, i32, i32
  }
  func.func @transform_1(%arg0: i32, %arg1: i32) -> (i32, i32, i32) {
    %c0_i32 = arith.constant 0 : i32
    %c0_i32_0 = arith.constant 0 : i32
    %c0_i32_1 = arith.constant 0 : i32
    return %arg0, %c0_i32, %c0_i32_0 : i32, i32, i32
  }
  func.func @transform_2(%arg0: i32, %arg1: i32) -> (i32, i32, i32) {
    %c0_i32 = arith.constant 0 : i32
    %c0_i32_0 = arith.constant 0 : i32
    return %arg0, %arg1, %c0_i32 : i32, i32, i32
  }
  func.func @transform_3(%arg0: i32, %arg1: i32) -> (i32, i32) {
    %c0_i32 = arith.constant 0 : i32
    %c0_i32_0 = arith.constant 0 : i32
    %c0_i32_1 = arith.constant 0 : i32
    return %c0_i32, %c0_i32_0 : i32, i32
  }
  func.func @transform_4(%arg0: i32, %arg1: i32) -> (i32, i32) {
    %c0_i32 = arith.constant 0 : i32
    %c0_i32_0 = arith.constant 0 : i32
    %c0_i32_1 = arith.constant 0 : i32
    return %c0_i32, %c0_i32_0 : i32, i32
  }
}

module attributes {stable_mosaic.version = 11 : i64} {
  func.func @_bn_relu_kernel(%arg0: i32, %arg1: i32, %arg2: memref<1x128x8xbf16, #tpu.memory_space<vmem>>, %arg3: memref<1x8xf32, #tpu.memory_space<vmem>>, %arg4: memref<1x8xf32, #tpu.memory_space<vmem>>, %arg5: memref<1x128x8xbf16, #tpu.memory_space<vmem>>) attributes {dimension_semantics = [#tpu.dimension_semantics<parallel>, #tpu.dimension_semantics<parallel>], iteration_bounds = array<i64: 4, 1>, scalar_prefetch = 0 : i64, scratch_operands = 0 : i64, tpu.core_type = #tpu.core_type<tc>, window_params = [{transform_indices = @transform_0, window_bounds = array<i64: 1, 128, 8>}, {pipeline_mode = #tpu.pipeline_mode<synchronous>, transform_indices = @transform_1, window_bounds = array<i64: 1, 8>}, {pipeline_mode = #tpu.pipeline_mode<synchronous>, transform_indices = @transform_2, window_bounds = array<i64: 1, 8>}, {transform_indices = @transform_3, window_bounds = array<i64: 1, 128, 8>}]} {
    %c0 = arith.constant 0 : index
    %c0_0 = arith.constant 0 : index
    %c0_1 = arith.constant 0 : index
    %0 = vector.load %arg2[%c0, %c0_0, %c0_1] : memref<1x128x8xbf16, #tpu.memory_space<vmem>>, vector<1x128x8xbf16>
    %1 = vector.shape_cast %0 : vector<1x128x8xbf16> to vector<128x8xbf16>
    %2 = arith.extf %1 : vector<128x8xbf16> to vector<128x8xf32>
    %c0_2 = arith.constant 0 : index
    %c0_3 = arith.constant 0 : index
    %3 = vector.load %arg3[%c0_2, %c0_3] : memref<1x8xf32, #tpu.memory_space<vmem>>, vector<1x8xf32>
    %4 = vector.broadcast %3 : vector<1x8xf32> to vector<128x8xf32>
    %5 = arith.mulf %2, %4 : vector<128x8xf32>
    %c0_4 = arith.constant 0 : index
    %c0_5 = arith.constant 0 : index
    %6 = vector.load %arg4[%c0_4, %c0_5] : memref<1x8xf32, #tpu.memory_space<vmem>>, vector<1x8xf32>
    %7 = vector.broadcast %6 : vector<1x8xf32> to vector<128x8xf32>
    %8 = arith.addf %5, %7 : vector<128x8xf32>
    %cst = arith.constant 0.000000e+00 : f32
    %9 = vector.broadcast %cst : f32 to vector<128x8xf32>
    %10 = arith.maximumf %8, %9 : vector<128x8xf32>
    %11 = arith.truncf %10 : vector<128x8xf32> to vector<128x8xbf16>
    %c0_6 = arith.constant 0 : index
    %c0_7 = arith.constant 0 : index
    %c0_8 = arith.constant 0 : index
    %12 = vector.load %arg5[%c0_6, %c0_7, %c0_8] : memref<1x128x8xbf16, #tpu.memory_space<vmem>>, vector<1x128x8xbf16>
    %13 = vector.shape_cast %12 : vector<1x128x8xbf16> to vector<128x8xbf16>
    %14 = vector.shape_cast %11 : vector<128x8xbf16> to vector<1x128x8xbf16>
    tpu.vector_store %arg5[%c0_6, %c0_7, %c0_8], %14 {strides = array<i32>} : memref<1x128x8xbf16, #tpu.memory_space<vmem>>, vector<1x128x8xbf16>,
    return
  }
  func.func @transform_0(%arg0: i32, %arg1: i32) -> (i32, i32, i32) {
    %c0_i32 = arith.constant 0 : i32
    %c0_i32_0 = arith.constant 0 : i32
    return %arg0, %arg1, %c0_i32 : i32, i32, i32
  }
  func.func @transform_1(%arg0: i32, %arg1: i32) -> (i32, i32) {
    %c0_i32 = arith.constant 0 : i32
    %c0_i32_0 = arith.constant 0 : i32
    %c0_i32_1 = arith.constant 0 : i32
    return %c0_i32, %c0_i32_0 : i32, i32
  }
  func.func @transform_2(%arg0: i32, %arg1: i32) -> (i32, i32) {
    %c0_i32 = arith.constant 0 : i32
    %c0_i32_0 = arith.constant 0 : i32
    %c0_i32_1 = arith.constant 0 : i32
    return %c0_i32, %c0_i32_0 : i32, i32
  }
  func.func @transform_3(%arg0: i32, %arg1: i32) -> (i32, i32, i32) {
    %c0_i32 = arith.constant 0 : i32
    %c0_i32_0 = arith.constant 0 : i32
    return %arg0, %arg1, %c0_i32 : i32, i32, i32
  }
}

module attributes {stable_mosaic.version = 11 : i64} {
  func.func @_gemm_stats_kernel(%arg0: i32, %arg1: i32, %arg2: memref<1x512x32xbf16, #tpu.memory_space<vmem>>, %arg3: memref<1x32x4xbf16, #tpu.memory_space<vmem>>, %arg4: memref<1x512x4xbf16, #tpu.memory_space<vmem>>, %arg5: memref<1x4xf32, #tpu.memory_space<vmem>>, %arg6: memref<1x4xf32, #tpu.memory_space<vmem>>) attributes {dimension_semantics = [#tpu.dimension_semantics<arbitrary>, #tpu.dimension_semantics<arbitrary>], iteration_bounds = array<i64: 4, 1>, scalar_prefetch = 0 : i64, scratch_operands = 0 : i64, tpu.core_type = #tpu.core_type<tc>, window_params = [{transform_indices = @transform_0, window_bounds = array<i64: 1, 512, 32>}, {transform_indices = @transform_1, window_bounds = array<i64: 1, 32, 4>}, {transform_indices = @transform_2, window_bounds = array<i64: 1, 512, 4>}, {pipeline_mode = #tpu.pipeline_mode<synchronous>, transform_indices = @transform_3, window_bounds = array<i64: 1, 4>}, {pipeline_mode = #tpu.pipeline_mode<synchronous>, transform_indices = @transform_4, window_bounds = array<i64: 1, 4>}]} {
    %c0_i32 = arith.constant 0 : i32
    %0 = arith.cmpi eq, %arg0, %c0_i32 : i32
    %c0_i32_0 = arith.constant 0 : i32
    %1 = arith.cmpi eq, %arg1, %c0_i32_0 : i32
    %2 = arith.andi %0, %1 : i1
    %3 = arith.extui %2 : i1 to i32
    %c0_i32_1 = arith.constant 0 : i32
    %4 = arith.cmpi ne, %3, %c0_i32_1 : i32
    scf.if %4 {
      %cst_20 = arith.constant 0.000000e+00 : f32
      %25 = vector.broadcast %cst_20 : f32 to vector<1x4xf32>
      %c0_21 = arith.constant 0 : index
      %c0_22 = arith.constant 0 : index
      %26 = vector.load %arg5[%c0_21, %c0_22] : memref<1x4xf32, #tpu.memory_space<vmem>>, vector<1x4xf32>
      tpu.vector_store %arg5[%c0_21, %c0_22], %25 {strides = array<i32>} : memref<1x4xf32, #tpu.memory_space<vmem>>, vector<1x4xf32>,
      %cst_23 = arith.constant 0.000000e+00 : f32
      %27 = vector.broadcast %cst_23 : f32 to vector<1x4xf32>
      %c0_24 = arith.constant 0 : index
      %c0_25 = arith.constant 0 : index
      %28 = vector.load %arg6[%c0_24, %c0_25] : memref<1x4xf32, #tpu.memory_space<vmem>>, vector<1x4xf32>
      tpu.vector_store %arg6[%c0_24, %c0_25], %27 {strides = array<i32>} : memref<1x4xf32, #tpu.memory_space<vmem>>, vector<1x4xf32>,
    } else {
    }
    %c0 = arith.constant 0 : index
    %c0_2 = arith.constant 0 : index
    %c0_3 = arith.constant 0 : index
    %5 = vector.load %arg2[%c0, %c0_2, %c0_3] : memref<1x512x32xbf16, #tpu.memory_space<vmem>>, vector<1x512x32xbf16>
    %6 = vector.shape_cast %5 : vector<1x512x32xbf16> to vector<512x32xbf16>
    %c0_4 = arith.constant 0 : index
    %c0_5 = arith.constant 0 : index
    %c0_6 = arith.constant 0 : index
    %7 = vector.load %arg3[%c0_4, %c0_5, %c0_6] : memref<1x32x4xbf16, #tpu.memory_space<vmem>>, vector<1x32x4xbf16>
    %8 = vector.shape_cast %7 : vector<1x32x4xbf16> to vector<32x4xbf16>
    %cst = arith.constant dense<0.000000e+00> : vector<512x4xf32>
    %9 = tpu.matmul %6, %8, %cst {dimension_numbers = #tpu.dot_dimension_numbers<[1], [0], [0], [1], [0, 0, 1, 1], [], []>} : vector<512x32xbf16>, vector<32x4xbf16>, vector<512x4xf32> -> vector<512x4xf32>
    %10 = arith.truncf %9 : vector<512x4xf32> to vector<512x4xbf16>
    %c0_7 = arith.constant 0 : index
    %c0_8 = arith.constant 0 : index
    %c0_9 = arith.constant 0 : index
    %11 = vector.load %arg4[%c0_7, %c0_8, %c0_9] : memref<1x512x4xbf16, #tpu.memory_space<vmem>>, vector<1x512x4xbf16>
    %12 = vector.shape_cast %11 : vector<1x512x4xbf16> to vector<512x4xbf16>
    %13 = vector.shape_cast %10 : vector<512x4xbf16> to vector<1x512x4xbf16>
    tpu.vector_store %arg4[%c0_7, %c0_8, %c0_9], %13 {strides = array<i32>} : memref<1x512x4xbf16, #tpu.memory_space<vmem>>, vector<1x512x4xbf16>,
    %c0_10 = arith.constant 0 : index
    %c0_11 = arith.constant 0 : index
    %14 = vector.load %arg5[%c0_10, %c0_11] : memref<1x4xf32, #tpu.memory_space<vmem>>, vector<1x4xf32>
    %cst_12 = arith.constant dense<0.000000e+00> : vector<4xf32>
    %15 = vector.multi_reduction <add>, %9, %cst_12 [0] : vector<512x4xf32> to vector<4xf32>
    %16 = vector.shape_cast %15 : vector<4xf32> to vector<1x4xf32>
    %17 = arith.addf %14, %16 : vector<1x4xf32>
    %c0_13 = arith.constant 0 : index
    %c0_14 = arith.constant 0 : index
    %18 = vector.load %arg5[%c0_13, %c0_14] : memref<1x4xf32, #tpu.memory_space<vmem>>, vector<1x4xf32>
    tpu.vector_store %arg5[%c0_13, %c0_14], %17 {strides = array<i32>} : memref<1x4xf32, #tpu.memory_space<vmem>>, vector<1x4xf32>,
    %c0_15 = arith.constant 0 : index
    %c0_16 = arith.constant 0 : index
    %19 = vector.load %arg6[%c0_15, %c0_16] : memref<1x4xf32, #tpu.memory_space<vmem>>, vector<1x4xf32>
    %20 = arith.mulf %9, %9 : vector<512x4xf32>
    %cst_17 = arith.constant dense<0.000000e+00> : vector<4xf32>
    %21 = vector.multi_reduction <add>, %20, %cst_17 [0] : vector<512x4xf32> to vector<4xf32>
    %22 = vector.shape_cast %21 : vector<4xf32> to vector<1x4xf32>
    %23 = arith.addf %19, %22 : vector<1x4xf32>
    %c0_18 = arith.constant 0 : index
    %c0_19 = arith.constant 0 : index
    %24 = vector.load %arg6[%c0_18, %c0_19] : memref<1x4xf32, #tpu.memory_space<vmem>>, vector<1x4xf32>
    tpu.vector_store %arg6[%c0_18, %c0_19], %23 {strides = array<i32>} : memref<1x4xf32, #tpu.memory_space<vmem>>, vector<1x4xf32>,
    return
  }
  func.func @transform_0(%arg0: i32, %arg1: i32) -> (i32, i32, i32) {
    %c0_i32 = arith.constant 0 : i32
    %c0_i32_0 = arith.constant 0 : i32
    return %arg0, %arg1, %c0_i32 : i32, i32, i32
  }
  func.func @transform_1(%arg0: i32, %arg1: i32) -> (i32, i32, i32) {
    %c0_i32 = arith.constant 0 : i32
    %c0_i32_0 = arith.constant 0 : i32
    %c0_i32_1 = arith.constant 0 : i32
    return %arg0, %c0_i32, %c0_i32_0 : i32, i32, i32
  }
  func.func @transform_2(%arg0: i32, %arg1: i32) -> (i32, i32, i32) {
    %c0_i32 = arith.constant 0 : i32
    %c0_i32_0 = arith.constant 0 : i32
    return %arg0, %arg1, %c0_i32 : i32, i32, i32
  }
  func.func @transform_3(%arg0: i32, %arg1: i32) -> (i32, i32) {
    %c0_i32 = arith.constant 0 : i32
    %c0_i32_0 = arith.constant 0 : i32
    %c0_i32_1 = arith.constant 0 : i32
    return %c0_i32, %c0_i32_0 : i32, i32
  }
  func.func @transform_4(%arg0: i32, %arg1: i32) -> (i32, i32) {
    %c0_i32 = arith.constant 0 : i32
    %c0_i32_0 = arith.constant 0 : i32
    %c0_i32_1 = arith.constant 0 : i32
    return %c0_i32, %c0_i32_0 : i32, i32
  }
}

module attributes {stable_mosaic.version = 11 : i64} {
  func.func @_bn_relu_kernel(%arg0: i32, %arg1: i32, %arg2: memref<1x512x4xbf16, #tpu.memory_space<vmem>>, %arg3: memref<1x4xf32, #tpu.memory_space<vmem>>, %arg4: memref<1x4xf32, #tpu.memory_space<vmem>>, %arg5: memref<1x512x4xbf16, #tpu.memory_space<vmem>>) attributes {dimension_semantics = [#tpu.dimension_semantics<parallel>, #tpu.dimension_semantics<parallel>], iteration_bounds = array<i64: 4, 1>, scalar_prefetch = 0 : i64, scratch_operands = 0 : i64, tpu.core_type = #tpu.core_type<tc>, window_params = [{transform_indices = @transform_0, window_bounds = array<i64: 1, 512, 4>}, {pipeline_mode = #tpu.pipeline_mode<synchronous>, transform_indices = @transform_1, window_bounds = array<i64: 1, 4>}, {pipeline_mode = #tpu.pipeline_mode<synchronous>, transform_indices = @transform_2, window_bounds = array<i64: 1, 4>}, {transform_indices = @transform_3, window_bounds = array<i64: 1, 512, 4>}]} {
    %c0 = arith.constant 0 : index
    %c0_0 = arith.constant 0 : index
    %c0_1 = arith.constant 0 : index
    %0 = vector.load %arg2[%c0, %c0_0, %c0_1] : memref<1x512x4xbf16, #tpu.memory_space<vmem>>, vector<1x512x4xbf16>
    %1 = vector.shape_cast %0 : vector<1x512x4xbf16> to vector<512x4xbf16>
    %2 = arith.extf %1 : vector<512x4xbf16> to vector<512x4xf32>
    %c0_2 = arith.constant 0 : index
    %c0_3 = arith.constant 0 : index
    %3 = vector.load %arg3[%c0_2, %c0_3] : memref<1x4xf32, #tpu.memory_space<vmem>>, vector<1x4xf32>
    %4 = vector.broadcast %3 : vector<1x4xf32> to vector<512x4xf32>
    %5 = arith.mulf %2, %4 : vector<512x4xf32>
    %c0_4 = arith.constant 0 : index
    %c0_5 = arith.constant 0 : index
    %6 = vector.load %arg4[%c0_4, %c0_5] : memref<1x4xf32, #tpu.memory_space<vmem>>, vector<1x4xf32>
    %7 = vector.broadcast %6 : vector<1x4xf32> to vector<512x4xf32>
    %8 = arith.addf %5, %7 : vector<512x4xf32>
    %cst = arith.constant 0.000000e+00 : f32
    %9 = vector.broadcast %cst : f32 to vector<512x4xf32>
    %10 = arith.maximumf %8, %9 : vector<512x4xf32>
    %11 = arith.truncf %10 : vector<512x4xf32> to vector<512x4xbf16>
    %c0_6 = arith.constant 0 : index
    %c0_7 = arith.constant 0 : index
    %c0_8 = arith.constant 0 : index
    %12 = vector.load %arg5[%c0_6, %c0_7, %c0_8] : memref<1x512x4xbf16, #tpu.memory_space<vmem>>, vector<1x512x4xbf16>
    %13 = vector.shape_cast %12 : vector<1x512x4xbf16> to vector<512x4xbf16>
    %14 = vector.shape_cast %11 : vector<512x4xbf16> to vector<1x512x4xbf16>
    tpu.vector_store %arg5[%c0_6, %c0_7, %c0_8], %14 {strides = array<i32>} : memref<1x512x4xbf16, #tpu.memory_space<vmem>>, vector<1x512x4xbf16>,
    return
  }
  func.func @transform_0(%arg0: i32, %arg1: i32) -> (i32, i32, i32) {
    %c0_i32 = arith.constant 0 : i32
    %c0_i32_0 = arith.constant 0 : i32
    return %arg0, %arg1, %c0_i32 : i32, i32, i32
  }
  func.func @transform_1(%arg0: i32, %arg1: i32) -> (i32, i32) {
    %c0_i32 = arith.constant 0 : i32
    %c0_i32_0 = arith.constant 0 : i32
    %c0_i32_1 = arith.constant 0 : i32
    return %c0_i32, %c0_i32_0 : i32, i32
  }
  func.func @transform_2(%arg0: i32, %arg1: i32) -> (i32, i32) {
    %c0_i32 = arith.constant 0 : i32
    %c0_i32_0 = arith.constant 0 : i32
    %c0_i32_1 = arith.constant 0 : i32
    return %c0_i32, %c0_i32_0 : i32, i32
  }
  func.func @transform_3(%arg0: i32, %arg1: i32) -> (i32, i32, i32) {
    %c0_i32 = arith.constant 0 : i32
    %c0_i32_0 = arith.constant 0 : i32
    return %arg0, %arg1, %c0_i32 : i32, i32, i32
  }
}

module attributes {stable_mosaic.version = 11 : i64} {
  func.func @_gemm_tanh_kernel(%arg0: i32, %arg1: i32, %arg2: memref<1x512x16xbf16, #tpu.memory_space<vmem>>, %arg3: memref<1x16x128xbf16, #tpu.memory_space<vmem>>, %arg4: memref<1x512x128xf32, #tpu.memory_space<vmem>>) attributes {dimension_semantics = [#tpu.dimension_semantics<parallel>, #tpu.dimension_semantics<parallel>], iteration_bounds = array<i64: 4, 4>, scalar_prefetch = 0 : i64, scratch_operands = 0 : i64, tpu.core_type = #tpu.core_type<tc>, window_params = [{transform_indices = @transform_0, window_bounds = array<i64: 1, 512, 16>}, {transform_indices = @transform_1, window_bounds = array<i64: 1, 16, 128>}, {transform_indices = @transform_2, window_bounds = array<i64: 1, 512, 128>}]} {
    %c0 = arith.constant 0 : index
    %c0_0 = arith.constant 0 : index
    %c0_1 = arith.constant 0 : index
    %0 = vector.load %arg2[%c0, %c0_0, %c0_1] : memref<1x512x16xbf16, #tpu.memory_space<vmem>>, vector<1x512x16xbf16>
    %1 = vector.shape_cast %0 : vector<1x512x16xbf16> to vector<512x16xbf16>
    %c0_2 = arith.constant 0 : index
    %c0_3 = arith.constant 0 : index
    %c0_4 = arith.constant 0 : index
    %2 = vector.load %arg3[%c0_2, %c0_3, %c0_4] : memref<1x16x128xbf16, #tpu.memory_space<vmem>>, vector<1x16x128xbf16>
    %3 = vector.shape_cast %2 : vector<1x16x128xbf16> to vector<16x128xbf16>
    %cst = arith.constant dense<0.000000e+00> : vector<512x128xf32>
    %4 = tpu.matmul %1, %3, %cst {dimension_numbers = #tpu.dot_dimension_numbers<[1], [0], [0], [1], [0, 0, 1, 1], [], []>} : vector<512x16xbf16>, vector<16x128xbf16>, vector<512x128xf32> -> vector<512x128xf32>
    %5 = math.tanh %4 : vector<512x128xf32>
    %c0_5 = arith.constant 0 : index
    %c0_6 = arith.constant 0 : index
    %c0_7 = arith.constant 0 : index
    %6 = vector.load %arg4[%c0_5, %c0_6, %c0_7] : memref<1x512x128xf32, #tpu.memory_space<vmem>>, vector<1x512x128xf32>
    %7 = vector.shape_cast %6 : vector<1x512x128xf32> to vector<512x128xf32>
    %8 = vector.shape_cast %5 : vector<512x128xf32> to vector<1x512x128xf32>
    tpu.vector_store %arg4[%c0_5, %c0_6, %c0_7], %8 {strides = array<i32>} : memref<1x512x128xf32, #tpu.memory_space<vmem>>, vector<1x512x128xf32>,
    return
  }
  func.func @transform_0(%arg0: i32, %arg1: i32) -> (i32, i32, i32) {
    %c0_i32 = arith.constant 0 : i32
    %c0_i32_0 = arith.constant 0 : i32
    return %arg0, %arg1, %c0_i32 : i32, i32, i32
  }
  func.func @transform_1(%arg0: i32, %arg1: i32) -> (i32, i32, i32) {
    %c0_i32 = arith.constant 0 : i32
    %c0_i32_0 = arith.constant 0 : i32
    %c0_i32_1 = arith.constant 0 : i32
    return %arg0, %c0_i32, %c0_i32_0 : i32, i32, i32
  }
  func.func @transform_2(%arg0: i32, %arg1: i32) -> (i32, i32, i32) {
    %c0_i32 = arith.constant 0 : i32
    %c0_i32_0 = arith.constant 0 : i32
    return %arg0, %arg1, %c0_i32 : i32, i32, i32
  }
}

</mosaic_0001>

<llo_original>
// kernel: squeeze.9
$region0: #{squeeze.9}
  %s0 = inlined_call_operand.vmem [shape: f32[512], index: 0, kind: input, shape index: {}]
  %s1 = inlined_call_operand.vmem [shape: f32[16,32], index: 1, kind: output, shape index: {}]
  $region1: #{squeeze.9} parent=0
    #allocation0 [shape = 'u8[4096]{0}', space=vmem, size = 0x1000, scoped, tag = 'scoped mem for input reshape']
    %s3 = sshll.u32 1, 4
    %s4 = ssub.s32 %s3, 1
    %v5 = vld [vmem:[%s0] sm:%s4]
    %6 = vst [vmem:[#allocation0] sm:%s4] %v5
    %v7 = vld [vmem:[#allocation0] sm:$0xf]
    %vm8 = vcmask 261120
    %9 = vst.msk [vmem:[%s1] ss:$4 sm:$0xf] %vm8, %v7
    %v10 = vld [vmem:[#allocation0] sm:$0xf]
    %11 = vrot.lane.b32.xlu0 %v10, 96
    %v12 = vpop.permute.xlu0 %11
    %vm13 = vcmask 261120
    %s14 = scalar_lea.vmem %s1, 1
    %15 = vst.msk [vmem:[%s14] ss:$4 sm:$0xf] %vm13, %v12
    %v16 = vld [vmem:[#allocation0] sm:$0xf]
    %17 = vrot.lane.b32.xlu0 %v16, 64
    %v18 = vpop.permute.xlu0 %17
    %vm19 = vcmask 261120
    %s20 = scalar_lea.vmem %s1, 2
    %21 = vst.msk [vmem:[%s20] ss:$4 sm:$0xf] %vm19, %v18
    %v22 = vld [vmem:[#allocation0] sm:$0xf]
    %23 = vrot.lane.b32.xlu0 %v22, 32
    %v24 = vpop.permute.xlu0 %23
    %vm25 = vcmask 261120
    %s26 = scalar_lea.vmem %s1, 3
    %27 = vst.msk [vmem:[%s26] ss:$4 sm:$0xf] %vm25, %v24

// kernel: tile.18
$region0: #{tile.18}
  #allocation0 [shape = 's32[1]{0}', space=sflag, size = 0x4, scoped, tag = 'scoped memory for tile.18']
  %s0 = inlined_call_operand.vmem [shape: f32[32], index: 0, kind: input, shape index: {}]
  %s1 = inlined_call_operand.vmem [shape: f32[16,32], index: 1, kind: output, shape index: {}]
  // Predicated region
  $region2: #{tile.18} parent=0 // pred_check
    _
  $region3: #{tile.18} parent=0 // pred_check_branch
    %3 = sbr.rel (0) target = $region5
  $region4: #{tile.18} parent=0 // pred_region
    _
  $region5: #{tile.18} parent=0 // pred_fallthru
    _
  %v4 = vld [vmem:[%s0] ss:$0 sm:$0xff]
  %5 = vst [vmem:[%s1] sm:$0xff] %v4
  %s6 = scalar_lea.vmem %s1, 8
  %7 = vst [vmem:[%s6] sm:$0xff] %v4

// kernel: tile.19
$region0: #{tile.19}
  %s0 = inlined_call_operand.vmem [shape: f32[16,32], index: 0, kind: input, shape index: {}]
  %s1 = inlined_call_operand.vmem [shape: f32[1,512], index: 1, kind: output, shape index: {}]
  $region1: #{tile.19} parent=0
    #allocation0 [shape = 'u8[16384]{0}', space=vmem, size = 0x4000, scoped, tag = 'scoped mem for output reshape']
    %v2 = vld [vmem:[%s0] ss:$4 sm:$0xf]
    %vm3 = vcmask 261120
    %4 = vst.msk [vmem:[#allocation0] ss:$8 sm:$0xf] %vm3, %v2
    %s5 = scalar_lea.vmem %s0, 3
    %v6 = vld [vmem:[%s5] ss:$4 sm:$0xf]
    %7 = vrot.lane.b32.xlu0 %v6, 96
    %v8 = vpop.permute.xlu0 %7
    %vm9 = vcmask 1048320
    %10 = vst.msk [vmem:[#allocation0] ss:$8 sm:$0xf] %vm9, %v8
    %s11 = scalar_lea.vmem %s0, 2
    %v12 = vld [vmem:[%s11] ss:$4 sm:$0xf]
    %13 = vrot.lane.b32.xlu0 %v12, 64
    %v14 = vpop.permute.xlu0 %13
    %vm15 = vcmask 785920
    %16 = vst.msk [vmem:[#allocation0] ss:$8 sm:$0xf] %vm15, %v14
    %s17 = scalar_lea.vmem %s0, 1
    %v18 = vld [vmem:[%s17] ss:$4 sm:$0xf]
    %19 = vrot.lane.b32.xlu0 %v18, 32
    %v20 = vpop.permute.xlu0 %19
    %vm21 = vcmask 523520
    %22 = vst.msk [vmem:[#allocation0] ss:$8 sm:$0xf] %vm21, %v20
    %s24 = sshll.u32 1, 1
    %s25 = ssub.s32 %s24, 1
    %v27 = vld [vmem:[#allocation0] sm:%s25]
    %s28 = sshll.u32 1, 1
    %s29 = ssub.s32 %s28, 1
    %30 = vst [vmem:[%s1] sm:%s29] %v27
    %s31 = scalar_lea.vmem [#allocation0], 8
    %v32 = vld [vmem:[%s31] sm:%s25]
    %s33 = sshll.u32 1, 1
    %s34 = ssub.s32 %s33, 1
    %s35 = scalar_lea.vmem %s1, 1
    %36 = vst [vmem:[%s35] sm:%s34] %v32
    %s37 = scalar_lea.vmem [#allocation0], 16
    %v38 = vld [vmem:[%s37] sm:%s25]
    %s39 = sshll.u32 1, 1
    %s40 = ssub.s32 %s39, 1
    %s41 = smul.addr 1, 2
    %s42 = scalar_lea.vmem %s1, %s41
    %43 = vst [vmem:[%s42] sm:%s40] %v38
    %s44 = scalar_lea.vmem [#allocation0], 24
    %v45 = vld [vmem:[%s44] sm:%s25]
    %s46 = sshll.u32 1, 1
    %s47 = ssub.s32 %s46, 1
    %s48 = smul.addr 1, 3
    %s49 = scalar_lea.vmem %s1, %s48
    %50 = vst [vmem:[%s49] sm:%s47] %v45

// kernel: squeeze.11
$region0: #{squeeze.11}
  %s0 = inlined_call_operand.vmem [shape: bf16[1,2,512], index: 0, kind: input, shape index: {}]
  %s1 = inlined_call_operand.vmem [shape: bf16[2,4,4,32], index: 1, kind: output, shape index: {}]
  $region1: #{squeeze.11} parent=0
    #allocation0 [shape = 'u8[32768]{0}', space=vmem, size = 0x8000, scoped, tag = 'scoped mem for output reshape']
    #allocation1 [shape = 'u8[16384]{0}', space=vmem, size = 0x4000, scoped, tag = 'scoped mem for input reshape']
    %s3 = smul.u32 1, 2
    %s4 = sshll.u32 1, %s3
    %s5 = ssub.s32 %s4, 1
    %s6 = smul.addr 1, 3
    %s7 = scalar_lea.vmem %s0, %s6
    %s8 = sshrl.u32 %s5, 1
    %s9 = sor.u32 %s5, %s8
    %s10 = sand.u32 %s9, 85
    %s11 = sshrl.u32 %s10, 1
    %s12 = sor.u32 %s10, %s11
    %s13 = sand.u32 51, %s12
    %s14 = sshrl.u32 %s13, 2
    %s15 = sor.u32 %s13, %s14
    %s16 = sand.u32 15, %s15
    %v17 = vld [vmem:[%s7] sm:%s16]
    %v18 = vunpack.c.l.bf16 %v17
    %v19 = vunpack.c.h.bf16 %v17
    %s20 = scalar_lea.vmem [#allocation1], 24
    %21 = vst [vmem:[%s20] sm:%s5] %v18
    %s22 = smul.addr 1, 2
    %s23 = scalar_lea.vmem %s0, %s22
    %s24 = sshrl.u32 %s5, 1
    %s25 = sor.u32 %s5, %s24
    %s26 = sand.u32 %s25, 85
    %s27 = sshrl.u32 %s26, 1
    %s28 = sor.u32 %s26, %s27
    %s29 = sand.u32 51, %s28
    %s30 = sshrl.u32 %s29, 2
    %s31 = sor.u32 %s29, %s30
    %s32 = sand.u32 15, %s31
    %v33 = vld [vmem:[%s23] sm:%s32]
    %v34 = vunpack.c.l.bf16 %v33
    %v35 = vunpack.c.h.bf16 %v33
    %s36 = scalar_lea.vmem [#allocation1], 16
    %37 = vst [vmem:[%s36] sm:%s5] %v34
    %s38 = scalar_lea.vmem %s0, 1
    %s39 = sshrl.u32 %s5, 1
    %s40 = sor.u32 %s5, %s39
    %s41 = sand.u32 %s40, 85
    %s42 = sshrl.u32 %s41, 1
    %s43 = sor.u32 %s41, %s42
    %s44 = sand.u32 51, %s43
    %s45 = sshrl.u32 %s44, 2
    %s46 = sor.u32 %s44, %s45
    %s47 = sand.u32 15, %s46
    %v48 = vld [vmem:[%s38] sm:%s47]
    %v49 = vunpack.c.l.bf16 %v48
    %v50 = vunpack.c.h.bf16 %v48
    %s51 = scalar_lea.vmem [#allocation1], 8
    %52 = vst [vmem:[%s51] sm:%s5] %v49
    %s53 = sshrl.u32 %s5, 1
    %s54 = sor.u32 %s5, %s53
    %s55 = sand.u32 %s54, 85
    %s56 = sshrl.u32 %s55, 1
    %s57 = sor.u32 %s55, %s56
    %s58 = sand.u32 51, %s57
    %s59 = sshrl.u32 %s58, 2
    %s60 = sor.u32 %s58, %s59
    %s61 = sand.u32 15, %s60
    %v62 = vld [vmem:[%s0] sm:%s61]
    %v63 = vunpack.c.l.bf16 %v62
    %v64 = vunpack.c.h.bf16 %v62
    %65 = vst [vmem:[#allocation1] sm:%s5] %v63
    %v66 = vld [vmem:[#allocation1] sm:$0x3]
    %vm67 = vcmask 261120
    %68 = vst.msk [vmem:[#allocation0] sm:$0x1] %vm67, %v66
    %s69 = scalar_lea.vmem [#allocation0], 31
    %70 = vst.msk [vmem:[%s69] sm:$0x2] %vm67, %v66
    %s71 = scalar_lea.vmem [#allocation1], 8
    %v72 = vld [vmem:[%s71] sm:$0x3]
    %vm73 = vcmask 261120
    %s74 = scalar_lea.vmem [#allocation0], 8
    %75 = vst.msk [vmem:[%s74] sm:$0x1] %vm73, %v72
    %s76 = scalar_lea.vmem [#allocation0], 39
    %77 = vst.msk [vmem:[%s76] sm:$0x2] %vm73, %v72
    %s78 = scalar_lea.vmem [#allocation1], 16
    %v79 = vld [vmem:[%s78] sm:$0x3]
    %vm80 = vcmask 261120
    %s81 = scalar_lea.vmem [#allocation0], 16
    %82 = vst.msk [vmem:[%s81] sm:$0x1] %vm80, %v79
    %s83 = scalar_lea.vmem [#allocation0], 47
    %84 = vst.msk [vmem:[%s83] sm:$0x2] %vm80, %v79
    %s85 = scalar_lea.vmem [#allocation1], 24
    %v86 = vld [vmem:[%s85] sm:$0x3]
    %vm87 = vcmask 261120
    %s88 = scalar_lea.vmem [#allocation0], 24
    %89 = vst.msk [vmem:[%s88] sm:$0x1] %vm87, %v86
    %s90 = scalar_lea.vmem [#allocation0], 55
    %91 = vst.msk [vmem:[%s90] sm:$0x2] %vm87, %v86
    %v92 = vld [vmem:[#allocation1] ss:$8 sm:$0xf]
    %s93 = scalar_lea.vmem [#allocation1], 4294967265
    %v94 = vld [vmem:[%s93] ss:$8 sm:$0xf0]
    %vm95 = vcmask 1047556
    %v96 = vsel %vm95, %v94, %v92
    %97 = vrot.lane.b32.xlu0 %v96, 96
    %v98 = vpop.permute.xlu0 %97
    %vm99 = vcmask 261120
    %s100 = scalar_lea.vmem [#allocation0], 1
    %101 = vst.msk [vmem:[%s100] ss:$8 sm:$0xf] %vm99, %v98
    %s102 = scalar_lea.vmem [#allocation0], 1
    %103 = vst.msk [vmem:[%s102] ss:$8 sm:$0xf0] %vm99, %v98
    %v104 = vld [vmem:[#allocation1] ss:$8 sm:$0xf]
    %s105 = scalar_lea.vmem [#allocation1], 4294967265
    %v106 = vld [vmem:[%s105] ss:$8 sm:$0xf0]
    %vm107 = vcmask 1047556
    %v108 = vsel %vm107, %v106, %v104
    %109 = vrot.lane.b32.xlu0 %v108, 64
    %v110 = vpop.permute.xlu0 %109
    %vm111 = vcmask 261120
    %s112 = scalar_lea.vmem [#allocation0], 2
    %113 = vst.msk [vmem:[%s112] ss:$8 sm:$0xf] %vm111, %v110
    %s114 = scalar_lea.vmem [#allocation0], 2
    %115 = vst.msk [vmem:[%s114] ss:$8 sm:$0xf0] %vm111, %v110
    %v116 = vld [vmem:[#allocation1] ss:$8 sm:$0xf]
    %s117 = scalar_lea.vmem [#allocation1], 4294967265
    %v118 = vld [vmem:[%s117] ss:$8 sm:$0xf0]
    %vm119 = vcmask 1047556
    %v120 = vsel %vm119, %v118, %v116
    %121 = vrot.lane.b32.xlu0 %v120, 32
    %v122 = vpop.permute.xlu0 %121
    %vm123 = vcmask 261120
    %s124 = scalar_lea.vmem [#allocation0], 3
    %125 = vst.msk [vmem:[%s124] ss:$8 sm:$0xf] %vm123, %v122
    %s126 = scalar_lea.vmem [#allocation0], 3
    %127 = vst.msk [vmem:[%s126] ss:$8 sm:$0xf0] %vm123, %v122
    %s129 = smul.u32 2, 2
    %s130 = sshll.u32 1, %s129
    %s131 = ssub.s32 %s130, 1
    %s132 = sshrl.u32 %s129, 1
    %v133 = vld [vmem:[#allocation0] sm:%s131]
    %v134 = vpack.c.bf16 0.0, %v133
    %s135 = sshll.u32 1, %s132
    %s136 = ssub.s32 %s135, 1
    %137 = vst [vmem:[%s1] sm:%s136] %v134
    %s138 = scalar_lea.vmem [#allocation0], 8
    %v139 = vld [vmem:[%s138] sm:%s131]
    %v140 = vpack.c.bf16 0.0, %v139
    %s141 = sshll.u32 1, %s132
    %s142 = ssub.s32 %s141, 1
    %s143 = scalar_lea.vmem %s1, 2
    %144 = vst [vmem:[%s143] sm:%s142] %v140
    %s145 = scalar_lea.vmem [#allocation0], 16
    %v146 = vld [vmem:[%s145] sm:%s131]
    %v147 = vpack.c.bf16 0.0, %v146
    %s148 = sshll.u32 1, %s132
    %s149 = ssub.s32 %s148, 1
    %s150 = smul.addr 2, 2
    %s151 = scalar_lea.vmem %s1, %s150
    %152 = vst [vmem:[%s151] sm:%s149] %v147
    %s153 = scalar_lea.vmem [#allocation0], 24
    %v154 = vld [vmem:[%s153] sm:%s131]
    %v155 = vpack.c.bf16 0.0, %v154
    %s156 = sshll.u32 1, %s132
    %s157 = ssub.s32 %s156, 1
    %s158 = smul.addr 2, 3
    %s159 = scalar_lea.vmem %s1, %s158
    %160 = vst [vmem:[%s159] sm:%s157] %v155
    %s161 = scalar_lea.vmem [#allocation0], 32
    %v162 = vld [vmem:[%s161] sm:%s131]
    %v163 = vpack.c.bf16 0.0, %v162
    %s164 = sshll.u32 1, %s132
    %s165 = ssub.s32 %s164, 1
    %s166 = smul.addr 2, 4
    %s167 = scalar_lea.vmem %s1, %s166
    %168 = vst [vmem:[%s167] sm:%s165] %v163
    %s169 = scalar_lea.vmem [#allocation0], 40
    %v170 = vld [vmem:[%s169] sm:%s131]
    %v171 = vpack.c.bf16 0.0, %v170
    %s172 = sshll.u32 1, %s132
    %s173 = ssub.s32 %s172, 1
    %s174 = smul.addr 2, 5
    %s175 = scalar_lea.vmem %s1, %s174
    %176 = vst [vmem:[%s175] sm:%s173] %v171
    %s177 = scalar_lea.vmem [#allocation0], 48
    %v178 = vld [vmem:[%s177] sm:%s131]
    %v179 = vpack.c.bf16 0.0, %v178
    %s180 = sshll.u32 1, %s132
    %s181 = ssub.s32 %s180, 1
    %s182 = smul.addr 2, 6
    %s183 = scalar_lea.vmem %s1, %s182
    %184 = vst [vmem:[%s183] sm:%s181] %v179
    %s185 = scalar_lea.vmem [#allocation0], 56
    %v186 = vld [vmem:[%s185] sm:%s131]
    %v187 = vpack.c.bf16 0.0, %v186
    %s188 = sshll.u32 1, %s132
    %s189 = ssub.s32 %s188, 1
    %s190 = smul.addr 2, 7
    %s191 = scalar_lea.vmem %s1, %s190
    %192 = vst [vmem:[%s191] sm:%s189] %v187

// kernel: _lambda_.9
$region0: #{_lambda_.9}
  #allocation0 [shape = 'u32[]', space=smem, size = 0x4, offset = 0x4, fixed_abs, tag = 'smem constant byte address 0x4 - core index']
  #allocation1 [shape = 'u32[144,128]{1,0:T(1,128)}', space=vmem, size = 0x12000, scoped, tag = 'internal scratch']
  %s0 = inlined_call_operand.vmem [shape: bf16[1,8,8], index: 0, kind: input, shape index: {}]
  %s1 = inlined_call_operand.hbm [shape: bf16[1,8,512], index: 1, kind: input, shape index: {}]
  %s2 = inlined_call_operand.vmem [shape: bf16[1,8,512], index: 2, kind: output, shape index: {0}]
  %s3 = inlined_call_operand.vmem [shape: f32[1,512], index: 3, kind: output, shape index: {1}]
  %s4 = inlined_call_operand.vmem [shape: f32[1,512], index: 4, kind: output, shape index: {2}]
  %5 = xla_tuple %s2, %s3, %s4
  %s6 = sld [smem:[#allocation0]]
  $region42: #{_lambda_.9} parent=0
    _
  %s8 = ssub.s32 1, %s6
  %s9 = scalar_select 0, %s8, %s6
  $region1: #{_lambda_.9} parent=0
    #allocation2 [shape = 'u8[8192]{0}', space=vmem, size = 0x2000, scoped, tag = 'input window, operand 1, single buffered']
    #allocation3 [shape = 's32[1]{0}', space=sflag, size = 0x4, scoped, tag = 'scoped memory for _lambda_.9']
    %10 = vsyncpa [#allocation3], 0
    // Predicated region
    $region2: #{_lambda_.9} parent=1 // pred_check
      _
    $region3: #{_lambda_.9} parent=1 // pred_check_branch
      %12 = sbr.rel (0) target = $region5
    $region4: #{_lambda_.9} parent=1 // pred_region
      _
    $region5: #{_lambda_.9} parent=1 // pred_fallthru
      _
    // Predicated region
    $region6: #{_lambda_.9} parent=1 // pred_check
      _
    $region7: #{_lambda_.9} parent=1 // pred_check_branch
      %14 = sbr.rel (0) target = $region9
    $region8: #{_lambda_.9} parent=1 // pred_region
      %s16 = ssub.s32 256, 256
      %17 = vsyncadd [#allocation3], %s16
      %s19 = sshll.u32 [#allocation2], 4
      %s20 = int_to_ptr.vmem [resolvable:$true] %s19
      %22 = dma.hbm_to_vmem [thread:$0]  %s1, 256, %s20, [#allocation3]
    $region9: #{_lambda_.9} parent=1 // pred_fallthru
      _
    // Predicated region
    $region10: #{_lambda_.9} parent=1 // pred_check
      _
    $region11: #{_lambda_.9} parent=1 // pred_check_branch
      %24 = sbr.rel (0) target = $region13
    $region12: #{_lambda_.9} parent=1 // pred_region
      %25 = dma.done [#allocation3], 256
    $region13: #{_lambda_.9} parent=1 // pred_fallthru
      _
    %p27 = scmp.eq.s32.totalorder 0, 0
    %p28 = scmp.eq.s32.totalorder 0, 0
    %p29 = pnand %p27, %p28
    %p30 = pneg %p29
    // Predicated region
    $region14: #{_lambda_.9} parent=1 // pred_check
      _
    $region15: #{_lambda_.9} parent=1 // pred_check_branch
      %32 = sbr.rel (%p29) target = $region17
    $region16: #{_lambda_.9} parent=1 // pred_region
      %v33 = vlaneseq
      %vm34 = vcmp.ge.s32.totalorder %v33, 0
      %vm35 = vcmp.lt.s32.totalorder %v33, 512
      %vm36 = vmand %vm34, %vm35
      %37 = vst.msk [vmem:[%s3] sm:$0xf] %vm36, 0.0
      %38 = vst.msk [vmem:[%s4] sm:$0xf] %vm36, 0.0
    $region17: #{_lambda_.9} parent=1 // pred_fallthru
      _
    %v39 = vld [vmem:[%s0] sm:$0xf]
    %v40 = vld [vmem:[#allocation2] sm:$0xff]
    %v41 = vld [vmem:[#allocation2 + $0x8] sm:$0xff]
    %v44 = vunpack.c.l.b16 %v40
    %v45 = vunpack.c.h.b16 %v40
    %v46 = vunpack.c.l.b16 %v41
    %v47 = vunpack.c.h.b16 %v41
    %v48 = vpack.c.b16 %v44, %v44
    %v49 = vpack.c.b16 %v45, %v45
    %v50 = vpack.c.b16 %v46, %v46
    %v51 = vpack.c.b16 %v47, %v47
    %vm52 = vcmask 64512
    %v54 = vsel %vm52, %v39, 0
    %vm56 = vcmask 1043456
    %v58 = vsel %vm56, %v48, 0
    %v61 = vsel %vm56, %v49, 0
    %v64 = vsel %vm56, %v50, 0
    %v67 = vsel %vm56, %v51, 0
    %69 = vmatprep.subr.bf16.mxu0 0
    %70 = vmatpush1.bf16.msra.mxu0 0
    %71 = vmatprep.subr.bf16.mxu0 0
    %72 = vmatpush1.bf16.msra.mxu0 0
    %73 = vmatprep.subr.bf16.mxu0 0
    %74 = vmatpush1.bf16.msra.mxu0 0
    %75 = vmatprep.subr.bf16.mxu0 0
    %76 = vmatpush1.bf16.msra.mxu0 0
    %77 = vmatprep.subr.bf16.mxu0 0
    %78 = vmatpush1.bf16.msra.mxu0 0
    %79 = vmatprep.subr.bf16.mxu0 0
    %80 = vmatpush1.bf16.msra.mxu0 0
    %81 = vmatprep.subr.bf16.mxu0 0
    %82 = vmatpush1.bf16.msra.mxu0 0
    %83 = vmatprep.subr.bf16.mxu0 %v61
    %84 = vmatpush1.bf16.msra.mxu0 %v58
    %85 = vmatprep.subr.bf16.mxu0 0
    %86 = vmatpush2.bf16.msra.mxu0 0
    %87 = vmatprep.subr.bf16.mxu0 0
    %88 = vmatpush2.bf16.msra.mxu0 0
    %89 = vmatprep.subr.bf16.mxu0 0
    %90 = vmatpush2.bf16.msra.mxu0 0
    %91 = vmatprep.subr.bf16.mxu0 0
    %92 = vmatpush2.bf16.msra.mxu0 0
    %93 = vmatprep.subr.bf16.mxu0 0
    %94 = vmatpush2.bf16.msra.mxu0 0
    %95 = vmatprep.subr.bf16.mxu0 0
    %96 = vmatpush2.bf16.msra.mxu0 0
    %97 = vmatprep.subr.bf16.mxu0 0
    %98 = vmatpush2.bf16.msra.mxu0 0
    %99 = vmatprep.subr.bf16.mxu0 0
    %100 = vmatpush2.bf16.msra.mxu0 0
    %101 = vmatprep.mubr.bf16.mxu0 0
    %102 = vmatmul.mubr.bf16.gmra.mxu0 %v54
    %v103 = vpop.f32.mrf.mxu0
    %v104 = vadd.f32 0.0, %v103
    %v105 = vpop.f32.mrf.mxu0
    %v106 = vadd.f32 0.0, %v105
    %v107 = vpop.f32.mrf.mxu0
    %v108 = vpop.f32.mrf.mxu0
    %109 = vdwg.mxu0
    %110 = vmatprep.subr.bf16.mxu0 0
    %111 = vmatpush1.bf16.msra.mxu0 0
    %112 = vmatprep.subr.bf16.mxu0 0
    %113 = vmatpush1.bf16.msra.mxu0 0
    %114 = vmatprep.subr.bf16.mxu0 0
    %115 = vmatpush1.bf16.msra.mxu0 0
    %116 = vmatprep.subr.bf16.mxu0 0
    %117 = vmatpush1.bf16.msra.mxu0 0
    %118 = vmatprep.subr.bf16.mxu0 0
    %119 = vmatpush1.bf16.msra.mxu0 0
    %120 = vmatprep.subr.bf16.mxu0 0
    %121 = vmatpush1.bf16.msra.mxu0 0
    %122 = vmatprep.subr.bf16.mxu0 0
    %123 = vmatpush1.bf16.msra.mxu0 0
    %124 = vmatprep.subr.bf16.mxu0 %v67
    %125 = vmatpush1.bf16.msra.mxu0 %v64
    %126 = vmatprep.subr.bf16.mxu0 0
    %127 = vmatpush2.bf16.msra.mxu0 0
    %128 = vmatprep.subr.bf16.mxu0 0
    %129 = vmatpush2.bf16.msra.mxu0 0
    %130 = vmatprep.subr.bf16.mxu0 0
    %131 = vmatpush2.bf16.msra.mxu0 0
    %132 = vmatprep.subr.bf16.mxu0 0
    %133 = vmatpush2.bf16.msra.mxu0 0
    %134 = vmatprep.subr.bf16.mxu0 0
    %135 = vmatpush2.bf16.msra.mxu0 0
    %136 = vmatprep.subr.bf16.mxu0 0
    %137 = vmatpush2.bf16.msra.mxu0 0
    %138 = vmatprep.subr.bf16.mxu0 0
    %139 = vmatpush2.bf16.msra.mxu0 0
    %140 = vmatprep.subr.bf16.mxu0 0
    %141 = vmatpush2.bf16.msra.mxu0 0
    %142 = vmatprep.mubr.bf16.mxu0 0
    %143 = vmatmul.mubr.bf16.gmra.mxu0 %v54
    %v144 = vpop.f32.mrf.mxu0
    %v145 = vadd.f32 0.0, %v144
    %v146 = vpop.f32.mrf.mxu0
    %v147 = vadd.f32 0.0, %v146
    %v148 = vpop.f32.mrf.mxu0
    %v149 = vpop.f32.mrf.mxu0
    %150 = vdwg.mxu0
    %v151 = vpack.c.bf16 %v104, %v104
    %v152 = vpack.c.bf16 %v106, %v106
    %v153 = vpack.c.bf16 %v145, %v145
    %v154 = vpack.c.bf16 %v147, %v147
    %v159 = vunpack.c.l.b16 %v151
    %v160 = vunpack.c.l.b16 %v152
    %v161 = vunpack.c.l.b16 %v153
    %v162 = vunpack.c.l.b16 %v154
    %v163 = vpack.c.b16 %v160, %v159
    %v164 = vpack.c.b16 %v162, %v161
    %167 = vst [vmem:[%s2] sm:$0xff] %v163
    %168 = vst [vmem:[%s2 + $0x8] sm:$0xff] %v164
    %v169 = vld [vmem:[%s3] sm:$0xf]
    %v170 = vrot.slane %v104, 4
    %v171 = vadd.f32 %v104, %v170
    %v172 = vrot.slane %v171, 2
    %v173 = vadd.f32 %v171, %v172
    %v174 = vrot.slane %v173, 1
    %v175 = vadd.f32 %v173, %v174
    %v176 = vrot.slane %v106, 4
    %v177 = vadd.f32 %v106, %v176
    %v178 = vrot.slane %v177, 2
    %v179 = vadd.f32 %v177, %v178
    %v180 = vrot.slane %v179, 1
    %v181 = vadd.f32 %v179, %v180
    %v182 = vrot.slane %v145, 4
    %v183 = vadd.f32 %v145, %v182
    %v184 = vrot.slane %v183, 2
    %v185 = vadd.f32 %v183, %v184
    %v186 = vrot.slane %v185, 1
    %v187 = vadd.f32 %v185, %v186
    %v188 = vrot.slane %v147, 4
    %v189 = vadd.f32 %v147, %v188
    %v190 = vrot.slane %v189, 2
    %v191 = vadd.f32 %v189, %v190
    %v192 = vrot.slane %v191, 1
    %v193 = vadd.f32 %v191, %v192
    %v198 = vcombine.low %v175, %v181
    %v199 = vcombine.low %v187, %v193
    %v201 = vunpack.c.l.s4 1966171168
    %v202 = vunpack.c.0.s8 %v201
    %v203 = vlaneseq
    %v204 = vshrl.u32 %v203, 7
    %v205 = vsub.s32 %v202, %v204
    %v206 = vrot.slane %v198, %v205
    %v208 = vunpack.c.l.s4 1966171168
    %v209 = vunpack.c.0.s8 %v208
    %v210 = vlaneseq
    %v211 = vshrl.u32 %v210, 7
    %v212 = vsub.s32 %v209, %v211
    %v213 = vrot.slane %v199, %v212
    %v214 = vcombine.low %v206, %v213
    %v216 = vunpack.c.l.s4 1966171168
    %v217 = vunpack.c.0.s8 %v216
    %v218 = vlaneseq
    %v219 = vshrl.u32 %v218, 7
    %v220 = vsub.s32 %v217, %v219
    %v221 = vrot.slane %v214, %v220
    %v223 = vadd.f32 %v169, %v221
    %v224 = vlaneseq
    %vm225 = vcmp.ge.s32.totalorder %v224, 0
    %vm226 = vcmp.lt.s32.totalorder %v224, 512
    %vm227 = vmand %vm225, %vm226
    %228 = vst.msk [vmem:[%s3] sm:$0xf] %vm227, %v223
    %v229 = vld [vmem:[%s4] sm:$0xf]
    %v230 = vmul.f32 %v104, %v104
    %v231 = vmul.f32 %v106, %v106
    %v232 = vmul.f32 %v145, %v145
    %v233 = vmul.f32 %v147, %v147
    %v234 = vrot.slane %v230, 4
    %v235 = vadd.f32 %v230, %v234
    %v236 = vrot.slane %v235, 2
    %v237 = vadd.f32 %v235, %v236
    %v238 = vrot.slane %v237, 1
    %v239 = vadd.f32 %v237, %v238
    %v240 = vrot.slane %v231, 4
    %v241 = vadd.f32 %v231, %v240
    %v242 = vrot.slane %v241, 2
    %v243 = vadd.f32 %v241, %v242
    %v244 = vrot.slane %v243, 1
    %v245 = vadd.f32 %v243, %v244
    %v246 = vrot.slane %v232, 4
    %v247 = vadd.f32 %v232, %v246
    %v248 = vrot.slane %v247, 2
    %v249 = vadd.f32 %v247, %v248
    %v250 = vrot.slane %v249, 1
    %v251 = vadd.f32 %v249, %v250
    %v252 = vrot.slane %v233, 4
    %v253 = vadd.f32 %v233, %v252
    %v254 = vrot.slane %v253, 2
    %v255 = vadd.f32 %v253, %v254
    %v256 = vrot.slane %v255, 1
    %v257 = vadd.f32 %v255, %v256
    %v262 = vcombine.low %v239, %v245
    %v263 = vcombine.low %v251, %v257
    %v265 = vunpack.c.l.s4 1966171168
    %v266 = vunpack.c.0.s8 %v265
    %v267 = vlaneseq
    %v268 = vshrl.u32 %v267, 7
    %v269 = vsub.s32 %v266, %v268
    %v270 = vrot.slane %v262, %v269
    %v272 = vunpack.c.l.s4 1966171168
    %v273 = vunpack.c.0.s8 %v272
    %v274 = vlaneseq
    %v275 = vshrl.u32 %v274, 7
    %v276 = vsub.s32 %v273, %v275
    %v277 = vrot.slane %v263, %v276
    %v278 = vcombine.low %v270, %v277
    %v280 = vunpack.c.l.s4 1966171168
    %v281 = vunpack.c.0.s8 %v280
    %v282 = vlaneseq
    %v283 = vshrl.u32 %v282, 7
    %v284 = vsub.s32 %v281, %v283
    %v285 = vrot.slane %v278, %v284
    %v287 = vadd.f32 %v229, %v285
    %288 = vst.msk [vmem:[%s4] sm:$0xf] %vm227, %v287
    // Predicated region
    $region18: #{_lambda_.9} parent=1 // pred_check
      _
    $region19: #{_lambda_.9} parent=1 // pred_check_branch
      %290 = sbr.rel (0) target = $region21
    $region20: #{_lambda_.9} parent=1 // pred_region
      _
    $region21: #{_lambda_.9} parent=1 // pred_fallthru
      _
    // Predicated region
    $region22: #{_lambda_.9} parent=1 // pred_check
      _
    $region23: #{_lambda_.9} parent=1 // pred_check_branch
      %292 = sbr.rel (0) target = $region25
    $region24: #{_lambda_.9} parent=1 // pred_region
      _
    $region25: #{_lambda_.9} parent=1 // pred_fallthru
      _
    // Predicated region
    $region26: #{_lambda_.9} parent=1 // pred_check
      _
    $region27: #{_lambda_.9} parent=1 // pred_check_branch
      %294 = sbr.rel (0) target = $region29
    $region28: #{_lambda_.9} parent=1 // pred_region
      _
    $region29: #{_lambda_.9} parent=1 // pred_fallthru
      _
    // Predicated region
    $region30: #{_lambda_.9} parent=1 // pred_check
      _
    $region31: #{_lambda_.9} parent=1 // pred_check_branch
      %296 = sbr.rel (0) target = $region33
    $region32: #{_lambda_.9} parent=1 // pred_region
      _
    $region33: #{_lambda_.9} parent=1 // pred_fallthru
      _
    // Predicated region
    $region34: #{_lambda_.9} parent=1 // pred_check
      _
    $region35: #{_lambda_.9} parent=1 // pred_check_branch
      %298 = sbr.rel (0) target = $region37
    $region36: #{_lambda_.9} parent=1 // pred_region
      _
    $region37: #{_lambda_.9} parent=1 // pred_fallthru
      _
    // Predicated region
    $region38: #{_lambda_.9} parent=1 // pred_check
      _
    $region39: #{_lambda_.9} parent=1 // pred_check_branch
      %300 = sbr.rel (0) target = $region41
    $region40: #{_lambda_.9} parent=1 // pred_region
      _
    $region41: #{_lambda_.9} parent=1 // pred_fallthru
      _
    %301 = vsyncpa [#allocation3], 1

// kernel: _lambda_.10
$region0: #{_lambda_.10}
  #allocation0 [shape = 'u32[]', space=smem, size = 0x4, offset = 0x4, fixed_abs, tag = 'smem constant byte address 0x4 - core index']
  #allocation1 [shape = 'u32[144,128]{1,0:T(1,128)}', space=vmem, size = 0x12000, scoped, tag = 'internal scratch']
  %s0 = inlined_call_operand.vmem [shape: bf16[1,8,512], index: 0, kind: input, shape index: {}]
  %s1 = inlined_call_operand.vmem [shape: f32[1,512], index: 1, kind: input, shape index: {}]
  %s2 = inlined_call_operand.vmem [shape: f32[1,512], index: 2, kind: input, shape index: {}]
  %s3 = inlined_call_operand.vmem [shape: bf16[1,8,512], index: 3, kind: output, shape index: {}]
  %s4 = sld [smem:[#allocation0]]
  $region22: #{_lambda_.10} parent=0
    _
  %s6 = ssub.s32 1, %s4
  %s7 = scalar_select 0, %s6, %s4
  // Predicated region
  $region2: #{_lambda_.10} parent=0 // pred_check
    _
  $region3: #{_lambda_.10} parent=0 // pred_check_branch
    %9 = sbr.rel (0) target = $region5
  $region4: #{_lambda_.10} parent=0 // pred_region
    _
  $region5: #{_lambda_.10} parent=0 // pred_fallthru
    _
  // Predicated region
  $region6: #{_lambda_.10} parent=0 // pred_check
    _
  $region7: #{_lambda_.10} parent=0 // pred_check_branch
    %11 = sbr.rel (0) target = $region9
  $region8: #{_lambda_.10} parent=0 // pred_region
    _
  $region9: #{_lambda_.10} parent=0 // pred_fallthru
    _
  // Predicated region
  $region10: #{_lambda_.10} parent=0 // pred_check
    _
  $region11: #{_lambda_.10} parent=0 // pred_check_branch
    %13 = sbr.rel (0) target = $region13
  $region12: #{_lambda_.10} parent=0 // pred_region
    _
  $region13: #{_lambda_.10} parent=0 // pred_fallthru
    _
  %v14 = vld [vmem:[%s0] sm:$0xff]
  %v15 = vld [vmem:[%s0 + $0x8] sm:$0xff]
  %v16 = vunpack.c.l.bf16 %v14
  %v17 = vunpack.c.h.bf16 %v14
  %v18 = vunpack.c.l.bf16 %v15
  %v19 = vunpack.c.h.bf16 %v15
  %v20 = vld [vmem:[%s1] sm:$0xf]
  %v22 = vlaneseq
  %v23 = vshrl.u32 %v22, 7
  %v24 = vsub.s32 0, %v23
  %v25 = vrot.slane %v20, %v24
  %v26 = vlaneseq
  %v27 = vshrl.u32 %v26, 7
  %v28 = vsub.s32 1, %v27
  %v29 = vrot.slane %v20, %v28
  %v30 = vlaneseq
  %v31 = vshrl.u32 %v30, 7
  %v32 = vsub.s32 2, %v31
  %v33 = vrot.slane %v20, %v32
  %v34 = vlaneseq
  %v35 = vshrl.u32 %v34, 7
  %v36 = vsub.s32 3, %v35
  %v37 = vrot.slane %v20, %v36
  %v42 = vmul.f32 %v16, %v25
  %v43 = vmul.f32 %v17, %v29
  %v44 = vmul.f32 %v18, %v33
  %v45 = vmul.f32 %v19, %v37
  %v46 = vld [vmem:[%s2] sm:$0xf]
  %v48 = vlaneseq
  %v49 = vshrl.u32 %v48, 7
  %v50 = vsub.s32 0, %v49
  %v51 = vrot.slane %v46, %v50
  %v52 = vlaneseq
  %v53 = vshrl.u32 %v52, 7
  %v54 = vsub.s32 1, %v53
  %v55 = vrot.slane %v46, %v54
  %v56 = vlaneseq
  %v57 = vshrl.u32 %v56, 7
  %v58 = vsub.s32 2, %v57
  %v59 = vrot.slane %v46, %v58
  %v60 = vlaneseq
  %v61 = vshrl.u32 %v60, 7
  %v62 = vsub.s32 3, %v61
  %v63 = vrot.slane %v46, %v62
  %v68 = vadd.f32 %v42, %v51
  %v69 = vadd.f32 %v43, %v55
  %v70 = vadd.f32 %v44, %v59
  %v71 = vadd.f32 %v45, %v63
  %v72 = vmax.f32 %v68, 0.0
  %v73 = vmax.f32 %v69, 0.0
  %v74 = vmax.f32 %v70, 0.0
  %v75 = vmax.f32 %v71, 0.0
  %v76 = vpack.c.bf16 %v72, %v72
  %v77 = vpack.c.bf16 %v73, %v73
  %v78 = vpack.c.bf16 %v74, %v74
  %v79 = vpack.c.bf16 %v75, %v75
  %v84 = vunpack.c.l.b16 %v76
  %v85 = vunpack.c.l.b16 %v77
  %v86 = vunpack.c.l.b16 %v78
  %v87 = vunpack.c.l.b16 %v79
  %v88 = vpack.c.b16 %v85, %v84
  %v89 = vpack.c.b16 %v87, %v86
  %92 = vst [vmem:[%s3] sm:$0xff] %v88
  %93 = vst [vmem:[%s3 + $0x8] sm:$0xff] %v89
  // Predicated region
  $region14: #{_lambda_.10} parent=0 // pred_check
    _
  $region15: #{_lambda_.10} parent=0 // pred_check_branch
    %95 = sbr.rel (0) target = $region17
  $region16: #{_lambda_.10} parent=0 // pred_region
    _
  $region17: #{_lambda_.10} parent=0 // pred_fallthru
    _
  // Predicated region
  $region18: #{_lambda_.10} parent=0 // pred_check
    _
  $region19: #{_lambda_.10} parent=0 // pred_check_branch
    %97 = sbr.rel (0) target = $region21
  $region20: #{_lambda_.10} parent=0 // pred_region
    _
  $region21: #{_lambda_.10} parent=0 // pred_fallthru
    _

// kernel: _lambda_.12
$region0: #{_lambda_.12}
  #allocation0 [shape = 'u32[]', space=smem, size = 0x4, offset = 0x4, fixed_abs, tag = 'smem constant byte address 0x4 - core index']
  #allocation1 [shape = 'u32[144,128]{1,0:T(1,128)}', space=vmem, size = 0x12000, scoped, tag = 'internal scratch']
  %s0 = inlined_call_operand.vmem [shape: bf16[4,32,16], index: 0, kind: input, shape index: {}]
  %s1 = inlined_call_operand.vmem [shape: f32[1,16], index: 1, kind: input, shape index: {}]
  %s2 = inlined_call_operand.vmem [shape: f32[1,16], index: 2, kind: input, shape index: {}]
  %s3 = inlined_call_operand.vmem [shape: bf16[4,32,16], index: 3, kind: output, shape index: {}]
  %s4 = sld [smem:[#allocation0]]
  $region45: #{_lambda_.12} parent=0
    _
  %s6 = ssub.s32 1, %s4
  %s7 = scalar_select 0, %s6, %s4
  loop: start=0, step=1, limit=6
  $region2: #{_lambda_.12} parent=0 // loop_pre_header
    _
  $region3: #{_lambda_.12} parent=0 // loop_header
    %s9 = sphi 0, %s13
    %p10 = scmp.ge.s32.totalorder %s9, 6
    %s16 = sphi 0, %s28
    %s17 = sphi 0, %s24
    %s18 = sphi 0, %s16
    %s19 = sphi 0, %s17
    %s20 = sphi 0, %s18
    %s21 = sphi 0, %s19
    %s33 = sphi 0, %s35
    %s36 = sphi 0, %s33
    %s37 = sphi 0, %s36
    %s53 = sphi 0, %s37
    %s57 = sphi 0, %s57
    %s59 = sphi 0, %s57
    %s60 = sphi 0, %s59
    %s74 = sphi 0, %s60
    %s78 = sphi 0, %s78
    %s80 = sphi 0, %s78
    %s81 = sphi 0, %s80
    %s95 = sphi 0, %s81
    %s103 = sphi 0, %s105
    %s106 = sphi 0, %s103
    %s107 = sphi 0, %s106
    %s123 = sphi 0, %s107
  $region4: #{_lambda_.12} parent=0 // loop_header_branch
    %12 = sbr.rel (%p10) target = $region8
  $region5: #{_lambda_.12} parent=0 // loop_body
    %s14 = ssub.s32 %s9, 1
    %s15 = ssub.s32 %s9, 2
    %s22 = sadd.s32 1, %s17
    %p23 = scmp.ge.s32.totalorder %s22, 1
    %s24 = scalar_select %p23, 0, %s22
    %s25 = sadd.s32 1, %s16
    %s26 = scalar_select %p23, %s25, %s16
    %p27 = scmp.ge.s32.totalorder %s26, 4
    %s28 = scalar_select %p27, 0, %s26
    %s29 = ssub.s32 %s16, %s28
    %s30 = ssub.s32 %s17, %s24
    %s31 = sor.u32 %s29, %s30
    %p32 = scmp.eq.s32.totalorder %s31, 0
    %s34 = sadd.s32 %s33, 1
    %s35 = scalar_select %p32, %s33, %s34
    %p38 = pneg %p32
    %p39 = scmp.eq.s32.totalorder %s9, 3
    %p40 = por %p38, %p39
    %p41 = scmp.ne.s32.totalorder %s33, %s36
    %p42 = scmp.eq.s32.totalorder %s9, 0
    %p43 = por %p41, %p42
    %p44 = scmp.ne.s32.totalorder %s33, %s36
    %p45 = scmp.eq.s32.totalorder %s14, 3
    %p46 = por %p44, %p45
    %p47 = scmp.ne.s32.totalorder %s36, %s37
    %p48 = scmp.eq.s32.totalorder %s14, 0
    %p49 = por %p47, %p48
    %p50 = scmp.ne.s32.totalorder %s36, %s37
    %p51 = scmp.eq.s32.totalorder %s15, 3
    %p52 = por %p50, %p51
    %p54 = scmp.ne.s32.totalorder %s37, %s53
    %p55 = scmp.eq.s32.totalorder %s15, 0
    %p56 = por %p54, %p55
    %s58 = sadd.s32 %s57, 1
    %p61 = scmp.eq.s32.totalorder %s9, 3
    %p62 = scmp.ne.s32.totalorder %s57, %s59
    %p63 = scmp.eq.s32.totalorder %s9, 0
    %p64 = por %p62, %p63
    %p65 = scmp.ne.s32.totalorder %s57, %s59
    %p66 = scmp.eq.s32.totalorder %s14, 3
    %p67 = por %p65, %p66
    %p68 = scmp.ne.s32.totalorder %s59, %s60
    %p69 = scmp.eq.s32.totalorder %s14, 0
    %p70 = por %p68, %p69
    %p71 = scmp.ne.s32.totalorder %s59, %s60
    %p72 = scmp.eq.s32.totalorder %s15, 3
    %p73 = por %p71, %p72
    %p75 = scmp.ne.s32.totalorder %s60, %s74
    %p76 = scmp.eq.s32.totalorder %s15, 0
    %p77 = por %p75, %p76
    %s79 = sadd.s32 %s78, 1
    %p82 = scmp.eq.s32.totalorder %s9, 3
    %p83 = scmp.ne.s32.totalorder %s78, %s80
    %p84 = scmp.eq.s32.totalorder %s9, 0
    %p85 = por %p83, %p84
    %p86 = scmp.ne.s32.totalorder %s78, %s80
    %p87 = scmp.eq.s32.totalorder %s14, 3
    %p88 = por %p86, %p87
    %p89 = scmp.ne.s32.totalorder %s80, %s81
    %p90 = scmp.eq.s32.totalorder %s14, 0
    %p91 = por %p89, %p90
    %p92 = scmp.ne.s32.totalorder %s80, %s81
    %p93 = scmp.eq.s32.totalorder %s15, 3
    %p94 = por %p92, %p93
    %p96 = scmp.ne.s32.totalorder %s81, %s95
    %p97 = scmp.eq.s32.totalorder %s15, 0
    %p98 = por %p96, %p97
    %s99 = ssub.s32 %s16, %s28
    %s100 = ssub.s32 %s17, %s24
    %s101 = sor.u32 %s99, %s100
    %p102 = scmp.eq.s32.totalorder %s101, 0
    %s104 = sadd.s32 %s103, 1
    %s105 = scalar_select %p102, %s103, %s104
    %p108 = pneg %p102
    %p109 = scmp.eq.s32.totalorder %s9, 3
    %p110 = por %p108, %p109
    %p111 = scmp.ne.s32.totalorder %s103, %s106
    %p112 = scmp.eq.s32.totalorder %s9, 0
    %p113 = por %p111, %p112
    %p114 = scmp.ne.s32.totalorder %s103, %s106
    %p115 = scmp.eq.s32.totalorder %s14, 3
    %p116 = por %p114, %p115
    %p117 = scmp.ne.s32.totalorder %s106, %s107
    %p118 = scmp.eq.s32.totalorder %s14, 0
    %p119 = por %p117, %p118
    %p120 = scmp.ne.s32.totalorder %s106, %s107
    %p121 = scmp.eq.s32.totalorder %s15, 3
    %p122 = por %p120, %p121
    %p124 = scmp.ne.s32.totalorder %s107, %s123
    %p125 = scmp.eq.s32.totalorder %s15, 0
    %p126 = por %p124, %p125
    %p127 = scmp.le.s32.totalorder 1, %s9
    %p128 = scmp.lt.s32.totalorder %s9, 5
    %p129 = pnand %p127, %p128
    %p130 = pneg %p129
    // Predicated region
    $region9: #{_lambda_.12} parent=5 // pred_check
      _
    $region10: #{_lambda_.12} parent=5 // pred_check_branch
      %132 = sbr.rel (%p129) target = $region12
    $region11: #{_lambda_.12} parent=5 // pred_region
      %s133 = ssub.s32 %s9, 1
      // Predicated region
      $region13: #{_lambda_.12} parent=11 // pred_check
        %p134 = pneg %p70
      $region14: #{_lambda_.12} parent=11 // pred_check_branch
        %136 = sbr.rel (%p134) target = $region16
      $region15: #{_lambda_.12} parent=11 // pred_region
        _
      $region16: #{_lambda_.12} parent=11 // pred_fallthru
        _
      // Predicated region
      $region17: #{_lambda_.12} parent=11 // pred_check
        %p137 = pneg %p91
      $region18: #{_lambda_.12} parent=11 // pred_check_branch
        %139 = sbr.rel (%p137) target = $region20
      $region19: #{_lambda_.12} parent=11 // pred_region
        _
      $region20: #{_lambda_.12} parent=11 // pred_fallthru
        _
    $region12: #{_lambda_.12} parent=5 // pred_fallthru
      _
    %p140 = scmp.lt.s32.totalorder %s9, 4
    // Predicated region
    $region21: #{_lambda_.12} parent=5 // pred_check
      %p141 = pneg %p140
    $region22: #{_lambda_.12} parent=5 // pred_check_branch
      %143 = sbr.rel (%p141) target = $region24
    $region23: #{_lambda_.12} parent=5 // pred_region
      // Predicated region
      $region25: #{_lambda_.12} parent=23 // pred_check
        %p144 = pneg %p43
      $region26: #{_lambda_.12} parent=23 // pred_check_branch
        %146 = sbr.rel (%p144) target = $region28
      $region27: #{_lambda_.12} parent=23 // pred_region
        %s147 = smul.u32 4, %s17
        %p148 = scmp.lt.s32.totalorder %s16, 3
        %s149 = scalar_select %p148, %s16, 3
        %p150 = scmp.lt.s32.totalorder %s147, 3
        %s151 = scalar_select %p150, %s147, 3
        %s152 = smul.addr %s149, 4
        %s153 = sadd.s32 %s151, %s152
        %s154 = smul.addr %s153, 4
        %s155 = scalar_lea.vmem %s0, %s154
        %s156 = smul.u32 4, %s17
      $region28: #{_lambda_.12} parent=23 // pred_fallthru
        _
    $region24: #{_lambda_.12} parent=5 // pred_fallthru
      _
    %p157 = scmp.le.s32.totalorder 1, %s9
    %p158 = scmp.lt.s32.totalorder %s9, 5
    %p159 = pnand %p157, %p158
    %p160 = pneg %p159
    // Predicated region
    $region29: #{_lambda_.12} parent=5 // pred_check
      _
    $region30: #{_lambda_.12} parent=5 // pred_check_branch
      %162 = sbr.rel (%p159) target = $region32
    $region31: #{_lambda_.12} parent=5 // pred_region
      %s163 = ssub.s32 %s9, 1
      %s164 = smul.u32 4, %s19
      %p165 = scmp.lt.s32.totalorder %s18, 3
      %s166 = scalar_select %p165, %s18, 3
      %p167 = scmp.lt.s32.totalorder %s164, 3
      %s168 = scalar_select %p167, %s164, 3
      %s169 = smul.addr %s166, 4
      %s170 = sadd.s32 %s168, %s169
      %s171 = smul.addr %s170, 4
      %s172 = scalar_lea.vmem %s0, %s171
      %p173 = pneg %p49
      %p174 = pneg %p46
      %p175 = pneg %p70
      %p176 = pneg %p67
      %p177 = pneg %p91
      %p178 = pneg %p88
      %p179 = pneg %p119
      %p180 = pneg %p116
      %s181 = smul.u32 4, %s19
      %p182 = scmp.lt.s32.totalorder %s18, 3
      %s183 = scalar_select %p182, %s18, 3
      %p184 = scmp.lt.s32.totalorder %s181, 3
      %s185 = scalar_select %p184, %s181, 3
      %s186 = smul.addr %s183, 4
      %s187 = sadd.s32 %s185, %s186
      %s188 = smul.addr %s187, 4
      %s189 = scalar_lea.vmem %s3, %s188
      %s190 = smul.u32 4, %s19
      %p191 = scmp.lt.s32.totalorder %s18, 3
      %s192 = scalar_select %p191, %s18, 3
      %p193 = scmp.lt.s32.totalorder %s190, 3
      %s194 = scalar_select %p193, %s190, 3
      %s195 = smul.addr %s192, 4
      %s196 = sadd.s32 %s194, %s195
      %s197 = smul.addr %s196, 4
      %s198 = scalar_lea.vmem %s0, %s197
      %s199 = smul.u32 4, %s19
      %s200 = smul.u32 4, %s19
      %p201 = scmp.lt.s32.totalorder %s18, 3
      %s202 = scalar_select %p201, %s18, 3
      %p203 = scmp.lt.s32.totalorder %s200, 3
      %s204 = scalar_select %p203, %s200, 3
      %s205 = smul.addr %s202, 4
      %s206 = sadd.s32 %s204, %s205
      %s207 = smul.addr %s206, 4
      %s208 = scalar_lea.vmem %s3, %s207
      %s209 = smul.u32 4, %s19
      %v210 = vld [vmem:[%s198] sm:$0xf]
      %v211 = vld [vmem:[%s198 + $0x4] sm:$0xf]
      %v212 = vld [vmem:[%s198 + $0x8] sm:$0xf]
      %v213 = vld [vmem:[%s198 + $0xc] sm:$0xf]
      %v214 = vunpack.c.l.bf16 %v210
      %v215 = vunpack.c.l.bf16 %v211
      %v216 = vunpack.c.l.bf16 %v212
      %v217 = vunpack.c.l.bf16 %v213
      %v218 = vld [vmem:[%s1] sm:$0x1]
      %v220 = vlaneseq
      %v221 = vshrl.u32 %v220, 7
      %v222 = vsub.s32 0, %v221
      %v223 = vrot.slane %v218, %v222
      %v225 = vmul.f32 %v214, %v223
      %v226 = vmul.f32 %v215, %v223
      %v227 = vmul.f32 %v216, %v223
      %v228 = vmul.f32 %v217, %v223
      %v229 = vld [vmem:[%s2] sm:$0x1]
      %v231 = vlaneseq
      %v232 = vshrl.u32 %v231, 7
      %v233 = vsub.s32 0, %v232
      %v234 = vrot.slane %v229, %v233
      %v236 = vadd.f32 %v225, %v234
      %v237 = vadd.f32 %v226, %v234
      %v238 = vadd.f32 %v227, %v234
      %v239 = vadd.f32 %v228, %v234
      %v240 = vmax.f32 %v236, 0.0
      %v241 = vmax.f32 %v237, 0.0
      %v242 = vmax.f32 %v238, 0.0
      %v243 = vmax.f32 %v239, 0.0
      %v244 = vpack.c.bf16 %v241, %v240
      %v245 = vpack.c.bf16 %v243, %v242
      %v248 = vunpack.c.l.b16 %v244
      %v249 = vunpack.c.h.b16 %v244
      %v250 = vunpack.c.l.b16 %v245
      %v251 = vunpack.c.h.b16 %v245
      %v252 = vpack.c.b16 %v248, %v248
      %v253 = vpack.c.b16 %v249, %v249
      %v254 = vpack.c.b16 %v250, %v250
      %v255 = vpack.c.b16 %v251, %v251
      %vm260 = vcmask 125952
      %261 = vst.msk [vmem:[%s208] sm:$0xf] %vm260, %v252
      %262 = vst.msk [vmem:[%s208 + $0x4] sm:$0xf] %vm260, %v253
      %263 = vst.msk [vmem:[%s208 + $0x8] sm:$0xf] %vm260, %v254
      %264 = vst.msk [vmem:[%s208 + $0xc] sm:$0xf] %vm260, %v255
      %s265 = smul.u32 4, %s19
      %p266 = scmp.lt.s32.totalorder %s18, 3
      %s267 = scalar_select %p266, %s18, 3
      %p268 = scmp.lt.s32.totalorder %s265, 3
      %s269 = scalar_select %p268, %s265, 3
      %s270 = smul.addr %s267, 4
      %s271 = sadd.s32 %s269, %s270
      %s272 = smul.addr %s271, 4
      %s273 = scalar_lea.vmem %s3, %s272
      // Predicated region
      $region33: #{_lambda_.12} parent=31 // pred_check
        %p274 = pneg %p116
      $region34: #{_lambda_.12} parent=31 // pred_check_branch
        %276 = sbr.rel (%p274) target = $region36
      $region35: #{_lambda_.12} parent=31 // pred_region
        %s277 = smul.u32 4, %s19
      $region36: #{_lambda_.12} parent=31 // pred_fallthru
        _
    $region32: #{_lambda_.12} parent=5 // pred_fallthru
      _
    %p278 = scmp.le.s32.totalorder 2, %s9
    // Predicated region
    $region37: #{_lambda_.12} parent=5 // pred_check
      %p279 = pneg %p278
    $region38: #{_lambda_.12} parent=5 // pred_check_branch
      %281 = sbr.rel (%p279) target = $region40
    $region39: #{_lambda_.12} parent=5 // pred_region
      %s282 = ssub.s32 %s9, 2
      // Predicated region
      $region41: #{_lambda_.12} parent=39 // pred_check
        %p283 = pneg %p122
      $region42: #{_lambda_.12} parent=39 // pred_check_branch
        %285 = sbr.rel (%p283) target = $region44
      $region43: #{_lambda_.12} parent=39 // pred_region
        %s286 = smul.u32 4, %s21
        %p287 = scmp.lt.s32.totalorder %s20, 3
        %s288 = scalar_select %p287, %s20, 3
        %p289 = scmp.lt.s32.totalorder %s286, 3
        %s290 = scalar_select %p289, %s286, 3
        %s291 = smul.addr %s288, 4
        %s292 = sadd.s32 %s290, %s291
        %s293 = smul.addr %s292, 4
        %s294 = scalar_lea.vmem %s3, %s293
      $region44: #{_lambda_.12} parent=39 // pred_fallthru
        _
    $region40: #{_lambda_.12} parent=5 // pred_fallthru
      _
  $region6: #{_lambda_.12} parent=0 // loop_footer
    %s13 = sadd.s32 1, %s9
  $region7: #{_lambda_.12} parent=0 // loop_footer_branch
    %8 = sbr.rel target = $region3
  $region8: #{_lambda_.12} parent=0 // loop_exit
    _

// kernel: _lambda_.11
$region0: #{_lambda_.11}
  #allocation0 [shape = 'u32[]', space=smem, size = 0x4, offset = 0x4, fixed_abs, tag = 'smem constant byte address 0x4 - core index']
  #allocation1 [shape = 'u32[144,128]{1,0:T(1,128)}', space=vmem, size = 0x12000, scoped, tag = 'internal scratch']
  %s0 = inlined_call_operand.vmem [shape: bf16[4,32,128], index: 0, kind: input, shape index: {}]
  %s1 = inlined_call_operand.hbm [shape: bf16[4,128,16], index: 1, kind: input, shape index: {}]
  %s2 = inlined_call_operand.vmem [shape: bf16[4,32,16], index: 2, kind: output, shape index: {0}]
  %s3 = inlined_call_operand.vmem [shape: f32[1,16], index: 3, kind: output, shape index: {1}]
  %s4 = inlined_call_operand.vmem [shape: f32[1,16], index: 4, kind: output, shape index: {2}]
  %5 = xla_tuple %s2, %s3, %s4
  %s6 = sld [smem:[#allocation0]]
  $region65: #{_lambda_.11} parent=0
    _
  %s8 = ssub.s32 1, %s6
  %s9 = scalar_select 0, %s8, %s6
  $region1: #{_lambda_.11} parent=0
    #allocation2 [shape = 'u8[65536]{0}', space=vmem, size = 0x10000, scoped, tag = 'input window, operand 1']
    #allocation3 [shape = 's32[2]{0}', space=sflag, size = 0x8, scoped, tag = 'scoped memory for _lambda_.11']
    %10 = vsyncpa [#allocation3], 0
    %s11 = scalar_lea.sflag [#allocation3], 1
    %12 = vsyncpa %s11, 0
    loop: start=0, step=1, limit=6
    $region2: #{_lambda_.11} parent=1 // loop_pre_header
      _
    $region3: #{_lambda_.11} parent=1 // loop_header
      %s14 = sphi 0, %s18
      %p15 = scmp.ge.s32.totalorder %s14, 6
      %s21 = sphi 0, %s33
      %s22 = sphi 0, %s29
      %s23 = sphi 0, %s21
      %s24 = sphi 0, %s22
      %s25 = sphi 0, %s23
      %s26 = sphi 0, %s24
      %s38 = sphi 0, %s40
      %s41 = sphi 0, %s38
      %s42 = sphi 0, %s41
      %s58 = sphi 0, %s42
      %s64 = sphi 0, %s66
      %s67 = sphi 0, %s64
      %s68 = sphi 0, %s67
      %s84 = sphi 0, %s68
      %s92 = sphi 0, %s94
      %s95 = sphi 0, %s92
      %s96 = sphi 0, %s95
      %s112 = sphi 0, %s96
      %s116 = sphi 0, %s116
      %s118 = sphi 0, %s116
      %s119 = sphi 0, %s118
      %s133 = sphi 0, %s119
      %s137 = sphi 0, %s137
      %s139 = sphi 0, %s137
      %s140 = sphi 0, %s139
      %s154 = sphi 0, %s140
    $region4: #{_lambda_.11} parent=1 // loop_header_branch
      %17 = sbr.rel (%p15) target = $region8
    $region5: #{_lambda_.11} parent=1 // loop_body
      %s19 = ssub.s32 %s14, 1
      %s20 = ssub.s32 %s14, 2
      %s27 = sadd.s32 1, %s22
      %p28 = scmp.ge.s32.totalorder %s27, 1
      %s29 = scalar_select %p28, 0, %s27
      %s30 = sadd.s32 1, %s21
      %s31 = scalar_select %p28, %s30, %s21
      %p32 = scmp.ge.s32.totalorder %s31, 4
      %s33 = scalar_select %p32, 0, %s31
      %s34 = ssub.s32 %s21, %s33
      %s35 = ssub.s32 %s22, %s29
      %s36 = sor.u32 %s34, %s35
      %p37 = scmp.eq.s32.totalorder %s36, 0
      %s39 = sadd.s32 %s38, 1
      %s40 = scalar_select %p37, %s38, %s39
      %p43 = pneg %p37
      %p44 = scmp.eq.s32.totalorder %s14, 3
      %p45 = por %p43, %p44
      %p46 = scmp.ne.s32.totalorder %s38, %s41
      %p47 = scmp.eq.s32.totalorder %s14, 0
      %p48 = por %p46, %p47
      %p49 = scmp.ne.s32.totalorder %s38, %s41
      %p50 = scmp.eq.s32.totalorder %s19, 3
      %p51 = por %p49, %p50
      %p52 = scmp.ne.s32.totalorder %s41, %s42
      %p53 = scmp.eq.s32.totalorder %s19, 0
      %p54 = por %p52, %p53
      %p55 = scmp.ne.s32.totalorder %s41, %s42
      %p56 = scmp.eq.s32.totalorder %s20, 3
      %p57 = por %p55, %p56
      %p59 = scmp.ne.s32.totalorder %s42, %s58
      %p60 = scmp.eq.s32.totalorder %s20, 0
      %p61 = por %p59, %p60
      %s62 = ssub.s32 %s21, %s33
      %p63 = scmp.eq.s32.totalorder %s62, 0
      %s65 = sadd.s32 %s64, 1
      %s66 = scalar_select %p63, %s64, %s65
      %p69 = pneg %p63
      %p70 = scmp.eq.s32.totalorder %s14, 3
      %p71 = por %p69, %p70
      %p72 = scmp.ne.s32.totalorder %s64, %s67
      %p73 = scmp.eq.s32.totalorder %s14, 0
      %p74 = por %p72, %p73
      %p75 = scmp.ne.s32.totalorder %s64, %s67
      %p76 = scmp.eq.s32.totalorder %s19, 3
      %p77 = por %p75, %p76
      %p78 = scmp.ne.s32.totalorder %s67, %s68
      %p79 = scmp.eq.s32.totalorder %s19, 0
      %p80 = por %p78, %p79
      %p81 = scmp.ne.s32.totalorder %s67, %s68
      %p82 = scmp.eq.s32.totalorder %s20, 3
      %p83 = por %p81, %p82
      %p85 = scmp.ne.s32.totalorder %s68, %s84
      %p86 = scmp.eq.s32.totalorder %s20, 0
      %p87 = por %p85, %p86
      %s88 = ssub.s32 %s21, %s33
      %s89 = ssub.s32 %s22, %s29
      %s90 = sor.u32 %s88, %s89
      %p91 = scmp.eq.s32.totalorder %s90, 0
      %s93 = sadd.s32 %s92, 1
      %s94 = scalar_select %p91, %s92, %s93
      %p97 = pneg %p91
      %p98 = scmp.eq.s32.totalorder %s14, 3
      %p99 = por %p97, %p98
      %p100 = scmp.ne.s32.totalorder %s92, %s95
      %p101 = scmp.eq.s32.totalorder %s14, 0
      %p102 = por %p100, %p101
      %p103 = scmp.ne.s32.totalorder %s92, %s95
      %p104 = scmp.eq.s32.totalorder %s19, 3
      %p105 = por %p103, %p104
      %p106 = scmp.ne.s32.totalorder %s95, %s96
      %p107 = scmp.eq.s32.totalorder %s19, 0
      %p108 = por %p106, %p107
      %p109 = scmp.ne.s32.totalorder %s95, %s96
      %p110 = scmp.eq.s32.totalorder %s20, 3
      %p111 = por %p109, %p110
      %p113 = scmp.ne.s32.totalorder %s96, %s112
      %p114 = scmp.eq.s32.totalorder %s20, 0
      %p115 = por %p113, %p114
      %s117 = sadd.s32 %s116, 1
      %p120 = scmp.eq.s32.totalorder %s14, 3
      %p121 = scmp.ne.s32.totalorder %s116, %s118
      %p122 = scmp.eq.s32.totalorder %s14, 0
      %p123 = por %p121, %p122
      %p124 = scmp.ne.s32.totalorder %s116, %s118
      %p125 = scmp.eq.s32.totalorder %s19, 3
      %p126 = por %p124, %p125
      %p127 = scmp.ne.s32.totalorder %s118, %s119
      %p128 = scmp.eq.s32.totalorder %s19, 0
      %p129 = por %p127, %p128
      %p130 = scmp.ne.s32.totalorder %s118, %s119
      %p131 = scmp.eq.s32.totalorder %s20, 3
      %p132 = por %p130, %p131
      %p134 = scmp.ne.s32.totalorder %s119, %s133
      %p135 = scmp.eq.s32.totalorder %s20, 0
      %p136 = por %p134, %p135
      %s138 = sadd.s32 %s137, 1
      %p141 = scmp.eq.s32.totalorder %s14, 3
      %p142 = scmp.ne.s32.totalorder %s137, %s139
      %p143 = scmp.eq.s32.totalorder %s14, 0
      %p144 = por %p142, %p143
      %p145 = scmp.ne.s32.totalorder %s137, %s139
      %p146 = scmp.eq.s32.totalorder %s19, 3
      %p147 = por %p145, %p146
      %p148 = scmp.ne.s32.totalorder %s139, %s140
      %p149 = scmp.eq.s32.totalorder %s19, 0
      %p150 = por %p148, %p149
      %p151 = scmp.ne.s32.totalorder %s139, %s140
      %p152 = scmp.eq.s32.totalorder %s20, 3
      %p153 = por %p151, %p152
      %p155 = scmp.ne.s32.totalorder %s140, %s154
      %p156 = scmp.eq.s32.totalorder %s20, 0
      %p157 = por %p155, %p156
      %p158 = scmp.le.s32.totalorder 1, %s14
      %p159 = scmp.lt.s32.totalorder %s14, 5
      %p160 = pnand %p158, %p159
      %p161 = pneg %p160
      // Predicated region
      $region9: #{_lambda_.11} parent=5 // pred_check
        _
      $region10: #{_lambda_.11} parent=5 // pred_check_branch
        %163 = sbr.rel (%p160) target = $region12
      $region11: #{_lambda_.11} parent=5 // pred_region
        %s164 = ssub.s32 %s14, 1
      $region12: #{_lambda_.11} parent=5 // pred_fallthru
        _
      %p165 = scmp.lt.s32.totalorder %s14, 4
      // Predicated region
      $region13: #{_lambda_.11} parent=5 // pred_check
        %p166 = pneg %p165
      $region14: #{_lambda_.11} parent=5 // pred_check_branch
        %168 = sbr.rel (%p166) target = $region16
      $region15: #{_lambda_.11} parent=5 // pred_region
        // Predicated region
        $region17: #{_lambda_.11} parent=15 // pred_check
          %p169 = pneg %p48
        $region18: #{_lambda_.11} parent=15 // pred_check_branch
          %171 = sbr.rel (%p169) target = $region20
        $region19: #{_lambda_.11} parent=15 // pred_region
          %s172 = smul.u32 4, %s22
          %p173 = scmp.lt.s32.totalorder %s21, 3
          %s174 = scalar_select %p173, %s21, 3
          %p175 = scmp.lt.s32.totalorder %s172, 3
          %s176 = scalar_select %p175, %s172, 3
          %s177 = smul.addr %s174, 4
          %s178 = sadd.s32 %s176, %s177
          %s179 = smul.addr %s178, 4
          %s180 = scalar_lea.vmem %s0, %s179
          %s181 = smul.u32 4, %s22
        $region20: #{_lambda_.11} parent=15 // pred_fallthru
          _
        // Predicated region
        $region21: #{_lambda_.11} parent=15 // pred_check
          %p182 = pneg %p74
        $region22: #{_lambda_.11} parent=15 // pred_check_branch
          %184 = sbr.rel (%p182) target = $region24
        $region23: #{_lambda_.11} parent=15 // pred_region
          %s185 = sand.u32 %s64, 1
          %s186 = scalar_lea.sflag [#allocation3], %s185
          %s187 = sand.u32 %s64, 1
          %s188 = smul.addr %s187, 64
          %s189 = scalar_lea.vmem [#allocation2], %s188
          %s191 = ssub.s32 1024, 1024
          %192 = vsyncadd %s186, %s191
          %s193 = smul.addr %s21, 16
          %s194 = smul.addr %s193, 64
          %s195 = scalar_lea.hbm %s1, %s194
          %s196 = sshll.u32 %s189, 4
          %s197 = int_to_ptr.vmem [resolvable:$true] %s196
          %202 = dma.hbm_to_vmem [thread:$0]  %s195, 1024, %s197, %s186, 64, 64, 4
        $region24: #{_lambda_.11} parent=15 // pred_fallthru
          _
      $region16: #{_lambda_.11} parent=5 // pred_fallthru
        _
      %p203 = scmp.le.s32.totalorder 1, %s14
      %p204 = scmp.lt.s32.totalorder %s14, 5
      %p205 = pnand %p203, %p204
      %p206 = pneg %p205
      // Predicated region
      $region25: #{_lambda_.11} parent=5 // pred_check
        _
      $region26: #{_lambda_.11} parent=5 // pred_check_branch
        %208 = sbr.rel (%p205) target = $region28
      $region27: #{_lambda_.11} parent=5 // pred_region
        %s209 = ssub.s32 %s14, 1
        %s210 = sand.u32 %s67, 1
        %s211 = scalar_lea.sflag [#allocation3], %s210
        %s212 = sand.u32 %s67, 1
        %s213 = smul.addr %s212, 64
        %s214 = scalar_lea.vmem [#allocation2], %s213
        // Predicated region
        $region29: #{_lambda_.11} parent=27 // pred_check
          %p215 = pneg %p80
        $region30: #{_lambda_.11} parent=27 // pred_check_branch
          %217 = sbr.rel (%p215) target = $region32
        $region31: #{_lambda_.11} parent=27 // pred_region
          %218 = dma.done %s211, 1024
        $region32: #{_lambda_.11} parent=27 // pred_fallthru
          _
        %s219 = smul.u32 4, %s24
        %p220 = scmp.lt.s32.totalorder %s23, 3
        %s221 = scalar_select %p220, %s23, 3
        %p222 = scmp.lt.s32.totalorder %s219, 3
        %s223 = scalar_select %p222, %s219, 3
        %s224 = smul.addr %s221, 4
        %s225 = sadd.s32 %s223, %s224
        %s226 = smul.addr %s225, 4
        %s227 = scalar_lea.vmem %s0, %s226
        %p228 = pneg %p54
        %p229 = pneg %p51
        %s230 = sand.u32 %s67, 1
        %s231 = scalar_lea.sflag [#allocation3], %s230
        %s232 = sand.u32 %s67, 1
        %s233 = smul.addr %s232, 64
        %s234 = scalar_lea.vmem [#allocation2], %s233
        %p235 = pneg %p80
        %p236 = pneg %p77
        %p237 = pneg %p108
        %p238 = pneg %p105
        %s239 = smul.u32 4, %s24
        %p240 = scmp.lt.s32.totalorder %s23, 3
        %s241 = scalar_select %p240, %s23, 3
        %p242 = scmp.lt.s32.totalorder %s239, 3
        %s243 = scalar_select %p242, %s239, 3
        %s244 = smul.addr %s241, 4
        %s245 = sadd.s32 %s243, %s244
        %s246 = smul.addr %s245, 4
        %s247 = scalar_lea.vmem %s2, %s246
        %p248 = pneg %p129
        %p249 = pneg %p126
        %p250 = pneg %p150
        %p251 = pneg %p147
        %s252 = smul.u32 4, %s24
        %p253 = scmp.lt.s32.totalorder %s23, 3
        %s254 = scalar_select %p253, %s23, 3
        %p255 = scmp.lt.s32.totalorder %s252, 3
        %s256 = scalar_select %p255, %s252, 3
        %s257 = smul.addr %s254, 4
        %s258 = sadd.s32 %s256, %s257
        %s259 = smul.addr %s258, 4
        %s260 = scalar_lea.vmem %s0, %s259
        %s261 = smul.u32 4, %s24
        %s262 = smul.u32 4, %s24
        %p263 = scmp.lt.s32.totalorder %s23, 3
        %s264 = scalar_select %p263, %s23, 3
        %p265 = scmp.lt.s32.totalorder %s262, 3
        %s266 = scalar_select %p265, %s262, 3
        %s267 = smul.addr %s264, 4
        %s268 = sadd.s32 %s266, %s267
        %s269 = smul.addr %s268, 4
        %s270 = scalar_lea.vmem %s2, %s269
        %s271 = smul.u32 4, %s24
        %p273 = scmp.eq.s32.totalorder %s23, 0
        %p274 = scmp.eq.s32.totalorder %s24, 0
        %p275 = pnand %p273, %p274
        %p276 = pneg %p275
        // Predicated region
        $region33: #{_lambda_.11} parent=27 // pred_check
          _
        $region34: #{_lambda_.11} parent=27 // pred_check_branch
          %278 = sbr.rel (%p275) target = $region36
        $region35: #{_lambda_.11} parent=27 // pred_region
          %vm279 = vcmask 122880
          %280 = vst.msk [vmem:[%s3] sm:$0x1] %vm279, 0.0
          %281 = vst.msk [vmem:[%s4] sm:$0x1] %vm279, 0.0
        $region36: #{_lambda_.11} parent=27 // pred_fallthru
          _
        %v282 = vld [vmem:[%s260] sm:$0xf]
        %v283 = vld [vmem:[%s260 + $0x4] sm:$0xf]
        %v284 = vld [vmem:[%s260 + $0x8] sm:$0xf]
        %v285 = vld [vmem:[%s260 + $0xc] sm:$0xf]
        %v286 = vld [vmem:[%s214] sm:$0xf]
        %v287 = vld [vmem:[%s214 + $0x4] sm:$0xf]
        %v288 = vld [vmem:[%s214 + $0x8] sm:$0xf]
        %v289 = vld [vmem:[%s214 + $0xc] sm:$0xf]
        %v290 = vld [vmem:[%s214 + $0x10] sm:$0xf]
        %v291 = vld [vmem:[%s214 + $0x14] sm:$0xf]
        %v292 = vld [vmem:[%s214 + $0x18] sm:$0xf]
        %v293 = vld [vmem:[%s214 + $0x1c] sm:$0xf]
        %v294 = vld [vmem:[%s214 + $0x20] sm:$0xf]
        %v295 = vld [vmem:[%s214 + $0x24] sm:$0xf]
        %v296 = vld [vmem:[%s214 + $0x28] sm:$0xf]
        %v297 = vld [vmem:[%s214 + $0x2c] sm:$0xf]
        %v298 = vld [vmem:[%s214 + $0x30] sm:$0xf]
        %v299 = vld [vmem:[%s214 + $0x34] sm:$0xf]
        %v300 = vld [vmem:[%s214 + $0x38] sm:$0xf]
        %v301 = vld [vmem:[%s214 + $0x3c] sm:$0xf]
        %v306 = vunpack.c.l.b16 %v282
        %v307 = vunpack.c.l.b16 %v283
        %v308 = vunpack.c.l.b16 %v284
        %v309 = vunpack.c.l.b16 %v285
        %v310 = vpack.c.b16 %v307, %v306
        %v311 = vpack.c.b16 %v309, %v308
        %v330 = vunpack.c.l.b16 %v286
        %v331 = vunpack.c.l.b16 %v287
        %v332 = vunpack.c.l.b16 %v288
        %v333 = vunpack.c.l.b16 %v289
        %v334 = vunpack.c.l.b16 %v290
        %v335 = vunpack.c.l.b16 %v291
        %v336 = vunpack.c.l.b16 %v292
        %v337 = vunpack.c.l.b16 %v293
        %v338 = vunpack.c.l.b16 %v294
        %v339 = vunpack.c.l.b16 %v295
        %v340 = vunpack.c.l.b16 %v296
        %v341 = vunpack.c.l.b16 %v297
        %v342 = vunpack.c.l.b16 %v298
        %v343 = vunpack.c.l.b16 %v299
        %v344 = vunpack.c.l.b16 %v300
        %v345 = vunpack.c.l.b16 %v301
        %v346 = vpack.c.b16 %v331, %v330
        %v347 = vpack.c.b16 %v333, %v332
        %v348 = vpack.c.b16 %v335, %v334
        %v349 = vpack.c.b16 %v337, %v336
        %v350 = vpack.c.b16 %v339, %v338
        %v351 = vpack.c.b16 %v341, %v340
        %v352 = vpack.c.b16 %v343, %v342
        %v353 = vpack.c.b16 %v345, %v344
        %362 = vmatprep.subr.bf16.mxu0 0
        %363 = vmatpush1.bf16.msra.mxu0 %v353
        %364 = vmatprep.subr.bf16.mxu0 0
        %365 = vmatpush1.bf16.msra.mxu0 %v352
        %366 = vmatprep.subr.bf16.mxu0 0
        %367 = vmatpush1.bf16.msra.mxu0 %v351
        %368 = vmatprep.subr.bf16.mxu0 0
        %369 = vmatpush1.bf16.msra.mxu0 %v350
        %370 = vmatprep.subr.bf16.mxu0 0
        %371 = vmatpush1.bf16.msra.mxu0 %v349
        %372 = vmatprep.subr.bf16.mxu0 0
        %373 = vmatpush1.bf16.msra.mxu0 %v348
        %374 = vmatprep.subr.bf16.mxu0 0
        %375 = vmatpush1.bf16.msra.mxu0 %v347
        %376 = vmatprep.subr.bf16.mxu0 0
        %377 = vmatpush1.bf16.msra.mxu0 %v346
        %378 = vmatprep.subr.bf16.mxu0 0
        %379 = vmatpush2.bf16.msra.mxu0 0
        %380 = vmatprep.subr.bf16.mxu0 0
        %381 = vmatpush2.bf16.msra.mxu0 0
        %382 = vmatprep.subr.bf16.mxu0 0
        %383 = vmatpush2.bf16.msra.mxu0 0
        %384 = vmatprep.subr.bf16.mxu0 0
        %385 = vmatpush2.bf16.msra.mxu0 0
        %386 = vmatprep.subr.bf16.mxu0 0
        %387 = vmatpush2.bf16.msra.mxu0 0
        %388 = vmatprep.subr.bf16.mxu0 0
        %389 = vmatpush2.bf16.msra.mxu0 0
        %390 = vmatprep.subr.bf16.mxu0 0
        %391 = vmatpush2.bf16.msra.mxu0 0
        %392 = vmatprep.subr.bf16.mxu0 0
        %393 = vmatpush2.bf16.msra.mxu0 0
        %394 = vmatprep.mubr.bf16.mxu0 0
        %395 = vmatmul.mubr.bf16.gmra.mxu0 %v310
        %v396 = vpop.f32.mrf.mxu0
        %v397 = vadd.f32 0.0, %v396
        %v398 = vpop.f32.mrf.mxu0
        %v399 = vpop.f32.mrf.mxu0
        %v400 = vadd.f32 0.0, %v399
        %v401 = vpop.f32.mrf.mxu0
        %402 = vmatprep.mubr.bf16.mxu0 0
        %403 = vmatmul.mubr.bf16.gmra.mxu0 %v311
        %v404 = vpop.f32.mrf.mxu0
        %v405 = vadd.f32 0.0, %v404
        %v406 = vpop.f32.mrf.mxu0
        %v407 = vpop.f32.mrf.mxu0
        %v408 = vadd.f32 0.0, %v407
        %v409 = vpop.f32.mrf.mxu0
        %410 = vdwg.mxu0
        %v411 = vpack.c.bf16 %v400, %v397
        %v412 = vpack.c.bf16 %v408, %v405
        %v415 = vunpack.c.l.b16 %v411
        %v416 = vunpack.c.h.b16 %v411
        %v417 = vunpack.c.l.b16 %v412
        %v418 = vunpack.c.h.b16 %v412
        %v419 = vpack.c.b16 %v415, %v415
        %v420 = vpack.c.b16 %v416, %v416
        %v421 = vpack.c.b16 %v417, %v417
        %v422 = vpack.c.b16 %v418, %v418
        %vm427 = vcmask 125952
        %428 = vst.msk [vmem:[%s270] sm:$0xf] %vm427, %v419
        %429 = vst.msk [vmem:[%s270 + $0x4] sm:$0xf] %vm427, %v420
        %430 = vst.msk [vmem:[%s270 + $0x8] sm:$0xf] %vm427, %v421
        %431 = vst.msk [vmem:[%s270 + $0xc] sm:$0xf] %vm427, %v422
        %v432 = vld [vmem:[%s3] sm:$0x1]
        %vm433 = vcmask 130048
        %v434 = vsel %vm433, %v397, 0.0
        %v435 = vsel %vm433, %v400, 0.0
        %v436 = vadd.f32 %v434, %v435
        %v437 = vsel %vm433, %v405, 0.0
        %v438 = vadd.f32 %v436, %v437
        %v439 = vsel %vm433, %v408, 0.0
        %v440 = vadd.f32 %v438, %v439
        %v441 = vrot.slane %v440, 4
        %v442 = vadd.f32 %v440, %v441
        %v443 = vrot.slane %v442, 2
        %v444 = vadd.f32 %v442, %v443
        %v445 = vrot.slane %v444, 1
        %v446 = vadd.f32 %v444, %v445
        %v447 = vadd.f32 %v432, %v446
        %vm448 = vcmask 122880
        %449 = vst.msk [vmem:[%s3] sm:$0x1] %vm448, %v447
        %v450 = vld [vmem:[%s4] sm:$0x1]
        %v451 = vmul.f32 %v397, %v397
        %v452 = vmul.f32 %v400, %v400
        %v453 = vmul.f32 %v405, %v405
        %v454 = vmul.f32 %v408, %v408
        %v455 = vsel %vm433, %v451, 0.0
        %v456 = vsel %vm433, %v452, 0.0
        %v457 = vadd.f32 %v455, %v456
        %v458 = vsel %vm433, %v453, 0.0
        %v459 = vadd.f32 %v457, %v458
        %v460 = vsel %vm433, %v454, 0.0
        %v461 = vadd.f32 %v459, %v460
        %v462 = vrot.slane %v461, 4
        %v463 = vadd.f32 %v461, %v462
        %v464 = vrot.slane %v463, 2
        %v465 = vadd.f32 %v463, %v464
        %v466 = vrot.slane %v465, 1
        %v467 = vadd.f32 %v465, %v466
        %v468 = vadd.f32 %v450, %v467
        %469 = vst.msk [vmem:[%s4] sm:$0x1] %vm448, %v468
        %s470 = smul.u32 4, %s24
        %p471 = scmp.lt.s32.totalorder %s23, 3
        %s472 = scalar_select %p471, %s23, 3
        %p473 = scmp.lt.s32.totalorder %s470, 3
        %s474 = scalar_select %p473, %s470, 3
        %s475 = smul.addr %s472, 4
        %s476 = sadd.s32 %s474, %s475
        %s477 = smul.addr %s476, 4
        %s478 = scalar_lea.vmem %s2, %s477
        // Predicated region
        $region37: #{_lambda_.11} parent=27 // pred_check
          %p479 = pneg %p105
        $region38: #{_lambda_.11} parent=27 // pred_check_branch
          %481 = sbr.rel (%p479) target = $region40
        $region39: #{_lambda_.11} parent=27 // pred_region
          %s482 = smul.u32 4, %s24
        $region40: #{_lambda_.11} parent=27 // pred_fallthru
          _
        // Predicated region
        $region41: #{_lambda_.11} parent=27 // pred_check
          %p483 = pneg %p126
        $region42: #{_lambda_.11} parent=27 // pred_check_branch
          %485 = sbr.rel (%p483) target = $region44
        $region43: #{_lambda_.11} parent=27 // pred_region
          _
        $region44: #{_lambda_.11} parent=27 // pred_fallthru
          _
        // Predicated region
        $region45: #{_lambda_.11} parent=27 // pred_check
          %p486 = pneg %p147
        $region46: #{_lambda_.11} parent=27 // pred_check_branch
          %488 = sbr.rel (%p486) target = $region48
        $region47: #{_lambda_.11} parent=27 // pred_region
          _
        $region48: #{_lambda_.11} parent=27 // pred_fallthru
          _
        // Predicated region
        $region49: #{_lambda_.11} parent=27 // pred_check
          %p489 = pneg %p126
        $region50: #{_lambda_.11} parent=27 // pred_check_branch
          %491 = sbr.rel (%p489) target = $region52
        $region51: #{_lambda_.11} parent=27 // pred_region
          _
        $region52: #{_lambda_.11} parent=27 // pred_fallthru
          _
        // Predicated region
        $region53: #{_lambda_.11} parent=27 // pred_check
          %p492 = pneg %p147
        $region54: #{_lambda_.11} parent=27 // pred_check_branch
          %494 = sbr.rel (%p492) target = $region56
        $region55: #{_lambda_.11} parent=27 // pred_region
          _
        $region56: #{_lambda_.11} parent=27 // pred_fallthru
          _
      $region28: #{_lambda_.11} parent=5 // pred_fallthru
        _
      %p495 = scmp.le.s32.totalorder 2, %s14
      // Predicated region
      $region57: #{_lambda_.11} parent=5 // pred_check
        %p496 = pneg %p495
      $region58: #{_lambda_.11} parent=5 // pred_check_branch
        %498 = sbr.rel (%p496) target = $region60
      $region59: #{_lambda_.11} parent=5 // pred_region
        %s499 = ssub.s32 %s14, 2
        // Predicated region
        $region61: #{_lambda_.11} parent=59 // pred_check
          %p500 = pneg %p111
        $region62: #{_lambda_.11} parent=59 // pred_check_branch
          %502 = sbr.rel (%p500) target = $region64
        $region63: #{_lambda_.11} parent=59 // pred_region
          %s503 = smul.u32 4, %s26
          %p504 = scmp.lt.s32.totalorder %s25, 3
          %s505 = scalar_select %p504, %s25, 3
          %p506 = scmp.lt.s32.totalorder %s503, 3
          %s507 = scalar_select %p506, %s503, 3
          %s508 = smul.addr %s505, 4
          %s509 = sadd.s32 %s507, %s508
          %s510 = smul.addr %s509, 4
          %s511 = scalar_lea.vmem %s2, %s510
        $region64: #{_lambda_.11} parent=59 // pred_fallthru
          _
      $region60: #{_lambda_.11} parent=5 // pred_fallthru
        _
    $region6: #{_lambda_.11} parent=1 // loop_footer
      %s18 = sadd.s32 1, %s14
    $region7: #{_lambda_.11} parent=1 // loop_footer_branch
      %13 = sbr.rel target = $region3
    $region8: #{_lambda_.11} parent=1 // loop_exit
      _
    %512 = vsyncpa [#allocation3], 1
    %s513 = scalar_lea.sflag [#allocation3], 1
    %514 = vsyncpa %s513, 1

// kernel: _lambda_.14
$region0: #{_lambda_.14}
  #allocation0 [shape = 'u32[]', space=smem, size = 0x4, offset = 0x4, fixed_abs, tag = 'smem constant byte address 0x4 - core index']
  #allocation1 [shape = 'u32[144,128]{1,0:T(1,128)}', space=vmem, size = 0x12000, scoped, tag = 'internal scratch']
  %s0 = inlined_call_operand.vmem [shape: bf16[4,128,8], index: 0, kind: input, shape index: {}]
  %s1 = inlined_call_operand.vmem [shape: f32[1,8], index: 1, kind: input, shape index: {}]
  %s2 = inlined_call_operand.vmem [shape: f32[1,8], index: 2, kind: input, shape index: {}]
  %s3 = inlined_call_operand.vmem [shape: bf16[4,128,8], index: 3, kind: output, shape index: {}]
  %s4 = sld [smem:[#allocation0]]
  $region45: #{_lambda_.14} parent=0
    _
  %s6 = ssub.s32 1, %s4
  %s7 = scalar_select 0, %s6, %s4
  loop: start=0, step=1, limit=6
  $region2: #{_lambda_.14} parent=0 // loop_pre_header
    _
  $region3: #{_lambda_.14} parent=0 // loop_header
    %s9 = sphi 0, %s13
    %p10 = scmp.ge.s32.totalorder %s9, 6
    %s16 = sphi 0, %s28
    %s17 = sphi 0, %s24
    %s18 = sphi 0, %s16
    %s19 = sphi 0, %s17
    %s20 = sphi 0, %s18
    %s21 = sphi 0, %s19
    %s33 = sphi 0, %s35
    %s36 = sphi 0, %s33
    %s37 = sphi 0, %s36
    %s53 = sphi 0, %s37
    %s57 = sphi 0, %s57
    %s59 = sphi 0, %s57
    %s60 = sphi 0, %s59
    %s74 = sphi 0, %s60
    %s78 = sphi 0, %s78
    %s80 = sphi 0, %s78
    %s81 = sphi 0, %s80
    %s95 = sphi 0, %s81
    %s103 = sphi 0, %s105
    %s106 = sphi 0, %s103
    %s107 = sphi 0, %s106
    %s123 = sphi 0, %s107
  $region4: #{_lambda_.14} parent=0 // loop_header_branch
    %12 = sbr.rel (%p10) target = $region8
  $region5: #{_lambda_.14} parent=0 // loop_body
    %s14 = ssub.s32 %s9, 1
    %s15 = ssub.s32 %s9, 2
    %s22 = sadd.s32 1, %s17
    %p23 = scmp.ge.s32.totalorder %s22, 1
    %s24 = scalar_select %p23, 0, %s22
    %s25 = sadd.s32 1, %s16
    %s26 = scalar_select %p23, %s25, %s16
    %p27 = scmp.ge.s32.totalorder %s26, 4
    %s28 = scalar_select %p27, 0, %s26
    %s29 = ssub.s32 %s16, %s28
    %s30 = ssub.s32 %s17, %s24
    %s31 = sor.u32 %s29, %s30
    %p32 = scmp.eq.s32.totalorder %s31, 0
    %s34 = sadd.s32 %s33, 1
    %s35 = scalar_select %p32, %s33, %s34
    %p38 = pneg %p32
    %p39 = scmp.eq.s32.totalorder %s9, 3
    %p40 = por %p38, %p39
    %p41 = scmp.ne.s32.totalorder %s33, %s36
    %p42 = scmp.eq.s32.totalorder %s9, 0
    %p43 = por %p41, %p42
    %p44 = scmp.ne.s32.totalorder %s33, %s36
    %p45 = scmp.eq.s32.totalorder %s14, 3
    %p46 = por %p44, %p45
    %p47 = scmp.ne.s32.totalorder %s36, %s37
    %p48 = scmp.eq.s32.totalorder %s14, 0
    %p49 = por %p47, %p48
    %p50 = scmp.ne.s32.totalorder %s36, %s37
    %p51 = scmp.eq.s32.totalorder %s15, 3
    %p52 = por %p50, %p51
    %p54 = scmp.ne.s32.totalorder %s37, %s53
    %p55 = scmp.eq.s32.totalorder %s15, 0
    %p56 = por %p54, %p55
    %s58 = sadd.s32 %s57, 1
    %p61 = scmp.eq.s32.totalorder %s9, 3
    %p62 = scmp.ne.s32.totalorder %s57, %s59
    %p63 = scmp.eq.s32.totalorder %s9, 0
    %p64 = por %p62, %p63
    %p65 = scmp.ne.s32.totalorder %s57, %s59
    %p66 = scmp.eq.s32.totalorder %s14, 3
    %p67 = por %p65, %p66
    %p68 = scmp.ne.s32.totalorder %s59, %s60
    %p69 = scmp.eq.s32.totalorder %s14, 0
    %p70 = por %p68, %p69
    %p71 = scmp.ne.s32.totalorder %s59, %s60
    %p72 = scmp.eq.s32.totalorder %s15, 3
    %p73 = por %p71, %p72
    %p75 = scmp.ne.s32.totalorder %s60, %s74
    %p76 = scmp.eq.s32.totalorder %s15, 0
    %p77 = por %p75, %p76
    %s79 = sadd.s32 %s78, 1
    %p82 = scmp.eq.s32.totalorder %s9, 3
    %p83 = scmp.ne.s32.totalorder %s78, %s80
    %p84 = scmp.eq.s32.totalorder %s9, 0
    %p85 = por %p83, %p84
    %p86 = scmp.ne.s32.totalorder %s78, %s80
    %p87 = scmp.eq.s32.totalorder %s14, 3
    %p88 = por %p86, %p87
    %p89 = scmp.ne.s32.totalorder %s80, %s81
    %p90 = scmp.eq.s32.totalorder %s14, 0
    %p91 = por %p89, %p90
    %p92 = scmp.ne.s32.totalorder %s80, %s81
    %p93 = scmp.eq.s32.totalorder %s15, 3
    %p94 = por %p92, %p93
    %p96 = scmp.ne.s32.totalorder %s81, %s95
    %p97 = scmp.eq.s32.totalorder %s15, 0
    %p98 = por %p96, %p97
    %s99 = ssub.s32 %s16, %s28
    %s100 = ssub.s32 %s17, %s24
    %s101 = sor.u32 %s99, %s100
    %p102 = scmp.eq.s32.totalorder %s101, 0
    %s104 = sadd.s32 %s103, 1
    %s105 = scalar_select %p102, %s103, %s104
    %p108 = pneg %p102
    %p109 = scmp.eq.s32.totalorder %s9, 3
    %p110 = por %p108, %p109
    %p111 = scmp.ne.s32.totalorder %s103, %s106
    %p112 = scmp.eq.s32.totalorder %s9, 0
    %p113 = por %p111, %p112
    %p114 = scmp.ne.s32.totalorder %s103, %s106
    %p115 = scmp.eq.s32.totalorder %s14, 3
    %p116 = por %p114, %p115
    %p117 = scmp.ne.s32.totalorder %s106, %s107
    %p118 = scmp.eq.s32.totalorder %s14, 0
    %p119 = por %p117, %p118
    %p120 = scmp.ne.s32.totalorder %s106, %s107
    %p121 = scmp.eq.s32.totalorder %s15, 3
    %p122 = por %p120, %p121
    %p124 = scmp.ne.s32.totalorder %s107, %s123
    %p125 = scmp.eq.s32.totalorder %s15, 0
    %p126 = por %p124, %p125
    %p127 = scmp.le.s32.totalorder 1, %s9
    %p128 = scmp.lt.s32.totalorder %s9, 5
    %p129 = pnand %p127, %p128
    %p130 = pneg %p129
    // Predicated region
    $region9: #{_lambda_.14} parent=5 // pred_check
      _
    $region10: #{_lambda_.14} parent=5 // pred_check_branch
      %132 = sbr.rel (%p129) target = $region12
    $region11: #{_lambda_.14} parent=5 // pred_region
      %s133 = ssub.s32 %s9, 1
      // Predicated region
      $region13: #{_lambda_.14} parent=11 // pred_check
        %p134 = pneg %p70
      $region14: #{_lambda_.14} parent=11 // pred_check_branch
        %136 = sbr.rel (%p134) target = $region16
      $region15: #{_lambda_.14} parent=11 // pred_region
        _
      $region16: #{_lambda_.14} parent=11 // pred_fallthru
        _
      // Predicated region
      $region17: #{_lambda_.14} parent=11 // pred_check
        %p137 = pneg %p91
      $region18: #{_lambda_.14} parent=11 // pred_check_branch
        %139 = sbr.rel (%p137) target = $region20
      $region19: #{_lambda_.14} parent=11 // pred_region
        _
      $region20: #{_lambda_.14} parent=11 // pred_fallthru
        _
    $region12: #{_lambda_.14} parent=5 // pred_fallthru
      _
    %p140 = scmp.lt.s32.totalorder %s9, 4
    // Predicated region
    $region21: #{_lambda_.14} parent=5 // pred_check
      %p141 = pneg %p140
    $region22: #{_lambda_.14} parent=5 // pred_check_branch
      %143 = sbr.rel (%p141) target = $region24
    $region23: #{_lambda_.14} parent=5 // pred_region
      // Predicated region
      $region25: #{_lambda_.14} parent=23 // pred_check
        %p144 = pneg %p43
      $region26: #{_lambda_.14} parent=23 // pred_check_branch
        %146 = sbr.rel (%p144) target = $region28
      $region27: #{_lambda_.14} parent=23 // pred_region
        %s147 = smul.u32 16, %s17
        %p148 = scmp.lt.s32.totalorder %s16, 3
        %s149 = scalar_select %p148, %s16, 3
        %p150 = scmp.lt.s32.totalorder %s147, 15
        %s151 = scalar_select %p150, %s147, 15
        %s152 = smul.addr %s149, 16
        %s153 = sadd.s32 %s151, %s152
        %s154 = smul.addr %s153, 4
        %s155 = scalar_lea.vmem %s0, %s154
        %s156 = smul.u32 16, %s17
      $region28: #{_lambda_.14} parent=23 // pred_fallthru
        _
    $region24: #{_lambda_.14} parent=5 // pred_fallthru
      _
    %p157 = scmp.le.s32.totalorder 1, %s9
    %p158 = scmp.lt.s32.totalorder %s9, 5
    %p159 = pnand %p157, %p158
    %p160 = pneg %p159
    // Predicated region
    $region29: #{_lambda_.14} parent=5 // pred_check
      _
    $region30: #{_lambda_.14} parent=5 // pred_check_branch
      %162 = sbr.rel (%p159) target = $region32
    $region31: #{_lambda_.14} parent=5 // pred_region
      %s163 = ssub.s32 %s9, 1
      %s164 = smul.u32 16, %s19
      %p165 = scmp.lt.s32.totalorder %s18, 3
      %s166 = scalar_select %p165, %s18, 3
      %p167 = scmp.lt.s32.totalorder %s164, 15
      %s168 = scalar_select %p167, %s164, 15
      %s169 = smul.addr %s166, 16
      %s170 = sadd.s32 %s168, %s169
      %s171 = smul.addr %s170, 4
      %s172 = scalar_lea.vmem %s0, %s171
      %p173 = pneg %p49
      %p174 = pneg %p46
      %p175 = pneg %p70
      %p176 = pneg %p67
      %p177 = pneg %p91
      %p178 = pneg %p88
      %p179 = pneg %p119
      %p180 = pneg %p116
      %s181 = smul.u32 16, %s19
      %p182 = scmp.lt.s32.totalorder %s18, 3
      %s183 = scalar_select %p182, %s18, 3
      %p184 = scmp.lt.s32.totalorder %s181, 15
      %s185 = scalar_select %p184, %s181, 15
      %s186 = smul.addr %s183, 16
      %s187 = sadd.s32 %s185, %s186
      %s188 = smul.addr %s187, 4
      %s189 = scalar_lea.vmem %s3, %s188
      %s190 = smul.u32 16, %s19
      %p191 = scmp.lt.s32.totalorder %s18, 3
      %s192 = scalar_select %p191, %s18, 3
      %p193 = scmp.lt.s32.totalorder %s190, 15
      %s194 = scalar_select %p193, %s190, 15
      %s195 = smul.addr %s192, 16
      %s196 = sadd.s32 %s194, %s195
      %s197 = smul.addr %s196, 4
      %s198 = scalar_lea.vmem %s0, %s197
      %s199 = smul.u32 16, %s19
      %s200 = smul.u32 16, %s19
      %p201 = scmp.lt.s32.totalorder %s18, 3
      %s202 = scalar_select %p201, %s18, 3
      %p203 = scmp.lt.s32.totalorder %s200, 15
      %s204 = scalar_select %p203, %s200, 15
      %s205 = smul.addr %s202, 16
      %s206 = sadd.s32 %s204, %s205
      %s207 = smul.addr %s206, 4
      %s208 = scalar_lea.vmem %s3, %s207
      %s209 = smul.u32 16, %s19
      %v210 = vld [vmem:[%s198] sm:$0xf]
      %v211 = vld [vmem:[%s198 + $0x4] sm:$0xf]
      %v212 = vld [vmem:[%s198 + $0x8] sm:$0xf]
      %v213 = vld [vmem:[%s198 + $0xc] sm:$0xf]
      %v214 = vld [vmem:[%s198 + $0x10] sm:$0xf]
      %v215 = vld [vmem:[%s198 + $0x14] sm:$0xf]
      %v216 = vld [vmem:[%s198 + $0x18] sm:$0xf]
      %v217 = vld [vmem:[%s198 + $0x1c] sm:$0xf]
      %v218 = vld [vmem:[%s198 + $0x20] sm:$0xf]
      %v219 = vld [vmem:[%s198 + $0x24] sm:$0xf]
      %v220 = vld [vmem:[%s198 + $0x28] sm:$0xf]
      %v221 = vld [vmem:[%s198 + $0x2c] sm:$0xf]
      %v222 = vld [vmem:[%s198 + $0x30] sm:$0xf]
      %v223 = vld [vmem:[%s198 + $0x34] sm:$0xf]
      %v224 = vld [vmem:[%s198 + $0x38] sm:$0xf]
      %v225 = vld [vmem:[%s198 + $0x3c] sm:$0xf]
      %v226 = vunpack.c.l.bf16 %v210
      %v227 = vunpack.c.l.bf16 %v211
      %v228 = vunpack.c.l.bf16 %v212
      %v229 = vunpack.c.l.bf16 %v213
      %v230 = vunpack.c.l.bf16 %v214
      %v231 = vunpack.c.l.bf16 %v215
      %v232 = vunpack.c.l.bf16 %v216
      %v233 = vunpack.c.l.bf16 %v217
      %v234 = vunpack.c.l.bf16 %v218
      %v235 = vunpack.c.l.bf16 %v219
      %v236 = vunpack.c.l.bf16 %v220
      %v237 = vunpack.c.l.bf16 %v221
      %v238 = vunpack.c.l.bf16 %v222
      %v239 = vunpack.c.l.bf16 %v223
      %v240 = vunpack.c.l.bf16 %v224
      %v241 = vunpack.c.l.bf16 %v225
      %v242 = vld [vmem:[%s1] sm:$0x1]
      %v244 = vlaneseq
      %v245 = vshrl.u32 %v244, 7
      %v246 = vsub.s32 0, %v245
      %v247 = vrot.slane %v242, %v246
      %v249 = vmul.f32 %v226, %v247
      %v250 = vmul.f32 %v227, %v247
      %v251 = vmul.f32 %v228, %v247
      %v252 = vmul.f32 %v229, %v247
      %v253 = vmul.f32 %v230, %v247
      %v254 = vmul.f32 %v231, %v247
      %v255 = vmul.f32 %v232, %v247
      %v256 = vmul.f32 %v233, %v247
      %v257 = vmul.f32 %v234, %v247
      %v258 = vmul.f32 %v235, %v247
      %v259 = vmul.f32 %v236, %v247
      %v260 = vmul.f32 %v237, %v247
      %v261 = vmul.f32 %v238, %v247
      %v262 = vmul.f32 %v239, %v247
      %v263 = vmul.f32 %v240, %v247
      %v264 = vmul.f32 %v241, %v247
      %v265 = vld [vmem:[%s2] sm:$0x1]
      %v267 = vlaneseq
      %v268 = vshrl.u32 %v267, 7
      %v269 = vsub.s32 0, %v268
      %v270 = vrot.slane %v265, %v269
      %v272 = vadd.f32 %v249, %v270
      %v273 = vadd.f32 %v250, %v270
      %v274 = vadd.f32 %v251, %v270
      %v275 = vadd.f32 %v252, %v270
      %v276 = vadd.f32 %v253, %v270
      %v277 = vadd.f32 %v254, %v270
      %v278 = vadd.f32 %v255, %v270
      %v279 = vadd.f32 %v256, %v270
      %v280 = vadd.f32 %v257, %v270
      %v281 = vadd.f32 %v258, %v270
      %v282 = vadd.f32 %v259, %v270
      %v283 = vadd.f32 %v260, %v270
      %v284 = vadd.f32 %v261, %v270
      %v285 = vadd.f32 %v262, %v270
      %v286 = vadd.f32 %v263, %v270
      %v287 = vadd.f32 %v264, %v270
      %v288 = vmax.f32 %v272, 0.0
      %v289 = vmax.f32 %v273, 0.0
      %v290 = vmax.f32 %v274, 0.0
      %v291 = vmax.f32 %v275, 0.0
      %v292 = vmax.f32 %v276, 0.0
      %v293 = vmax.f32 %v277, 0.0
      %v294 = vmax.f32 %v278, 0.0
      %v295 = vmax.f32 %v279, 0.0
      %v296 = vmax.f32 %v280, 0.0
      %v297 = vmax.f32 %v281, 0.0
      %v298 = vmax.f32 %v282, 0.0
      %v299 = vmax.f32 %v283, 0.0
      %v300 = vmax.f32 %v284, 0.0
      %v301 = vmax.f32 %v285, 0.0
      %v302 = vmax.f32 %v286, 0.0
      %v303 = vmax.f32 %v287, 0.0
      %v304 = vpack.c.bf16 %v289, %v288
      %v305 = vpack.c.bf16 %v291, %v290
      %v306 = vpack.c.bf16 %v293, %v292
      %v307 = vpack.c.bf16 %v295, %v294
      %v308 = vpack.c.bf16 %v297, %v296
      %v309 = vpack.c.bf16 %v299, %v298
      %v310 = vpack.c.bf16 %v301, %v300
      %v311 = vpack.c.bf16 %v303, %v302
      %v320 = vunpack.c.l.b16 %v304
      %v321 = vunpack.c.h.b16 %v304
      %v322 = vunpack.c.l.b16 %v305
      %v323 = vunpack.c.h.b16 %v305
      %v324 = vunpack.c.l.b16 %v306
      %v325 = vunpack.c.h.b16 %v306
      %v326 = vunpack.c.l.b16 %v307
      %v327 = vunpack.c.h.b16 %v307
      %v328 = vunpack.c.l.b16 %v308
      %v329 = vunpack.c.h.b16 %v308
      %v330 = vunpack.c.l.b16 %v309
      %v331 = vunpack.c.h.b16 %v309
      %v332 = vunpack.c.l.b16 %v310
      %v333 = vunpack.c.h.b16 %v310
      %v334 = vunpack.c.l.b16 %v311
      %v335 = vunpack.c.h.b16 %v311
      %v336 = vpack.c.b16 %v320, %v320
      %v337 = vpack.c.b16 %v321, %v321
      %v338 = vpack.c.b16 %v322, %v322
      %v339 = vpack.c.b16 %v323, %v323
      %v340 = vpack.c.b16 %v324, %v324
      %v341 = vpack.c.b16 %v325, %v325
      %v342 = vpack.c.b16 %v326, %v326
      %v343 = vpack.c.b16 %v327, %v327
      %v344 = vpack.c.b16 %v328, %v328
      %v345 = vpack.c.b16 %v329, %v329
      %v346 = vpack.c.b16 %v330, %v330
      %v347 = vpack.c.b16 %v331, %v331
      %v348 = vpack.c.b16 %v332, %v332
      %v349 = vpack.c.b16 %v333, %v333
      %v350 = vpack.c.b16 %v334, %v334
      %v351 = vpack.c.b16 %v335, %v335
      %vm368 = vcmask 60416
      %369 = vst.msk [vmem:[%s208] sm:$0xf] %vm368, %v336
      %370 = vst.msk [vmem:[%s208 + $0x4] sm:$0xf] %vm368, %v337
      %371 = vst.msk [vmem:[%s208 + $0x8] sm:$0xf] %vm368, %v338
      %372 = vst.msk [vmem:[%s208 + $0xc] sm:$0xf] %vm368, %v339
      %373 = vst.msk [vmem:[%s208 + $0x10] sm:$0xf] %vm368, %v340
      %374 = vst.msk [vmem:[%s208 + $0x14] sm:$0xf] %vm368, %v341
      %375 = vst.msk [vmem:[%s208 + $0x18] sm:$0xf] %vm368, %v342
      %376 = vst.msk [vmem:[%s208 + $0x1c] sm:$0xf] %vm368, %v343
      %377 = vst.msk [vmem:[%s208 + $0x20] sm:$0xf] %vm368, %v344
      %378 = vst.msk [vmem:[%s208 + $0x24] sm:$0xf] %vm368, %v345
      %379 = vst.msk [vmem:[%s208 + $0x28] sm:$0xf] %vm368, %v346
      %380 = vst.msk [vmem:[%s208 + $0x2c] sm:$0xf] %vm368, %v347
      %381 = vst.msk [vmem:[%s208 + $0x30] sm:$0xf] %vm368, %v348
      %382 = vst.msk [vmem:[%s208 + $0x34] sm:$0xf] %vm368, %v349
      %383 = vst.msk [vmem:[%s208 + $0x38] sm:$0xf] %vm368, %v350
      %384 = vst.msk [vmem:[%s208 + $0x3c] sm:$0xf] %vm368, %v351
      %s385 = smul.u32 16, %s19
      %p386 = scmp.lt.s32.totalorder %s18, 3
      %s387 = scalar_select %p386, %s18, 3
      %p388 = scmp.lt.s32.totalorder %s385, 15
      %s389 = scalar_select %p388, %s385, 15
      %s390 = smul.addr %s387, 16
      %s391 = sadd.s32 %s389, %s390
      %s392 = smul.addr %s391, 4
      %s393 = scalar_lea.vmem %s3, %s392
      // Predicated region
      $region33: #{_lambda_.14} parent=31 // pred_check
        %p394 = pneg %p116
      $region34: #{_lambda_.14} parent=31 // pred_check_branch
        %396 = sbr.rel (%p394) target = $region36
      $region35: #{_lambda_.14} parent=31 // pred_region
        %s397 = smul.u32 16, %s19
      $region36: #{_lambda_.14} parent=31 // pred_fallthru
        _
    $region32: #{_lambda_.14} parent=5 // pred_fallthru
      _
    %p398 = scmp.le.s32.totalorder 2, %s9
    // Predicated region
    $region37: #{_lambda_.14} parent=5 // pred_check
      %p399 = pneg %p398
    $region38: #{_lambda_.14} parent=5 // pred_check_branch
      %401 = sbr.rel (%p399) target = $region40
    $region39: #{_lambda_.14} parent=5 // pred_region
      %s402 = ssub.s32 %s9, 2
      // Predicated region
      $region41: #{_lambda_.14} parent=39 // pred_check
        %p403 = pneg %p122
      $region42: #{_lambda_.14} parent=39 // pred_check_branch
        %405 = sbr.rel (%p403) target = $region44
      $region43: #{_lambda_.14} parent=39 // pred_region
        %s406 = smul.u32 16, %s21
        %p407 = scmp.lt.s32.totalorder %s20, 3
        %s408 = scalar_select %p407, %s20, 3
        %p409 = scmp.lt.s32.totalorder %s406, 15
        %s410 = scalar_select %p409, %s406, 15
        %s411 = smul.addr %s408, 16
        %s412 = sadd.s32 %s410, %s411
        %s413 = smul.addr %s412, 4
        %s414 = scalar_lea.vmem %s3, %s413
      $region44: #{_lambda_.14} parent=39 // pred_fallthru
        _
    $region40: #{_lambda_.14} parent=5 // pred_fallthru
      _
  $region6: #{_lambda_.14} parent=0 // loop_footer
    %s13 = sadd.s32 1, %s9
  $region7: #{_lambda_.14} parent=0 // loop_footer_branch
    %8 = sbr.rel target = $region3
  $region8: #{_lambda_.14} parent=0 // loop_exit
    _

// kernel: _lambda_.13
$region0: #{_lambda_.13}
  #allocation0 [shape = 'u32[]', space=smem, size = 0x4, offset = 0x4, fixed_abs, tag = 'smem constant byte address 0x4 - core index']
  #allocation1 [shape = 'u32[144,128]{1,0:T(1,128)}', space=vmem, size = 0x12000, scoped, tag = 'internal scratch']
  %s0 = inlined_call_operand.vmem [shape: bf16[4,128,64], index: 0, kind: input, shape index: {}]
  %s1 = inlined_call_operand.vmem [shape: bf16[4,64,8], index: 1, kind: input, shape index: {}]
  %s2 = inlined_call_operand.vmem [shape: bf16[4,128,8], index: 2, kind: output, shape index: {0}]
  %s3 = inlined_call_operand.vmem [shape: f32[1,8], index: 3, kind: output, shape index: {1}]
  %s4 = inlined_call_operand.vmem [shape: f32[1,8], index: 4, kind: output, shape index: {2}]
  %5 = xla_tuple %s2, %s3, %s4
  %s6 = sld [smem:[#allocation0]]
  $region61: #{_lambda_.13} parent=0
    _
  %s8 = ssub.s32 1, %s6
  %s9 = scalar_select 0, %s8, %s6
  loop: start=0, step=1, limit=6
  $region2: #{_lambda_.13} parent=0 // loop_pre_header
    _
  $region3: #{_lambda_.13} parent=0 // loop_header
    %s11 = sphi 0, %s15
    %p12 = scmp.ge.s32.totalorder %s11, 6
    %s18 = sphi 0, %s30
    %s19 = sphi 0, %s26
    %s20 = sphi 0, %s18
    %s21 = sphi 0, %s19
    %s22 = sphi 0, %s20
    %s23 = sphi 0, %s21
    %s35 = sphi 0, %s37
    %s38 = sphi 0, %s35
    %s39 = sphi 0, %s38
    %s55 = sphi 0, %s39
    %s61 = sphi 0, %s63
    %s64 = sphi 0, %s61
    %s65 = sphi 0, %s64
    %s81 = sphi 0, %s65
    %s89 = sphi 0, %s91
    %s92 = sphi 0, %s89
    %s93 = sphi 0, %s92
    %s109 = sphi 0, %s93
    %s113 = sphi 0, %s113
    %s115 = sphi 0, %s113
    %s116 = sphi 0, %s115
    %s130 = sphi 0, %s116
    %s134 = sphi 0, %s134
    %s136 = sphi 0, %s134
    %s137 = sphi 0, %s136
    %s151 = sphi 0, %s137
  $region4: #{_lambda_.13} parent=0 // loop_header_branch
    %14 = sbr.rel (%p12) target = $region8
  $region5: #{_lambda_.13} parent=0 // loop_body
    %s16 = ssub.s32 %s11, 1
    %s17 = ssub.s32 %s11, 2
    %s24 = sadd.s32 1, %s19
    %p25 = scmp.ge.s32.totalorder %s24, 1
    %s26 = scalar_select %p25, 0, %s24
    %s27 = sadd.s32 1, %s18
    %s28 = scalar_select %p25, %s27, %s18
    %p29 = scmp.ge.s32.totalorder %s28, 4
    %s30 = scalar_select %p29, 0, %s28
    %s31 = ssub.s32 %s18, %s30
    %s32 = ssub.s32 %s19, %s26
    %s33 = sor.u32 %s31, %s32
    %p34 = scmp.eq.s32.totalorder %s33, 0
    %s36 = sadd.s32 %s35, 1
    %s37 = scalar_select %p34, %s35, %s36
    %p40 = pneg %p34
    %p41 = scmp.eq.s32.totalorder %s11, 3
    %p42 = por %p40, %p41
    %p43 = scmp.ne.s32.totalorder %s35, %s38
    %p44 = scmp.eq.s32.totalorder %s11, 0
    %p45 = por %p43, %p44
    %p46 = scmp.ne.s32.totalorder %s35, %s38
    %p47 = scmp.eq.s32.totalorder %s16, 3
    %p48 = por %p46, %p47
    %p49 = scmp.ne.s32.totalorder %s38, %s39
    %p50 = scmp.eq.s32.totalorder %s16, 0
    %p51 = por %p49, %p50
    %p52 = scmp.ne.s32.totalorder %s38, %s39
    %p53 = scmp.eq.s32.totalorder %s17, 3
    %p54 = por %p52, %p53
    %p56 = scmp.ne.s32.totalorder %s39, %s55
    %p57 = scmp.eq.s32.totalorder %s17, 0
    %p58 = por %p56, %p57
    %s59 = ssub.s32 %s18, %s30
    %p60 = scmp.eq.s32.totalorder %s59, 0
    %s62 = sadd.s32 %s61, 1
    %s63 = scalar_select %p60, %s61, %s62
    %p66 = pneg %p60
    %p67 = scmp.eq.s32.totalorder %s11, 3
    %p68 = por %p66, %p67
    %p69 = scmp.ne.s32.totalorder %s61, %s64
    %p70 = scmp.eq.s32.totalorder %s11, 0
    %p71 = por %p69, %p70
    %p72 = scmp.ne.s32.totalorder %s61, %s64
    %p73 = scmp.eq.s32.totalorder %s16, 3
    %p74 = por %p72, %p73
    %p75 = scmp.ne.s32.totalorder %s64, %s65
    %p76 = scmp.eq.s32.totalorder %s16, 0
    %p77 = por %p75, %p76
    %p78 = scmp.ne.s32.totalorder %s64, %s65
    %p79 = scmp.eq.s32.totalorder %s17, 3
    %p80 = por %p78, %p79
    %p82 = scmp.ne.s32.totalorder %s65, %s81
    %p83 = scmp.eq.s32.totalorder %s17, 0
    %p84 = por %p82, %p83
    %s85 = ssub.s32 %s18, %s30
    %s86 = ssub.s32 %s19, %s26
    %s87 = sor.u32 %s85, %s86
    %p88 = scmp.eq.s32.totalorder %s87, 0
    %s90 = sadd.s32 %s89, 1
    %s91 = scalar_select %p88, %s89, %s90
    %p94 = pneg %p88
    %p95 = scmp.eq.s32.totalorder %s11, 3
    %p96 = por %p94, %p95
    %p97 = scmp.ne.s32.totalorder %s89, %s92
    %p98 = scmp.eq.s32.totalorder %s11, 0
    %p99 = por %p97, %p98
    %p100 = scmp.ne.s32.totalorder %s89, %s92
    %p101 = scmp.eq.s32.totalorder %s16, 3
    %p102 = por %p100, %p101
    %p103 = scmp.ne.s32.totalorder %s92, %s93
    %p104 = scmp.eq.s32.totalorder %s16, 0
    %p105 = por %p103, %p104
    %p106 = scmp.ne.s32.totalorder %s92, %s93
    %p107 = scmp.eq.s32.totalorder %s17, 3
    %p108 = por %p106, %p107
    %p110 = scmp.ne.s32.totalorder %s93, %s109
    %p111 = scmp.eq.s32.totalorder %s17, 0
    %p112 = por %p110, %p111
    %s114 = sadd.s32 %s113, 1
    %p117 = scmp.eq.s32.totalorder %s11, 3
    %p118 = scmp.ne.s32.totalorder %s113, %s115
    %p119 = scmp.eq.s32.totalorder %s11, 0
    %p120 = por %p118, %p119
    %p121 = scmp.ne.s32.totalorder %s113, %s115
    %p122 = scmp.eq.s32.totalorder %s16, 3
    %p123 = por %p121, %p122
    %p124 = scmp.ne.s32.totalorder %s115, %s116
    %p125 = scmp.eq.s32.totalorder %s16, 0
    %p126 = por %p124, %p125
    %p127 = scmp.ne.s32.totalorder %s115, %s116
    %p128 = scmp.eq.s32.totalorder %s17, 3
    %p129 = por %p127, %p128
    %p131 = scmp.ne.s32.totalorder %s116, %s130
    %p132 = scmp.eq.s32.totalorder %s17, 0
    %p133 = por %p131, %p132
    %s135 = sadd.s32 %s134, 1
    %p138 = scmp.eq.s32.totalorder %s11, 3
    %p139 = scmp.ne.s32.totalorder %s134, %s136
    %p140 = scmp.eq.s32.totalorder %s11, 0
    %p141 = por %p139, %p140
    %p142 = scmp.ne.s32.totalorder %s134, %s136
    %p143 = scmp.eq.s32.totalorder %s16, 3
    %p144 = por %p142, %p143
    %p145 = scmp.ne.s32.totalorder %s136, %s137
    %p146 = scmp.eq.s32.totalorder %s16, 0
    %p147 = por %p145, %p146
    %p148 = scmp.ne.s32.totalorder %s136, %s137
    %p149 = scmp.eq.s32.totalorder %s17, 3
    %p150 = por %p148, %p149
    %p152 = scmp.ne.s32.totalorder %s137, %s151
    %p153 = scmp.eq.s32.totalorder %s17, 0
    %p154 = por %p152, %p153
    %p155 = scmp.le.s32.totalorder 1, %s11
    %p156 = scmp.lt.s32.totalorder %s11, 5
    %p157 = pnand %p155, %p156
    %p158 = pneg %p157
    // Predicated region
    $region9: #{_lambda_.13} parent=5 // pred_check
      _
    $region10: #{_lambda_.13} parent=5 // pred_check_branch
      %160 = sbr.rel (%p157) target = $region12
    $region11: #{_lambda_.13} parent=5 // pred_region
      %s161 = ssub.s32 %s11, 1
    $region12: #{_lambda_.13} parent=5 // pred_fallthru
      _
    %p162 = scmp.lt.s32.totalorder %s11, 4
    // Predicated region
    $region13: #{_lambda_.13} parent=5 // pred_check
      %p163 = pneg %p162
    $region14: #{_lambda_.13} parent=5 // pred_check_branch
      %165 = sbr.rel (%p163) target = $region16
    $region15: #{_lambda_.13} parent=5 // pred_region
      // Predicated region
      $region17: #{_lambda_.13} parent=15 // pred_check
        %p166 = pneg %p45
      $region18: #{_lambda_.13} parent=15 // pred_check_branch
        %168 = sbr.rel (%p166) target = $region20
      $region19: #{_lambda_.13} parent=15 // pred_region
        %s169 = smul.u32 16, %s19
        %p170 = scmp.lt.s32.totalorder %s18, 3
        %s171 = scalar_select %p170, %s18, 3
        %p172 = scmp.lt.s32.totalorder %s169, 15
        %s173 = scalar_select %p172, %s169, 15
        %s174 = smul.addr %s171, 16
        %s175 = sadd.s32 %s173, %s174
        %s176 = smul.addr %s175, 4
        %s177 = scalar_lea.vmem %s0, %s176
        %s178 = smul.u32 16, %s19
      $region20: #{_lambda_.13} parent=15 // pred_fallthru
        _
      // Predicated region
      $region21: #{_lambda_.13} parent=15 // pred_check
        %p179 = pneg %p71
      $region22: #{_lambda_.13} parent=15 // pred_check_branch
        %181 = sbr.rel (%p179) target = $region24
      $region23: #{_lambda_.13} parent=15 // pred_region
        %p182 = scmp.lt.s32.totalorder %s18, 3
        %s183 = scalar_select %p182, %s18, 3
        %s184 = smul.addr %s183, 8
        %s185 = smul.addr %s184, 4
        %s186 = scalar_lea.vmem %s1, %s185
      $region24: #{_lambda_.13} parent=15 // pred_fallthru
        _
    $region16: #{_lambda_.13} parent=5 // pred_fallthru
      _
    %p187 = scmp.le.s32.totalorder 1, %s11
    %p188 = scmp.lt.s32.totalorder %s11, 5
    %p189 = pnand %p187, %p188
    %p190 = pneg %p189
    // Predicated region
    $region25: #{_lambda_.13} parent=5 // pred_check
      _
    $region26: #{_lambda_.13} parent=5 // pred_check_branch
      %192 = sbr.rel (%p189) target = $region28
    $region27: #{_lambda_.13} parent=5 // pred_region
      %s193 = ssub.s32 %s11, 1
      %s194 = smul.u32 16, %s21
      %p195 = scmp.lt.s32.totalorder %s20, 3
      %s196 = scalar_select %p195, %s20, 3
      %p197 = scmp.lt.s32.totalorder %s194, 15
      %s198 = scalar_select %p197, %s194, 15
      %s199 = smul.addr %s196, 16
      %s200 = sadd.s32 %s198, %s199
      %s201 = smul.addr %s200, 4
      %s202 = scalar_lea.vmem %s0, %s201
      %p203 = pneg %p51
      %p204 = pneg %p48
      %p205 = scmp.lt.s32.totalorder %s20, 3
      %s206 = scalar_select %p205, %s20, 3
      %s207 = smul.addr %s206, 8
      %s208 = smul.addr %s207, 4
      %s209 = scalar_lea.vmem %s1, %s208
      %p210 = pneg %p77
      %p211 = pneg %p74
      %p212 = pneg %p105
      %p213 = pneg %p102
      %s214 = smul.u32 16, %s21
      %p215 = scmp.lt.s32.totalorder %s20, 3
      %s216 = scalar_select %p215, %s20, 3
      %p217 = scmp.lt.s32.totalorder %s214, 15
      %s218 = scalar_select %p217, %s214, 15
      %s219 = smul.addr %s216, 16
      %s220 = sadd.s32 %s218, %s219
      %s221 = smul.addr %s220, 4
      %s222 = scalar_lea.vmem %s2, %s221
      %p223 = pneg %p126
      %p224 = pneg %p123
      %p225 = pneg %p147
      %p226 = pneg %p144
      %s227 = smul.u32 16, %s21
      %p228 = scmp.lt.s32.totalorder %s20, 3
      %s229 = scalar_select %p228, %s20, 3
      %p230 = scmp.lt.s32.totalorder %s227, 15
      %s231 = scalar_select %p230, %s227, 15
      %s232 = smul.addr %s229, 16
      %s233 = sadd.s32 %s231, %s232
      %s234 = smul.addr %s233, 4
      %s235 = scalar_lea.vmem %s0, %s234
      %s236 = smul.u32 16, %s21
      %p237 = scmp.lt.s32.totalorder %s20, 3
      %s238 = scalar_select %p237, %s20, 3
      %s239 = smul.addr %s238, 8
      %s240 = smul.addr %s239, 4
      %s241 = scalar_lea.vmem %s1, %s240
      %s242 = smul.u32 16, %s21
      %p243 = scmp.lt.s32.totalorder %s20, 3
      %s244 = scalar_select %p243, %s20, 3
      %p245 = scmp.lt.s32.totalorder %s242, 15
      %s246 = scalar_select %p245, %s242, 15
      %s247 = smul.addr %s244, 16
      %s248 = sadd.s32 %s246, %s247
      %s249 = smul.addr %s248, 4
      %s250 = scalar_lea.vmem %s2, %s249
      %s251 = smul.u32 16, %s21
      %p253 = scmp.eq.s32.totalorder %s20, 0
      %p254 = scmp.eq.s32.totalorder %s21, 0
      %p255 = pnand %p253, %p254
      %p256 = pneg %p255
      // Predicated region
      $region29: #{_lambda_.13} parent=27 // pred_check
        _
      $region30: #{_lambda_.13} parent=27 // pred_check_branch
        %258 = sbr.rel (%p255) target = $region32
      $region31: #{_lambda_.13} parent=27 // pred_region
        %vm259 = vcmask 57344
        %260 = vst.msk [vmem:[%s3] sm:$0x1] %vm259, 0.0
        %261 = vst.msk [vmem:[%s4] sm:$0x1] %vm259, 0.0
      $region32: #{_lambda_.13} parent=27 // pred_fallthru
        _
      %v262 = vld [vmem:[%s235] sm:$0xf]
      %v263 = vld [vmem:[%s235 + $0x4] sm:$0xf]
      %v264 = vld [vmem:[%s235 + $0x8] sm:$0xf]
      %v265 = vld [vmem:[%s235 + $0xc] sm:$0xf]
      %v266 = vld [vmem:[%s235 + $0x10] sm:$0xf]
      %v267 = vld [vmem:[%s235 + $0x14] sm:$0xf]
      %v268 = vld [vmem:[%s235 + $0x18] sm:$0xf]
      %v269 = vld [vmem:[%s235 + $0x1c] sm:$0xf]
      %v270 = vld [vmem:[%s235 + $0x20] sm:$0xf]
      %v271 = vld [vmem:[%s235 + $0x24] sm:$0xf]
      %v272 = vld [vmem:[%s235 + $0x28] sm:$0xf]
      %v273 = vld [vmem:[%s235 + $0x2c] sm:$0xf]
      %v274 = vld [vmem:[%s235 + $0x30] sm:$0xf]
      %v275 = vld [vmem:[%s235 + $0x34] sm:$0xf]
      %v276 = vld [vmem:[%s235 + $0x38] sm:$0xf]
      %v277 = vld [vmem:[%s235 + $0x3c] sm:$0xf]
      %v278 = vld [vmem:[%s241] sm:$0xf]
      %v279 = vld [vmem:[%s241 + $0x4] sm:$0xf]
      %v280 = vld [vmem:[%s241 + $0x8] sm:$0xf]
      %v281 = vld [vmem:[%s241 + $0xc] sm:$0xf]
      %v282 = vld [vmem:[%s241 + $0x10] sm:$0xf]
      %v283 = vld [vmem:[%s241 + $0x14] sm:$0xf]
      %v284 = vld [vmem:[%s241 + $0x18] sm:$0xf]
      %v285 = vld [vmem:[%s241 + $0x1c] sm:$0xf]
      %v302 = vunpack.c.l.b16 %v262
      %v303 = vunpack.c.l.b16 %v263
      %v304 = vunpack.c.l.b16 %v264
      %v305 = vunpack.c.l.b16 %v265
      %v306 = vunpack.c.l.b16 %v266
      %v307 = vunpack.c.l.b16 %v267
      %v308 = vunpack.c.l.b16 %v268
      %v309 = vunpack.c.l.b16 %v269
      %v310 = vunpack.c.l.b16 %v270
      %v311 = vunpack.c.l.b16 %v271
      %v312 = vunpack.c.l.b16 %v272
      %v313 = vunpack.c.l.b16 %v273
      %v314 = vunpack.c.l.b16 %v274
      %v315 = vunpack.c.l.b16 %v275
      %v316 = vunpack.c.l.b16 %v276
      %v317 = vunpack.c.l.b16 %v277
      %v318 = vpack.c.b16 %v303, %v302
      %v319 = vpack.c.b16 %v305, %v304
      %v320 = vpack.c.b16 %v307, %v306
      %v321 = vpack.c.b16 %v309, %v308
      %v322 = vpack.c.b16 %v311, %v310
      %v323 = vpack.c.b16 %v313, %v312
      %v324 = vpack.c.b16 %v315, %v314
      %v325 = vpack.c.b16 %v317, %v316
      %v334 = vunpack.c.l.b16 %v278
      %v335 = vunpack.c.l.b16 %v279
      %v336 = vunpack.c.l.b16 %v280
      %v337 = vunpack.c.l.b16 %v281
      %v338 = vunpack.c.l.b16 %v282
      %v339 = vunpack.c.l.b16 %v283
      %v340 = vunpack.c.l.b16 %v284
      %v341 = vunpack.c.l.b16 %v285
      %v342 = vpack.c.b16 %v335, %v334
      %v343 = vpack.c.b16 %v337, %v336
      %v344 = vpack.c.b16 %v339, %v338
      %v345 = vpack.c.b16 %v341, %v340
      %vm350 = vcmask 523264
      %v352 = vsel %vm350, %v318, 0
      %v355 = vsel %vm350, %v319, 0
      %v358 = vsel %vm350, %v320, 0
      %v361 = vsel %vm350, %v321, 0
      %v364 = vsel %vm350, %v322, 0
      %v367 = vsel %vm350, %v323, 0
      %v370 = vsel %vm350, %v324, 0
      %v373 = vsel %vm350, %v325, 0
      %375 = vmatprep.subr.bf16.mxu0 0
      %376 = vmatpush1.bf16.msra.mxu0 0
      %377 = vmatprep.subr.bf16.mxu0 0
      %378 = vmatpush1.bf16.msra.mxu0 0
      %379 = vmatprep.subr.bf16.mxu0 0
      %380 = vmatpush1.bf16.msra.mxu0 0
      %381 = vmatprep.subr.bf16.mxu0 0
      %382 = vmatpush1.bf16.msra.mxu0 0
      %383 = vmatprep.subr.bf16.mxu0 0
      %384 = vmatpush1.bf16.msra.mxu0 %v345
      %385 = vmatprep.subr.bf16.mxu0 0
      %386 = vmatpush1.bf16.msra.mxu0 %v344
      %387 = vmatprep.subr.bf16.mxu0 0
      %388 = vmatpush1.bf16.msra.mxu0 %v343
      %389 = vmatprep.subr.bf16.mxu0 0
      %390 = vmatpush1.bf16.msra.mxu0 %v342
      %391 = vmatprep.subr.bf16.mxu0 0
      %392 = vmatpush2.bf16.msra.mxu0 0
      %393 = vmatprep.subr.bf16.mxu0 0
      %394 = vmatpush2.bf16.msra.mxu0 0
      %395 = vmatprep.subr.bf16.mxu0 0
      %396 = vmatpush2.bf16.msra.mxu0 0
      %397 = vmatprep.subr.bf16.mxu0 0
      %398 = vmatpush2.bf16.msra.mxu0 0
      %399 = vmatprep.subr.bf16.mxu0 0
      %400 = vmatpush2.bf16.msra.mxu0 0
      %401 = vmatprep.subr.bf16.mxu0 0
      %402 = vmatpush2.bf16.msra.mxu0 0
      %403 = vmatprep.subr.bf16.mxu0 0
      %404 = vmatpush2.bf16.msra.mxu0 0
      %405 = vmatprep.subr.bf16.mxu0 0
      %406 = vmatpush2.bf16.msra.mxu0 0
      %407 = vmatprep.mubr.bf16.mxu0 0
      %408 = vmatmul.mubr.bf16.gmra.mxu0 %v352
      %v409 = vpop.f32.mrf.mxu0
      %v410 = vadd.f32 0.0, %v409
      %v411 = vpop.f32.mrf.mxu0
      %v412 = vpop.f32.mrf.mxu0
      %v413 = vadd.f32 0.0, %v412
      %v414 = vpop.f32.mrf.mxu0
      %415 = vmatprep.mubr.bf16.mxu0 0
      %416 = vmatmul.mubr.bf16.gmra.mxu0 %v355
      %v417 = vpop.f32.mrf.mxu0
      %v418 = vadd.f32 0.0, %v417
      %v419 = vpop.f32.mrf.mxu0
      %v420 = vpop.f32.mrf.mxu0
      %v421 = vadd.f32 0.0, %v420
      %v422 = vpop.f32.mrf.mxu0
      %423 = vmatprep.mubr.bf16.mxu0 0
      %424 = vmatmul.mubr.bf16.gmra.mxu0 %v358
      %v425 = vpop.f32.mrf.mxu0
      %v426 = vadd.f32 0.0, %v425
      %v427 = vpop.f32.mrf.mxu0
      %v428 = vpop.f32.mrf.mxu0
      %v429 = vadd.f32 0.0, %v428
      %v430 = vpop.f32.mrf.mxu0
      %431 = vmatprep.mubr.bf16.mxu0 0
      %432 = vmatmul.mubr.bf16.gmra.mxu0 %v361
      %v433 = vpop.f32.mrf.mxu0
      %v434 = vadd.f32 0.0, %v433
      %v435 = vpop.f32.mrf.mxu0
      %v436 = vpop.f32.mrf.mxu0
      %v437 = vadd.f32 0.0, %v436
      %v438 = vpop.f32.mrf.mxu0
      %439 = vmatprep.mubr.bf16.mxu0 0
      %440 = vmatmul.mubr.bf16.gmra.mxu0 %v364
      %v441 = vpop.f32.mrf.mxu0
      %v442 = vadd.f32 0.0, %v441
      %v443 = vpop.f32.mrf.mxu0
      %v444 = vpop.f32.mrf.mxu0
      %v445 = vadd.f32 0.0, %v444
      %v446 = vpop.f32.mrf.mxu0
      %447 = vmatprep.mubr.bf16.mxu0 0
      %448 = vmatmul.mubr.bf16.gmra.mxu0 %v367
      %v449 = vpop.f32.mrf.mxu0
      %v450 = vadd.f32 0.0, %v449
      %v451 = vpop.f32.mrf.mxu0
      %v452 = vpop.f32.mrf.mxu0
      %v453 = vadd.f32 0.0, %v452
      %v454 = vpop.f32.mrf.mxu0
      %455 = vmatprep.mubr.bf16.mxu0 0
      %456 = vmatmul.mubr.bf16.gmra.mxu0 %v370
      %v457 = vpop.f32.mrf.mxu0
      %v458 = vadd.f32 0.0, %v457
      %v459 = vpop.f32.mrf.mxu0
      %v460 = vpop.f32.mrf.mxu0
      %v461 = vadd.f32 0.0, %v460
      %v462 = vpop.f32.mrf.mxu0
      %463 = vmatprep.mubr.bf16.mxu0 0
      %464 = vmatmul.mubr.bf16.gmra.mxu0 %v373
      %v465 = vpop.f32.mrf.mxu0
      %v466 = vadd.f32 0.0, %v465
      %v467 = vpop.f32.mrf.mxu0
      %v468 = vpop.f32.mrf.mxu0
      %v469 = vadd.f32 0.0, %v468
      %v470 = vpop.f32.mrf.mxu0
      %471 = vdwg.mxu0
      %v472 = vpack.c.bf16 %v413, %v410
      %v473 = vpack.c.bf16 %v421, %v418
      %v474 = vpack.c.bf16 %v429, %v426
      %v475 = vpack.c.bf16 %v437, %v434
      %v476 = vpack.c.bf16 %v445, %v442
      %v477 = vpack.c.bf16 %v453, %v450
      %v478 = vpack.c.bf16 %v461, %v458
      %v479 = vpack.c.bf16 %v469, %v466
      %v488 = vunpack.c.l.b16 %v472
      %v489 = vunpack.c.h.b16 %v472
      %v490 = vunpack.c.l.b16 %v473
      %v491 = vunpack.c.h.b16 %v473
      %v492 = vunpack.c.l.b16 %v474
      %v493 = vunpack.c.h.b16 %v474
      %v494 = vunpack.c.l.b16 %v475
      %v495 = vunpack.c.h.b16 %v475
      %v496 = vunpack.c.l.b16 %v476
      %v497 = vunpack.c.h.b16 %v476
      %v498 = vunpack.c.l.b16 %v477
      %v499 = vunpack.c.h.b16 %v477
      %v500 = vunpack.c.l.b16 %v478
      %v501 = vunpack.c.h.b16 %v478
      %v502 = vunpack.c.l.b16 %v479
      %v503 = vunpack.c.h.b16 %v479
      %v504 = vpack.c.b16 %v488, %v488
      %v505 = vpack.c.b16 %v489, %v489
      %v506 = vpack.c.b16 %v490, %v490
      %v507 = vpack.c.b16 %v491, %v491
      %v508 = vpack.c.b16 %v492, %v492
      %v509 = vpack.c.b16 %v493, %v493
      %v510 = vpack.c.b16 %v494, %v494
      %v511 = vpack.c.b16 %v495, %v495
      %v512 = vpack.c.b16 %v496, %v496
      %v513 = vpack.c.b16 %v497, %v497
      %v514 = vpack.c.b16 %v498, %v498
      %v515 = vpack.c.b16 %v499, %v499
      %v516 = vpack.c.b16 %v500, %v500
      %v517 = vpack.c.b16 %v501, %v501
      %v518 = vpack.c.b16 %v502, %v502
      %v519 = vpack.c.b16 %v503, %v503
      %vm536 = vcmask 60416
      %537 = vst.msk [vmem:[%s250] sm:$0xf] %vm536, %v504
      %538 = vst.msk [vmem:[%s250 + $0x4] sm:$0xf] %vm536, %v505
      %539 = vst.msk [vmem:[%s250 + $0x8] sm:$0xf] %vm536, %v506
      %540 = vst.msk [vmem:[%s250 + $0xc] sm:$0xf] %vm536, %v507
      %541 = vst.msk [vmem:[%s250 + $0x10] sm:$0xf] %vm536, %v508
      %542 = vst.msk [vmem:[%s250 + $0x14] sm:$0xf] %vm536, %v509
      %543 = vst.msk [vmem:[%s250 + $0x18] sm:$0xf] %vm536, %v510
      %544 = vst.msk [vmem:[%s250 + $0x1c] sm:$0xf] %vm536, %v511
      %545 = vst.msk [vmem:[%s250 + $0x20] sm:$0xf] %vm536, %v512
      %546 = vst.msk [vmem:[%s250 + $0x24] sm:$0xf] %vm536, %v513
      %547 = vst.msk [vmem:[%s250 + $0x28] sm:$0xf] %vm536, %v514
      %548 = vst.msk [vmem:[%s250 + $0x2c] sm:$0xf] %vm536, %v515
      %549 = vst.msk [vmem:[%s250 + $0x30] sm:$0xf] %vm536, %v516
      %550 = vst.msk [vmem:[%s250 + $0x34] sm:$0xf] %vm536, %v517
      %551 = vst.msk [vmem:[%s250 + $0x38] sm:$0xf] %vm536, %v518
      %552 = vst.msk [vmem:[%s250 + $0x3c] sm:$0xf] %vm536, %v519
      %v553 = vld [vmem:[%s3] sm:$0x1]
      %vm554 = vcmask 64512
      %v555 = vsel %vm554, %v410, 0.0
      %v556 = vsel %vm554, %v413, 0.0
      %v557 = vadd.f32 %v555, %v556
      %v558 = vsel %vm554, %v418, 0.0
      %v559 = vadd.f32 %v557, %v558
      %v560 = vsel %vm554, %v421, 0.0
      %v561 = vadd.f32 %v559, %v560
      %v562 = vsel %vm554, %v426, 0.0
      %v563 = vadd.f32 %v561, %v562
      %v564 = vsel %vm554, %v429, 0.0
      %v565 = vadd.f32 %v563, %v564
      %v566 = vsel %vm554, %v434, 0.0
      %v567 = vadd.f32 %v565, %v566
      %v568 = vsel %vm554, %v437, 0.0
      %v569 = vadd.f32 %v567, %v568
      %v570 = vsel %vm554, %v442, 0.0
      %v571 = vadd.f32 %v569, %v570
      %v572 = vsel %vm554, %v445, 0.0
      %v573 = vadd.f32 %v571, %v572
      %v574 = vsel %vm554, %v450, 0.0
      %v575 = vadd.f32 %v573, %v574
      %v576 = vsel %vm554, %v453, 0.0
      %v577 = vadd.f32 %v575, %v576
      %v578 = vsel %vm554, %v458, 0.0
      %v579 = vadd.f32 %v577, %v578
      %v580 = vsel %vm554, %v461, 0.0
      %v581 = vadd.f32 %v579, %v580
      %v582 = vsel %vm554, %v466, 0.0
      %v583 = vadd.f32 %v581, %v582
      %v584 = vsel %vm554, %v469, 0.0
      %v585 = vadd.f32 %v583, %v584
      %v586 = vrot.slane %v585, 4
      %v587 = vadd.f32 %v585, %v586
      %v588 = vrot.slane %v587, 2
      %v589 = vadd.f32 %v587, %v588
      %v590 = vrot.slane %v589, 1
      %v591 = vadd.f32 %v589, %v590
      %v592 = vadd.f32 %v553, %v591
      %vm593 = vcmask 57344
      %594 = vst.msk [vmem:[%s3] sm:$0x1] %vm593, %v592
      %v595 = vld [vmem:[%s4] sm:$0x1]
      %v596 = vmul.f32 %v410, %v410
      %v597 = vmul.f32 %v413, %v413
      %v598 = vmul.f32 %v418, %v418
      %v599 = vmul.f32 %v421, %v421
      %v600 = vmul.f32 %v426, %v426
      %v601 = vmul.f32 %v429, %v429
      %v602 = vmul.f32 %v434, %v434
      %v603 = vmul.f32 %v437, %v437
      %v604 = vmul.f32 %v442, %v442
      %v605 = vmul.f32 %v445, %v445
      %v606 = vmul.f32 %v450, %v450
      %v607 = vmul.f32 %v453, %v453
      %v608 = vmul.f32 %v458, %v458
      %v609 = vmul.f32 %v461, %v461
      %v610 = vmul.f32 %v466, %v466
      %v611 = vmul.f32 %v469, %v469
      %v612 = vsel %vm554, %v596, 0.0
      %v613 = vsel %vm554, %v597, 0.0
      %v614 = vadd.f32 %v612, %v613
      %v615 = vsel %vm554, %v598, 0.0
      %v616 = vadd.f32 %v614, %v615
      %v617 = vsel %vm554, %v599, 0.0
      %v618 = vadd.f32 %v616, %v617
      %v619 = vsel %vm554, %v600, 0.0
      %v620 = vadd.f32 %v618, %v619
      %v621 = vsel %vm554, %v601, 0.0
      %v622 = vadd.f32 %v620, %v621
      %v623 = vsel %vm554, %v602, 0.0
      %v624 = vadd.f32 %v622, %v623
      %v625 = vsel %vm554, %v603, 0.0
      %v626 = vadd.f32 %v624, %v625
      %v627 = vsel %vm554, %v604, 0.0
      %v628 = vadd.f32 %v626, %v627
      %v629 = vsel %vm554, %v605, 0.0
      %v630 = vadd.f32 %v628, %v629
      %v631 = vsel %vm554, %v606, 0.0
      %v632 = vadd.f32 %v630, %v631
      %v633 = vsel %vm554, %v607, 0.0
      %v634 = vadd.f32 %v632, %v633
      %v635 = vsel %vm554, %v608, 0.0
      %v636 = vadd.f32 %v634, %v635
      %v637 = vsel %vm554, %v609, 0.0
      %v638 = vadd.f32 %v636, %v637
      %v639 = vsel %vm554, %v610, 0.0
      %v640 = vadd.f32 %v638, %v639
      %v641 = vsel %vm554, %v611, 0.0
      %v642 = vadd.f32 %v640, %v641
      %v643 = vrot.slane %v642, 4
      %v644 = vadd.f32 %v642, %v643
      %v645 = vrot.slane %v644, 2
      %v646 = vadd.f32 %v644, %v645
      %v647 = vrot.slane %v646, 1
      %v648 = vadd.f32 %v646, %v647
      %v649 = vadd.f32 %v595, %v648
      %650 = vst.msk [vmem:[%s4] sm:$0x1] %vm593, %v649
      %s651 = smul.u32 16, %s21
      %p652 = scmp.lt.s32.totalorder %s20, 3
      %s653 = scalar_select %p652, %s20, 3
      %p654 = scmp.lt.s32.totalorder %s651, 15
      %s655 = scalar_select %p654, %s651, 15
      %s656 = smul.addr %s653, 16
      %s657 = sadd.s32 %s655, %s656
      %s658 = smul.addr %s657, 4
      %s659 = scalar_lea.vmem %s2, %s658
      // Predicated region
      $region33: #{_lambda_.13} parent=27 // pred_check
        %p660 = pneg %p102
      $region34: #{_lambda_.13} parent=27 // pred_check_branch
        %662 = sbr.rel (%p660) target = $region36
      $region35: #{_lambda_.13} parent=27 // pred_region
        %s663 = smul.u32 16, %s21
      $region36: #{_lambda_.13} parent=27 // pred_fallthru
        _
      // Predicated region
      $region37: #{_lambda_.13} parent=27 // pred_check
        %p664 = pneg %p123
      $region38: #{_lambda_.13} parent=27 // pred_check_branch
        %666 = sbr.rel (%p664) target = $region40
      $region39: #{_lambda_.13} parent=27 // pred_region
        _
      $region40: #{_lambda_.13} parent=27 // pred_fallthru
        _
      // Predicated region
      $region41: #{_lambda_.13} parent=27 // pred_check
        %p667 = pneg %p144
      $region42: #{_lambda_.13} parent=27 // pred_check_branch
        %669 = sbr.rel (%p667) target = $region44
      $region43: #{_lambda_.13} parent=27 // pred_region
        _
      $region44: #{_lambda_.13} parent=27 // pred_fallthru
        _
      // Predicated region
      $region45: #{_lambda_.13} parent=27 // pred_check
        %p670 = pneg %p123
      $region46: #{_lambda_.13} parent=27 // pred_check_branch
        %672 = sbr.rel (%p670) target = $region48
      $region47: #{_lambda_.13} parent=27 // pred_region
        _
      $region48: #{_lambda_.13} parent=27 // pred_fallthru
        _
      // Predicated region
      $region49: #{_lambda_.13} parent=27 // pred_check
        %p673 = pneg %p144
      $region50: #{_lambda_.13} parent=27 // pred_check_branch
        %675 = sbr.rel (%p673) target = $region52
      $region51: #{_lambda_.13} parent=27 // pred_region
        _
      $region52: #{_lambda_.13} parent=27 // pred_fallthru
        _
    $region28: #{_lambda_.13} parent=5 // pred_fallthru
      _
    %p676 = scmp.le.s32.totalorder 2, %s11
    // Predicated region
    $region53: #{_lambda_.13} parent=5 // pred_check
      %p677 = pneg %p676
    $region54: #{_lambda_.13} parent=5 // pred_check_branch
      %679 = sbr.rel (%p677) target = $region56
    $region55: #{_lambda_.13} parent=5 // pred_region
      %s680 = ssub.s32 %s11, 2
      // Predicated region
      $region57: #{_lambda_.13} parent=55 // pred_check
        %p681 = pneg %p108
      $region58: #{_lambda_.13} parent=55 // pred_check_branch
        %683 = sbr.rel (%p681) target = $region60
      $region59: #{_lambda_.13} parent=55 // pred_region
        %s684 = smul.u32 16, %s23
        %p685 = scmp.lt.s32.totalorder %s22, 3
        %s686 = scalar_select %p685, %s22, 3
        %p687 = scmp.lt.s32.totalorder %s684, 15
        %s688 = scalar_select %p687, %s684, 15
        %s689 = smul.addr %s686, 16
        %s690 = sadd.s32 %s688, %s689
        %s691 = smul.addr %s690, 4
        %s692 = scalar_lea.vmem %s2, %s691
      $region60: #{_lambda_.13} parent=55 // pred_fallthru
        _
    $region56: #{_lambda_.13} parent=5 // pred_fallthru
      _
  $region6: #{_lambda_.13} parent=0 // loop_footer
    %s15 = sadd.s32 1, %s11
  $region7: #{_lambda_.13} parent=0 // loop_footer_branch
    %10 = sbr.rel target = $region3
  $region8: #{_lambda_.13} parent=0 // loop_exit
    _

// kernel: _lambda_.15
$region0: #{_lambda_.15}
  #allocation0 [shape = 'u32[]', space=smem, size = 0x4, offset = 0x4, fixed_abs, tag = 'smem constant byte address 0x4 - core index']
  #allocation1 [shape = 'u32[144,128]{1,0:T(1,128)}', space=vmem, size = 0x12000, scoped, tag = 'internal scratch']
  %s0 = inlined_call_operand.vmem [shape: bf16[4,512,32], index: 0, kind: input, shape index: {}]
  %s1 = inlined_call_operand.vmem [shape: bf16[4,32,4], index: 1, kind: input, shape index: {}]
  %s2 = inlined_call_operand.vmem [shape: bf16[4,512,4], index: 2, kind: output, shape index: {0}]
  %s3 = inlined_call_operand.vmem [shape: f32[1,4], index: 3, kind: output, shape index: {1}]
  %s4 = inlined_call_operand.vmem [shape: f32[1,4], index: 4, kind: output, shape index: {2}]
  %5 = xla_tuple %s2, %s3, %s4
  %s6 = sld [smem:[#allocation0]]
  $region61: #{_lambda_.15} parent=0
    _
  %s8 = ssub.s32 1, %s6
  %s9 = scalar_select 0, %s8, %s6
  loop: start=0, step=1, limit=6
  $region2: #{_lambda_.15} parent=0 // loop_pre_header
    _
  $region3: #{_lambda_.15} parent=0 // loop_header
    %s11 = sphi 0, %s15
    %p12 = scmp.ge.s32.totalorder %s11, 6
    %s18 = sphi 0, %s30
    %s19 = sphi 0, %s26
    %s20 = sphi 0, %s18
    %s21 = sphi 0, %s19
    %s22 = sphi 0, %s20
    %s23 = sphi 0, %s21
    %s35 = sphi 0, %s37
    %s38 = sphi 0, %s35
    %s39 = sphi 0, %s38
    %s55 = sphi 0, %s39
    %s61 = sphi 0, %s63
    %s64 = sphi 0, %s61
    %s65 = sphi 0, %s64
    %s81 = sphi 0, %s65
    %s89 = sphi 0, %s91
    %s92 = sphi 0, %s89
    %s93 = sphi 0, %s92
    %s109 = sphi 0, %s93
    %s113 = sphi 0, %s113
    %s115 = sphi 0, %s113
    %s116 = sphi 0, %s115
    %s130 = sphi 0, %s116
    %s134 = sphi 0, %s134
    %s136 = sphi 0, %s134
    %s137 = sphi 0, %s136
    %s151 = sphi 0, %s137
  $region4: #{_lambda_.15} parent=0 // loop_header_branch
    %14 = sbr.rel (%p12) target = $region8
  $region5: #{_lambda_.15} parent=0 // loop_body
    %s16 = ssub.s32 %s11, 1
    %s17 = ssub.s32 %s11, 2
    %s24 = sadd.s32 1, %s19
    %p25 = scmp.ge.s32.totalorder %s24, 1
    %s26 = scalar_select %p25, 0, %s24
    %s27 = sadd.s32 1, %s18
    %s28 = scalar_select %p25, %s27, %s18
    %p29 = scmp.ge.s32.totalorder %s28, 4
    %s30 = scalar_select %p29, 0, %s28
    %s31 = ssub.s32 %s18, %s30
    %s32 = ssub.s32 %s19, %s26
    %s33 = sor.u32 %s31, %s32
    %p34 = scmp.eq.s32.totalorder %s33, 0
    %s36 = sadd.s32 %s35, 1
    %s37 = scalar_select %p34, %s35, %s36
    %p40 = pneg %p34
    %p41 = scmp.eq.s32.totalorder %s11, 3
    %p42 = por %p40, %p41
    %p43 = scmp.ne.s32.totalorder %s35, %s38
    %p44 = scmp.eq.s32.totalorder %s11, 0
    %p45 = por %p43, %p44
    %p46 = scmp.ne.s32.totalorder %s35, %s38
    %p47 = scmp.eq.s32.totalorder %s16, 3
    %p48 = por %p46, %p47
    %p49 = scmp.ne.s32.totalorder %s38, %s39
    %p50 = scmp.eq.s32.totalorder %s16, 0
    %p51 = por %p49, %p50
    %p52 = scmp.ne.s32.totalorder %s38, %s39
    %p53 = scmp.eq.s32.totalorder %s17, 3
    %p54 = por %p52, %p53
    %p56 = scmp.ne.s32.totalorder %s39, %s55
    %p57 = scmp.eq.s32.totalorder %s17, 0
    %p58 = por %p56, %p57
    %s59 = ssub.s32 %s18, %s30
    %p60 = scmp.eq.s32.totalorder %s59, 0
    %s62 = sadd.s32 %s61, 1
    %s63 = scalar_select %p60, %s61, %s62
    %p66 = pneg %p60
    %p67 = scmp.eq.s32.totalorder %s11, 3
    %p68 = por %p66, %p67
    %p69 = scmp.ne.s32.totalorder %s61, %s64
    %p70 = scmp.eq.s32.totalorder %s11, 0
    %p71 = por %p69, %p70
    %p72 = scmp.ne.s32.totalorder %s61, %s64
    %p73 = scmp.eq.s32.totalorder %s16, 3
    %p74 = por %p72, %p73
    %p75 = scmp.ne.s32.totalorder %s64, %s65
    %p76 = scmp.eq.s32.totalorder %s16, 0
    %p77 = por %p75, %p76
    %p78 = scmp.ne.s32.totalorder %s64, %s65
    %p79 = scmp.eq.s32.totalorder %s17, 3
    %p80 = por %p78, %p79
    %p82 = scmp.ne.s32.totalorder %s65, %s81
    %p83 = scmp.eq.s32.totalorder %s17, 0
    %p84 = por %p82, %p83
    %s85 = ssub.s32 %s18, %s30
    %s86 = ssub.s32 %s19, %s26
    %s87 = sor.u32 %s85, %s86
    %p88 = scmp.eq.s32.totalorder %s87, 0
    %s90 = sadd.s32 %s89, 1
    %s91 = scalar_select %p88, %s89, %s90
    %p94 = pneg %p88
    %p95 = scmp.eq.s32.totalorder %s11, 3
    %p96 = por %p94, %p95
    %p97 = scmp.ne.s32.totalorder %s89, %s92
    %p98 = scmp.eq.s32.totalorder %s11, 0
    %p99 = por %p97, %p98
    %p100 = scmp.ne.s32.totalorder %s89, %s92
    %p101 = scmp.eq.s32.totalorder %s16, 3
    %p102 = por %p100, %p101
    %p103 = scmp.ne.s32.totalorder %s92, %s93
    %p104 = scmp.eq.s32.totalorder %s16, 0
    %p105 = por %p103, %p104
    %p106 = scmp.ne.s32.totalorder %s92, %s93
    %p107 = scmp.eq.s32.totalorder %s17, 3
    %p108 = por %p106, %p107
    %p110 = scmp.ne.s32.totalorder %s93, %s109
    %p111 = scmp.eq.s32.totalorder %s17, 0
    %p112 = por %p110, %p111
    %s114 = sadd.s32 %s113, 1
    %p117 = scmp.eq.s32.totalorder %s11, 3
    %p118 = scmp.ne.s32.totalorder %s113, %s115
    %p119 = scmp.eq.s32.totalorder %s11, 0
    %p120 = por %p118, %p119
    %p121 = scmp.ne.s32.totalorder %s113, %s115
    %p122 = scmp.eq.s32.totalorder %s16, 3
    %p123 = por %p121, %p122
    %p124 = scmp.ne.s32.totalorder %s115, %s116
    %p125 = scmp.eq.s32.totalorder %s16, 0
    %p126 = por %p124, %p125
    %p127 = scmp.ne.s32.totalorder %s115, %s116
    %p128 = scmp.eq.s32.totalorder %s17, 3
    %p129 = por %p127, %p128
    %p131 = scmp.ne.s32.totalorder %s116, %s130
    %p132 = scmp.eq.s32.totalorder %s17, 0
    %p133 = por %p131, %p132
    %s135 = sadd.s32 %s134, 1
    %p138 = scmp.eq.s32.totalorder %s11, 3
    %p139 = scmp.ne.s32.totalorder %s134, %s136
    %p140 = scmp.eq.s32.totalorder %s11, 0
    %p141 = por %p139, %p140
    %p142 = scmp.ne.s32.totalorder %s134, %s136
    %p143 = scmp.eq.s32.totalorder %s16, 3
    %p144 = por %p142, %p143
    %p145 = scmp.ne.s32.totalorder %s136, %s137
    %p146 = scmp.eq.s32.totalorder %s16, 0
    %p147 = por %p145, %p146
    %p148 = scmp.ne.s32.totalorder %s136, %s137
    %p149 = scmp.eq.s32.totalorder %s17, 3
    %p150 = por %p148, %p149
    %p152 = scmp.ne.s32.totalorder %s137, %s151
    %p153 = scmp.eq.s32.totalorder %s17, 0
    %p154 = por %p152, %p153
    %p155 = scmp.le.s32.totalorder 1, %s11
    %p156 = scmp.lt.s32.totalorder %s11, 5
    %p157 = pnand %p155, %p156
    %p158 = pneg %p157
    // Predicated region
    $region9: #{_lambda_.15} parent=5 // pred_check
      _
    $region10: #{_lambda_.15} parent=5 // pred_check_branch
      %160 = sbr.rel (%p157) target = $region12
    $region11: #{_lambda_.15} parent=5 // pred_region
      %s161 = ssub.s32 %s11, 1
    $region12: #{_lambda_.15} parent=5 // pred_fallthru
      _
    %p162 = scmp.lt.s32.totalorder %s11, 4
    // Predicated region
    $region13: #{_lambda_.15} parent=5 // pred_check
      %p163 = pneg %p162
    $region14: #{_lambda_.15} parent=5 // pred_check_branch
      %165 = sbr.rel (%p163) target = $region16
    $region15: #{_lambda_.15} parent=5 // pred_region
      // Predicated region
      $region17: #{_lambda_.15} parent=15 // pred_check
        %p166 = pneg %p45
      $region18: #{_lambda_.15} parent=15 // pred_check_branch
        %168 = sbr.rel (%p166) target = $region20
      $region19: #{_lambda_.15} parent=15 // pred_region
        %s169 = smul.u32 64, %s19
        %p170 = scmp.lt.s32.totalorder %s18, 3
        %s171 = scalar_select %p170, %s18, 3
        %p172 = scmp.lt.s32.totalorder %s169, 63
        %s173 = scalar_select %p172, %s169, 63
        %s174 = smul.addr %s171, 64
        %s175 = sadd.s32 %s173, %s174
        %s176 = smul.addr %s175, 4
        %s177 = scalar_lea.vmem %s0, %s176
        %s178 = smul.u32 64, %s19
      $region20: #{_lambda_.15} parent=15 // pred_fallthru
        _
      // Predicated region
      $region21: #{_lambda_.15} parent=15 // pred_check
        %p179 = pneg %p71
      $region22: #{_lambda_.15} parent=15 // pred_check_branch
        %181 = sbr.rel (%p179) target = $region24
      $region23: #{_lambda_.15} parent=15 // pred_region
        %p182 = scmp.lt.s32.totalorder %s18, 3
        %s183 = scalar_select %p182, %s18, 3
        %s184 = smul.addr %s183, 4
        %s185 = smul.addr %s184, 4
        %s186 = scalar_lea.vmem %s1, %s185
      $region24: #{_lambda_.15} parent=15 // pred_fallthru
        _
    $region16: #{_lambda_.15} parent=5 // pred_fallthru
      _
    %p187 = scmp.le.s32.totalorder 1, %s11
    %p188 = scmp.lt.s32.totalorder %s11, 5
    %p189 = pnand %p187, %p188
    %p190 = pneg %p189
    // Predicated region
    $region25: #{_lambda_.15} parent=5 // pred_check
      _
    $region26: #{_lambda_.15} parent=5 // pred_check_branch
      %192 = sbr.rel (%p189) target = $region28
    $region27: #{_lambda_.15} parent=5 // pred_region
      %s193 = ssub.s32 %s11, 1
      %s194 = smul.u32 64, %s21
      %p195 = scmp.lt.s32.totalorder %s20, 3
      %s196 = scalar_select %p195, %s20, 3
      %p197 = scmp.lt.s32.totalorder %s194, 63
      %s198 = scalar_select %p197, %s194, 63
      %s199 = smul.addr %s196, 64
      %s200 = sadd.s32 %s198, %s199
      %s201 = smul.addr %s200, 4
      %s202 = scalar_lea.vmem %s0, %s201
      %p203 = pneg %p51
      %p204 = pneg %p48
      %p205 = scmp.lt.s32.totalorder %s20, 3
      %s206 = scalar_select %p205, %s20, 3
      %s207 = smul.addr %s206, 4
      %s208 = smul.addr %s207, 4
      %s209 = scalar_lea.vmem %s1, %s208
      %p210 = pneg %p77
      %p211 = pneg %p74
      %p212 = pneg %p105
      %p213 = pneg %p102
      %s214 = smul.u32 64, %s21
      %p215 = scmp.lt.s32.totalorder %s20, 3
      %s216 = scalar_select %p215, %s20, 3
      %p217 = scmp.lt.s32.totalorder %s214, 63
      %s218 = scalar_select %p217, %s214, 63
      %s219 = smul.addr %s216, 64
      %s220 = sadd.s32 %s218, %s219
      %s221 = smul.addr %s220, 4
      %s222 = scalar_lea.vmem %s2, %s221
      %p223 = pneg %p126
      %p224 = pneg %p123
      %p225 = pneg %p147
      %p226 = pneg %p144
      %s227 = smul.u32 64, %s21
      %p228 = scmp.lt.s32.totalorder %s20, 3
      %s229 = scalar_select %p228, %s20, 3
      %p230 = scmp.lt.s32.totalorder %s227, 63
      %s231 = scalar_select %p230, %s227, 63
      %s232 = smul.addr %s229, 64
      %s233 = sadd.s32 %s231, %s232
      %s234 = smul.addr %s233, 4
      %s235 = scalar_lea.vmem %s0, %s234
      %s236 = smul.u32 64, %s21
      %p237 = scmp.lt.s32.totalorder %s20, 3
      %s238 = scalar_select %p237, %s20, 3
      %s239 = smul.addr %s238, 4
      %s240 = smul.addr %s239, 4
      %s241 = scalar_lea.vmem %s1, %s240
      %s242 = smul.u32 64, %s21
      %p243 = scmp.lt.s32.totalorder %s20, 3
      %s244 = scalar_select %p243, %s20, 3
      %p245 = scmp.lt.s32.totalorder %s242, 63
      %s246 = scalar_select %p245, %s242, 63
      %s247 = smul.addr %s244, 64
      %s248 = sadd.s32 %s246, %s247
      %s249 = smul.addr %s248, 4
      %s250 = scalar_lea.vmem %s2, %s249
      %s251 = smul.u32 64, %s21
      %p253 = scmp.eq.s32.totalorder %s20, 0
      %p254 = scmp.eq.s32.totalorder %s21, 0
      %p255 = pnand %p253, %p254
      %p256 = pneg %p255
      // Predicated region
      $region29: #{_lambda_.15} parent=27 // pred_check
        _
      $region30: #{_lambda_.15} parent=27 // pred_check_branch
        %258 = sbr.rel (%p255) target = $region32
      $region31: #{_lambda_.15} parent=27 // pred_region
        %vm259 = vcmask 24576
        %260 = vst.msk [vmem:[%s3] sm:$0x1] %vm259, 0.0
        %261 = vst.msk [vmem:[%s4] sm:$0x1] %vm259, 0.0
      $region32: #{_lambda_.15} parent=27 // pred_fallthru
        _
      %v262 = vld [vmem:[%s235] sm:$0xf]
      %v263 = vld [vmem:[%s235 + $0x4] sm:$0xf]
      %v264 = vld [vmem:[%s235 + $0x8] sm:$0xf]
      %v265 = vld [vmem:[%s235 + $0xc] sm:$0xf]
      %v266 = vld [vmem:[%s235 + $0x10] sm:$0xf]
      %v267 = vld [vmem:[%s235 + $0x14] sm:$0xf]
      %v268 = vld [vmem:[%s235 + $0x18] sm:$0xf]
      %v269 = vld [vmem:[%s235 + $0x1c] sm:$0xf]
      %v270 = vld [vmem:[%s235 + $0x20] sm:$0xf]
      %v271 = vld [vmem:[%s235 + $0x24] sm:$0xf]
      %v272 = vld [vmem:[%s235 + $0x28] sm:$0xf]
      %v273 = vld [vmem:[%s235 + $0x2c] sm:$0xf]
      %v274 = vld [vmem:[%s235 + $0x30] sm:$0xf]
      %v275 = vld [vmem:[%s235 + $0x34] sm:$0xf]
      %v276 = vld [vmem:[%s235 + $0x38] sm:$0xf]
      %v277 = vld [vmem:[%s235 + $0x3c] sm:$0xf]
      %v278 = vld [vmem:[%s235 + $0x40] sm:$0xf]
      %v279 = vld [vmem:[%s235 + $0x44] sm:$0xf]
      %v280 = vld [vmem:[%s235 + $0x48] sm:$0xf]
      %v281 = vld [vmem:[%s235 + $0x4c] sm:$0xf]
      %v282 = vld [vmem:[%s235 + $0x50] sm:$0xf]
      %v283 = vld [vmem:[%s235 + $0x54] sm:$0xf]
      %v284 = vld [vmem:[%s235 + $0x58] sm:$0xf]
      %v285 = vld [vmem:[%s235 + $0x5c] sm:$0xf]
      %v286 = vld [vmem:[%s235 + $0x60] sm:$0xf]
      %v287 = vld [vmem:[%s235 + $0x64] sm:$0xf]
      %v288 = vld [vmem:[%s235 + $0x68] sm:$0xf]
      %v289 = vld [vmem:[%s235 + $0x6c] sm:$0xf]
      %v290 = vld [vmem:[%s235 + $0x70] sm:$0xf]
      %v291 = vld [vmem:[%s235 + $0x74] sm:$0xf]
      %v292 = vld [vmem:[%s235 + $0x78] sm:$0xf]
      %v293 = vld [vmem:[%s235 + $0x7c] sm:$0xf]
      %v294 = vld [vmem:[%s235 + $0x80] sm:$0xf]
      %v295 = vld [vmem:[%s235 + $0x84] sm:$0xf]
      %v296 = vld [vmem:[%s235 + $0x88] sm:$0xf]
      %v297 = vld [vmem:[%s235 + $0x8c] sm:$0xf]
      %v298 = vld [vmem:[%s235 + $0x90] sm:$0xf]
      %v299 = vld [vmem:[%s235 + $0x94] sm:$0xf]
      %v300 = vld [vmem:[%s235 + $0x98] sm:$0xf]
      %v301 = vld [vmem:[%s235 + $0x9c] sm:$0xf]
      %v302 = vld [vmem:[%s235 + $0xa0] sm:$0xf]
      %v303 = vld [vmem:[%s235 + $0xa4] sm:$0xf]
      %v304 = vld [vmem:[%s235 + $0xa8] sm:$0xf]
      %v305 = vld [vmem:[%s235 + $0xac] sm:$0xf]
      %v306 = vld [vmem:[%s235 + $0xb0] sm:$0xf]
      %v307 = vld [vmem:[%s235 + $0xb4] sm:$0xf]
      %v308 = vld [vmem:[%s235 + $0xb8] sm:$0xf]
      %v309 = vld [vmem:[%s235 + $0xbc] sm:$0xf]
      %v310 = vld [vmem:[%s235 + $0xc0] sm:$0xf]
      %v311 = vld [vmem:[%s235 + $0xc4] sm:$0xf]
      %v312 = vld [vmem:[%s235 + $0xc8] sm:$0xf]
      %v313 = vld [vmem:[%s235 + $0xcc] sm:$0xf]
      %v314 = vld [vmem:[%s235 + $0xd0] sm:$0xf]
      %v315 = vld [vmem:[%s235 + $0xd4] sm:$0xf]
      %v316 = vld [vmem:[%s235 + $0xd8] sm:$0xf]
      %v317 = vld [vmem:[%s235 + $0xdc] sm:$0xf]
      %v318 = vld [vmem:[%s235 + $0xe0] sm:$0xf]
      %v319 = vld [vmem:[%s235 + $0xe4] sm:$0xf]
      %v320 = vld [vmem:[%s235 + $0xe8] sm:$0xf]
      %v321 = vld [vmem:[%s235 + $0xec] sm:$0xf]
      %v322 = vld [vmem:[%s235 + $0xf0] sm:$0xf]
      %v323 = vld [vmem:[%s235 + $0xf4] sm:$0xf]
      %v324 = vld [vmem:[%s235 + $0xf8] sm:$0xf]
      %v325 = vld [vmem:[%s235 + $0xfc] sm:$0xf]
      %v326 = vld [vmem:[%s241] sm:$0xf]
      %v327 = vld [vmem:[%s241 + $0x4] sm:$0xf]
      %v328 = vld [vmem:[%s241 + $0x8] sm:$0xf]
      %v329 = vld [vmem:[%s241 + $0xc] sm:$0xf]
      %v394 = vunpack.c.l.b16 %v262
      %v395 = vunpack.c.l.b16 %v263
      %v396 = vunpack.c.l.b16 %v264
      %v397 = vunpack.c.l.b16 %v265
      %v398 = vunpack.c.l.b16 %v266
      %v399 = vunpack.c.l.b16 %v267
      %v400 = vunpack.c.l.b16 %v268
      %v401 = vunpack.c.l.b16 %v269
      %v402 = vunpack.c.l.b16 %v270
      %v403 = vunpack.c.l.b16 %v271
      %v404 = vunpack.c.l.b16 %v272
      %v405 = vunpack.c.l.b16 %v273
      %v406 = vunpack.c.l.b16 %v274
      %v407 = vunpack.c.l.b16 %v275
      %v408 = vunpack.c.l.b16 %v276
      %v409 = vunpack.c.l.b16 %v277
      %v410 = vunpack.c.l.b16 %v278
      %v411 = vunpack.c.l.b16 %v279
      %v412 = vunpack.c.l.b16 %v280
      %v413 = vunpack.c.l.b16 %v281
      %v414 = vunpack.c.l.b16 %v282
      %v415 = vunpack.c.l.b16 %v283
      %v416 = vunpack.c.l.b16 %v284
      %v417 = vunpack.c.l.b16 %v285
      %v418 = vunpack.c.l.b16 %v286
      %v419 = vunpack.c.l.b16 %v287
      %v420 = vunpack.c.l.b16 %v288
      %v421 = vunpack.c.l.b16 %v289
      %v422 = vunpack.c.l.b16 %v290
      %v423 = vunpack.c.l.b16 %v291
      %v424 = vunpack.c.l.b16 %v292
      %v425 = vunpack.c.l.b16 %v293
      %v426 = vunpack.c.l.b16 %v294
      %v427 = vunpack.c.l.b16 %v295
      %v428 = vunpack.c.l.b16 %v296
      %v429 = vunpack.c.l.b16 %v297
      %v430 = vunpack.c.l.b16 %v298
      %v431 = vunpack.c.l.b16 %v299
      %v432 = vunpack.c.l.b16 %v300
      %v433 = vunpack.c.l.b16 %v301
      %v434 = vunpack.c.l.b16 %v302
      %v435 = vunpack.c.l.b16 %v303
      %v436 = vunpack.c.l.b16 %v304
      %v437 = vunpack.c.l.b16 %v305
      %v438 = vunpack.c.l.b16 %v306
      %v439 = vunpack.c.l.b16 %v307
      %v440 = vunpack.c.l.b16 %v308
      %v441 = vunpack.c.l.b16 %v309
      %v442 = vunpack.c.l.b16 %v310
      %v443 = vunpack.c.l.b16 %v311
      %v444 = vunpack.c.l.b16 %v312
      %v445 = vunpack.c.l.b16 %v313
      %v446 = vunpack.c.l.b16 %v314
      %v447 = vunpack.c.l.b16 %v315
      %v448 = vunpack.c.l.b16 %v316
      %v449 = vunpack.c.l.b16 %v317
      %v450 = vunpack.c.l.b16 %v318
      %v451 = vunpack.c.l.b16 %v319
      %v452 = vunpack.c.l.b16 %v320
      %v453 = vunpack.c.l.b16 %v321
      %v454 = vunpack.c.l.b16 %v322
      %v455 = vunpack.c.l.b16 %v323
      %v456 = vunpack.c.l.b16 %v324
      %v457 = vunpack.c.l.b16 %v325
      %v458 = vpack.c.b16 %v395, %v394
      %v459 = vpack.c.b16 %v397, %v396
      %v460 = vpack.c.b16 %v399, %v398
      %v461 = vpack.c.b16 %v401, %v400
      %v462 = vpack.c.b16 %v403, %v402
      %v463 = vpack.c.b16 %v405, %v404
      %v464 = vpack.c.b16 %v407, %v406
      %v465 = vpack.c.b16 %v409, %v408
      %v466 = vpack.c.b16 %v411, %v410
      %v467 = vpack.c.b16 %v413, %v412
      %v468 = vpack.c.b16 %v415, %v414
      %v469 = vpack.c.b16 %v417, %v416
      %v470 = vpack.c.b16 %v419, %v418
      %v471 = vpack.c.b16 %v421, %v420
      %v472 = vpack.c.b16 %v423, %v422
      %v473 = vpack.c.b16 %v425, %v424
      %v474 = vpack.c.b16 %v427, %v426
      %v475 = vpack.c.b16 %v429, %v428
      %v476 = vpack.c.b16 %v431, %v430
      %v477 = vpack.c.b16 %v433, %v432
      %v478 = vpack.c.b16 %v435, %v434
      %v479 = vpack.c.b16 %v437, %v436
      %v480 = vpack.c.b16 %v439, %v438
      %v481 = vpack.c.b16 %v441, %v440
      %v482 = vpack.c.b16 %v443, %v442
      %v483 = vpack.c.b16 %v445, %v444
      %v484 = vpack.c.b16 %v447, %v446
      %v485 = vpack.c.b16 %v449, %v448
      %v486 = vpack.c.b16 %v451, %v450
      %v487 = vpack.c.b16 %v453, %v452
      %v488 = vpack.c.b16 %v455, %v454
      %v489 = vpack.c.b16 %v457, %v456
      %v494 = vunpack.c.l.b16 %v326
      %v495 = vunpack.c.l.b16 %v327
      %v496 = vunpack.c.l.b16 %v328
      %v497 = vunpack.c.l.b16 %v329
      %v498 = vpack.c.b16 %v495, %v494
      %v499 = vpack.c.b16 %v497, %v496
      %vm502 = vcmask 261120
      %v504 = vsel %vm502, %v458, 0
      %v507 = vsel %vm502, %v459, 0
      %v510 = vsel %vm502, %v460, 0
      %v513 = vsel %vm502, %v461, 0
      %v516 = vsel %vm502, %v462, 0
      %v519 = vsel %vm502, %v463, 0
      %v522 = vsel %vm502, %v464, 0
      %v525 = vsel %vm502, %v465, 0
      %v528 = vsel %vm502, %v466, 0
      %v531 = vsel %vm502, %v467, 0
      %v534 = vsel %vm502, %v468, 0
      %v537 = vsel %vm502, %v469, 0
      %v540 = vsel %vm502, %v470, 0
      %v543 = vsel %vm502, %v471, 0
      %v546 = vsel %vm502, %v472, 0
      %v549 = vsel %vm502, %v473, 0
      %v552 = vsel %vm502, %v474, 0
      %v555 = vsel %vm502, %v475, 0
      %v558 = vsel %vm502, %v476, 0
      %v561 = vsel %vm502, %v477, 0
      %v564 = vsel %vm502, %v478, 0
      %v567 = vsel %vm502, %v479, 0
      %v570 = vsel %vm502, %v480, 0
      %v573 = vsel %vm502, %v481, 0
      %v576 = vsel %vm502, %v482, 0
      %v579 = vsel %vm502, %v483, 0
      %v582 = vsel %vm502, %v484, 0
      %v585 = vsel %vm502, %v485, 0
      %v588 = vsel %vm502, %v486, 0
      %v591 = vsel %vm502, %v487, 0
      %v594 = vsel %vm502, %v488, 0
      %v597 = vsel %vm502, %v489, 0
      %599 = vmatprep.subr.bf16.mxu0 0
      %600 = vmatpush1.bf16.msra.mxu0 0
      %601 = vmatprep.subr.bf16.mxu0 0
      %602 = vmatpush1.bf16.msra.mxu0 0
      %603 = vmatprep.subr.bf16.mxu0 0
      %604 = vmatpush1.bf16.msra.mxu0 0
      %605 = vmatprep.subr.bf16.mxu0 0
      %606 = vmatpush1.bf16.msra.mxu0 0
      %607 = vmatprep.subr.bf16.mxu0 0
      %608 = vmatpush1.bf16.msra.mxu0 0
      %609 = vmatprep.subr.bf16.mxu0 0
      %610 = vmatpush1.bf16.msra.mxu0 0
      %611 = vmatprep.subr.bf16.mxu0 0
      %612 = vmatpush1.bf16.msra.mxu0 %v499
      %613 = vmatprep.subr.bf16.mxu0 0
      %614 = vmatpush1.bf16.msra.mxu0 %v498
      %615 = vmatprep.subr.bf16.mxu0 0
      %616 = vmatpush2.bf16.msra.mxu0 0
      %617 = vmatprep.subr.bf16.mxu0 0
      %618 = vmatpush2.bf16.msra.mxu0 0
      %619 = vmatprep.subr.bf16.mxu0 0
      %620 = vmatpush2.bf16.msra.mxu0 0
      %621 = vmatprep.subr.bf16.mxu0 0
      %622 = vmatpush2.bf16.msra.mxu0 0
      %623 = vmatprep.subr.bf16.mxu0 0
      %624 = vmatpush2.bf16.msra.mxu0 0
      %625 = vmatprep.subr.bf16.mxu0 0
      %626 = vmatpush2.bf16.msra.mxu0 0
      %627 = vmatprep.subr.bf16.mxu0 0
      %628 = vmatpush2.bf16.msra.mxu0 0
      %629 = vmatprep.subr.bf16.mxu0 0
      %630 = vmatpush2.bf16.msra.mxu0 0
      %631 = vmatprep.mubr.bf16.mxu0 0
      %632 = vmatmul.mubr.bf16.gmra.mxu0 %v504
      %v633 = vpop.f32.mrf.mxu0
      %v634 = vadd.f32 0.0, %v633
      %v635 = vpop.f32.mrf.mxu0
      %v636 = vpop.f32.mrf.mxu0
      %v637 = vadd.f32 0.0, %v636
      %v638 = vpop.f32.mrf.mxu0
      %639 = vmatprep.mubr.bf16.mxu0 0
      %640 = vmatmul.mubr.bf16.gmra.mxu0 %v507
      %v641 = vpop.f32.mrf.mxu0
      %v642 = vadd.f32 0.0, %v641
      %v643 = vpop.f32.mrf.mxu0
      %v644 = vpop.f32.mrf.mxu0
      %v645 = vadd.f32 0.0, %v644
      %v646 = vpop.f32.mrf.mxu0
      %647 = vmatprep.mubr.bf16.mxu0 0
      %648 = vmatmul.mubr.bf16.gmra.mxu0 %v510
      %v649 = vpop.f32.mrf.mxu0
      %v650 = vadd.f32 0.0, %v649
      %v651 = vpop.f32.mrf.mxu0
      %v652 = vpop.f32.mrf.mxu0
      %v653 = vadd.f32 0.0, %v652
      %v654 = vpop.f32.mrf.mxu0
      %655 = vmatprep.mubr.bf16.mxu0 0
      %656 = vmatmul.mubr.bf16.gmra.mxu0 %v513
      %v657 = vpop.f32.mrf.mxu0
      %v658 = vadd.f32 0.0, %v657
      %v659 = vpop.f32.mrf.mxu0
      %v660 = vpop.f32.mrf.mxu0
      %v661 = vadd.f32 0.0, %v660
      %v662 = vpop.f32.mrf.mxu0
      %663 = vmatprep.mubr.bf16.mxu0 0
      %664 = vmatmul.mubr.bf16.gmra.mxu0 %v516
      %v665 = vpop.f32.mrf.mxu0
      %v666 = vadd.f32 0.0, %v665
      %v667 = vpop.f32.mrf.mxu0
      %v668 = vpop.f32.mrf.mxu0
      %v669 = vadd.f32 0.0, %v668
      %v670 = vpop.f32.mrf.mxu0
      %671 = vmatprep.mubr.bf16.mxu0 0
      %672 = vmatmul.mubr.bf16.gmra.mxu0 %v519
      %v673 = vpop.f32.mrf.mxu0
      %v674 = vadd.f32 0.0, %v673
      %v675 = vpop.f32.mrf.mxu0
      %v676 = vpop.f32.mrf.mxu0
      %v677 = vadd.f32 0.0, %v676
      %v678 = vpop.f32.mrf.mxu0
      %679 = vmatprep.mubr.bf16.mxu0 0
      %680 = vmatmul.mubr.bf16.gmra.mxu0 %v522
      %v681 = vpop.f32.mrf.mxu0
      %v682 = vadd.f32 0.0, %v681
      %v683 = vpop.f32.mrf.mxu0
      %v684 = vpop.f32.mrf.mxu0
      %v685 = vadd.f32 0.0, %v684
      %v686 = vpop.f32.mrf.mxu0
      %687 = vmatprep.mubr.bf16.mxu0 0
      %688 = vmatmul.mubr.bf16.gmra.mxu0 %v525
      %v689 = vpop.f32.mrf.mxu0
      %v690 = vadd.f32 0.0, %v689
      %v691 = vpop.f32.mrf.mxu0
      %v692 = vpop.f32.mrf.mxu0
      %v693 = vadd.f32 0.0, %v692
      %v694 = vpop.f32.mrf.mxu0
      %695 = vmatprep.mubr.bf16.mxu0 0
      %696 = vmatmul.mubr.bf16.gmra.mxu0 %v528
      %v697 = vpop.f32.mrf.mxu0
      %v698 = vadd.f32 0.0, %v697
      %v699 = vpop.f32.mrf.mxu0
      %v700 = vpop.f32.mrf.mxu0
      %v701 = vadd.f32 0.0, %v700
      %v702 = vpop.f32.mrf.mxu0
      %703 = vmatprep.mubr.bf16.mxu0 0
      %704 = vmatmul.mubr.bf16.gmra.mxu0 %v531
      %v705 = vpop.f32.mrf.mxu0
      %v706 = vadd.f32 0.0, %v705
      %v707 = vpop.f32.mrf.mxu0
      %v708 = vpop.f32.mrf.mxu0
      %v709 = vadd.f32 0.0, %v708
      %v710 = vpop.f32.mrf.mxu0
      %711 = vmatprep.mubr.bf16.mxu0 0
      %712 = vmatmul.mubr.bf16.gmra.mxu0 %v534
      %v713 = vpop.f32.mrf.mxu0
      %v714 = vadd.f32 0.0, %v713
      %v715 = vpop.f32.mrf.mxu0
      %v716 = vpop.f32.mrf.mxu0
      %v717 = vadd.f32 0.0, %v716
      %v718 = vpop.f32.mrf.mxu0
      %719 = vmatprep.mubr.bf16.mxu0 0
      %720 = vmatmul.mubr.bf16.gmra.mxu0 %v537
      %v721 = vpop.f32.mrf.mxu0
      %v722 = vadd.f32 0.0, %v721
      %v723 = vpop.f32.mrf.mxu0
      %v724 = vpop.f32.mrf.mxu0
      %v725 = vadd.f32 0.0, %v724
      %v726 = vpop.f32.mrf.mxu0
      %727 = vmatprep.mubr.bf16.mxu0 0
      %728 = vmatmul.mubr.bf16.gmra.mxu0 %v540
      %v729 = vpop.f32.mrf.mxu0
      %v730 = vadd.f32 0.0, %v729
      %v731 = vpop.f32.mrf.mxu0
      %v732 = vpop.f32.mrf.mxu0
      %v733 = vadd.f32 0.0, %v732
      %v734 = vpop.f32.mrf.mxu0
      %735 = vmatprep.mubr.bf16.mxu0 0
      %736 = vmatmul.mubr.bf16.gmra.mxu0 %v543
      %v737 = vpop.f32.mrf.mxu0
      %v738 = vadd.f32 0.0, %v737
      %v739 = vpop.f32.mrf.mxu0
      %v740 = vpop.f32.mrf.mxu0
      %v741 = vadd.f32 0.0, %v740
      %v742 = vpop.f32.mrf.mxu0
      %743 = vmatprep.mubr.bf16.mxu0 0
      %744 = vmatmul.mubr.bf16.gmra.mxu0 %v546
      %v745 = vpop.f32.mrf.mxu0
      %v746 = vadd.f32 0.0, %v745
      %v747 = vpop.f32.mrf.mxu0
      %v748 = vpop.f32.mrf.mxu0
      %v749 = vadd.f32 0.0, %v748
      %v750 = vpop.f32.mrf.mxu0
      %751 = vmatprep.mubr.bf16.mxu0 0
      %752 = vmatmul.mubr.bf16.gmra.mxu0 %v549
      %v753 = vpop.f32.mrf.mxu0
      %v754 = vadd.f32 0.0, %v753
      %v755 = vpop.f32.mrf.mxu0
      %v756 = vpop.f32.mrf.mxu0
      %v757 = vadd.f32 0.0, %v756
      %v758 = vpop.f32.mrf.mxu0
      %759 = vmatprep.mubr.bf16.mxu0 0
      %760 = vmatmul.mubr.bf16.gmra.mxu0 %v552
      %v761 = vpop.f32.mrf.mxu0
      %v762 = vadd.f32 0.0, %v761
      %v763 = vpop.f32.mrf.mxu0
      %v764 = vpop.f32.mrf.mxu0
      %v765 = vadd.f32 0.0, %v764
      %v766 = vpop.f32.mrf.mxu0
      %767 = vmatprep.mubr.bf16.mxu0 0
      %768 = vmatmul.mubr.bf16.gmra.mxu0 %v555
      %v769 = vpop.f32.mrf.mxu0
      %v770 = vadd.f32 0.0, %v769
      %v771 = vpop.f32.mrf.mxu0
      %v772 = vpop.f32.mrf.mxu0
      %v773 = vadd.f32 0.0, %v772
      %v774 = vpop.f32.mrf.mxu0
      %775 = vmatprep.mubr.bf16.mxu0 0
      %776 = vmatmul.mubr.bf16.gmra.mxu0 %v558
      %v777 = vpop.f32.mrf.mxu0
      %v778 = vadd.f32 0.0, %v777
      %v779 = vpop.f32.mrf.mxu0
      %v780 = vpop.f32.mrf.mxu0
      %v781 = vadd.f32 0.0, %v780
      %v782 = vpop.f32.mrf.mxu0
      %783 = vmatprep.mubr.bf16.mxu0 0
      %784 = vmatmul.mubr.bf16.gmra.mxu0 %v561
      %v785 = vpop.f32.mrf.mxu0
      %v786 = vadd.f32 0.0, %v785
      %v787 = vpop.f32.mrf.mxu0
      %v788 = vpop.f32.mrf.mxu0
      %v789 = vadd.f32 0.0, %v788
      %v790 = vpop.f32.mrf.mxu0
      %791 = vmatprep.mubr.bf16.mxu0 0
      %792 = vmatmul.mubr.bf16.gmra.mxu0 %v564
      %v793 = vpop.f32.mrf.mxu0
      %v794 = vadd.f32 0.0, %v793
      %v795 = vpop.f32.mrf.mxu0
      %v796 = vpop.f32.mrf.mxu0
      %v797 = vadd.f32 0.0, %v796
      %v798 = vpop.f32.mrf.mxu0
      %799 = vmatprep.mubr.bf16.mxu0 0
      %800 = vmatmul.mubr.bf16.gmra.mxu0 %v567
      %v801 = vpop.f32.mrf.mxu0
      %v802 = vadd.f32 0.0, %v801
      %v803 = vpop.f32.mrf.mxu0
      %v804 = vpop.f32.mrf.mxu0
      %v805 = vadd.f32 0.0, %v804
      %v806 = vpop.f32.mrf.mxu0
      %807 = vmatprep.mubr.bf16.mxu0 0
      %808 = vmatmul.mubr.bf16.gmra.mxu0 %v570
      %v809 = vpop.f32.mrf.mxu0
      %v810 = vadd.f32 0.0, %v809
      %v811 = vpop.f32.mrf.mxu0
      %v812 = vpop.f32.mrf.mxu0
      %v813 = vadd.f32 0.0, %v812
      %v814 = vpop.f32.mrf.mxu0
      %815 = vmatprep.mubr.bf16.mxu0 0
      %816 = vmatmul.mubr.bf16.gmra.mxu0 %v573
      %v817 = vpop.f32.mrf.mxu0
      %v818 = vadd.f32 0.0, %v817
      %v819 = vpop.f32.mrf.mxu0
      %v820 = vpop.f32.mrf.mxu0
      %v821 = vadd.f32 0.0, %v820
      %v822 = vpop.f32.mrf.mxu0
      %823 = vmatprep.mubr.bf16.mxu0 0
      %824 = vmatmul.mubr.bf16.gmra.mxu0 %v576
      %v825 = vpop.f32.mrf.mxu0
      %v826 = vadd.f32 0.0, %v825
      %v827 = vpop.f32.mrf.mxu0
      %v828 = vpop.f32.mrf.mxu0
      %v829 = vadd.f32 0.0, %v828
      %v830 = vpop.f32.mrf.mxu0
      %831 = vmatprep.mubr.bf16.mxu0 0
      %832 = vmatmul.mubr.bf16.gmra.mxu0 %v579
      %v833 = vpop.f32.mrf.mxu0
      %v834 = vadd.f32 0.0, %v833
      %v835 = vpop.f32.mrf.mxu0
      %v836 = vpop.f32.mrf.mxu0
      %v837 = vadd.f32 0.0, %v836
      %v838 = vpop.f32.mrf.mxu0
      %839 = vmatprep.mubr.bf16.mxu0 0
      %840 = vmatmul.mubr.bf16.gmra.mxu0 %v582
      %v841 = vpop.f32.mrf.mxu0
      %v842 = vadd.f32 0.0, %v841
      %v843 = vpop.f32.mrf.mxu0
      %v844 = vpop.f32.mrf.mxu0
      %v845 = vadd.f32 0.0, %v844
      %v846 = vpop.f32.mrf.mxu0
      %847 = vmatprep.mubr.bf16.mxu0 0
      %848 = vmatmul.mubr.bf16.gmra.mxu0 %v585
      %v849 = vpop.f32.mrf.mxu0
      %v850 = vadd.f32 0.0, %v849
      %v851 = vpop.f32.mrf.mxu0
      %v852 = vpop.f32.mrf.mxu0
      %v853 = vadd.f32 0.0, %v852
      %v854 = vpop.f32.mrf.mxu0
      %855 = vmatprep.mubr.bf16.mxu0 0
      %856 = vmatmul.mubr.bf16.gmra.mxu0 %v588
      %v857 = vpop.f32.mrf.mxu0
      %v858 = vadd.f32 0.0, %v857
      %v859 = vpop.f32.mrf.mxu0
      %v860 = vpop.f32.mrf.mxu0
      %v861 = vadd.f32 0.0, %v860
      %v862 = vpop.f32.mrf.mxu0
      %863 = vmatprep.mubr.bf16.mxu0 0
      %864 = vmatmul.mubr.bf16.gmra.mxu0 %v591
      %v865 = vpop.f32.mrf.mxu0
      %v866 = vadd.f32 0.0, %v865
      %v867 = vpop.f32.mrf.mxu0
      %v868 = vpop.f32.mrf.mxu0
      %v869 = vadd.f32 0.0, %v868
      %v870 = vpop.f32.mrf.mxu0
      %871 = vmatprep.mubr.bf16.mxu0 0
      %872 = vmatmul.mubr.bf16.gmra.mxu0 %v594
      %v873 = vpop.f32.mrf.mxu0
      %v874 = vadd.f32 0.0, %v873
      %v875 = vpop.f32.mrf.mxu0
      %v876 = vpop.f32.mrf.mxu0
      %v877 = vadd.f32 0.0, %v876
      %v878 = vpop.f32.mrf.mxu0
      %879 = vmatprep.mubr.bf16.mxu0 0
      %880 = vmatmul.mubr.bf16.gmra.mxu0 %v597
      %v881 = vpop.f32.mrf.mxu0
      %v882 = vadd.f32 0.0, %v881
      %v883 = vpop.f32.mrf.mxu0
      %v884 = vpop.f32.mrf.mxu0
      %v885 = vadd.f32 0.0, %v884
      %v886 = vpop.f32.mrf.mxu0
      %887 = vdwg.mxu0
      %v888 = vpack.c.bf16 %v637, %v634
      %v889 = vpack.c.bf16 %v645, %v642
      %v890 = vpack.c.bf16 %v653, %v650
      %v891 = vpack.c.bf16 %v661, %v658
      %v892 = vpack.c.bf16 %v669, %v666
      %v893 = vpack.c.bf16 %v677, %v674
      %v894 = vpack.c.bf16 %v685, %v682
      %v895 = vpack.c.bf16 %v693, %v690
      %v896 = vpack.c.bf16 %v701, %v698
      %v897 = vpack.c.bf16 %v709, %v706
      %v898 = vpack.c.bf16 %v717, %v714
      %v899 = vpack.c.bf16 %v725, %v722
      %v900 = vpack.c.bf16 %v733, %v730
      %v901 = vpack.c.bf16 %v741, %v738
      %v902 = vpack.c.bf16 %v749, %v746
      %v903 = vpack.c.bf16 %v757, %v754
      %v904 = vpack.c.bf16 %v765, %v762
      %v905 = vpack.c.bf16 %v773, %v770
      %v906 = vpack.c.bf16 %v781, %v778
      %v907 = vpack.c.bf16 %v789, %v786
      %v908 = vpack.c.bf16 %v797, %v794
      %v909 = vpack.c.bf16 %v805, %v802
      %v910 = vpack.c.bf16 %v813, %v810
      %v911 = vpack.c.bf16 %v821, %v818
      %v912 = vpack.c.bf16 %v829, %v826
      %v913 = vpack.c.bf16 %v837, %v834
      %v914 = vpack.c.bf16 %v845, %v842
      %v915 = vpack.c.bf16 %v853, %v850
      %v916 = vpack.c.bf16 %v861, %v858
      %v917 = vpack.c.bf16 %v869, %v866
      %v918 = vpack.c.bf16 %v877, %v874
      %v919 = vpack.c.bf16 %v885, %v882
      %v952 = vunpack.c.l.b16 %v888
      %v953 = vunpack.c.h.b16 %v888
      %v954 = vunpack.c.l.b16 %v889
      %v955 = vunpack.c.h.b16 %v889
      %v956 = vunpack.c.l.b16 %v890
      %v957 = vunpack.c.h.b16 %v890
      %v958 = vunpack.c.l.b16 %v891
      %v959 = vunpack.c.h.b16 %v891
      %v960 = vunpack.c.l.b16 %v892
      %v961 = vunpack.c.h.b16 %v892
      %v962 = vunpack.c.l.b16 %v893
      %v963 = vunpack.c.h.b16 %v893
      %v964 = vunpack.c.l.b16 %v894
      %v965 = vunpack.c.h.b16 %v894
      %v966 = vunpack.c.l.b16 %v895
      %v967 = vunpack.c.h.b16 %v895
      %v968 = vunpack.c.l.b16 %v896
      %v969 = vunpack.c.h.b16 %v896
      %v970 = vunpack.c.l.b16 %v897
      %v971 = vunpack.c.h.b16 %v897
      %v972 = vunpack.c.l.b16 %v898
      %v973 = vunpack.c.h.b16 %v898
      %v974 = vunpack.c.l.b16 %v899
      %v975 = vunpack.c.h.b16 %v899
      %v976 = vunpack.c.l.b16 %v900
      %v977 = vunpack.c.h.b16 %v900
      %v978 = vunpack.c.l.b16 %v901
      %v979 = vunpack.c.h.b16 %v901
      %v980 = vunpack.c.l.b16 %v902
      %v981 = vunpack.c.h.b16 %v902
      %v982 = vunpack.c.l.b16 %v903
      %v983 = vunpack.c.h.b16 %v903
      %v984 = vunpack.c.l.b16 %v904
      %v985 = vunpack.c.h.b16 %v904
      %v986 = vunpack.c.l.b16 %v905
      %v987 = vunpack.c.h.b16 %v905
      %v988 = vunpack.c.l.b16 %v906
      %v989 = vunpack.c.h.b16 %v906
      %v990 = vunpack.c.l.b16 %v907
      %v991 = vunpack.c.h.b16 %v907
      %v992 = vunpack.c.l.b16 %v908
      %v993 = vunpack.c.h.b16 %v908
      %v994 = vunpack.c.l.b16 %v909
      %v995 = vunpack.c.h.b16 %v909
      %v996 = vunpack.c.l.b16 %v910
      %v997 = vunpack.c.h.b16 %v910
      %v998 = vunpack.c.l.b16 %v911
      %v999 = vunpack.c.h.b16 %v911
      %v1000 = vunpack.c.l.b16 %v912
      %v1001 = vunpack.c.h.b16 %v912
      %v1002 = vunpack.c.l.b16 %v913
      %v1003 = vunpack.c.h.b16 %v913
      %v1004 = vunpack.c.l.b16 %v914
      %v1005 = vunpack.c.h.b16 %v914
      %v1006 = vunpack.c.l.b16 %v915
      %v1007 = vunpack.c.h.b16 %v915
      %v1008 = vunpack.c.l.b16 %v916
      %v1009 = vunpack.c.h.b16 %v916
      %v1010 = vunpack.c.l.b16 %v917
      %v1011 = vunpack.c.h.b16 %v917
      %v1012 = vunpack.c.l.b16 %v918
      %v1013 = vunpack.c.h.b16 %v918
      %v1014 = vunpack.c.l.b16 %v919
      %v1015 = vunpack.c.h.b16 %v919
      %v1016 = vpack.c.b16 %v952, %v952
      %v1017 = vpack.c.b16 %v953, %v953
      %v1018 = vpack.c.b16 %v954, %v954
      %v1019 = vpack.c.b16 %v955, %v955
      %v1020 = vpack.c.b16 %v956, %v956
      %v1021 = vpack.c.b16 %v957, %v957
      %v1022 = vpack.c.b16 %v958, %v958
      %v1023 = vpack.c.b16 %v959, %v959
      %v1024 = vpack.c.b16 %v960, %v960
      %v1025 = vpack.c.b16 %v961, %v961
      %v1026 = vpack.c.b16 %v962, %v962
      %v1027 = vpack.c.b16 %v963, %v963
      %v1028 = vpack.c.b16 %v964, %v964
      %v1029 = vpack.c.b16 %v965, %v965
      %v1030 = vpack.c.b16 %v966, %v966
      %v1031 = vpack.c.b16 %v967, %v967
      %v1032 = vpack.c.b16 %v968, %v968
      %v1033 = vpack.c.b16 %v969, %v969
      %v1034 = vpack.c.b16 %v970, %v970
      %v1035 = vpack.c.b16 %v971, %v971
      %v1036 = vpack.c.b16 %v972, %v972
      %v1037 = vpack.c.b16 %v973, %v973
      %v1038 = vpack.c.b16 %v974, %v974
      %v1039 = vpack.c.b16 %v975, %v975
      %v1040 = vpack.c.b16 %v976, %v976
      %v1041 = vpack.c.b16 %v977, %v977
      %v1042 = vpack.c.b16 %v978, %v978
      %v1043 = vpack.c.b16 %v979, %v979
      %v1044 = vpack.c.b16 %v980, %v980
      %v1045 = vpack.c.b16 %v981, %v981
      %v1046 = vpack.c.b16 %v982, %v982
      %v1047 = vpack.c.b16 %v983, %v983
      %v1048 = vpack.c.b16 %v984, %v984
      %v1049 = vpack.c.b16 %v985, %v985
      %v1050 = vpack.c.b16 %v986, %v986
      %v1051 = vpack.c.b16 %v987, %v987
      %v1052 = vpack.c.b16 %v988, %v988
      %v1053 = vpack.c.b16 %v989, %v989
      %v1054 = vpack.c.b16 %v990, %v990
      %v1055 = vpack.c.b16 %v991, %v991
      %v1056 = vpack.c.b16 %v992, %v992
      %v1057 = vpack.c.b16 %v993, %v993
      %v1058 = vpack.c.b16 %v994, %v994
      %v1059 = vpack.c.b16 %v995, %v995
      %v1060 = vpack.c.b16 %v996, %v996
      %v1061 = vpack.c.b16 %v997, %v997
      %v1062 = vpack.c.b16 %v998, %v998
      %v1063 = vpack.c.b16 %v999, %v999
      %v1064 = vpack.c.b16 %v1000, %v1000
      %v1065 = vpack.c.b16 %v1001, %v1001
      %v1066 = vpack.c.b16 %v1002, %v1002
      %v1067 = vpack.c.b16 %v1003, %v1003
      %v1068 = vpack.c.b16 %v1004, %v1004
      %v1069 = vpack.c.b16 %v1005, %v1005
      %v1070 = vpack.c.b16 %v1006, %v1006
      %v1071 = vpack.c.b16 %v1007, %v1007
      %v1072 = vpack.c.b16 %v1008, %v1008
      %v1073 = vpack.c.b16 %v1009, %v1009
      %v1074 = vpack.c.b16 %v1010, %v1010
      %v1075 = vpack.c.b16 %v1011, %v1011
      %v1076 = vpack.c.b16 %v1012, %v1012
      %v1077 = vpack.c.b16 %v1013, %v1013
      %v1078 = vpack.c.b16 %v1014, %v1014
      %v1079 = vpack.c.b16 %v1015, %v1015
      %vm1144 = vcmask 27648
      %1145 = vst.msk [vmem:[%s250] sm:$0xf] %vm1144, %v1016
      %1146 = vst.msk [vmem:[%s250 + $0x4] sm:$0xf] %vm1144, %v1017
      %1147 = vst.msk [vmem:[%s250 + $0x8] sm:$0xf] %vm1144, %v1018
      %1148 = vst.msk [vmem:[%s250 + $0xc] sm:$0xf] %vm1144, %v1019
      %1149 = vst.msk [vmem:[%s250 + $0x10] sm:$0xf] %vm1144, %v1020
      %1150 = vst.msk [vmem:[%s250 + $0x14] sm:$0xf] %vm1144, %v1021
      %1151 = vst.msk [vmem:[%s250 + $0x18] sm:$0xf] %vm1144, %v1022
      %1152 = vst.msk [vmem:[%s250 + $0x1c] sm:$0xf] %vm1144, %v1023
      %1153 = vst.msk [vmem:[%s250 + $0x20] sm:$0xf] %vm1144, %v1024
      %1154 = vst.msk [vmem:[%s250 + $0x24] sm:$0xf] %vm1144, %v1025
      %1155 = vst.msk [vmem:[%s250 + $0x28] sm:$0xf] %vm1144, %v1026
      %1156 = vst.msk [vmem:[%s250 + $0x2c] sm:$0xf] %vm1144, %v1027
      %1157 = vst.msk [vmem:[%s250 + $0x30] sm:$0xf] %vm1144, %v1028
      %1158 = vst.msk [vmem:[%s250 + $0x34] sm:$0xf] %vm1144, %v1029
      %1159 = vst.msk [vmem:[%s250 + $0x38] sm:$0xf] %vm1144, %v1030
      %1160 = vst.msk [vmem:[%s250 + $0x3c] sm:$0xf] %vm1144, %v1031
      %1161 = vst.msk [vmem:[%s250 + $0x40] sm:$0xf] %vm1144, %v1032
      %1162 = vst.msk [vmem:[%s250 + $0x44] sm:$0xf] %vm1144, %v1033
      %1163 = vst.msk [vmem:[%s250 + $0x48] sm:$0xf] %vm1144, %v1034
      %1164 = vst.msk [vmem:[%s250 + $0x4c] sm:$0xf] %vm1144, %v1035
      %1165 = vst.msk [vmem:[%s250 + $0x50] sm:$0xf] %vm1144, %v1036
      %1166 = vst.msk [vmem:[%s250 + $0x54] sm:$0xf] %vm1144, %v1037
      %1167 = vst.msk [vmem:[%s250 + $0x58] sm:$0xf] %vm1144, %v1038
      %1168 = vst.msk [vmem:[%s250 + $0x5c] sm:$0xf] %vm1144, %v1039
      %1169 = vst.msk [vmem:[%s250 + $0x60] sm:$0xf] %vm1144, %v1040
      %1170 = vst.msk [vmem:[%s250 + $0x64] sm:$0xf] %vm1144, %v1041
      %1171 = vst.msk [vmem:[%s250 + $0x68] sm:$0xf] %vm1144, %v1042
      %1172 = vst.msk [vmem:[%s250 + $0x6c] sm:$0xf] %vm1144, %v1043
      %1173 = vst.msk [vmem:[%s250 + $0x70] sm:$0xf] %vm1144, %v1044
      %1174 = vst.msk [vmem:[%s250 + $0x74] sm:$0xf] %vm1144, %v1045
      %1175 = vst.msk [vmem:[%s250 + $0x78] sm:$0xf] %vm1144, %v1046
      %1176 = vst.msk [vmem:[%s250 + $0x7c] sm:$0xf] %vm1144, %v1047
      %1177 = vst.msk [vmem:[%s250 + $0x80] sm:$0xf] %vm1144, %v1048
      %1178 = vst.msk [vmem:[%s250 + $0x84] sm:$0xf] %vm1144, %v1049
      %1179 = vst.msk [vmem:[%s250 + $0x88] sm:$0xf] %vm1144, %v1050
      %1180 = vst.msk [vmem:[%s250 + $0x8c] sm:$0xf] %vm1144, %v1051
      %1181 = vst.msk [vmem:[%s250 + $0x90] sm:$0xf] %vm1144, %v1052
      %1182 = vst.msk [vmem:[%s250 + $0x94] sm:$0xf] %vm1144, %v1053
      %1183 = vst.msk [vmem:[%s250 + $0x98] sm:$0xf] %vm1144, %v1054
      %1184 = vst.msk [vmem:[%s250 + $0x9c] sm:$0xf] %vm1144, %v1055
      %1185 = vst.msk [vmem:[%s250 + $0xa0] sm:$0xf] %vm1144, %v1056
      %1186 = vst.msk [vmem:[%s250 + $0xa4] sm:$0xf] %vm1144, %v1057
      %1187 = vst.msk [vmem:[%s250 + $0xa8] sm:$0xf] %vm1144, %v1058
      %1188 = vst.msk [vmem:[%s250 + $0xac] sm:$0xf] %vm1144, %v1059
      %1189 = vst.msk [vmem:[%s250 + $0xb0] sm:$0xf] %vm1144, %v1060
      %1190 = vst.msk [vmem:[%s250 + $0xb4] sm:$0xf] %vm1144, %v1061
      %1191 = vst.msk [vmem:[%s250 + $0xb8] sm:$0xf] %vm1144, %v1062
      %1192 = vst.msk [vmem:[%s250 + $0xbc] sm:$0xf] %vm1144, %v1063
      %1193 = vst.msk [vmem:[%s250 + $0xc0] sm:$0xf] %vm1144, %v1064
      %1194 = vst.msk [vmem:[%s250 + $0xc4] sm:$0xf] %vm1144, %v1065
      %1195 = vst.msk [vmem:[%s250 + $0xc8] sm:$0xf] %vm1144, %v1066
      %1196 = vst.msk [vmem:[%s250 + $0xcc] sm:$0xf] %vm1144, %v1067
      %1197 = vst.msk [vmem:[%s250 + $0xd0] sm:$0xf] %vm1144, %v1068
      %1198 = vst.msk [vmem:[%s250 + $0xd4] sm:$0xf] %vm1144, %v1069
      %1199 = vst.msk [vmem:[%s250 + $0xd8] sm:$0xf] %vm1144, %v1070
      %1200 = vst.msk [vmem:[%s250 + $0xdc] sm:$0xf] %vm1144, %v1071
      %1201 = vst.msk [vmem:[%s250 + $0xe0] sm:$0xf] %vm1144, %v1072
      %1202 = vst.msk [vmem:[%s250 + $0xe4] sm:$0xf] %vm1144, %v1073
      %1203 = vst.msk [vmem:[%s250 + $0xe8] sm:$0xf] %vm1144, %v1074
      %1204 = vst.msk [vmem:[%s250 + $0xec] sm:$0xf] %vm1144, %v1075
      %1205 = vst.msk [vmem:[%s250 + $0xf0] sm:$0xf] %vm1144, %v1076
      %1206 = vst.msk [vmem:[%s250 + $0xf4] sm:$0xf] %vm1144, %v1077
      %1207 = vst.msk [vmem:[%s250 + $0xf8] sm:$0xf] %vm1144, %v1078
      %1208 = vst.msk [vmem:[%s250 + $0xfc] sm:$0xf] %vm1144, %v1079
      %v1209 = vld [vmem:[%s3] sm:$0x1]
      %vm1210 = vcmask 31744
      %v1211 = vsel %vm1210, %v634, 0.0
      %v1212 = vsel %vm1210, %v637, 0.0
      %v1213 = vadd.f32 %v1211, %v1212
      %v1214 = vsel %vm1210, %v642, 0.0
      %v1215 = vadd.f32 %v1213, %v1214
      %v1216 = vsel %vm1210, %v645, 0.0
      %v1217 = vadd.f32 %v1215, %v1216
      %v1218 = vsel %vm1210, %v650, 0.0
      %v1219 = vadd.f32 %v1217, %v1218
      %v1220 = vsel %vm1210, %v653, 0.0
      %v1221 = vadd.f32 %v1219, %v1220
      %v1222 = vsel %vm1210, %v658, 0.0
      %v1223 = vadd.f32 %v1221, %v1222
      %v1224 = vsel %vm1210, %v661, 0.0
      %v1225 = vadd.f32 %v1223, %v1224
      %v1226 = vsel %vm1210, %v666, 0.0
      %v1227 = vadd.f32 %v1225, %v1226
      %v1228 = vsel %vm1210, %v669, 0.0
      %v1229 = vadd.f32 %v1227, %v1228
      %v1230 = vsel %vm1210, %v674, 0.0
      %v1231 = vadd.f32 %v1229, %v1230
      %v1232 = vsel %vm1210, %v677, 0.0
      %v1233 = vadd.f32 %v1231, %v1232
      %v1234 = vsel %vm1210, %v682, 0.0
      %v1235 = vadd.f32 %v1233, %v1234
      %v1236 = vsel %vm1210, %v685, 0.0
      %v1237 = vadd.f32 %v1235, %v1236
      %v1238 = vsel %vm1210, %v690, 0.0
      %v1239 = vadd.f32 %v1237, %v1238
      %v1240 = vsel %vm1210, %v693, 0.0
      %v1241 = vadd.f32 %v1239, %v1240
      %v1242 = vsel %vm1210, %v698, 0.0
      %v1243 = vadd.f32 %v1241, %v1242
      %v1244 = vsel %vm1210, %v701, 0.0
      %v1245 = vadd.f32 %v1243, %v1244
      %v1246 = vsel %vm1210, %v706, 0.0
      %v1247 = vadd.f32 %v1245, %v1246
      %v1248 = vsel %vm1210, %v709, 0.0
      %v1249 = vadd.f32 %v1247, %v1248
      %v1250 = vsel %vm1210, %v714, 0.0
      %v1251 = vadd.f32 %v1249, %v1250
      %v1252 = vsel %vm1210, %v717, 0.0
      %v1253 = vadd.f32 %v1251, %v1252
      %v1254 = vsel %vm1210, %v722, 0.0
      %v1255 = vadd.f32 %v1253, %v1254
      %v1256 = vsel %vm1210, %v725, 0.0
      %v1257 = vadd.f32 %v1255, %v1256
      %v1258 = vsel %vm1210, %v730, 0.0
      %v1259 = vadd.f32 %v1257, %v1258
      %v1260 = vsel %vm1210, %v733, 0.0
      %v1261 = vadd.f32 %v1259, %v1260
      %v1262 = vsel %vm1210, %v738, 0.0
      %v1263 = vadd.f32 %v1261, %v1262
      %v1264 = vsel %vm1210, %v741, 0.0
      %v1265 = vadd.f32 %v1263, %v1264
      %v1266 = vsel %vm1210, %v746, 0.0
      %v1267 = vadd.f32 %v1265, %v1266
      %v1268 = vsel %vm1210, %v749, 0.0
      %v1269 = vadd.f32 %v1267, %v1268
      %v1270 = vsel %vm1210, %v754, 0.0
      %v1271 = vadd.f32 %v1269, %v1270
      %v1272 = vsel %vm1210, %v757, 0.0
      %v1273 = vadd.f32 %v1271, %v1272
      %v1274 = vsel %vm1210, %v762, 0.0
      %v1275 = vadd.f32 %v1273, %v1274
      %v1276 = vsel %vm1210, %v765, 0.0
      %v1277 = vadd.f32 %v1275, %v1276
      %v1278 = vsel %vm1210, %v770, 0.0
      %v1279 = vadd.f32 %v1277, %v1278
      %v1280 = vsel %vm1210, %v773, 0.0
      %v1281 = vadd.f32 %v1279, %v1280
      %v1282 = vsel %vm1210, %v778, 0.0
      %v1283 = vadd.f32 %v1281, %v1282
      %v1284 = vsel %vm1210, %v781, 0.0
      %v1285 = vadd.f32 %v1283, %v1284
      %v1286 = vsel %vm1210, %v786, 0.0
      %v1287 = vadd.f32 %v1285, %v1286
      %v1288 = vsel %vm1210, %v789, 0.0
      %v1289 = vadd.f32 %v1287, %v1288
      %v1290 = vsel %vm1210, %v794, 0.0
      %v1291 = vadd.f32 %v1289, %v1290
      %v1292 = vsel %vm1210, %v797, 0.0
      %v1293 = vadd.f32 %v1291, %v1292
      %v1294 = vsel %vm1210, %v802, 0.0
      %v1295 = vadd.f32 %v1293, %v1294
      %v1296 = vsel %vm1210, %v805, 0.0
      %v1297 = vadd.f32 %v1295, %v1296
      %v1298 = vsel %vm1210, %v810, 0.0
      %v1299 = vadd.f32 %v1297, %v1298
      %v1300 = vsel %vm1210, %v813, 0.0
      %v1301 = vadd.f32 %v1299, %v1300
      %v1302 = vsel %vm1210, %v818, 0.0
      %v1303 = vadd.f32 %v1301, %v1302
      %v1304 = vsel %vm1210, %v821, 0.0
      %v1305 = vadd.f32 %v1303, %v1304
      %v1306 = vsel %vm1210, %v826, 0.0
      %v1307 = vadd.f32 %v1305, %v1306
      %v1308 = vsel %vm1210, %v829, 0.0
      %v1309 = vadd.f32 %v1307, %v1308
      %v1310 = vsel %vm1210, %v834, 0.0
      %v1311 = vadd.f32 %v1309, %v1310
      %v1312 = vsel %vm1210, %v837, 0.0
      %v1313 = vadd.f32 %v1311, %v1312
      %v1314 = vsel %vm1210, %v842, 0.0
      %v1315 = vadd.f32 %v1313, %v1314
      %v1316 = vsel %vm1210, %v845, 0.0
      %v1317 = vadd.f32 %v1315, %v1316
      %v1318 = vsel %vm1210, %v850, 0.0
      %v1319 = vadd.f32 %v1317, %v1318
      %v1320 = vsel %vm1210, %v853, 0.0
      %v1321 = vadd.f32 %v1319, %v1320
      %v1322 = vsel %vm1210, %v858, 0.0
      %v1323 = vadd.f32 %v1321, %v1322
      %v1324 = vsel %vm1210, %v861, 0.0
      %v1325 = vadd.f32 %v1323, %v1324
      %v1326 = vsel %vm1210, %v866, 0.0
      %v1327 = vadd.f32 %v1325, %v1326
      %v1328 = vsel %vm1210, %v869, 0.0
      %v1329 = vadd.f32 %v1327, %v1328
      %v1330 = vsel %vm1210, %v874, 0.0
      %v1331 = vadd.f32 %v1329, %v1330
      %v1332 = vsel %vm1210, %v877, 0.0
      %v1333 = vadd.f32 %v1331, %v1332
      %v1334 = vsel %vm1210, %v882, 0.0
      %v1335 = vadd.f32 %v1333, %v1334
      %v1336 = vsel %vm1210, %v885, 0.0
      %v1337 = vadd.f32 %v1335, %v1336
      %v1338 = vrot.slane %v1337, 4
      %v1339 = vadd.f32 %v1337, %v1338
      %v1340 = vrot.slane %v1339, 2
      %v1341 = vadd.f32 %v1339, %v1340
      %v1342 = vrot.slane %v1341, 1
      %v1343 = vadd.f32 %v1341, %v1342
      %v1344 = vadd.f32 %v1209, %v1343
      %vm1345 = vcmask 24576
      %1346 = vst.msk [vmem:[%s3] sm:$0x1] %vm1345, %v1344
      %v1347 = vld [vmem:[%s4] sm:$0x1]
      %v1348 = vmul.f32 %v634, %v634
      %v1349 = vmul.f32 %v637, %v637
      %v1350 = vmul.f32 %v642, %v642
      %v1351 = vmul.f32 %v645, %v645
      %v1352 = vmul.f32 %v650, %v650
      %v1353 = vmul.f32 %v653, %v653
      %v1354 = vmul.f32 %v658, %v658
      %v1355 = vmul.f32 %v661, %v661
      %v1356 = vmul.f32 %v666, %v666
      %v1357 = vmul.f32 %v669, %v669
      %v1358 = vmul.f32 %v674, %v674
      %v1359 = vmul.f32 %v677, %v677
      %v1360 = vmul.f32 %v682, %v682
      %v1361 = vmul.f32 %v685, %v685
      %v1362 = vmul.f32 %v690, %v690
      %v1363 = vmul.f32 %v693, %v693
      %v1364 = vmul.f32 %v698, %v698
      %v1365 = vmul.f32 %v701, %v701
      %v1366 = vmul.f32 %v706, %v706
      %v1367 = vmul.f32 %v709, %v709
      %v1368 = vmul.f32 %v714, %v714
      %v1369 = vmul.f32 %v717, %v717
      %v1370 = vmul.f32 %v722, %v722
      %v1371 = vmul.f32 %v725, %v725
      %v1372 = vmul.f32 %v730, %v730
      %v1373 = vmul.f32 %v733, %v733
      %v1374 = vmul.f32 %v738, %v738
      %v1375 = vmul.f32 %v741, %v741
      %v1376 = vmul.f32 %v746, %v746
      %v1377 = vmul.f32 %v749, %v749
      %v1378 = vmul.f32 %v754, %v754
      %v1379 = vmul.f32 %v757, %v757
      %v1380 = vmul.f32 %v762, %v762
      %v1381 = vmul.f32 %v765, %v765
      %v1382 = vmul.f32 %v770, %v770
      %v1383 = vmul.f32 %v773, %v773
      %v1384 = vmul.f32 %v778, %v778
      %v1385 = vmul.f32 %v781, %v781
      %v1386 = vmul.f32 %v786, %v786
      %v1387 = vmul.f32 %v789, %v789
      %v1388 = vmul.f32 %v794, %v794
      %v1389 = vmul.f32 %v797, %v797
      %v1390 = vmul.f32 %v802, %v802
      %v1391 = vmul.f32 %v805, %v805
      %v1392 = vmul.f32 %v810, %v810
      %v1393 = vmul.f32 %v813, %v813
      %v1394 = vmul.f32 %v818, %v818
      %v1395 = vmul.f32 %v821, %v821
      %v1396 = vmul.f32 %v826, %v826
      %v1397 = vmul.f32 %v829, %v829
      %v1398 = vmul.f32 %v834, %v834
      %v1399 = vmul.f32 %v837, %v837
      %v1400 = vmul.f32 %v842, %v842
      %v1401 = vmul.f32 %v845, %v845
      %v1402 = vmul.f32 %v850, %v850
      %v1403 = vmul.f32 %v853, %v853
      %v1404 = vmul.f32 %v858, %v858
      %v1405 = vmul.f32 %v861, %v861
      %v1406 = vmul.f32 %v866, %v866
      %v1407 = vmul.f32 %v869, %v869
      %v1408 = vmul.f32 %v874, %v874
      %v1409 = vmul.f32 %v877, %v877
      %v1410 = vmul.f32 %v882, %v882
      %v1411 = vmul.f32 %v885, %v885
      %v1412 = vsel %vm1210, %v1348, 0.0
      %v1413 = vsel %vm1210, %v1349, 0.0
      %v1414 = vadd.f32 %v1412, %v1413
      %v1415 = vsel %vm1210, %v1350, 0.0
      %v1416 = vadd.f32 %v1414, %v1415
      %v1417 = vsel %vm1210, %v1351, 0.0
      %v1418 = vadd.f32 %v1416, %v1417
      %v1419 = vsel %vm1210, %v1352, 0.0
      %v1420 = vadd.f32 %v1418, %v1419
      %v1421 = vsel %vm1210, %v1353, 0.0
      %v1422 = vadd.f32 %v1420, %v1421
      %v1423 = vsel %vm1210, %v1354, 0.0
      %v1424 = vadd.f32 %v1422, %v1423
      %v1425 = vsel %vm1210, %v1355, 0.0
      %v1426 = vadd.f32 %v1424, %v1425
      %v1427 = vsel %vm1210, %v1356, 0.0
      %v1428 = vadd.f32 %v1426, %v1427
      %v1429 = vsel %vm1210, %v1357, 0.0
      %v1430 = vadd.f32 %v1428, %v1429
      %v1431 = vsel %vm1210, %v1358, 0.0
      %v1432 = vadd.f32 %v1430, %v1431
      %v1433 = vsel %vm1210, %v1359, 0.0
      %v1434 = vadd.f32 %v1432, %v1433
      %v1435 = vsel %vm1210, %v1360, 0.0
      %v1436 = vadd.f32 %v1434, %v1435
      %v1437 = vsel %vm1210, %v1361, 0.0
      %v1438 = vadd.f32 %v1436, %v1437
      %v1439 = vsel %vm1210, %v1362, 0.0
      %v1440 = vadd.f32 %v1438, %v1439
      %v1441 = vsel %vm1210, %v1363, 0.0
      %v1442 = vadd.f32 %v1440, %v1441
      %v1443 = vsel %vm1210, %v1364, 0.0
      %v1444 = vadd.f32 %v1442, %v1443
      %v1445 = vsel %vm1210, %v1365, 0.0
      %v1446 = vadd.f32 %v1444, %v1445
      %v1447 = vsel %vm1210, %v1366, 0.0
      %v1448 = vadd.f32 %v1446, %v1447
      %v1449 = vsel %vm1210, %v1367, 0.0
      %v1450 = vadd.f32 %v1448, %v1449
      %v1451 = vsel %vm1210, %v1368, 0.0
      %v1452 = vadd.f32 %v1450, %v1451
      %v1453 = vsel %vm1210, %v1369, 0.0
      %v1454 = vadd.f32 %v1452, %v1453
      %v1455 = vsel %vm1210, %v1370, 0.0
      %v1456 = vadd.f32 %v1454, %v1455
      %v1457 = vsel %vm1210, %v1371, 0.0
      %v1458 = vadd.f32 %v1456, %v1457
      %v1459 = vsel %vm1210, %v1372, 0.0
      %v1460 = vadd.f32 %v1458, %v1459
      %v1461 = vsel %vm1210, %v1373, 0.0
      %v1462 = vadd.f32 %v1460, %v1461
      %v1463 = vsel %vm1210, %v1374, 0.0
      %v1464 = vadd.f32 %v1462, %v1463
      %v1465 = vsel %vm1210, %v1375, 0.0
      %v1466 = vadd.f32 %v1464, %v1465
      %v1467 = vsel %vm1210, %v1376, 0.0
      %v1468 = vadd.f32 %v1466, %v1467
      %v1469 = vsel %vm1210, %v1377, 0.0
      %v1470 = vadd.f32 %v1468, %v1469
      %v1471 = vsel %vm1210, %v1378, 0.0
      %v1472 = vadd.f32 %v1470, %v1471
      %v1473 = vsel %vm1210, %v1379, 0.0
      %v1474 = vadd.f32 %v1472, %v1473
      %v1475 = vsel %vm1210, %v1380, 0.0
      %v1476 = vadd.f32 %v1474, %v1475
      %v1477 = vsel %vm1210, %v1381, 0.0
      %v1478 = vadd.f32 %v1476, %v1477
      %v1479 = vsel %vm1210, %v1382, 0.0
      %v1480 = vadd.f32 %v1478, %v1479
      %v1481 = vsel %vm1210, %v1383, 0.0
      %v1482 = vadd.f32 %v1480, %v1481
      %v1483 = vsel %vm1210, %v1384, 0.0
      %v1484 = vadd.f32 %v1482, %v1483
      %v1485 = vsel %vm1210, %v1385, 0.0
      %v1486 = vadd.f32 %v1484, %v1485
      %v1487 = vsel %vm1210, %v1386, 0.0
      %v1488 = vadd.f32 %v1486, %v1487
      %v1489 = vsel %vm1210, %v1387, 0.0
      %v1490 = vadd.f32 %v1488, %v1489
      %v1491 = vsel %vm1210, %v1388, 0.0
      %v1492 = vadd.f32 %v1490, %v1491
      %v1493 = vsel %vm1210, %v1389, 0.0
      %v1494 = vadd.f32 %v1492, %v1493
      %v1495 = vsel %vm1210, %v1390, 0.0
      %v1496 = vadd.f32 %v1494, %v1495
      %v1497 = vsel %vm1210, %v1391, 0.0
      %v1498 = vadd.f32 %v1496, %v1497
      %v1499 = vsel %vm1210, %v1392, 0.0
      %v1500 = vadd.f32 %v1498, %v1499
      %v1501 = vsel %vm1210, %v1393, 0.0
      %v1502 = vadd.f32 %v1500, %v1501
      %v1503 = vsel %vm1210, %v1394, 0.0
      %v1504 = vadd.f32 %v1502, %v1503
      %v1505 = vsel %vm1210, %v1395, 0.0
      %v1506 = vadd.f32 %v1504, %v1505
      %v1507 = vsel %vm1210, %v1396, 0.0
      %v1508 = vadd.f32 %v1506, %v1507
      %v1509 = vsel %vm1210, %v1397, 0.0
      %v1510 = vadd.f32 %v1508, %v1509
      %v1511 = vsel %vm1210, %v1398, 0.0
      %v1512 = vadd.f32 %v1510, %v1511
      %v1513 = vsel %vm1210, %v1399, 0.0
      %v1514 = vadd.f32 %v1512, %v1513
      %v1515 = vsel %vm1210, %v1400, 0.0
      %v1516 = vadd.f32 %v1514, %v1515
      %v1517 = vsel %vm1210, %v1401, 0.0
      %v1518 = vadd.f32 %v1516, %v1517
      %v1519 = vsel %vm1210, %v1402, 0.0
      %v1520 = vadd.f32 %v1518, %v1519
      %v1521 = vsel %vm1210, %v1403, 0.0
      %v1522 = vadd.f32 %v1520, %v1521
      %v1523 = vsel %vm1210, %v1404, 0.0
      %v1524 = vadd.f32 %v1522, %v1523
      %v1525 = vsel %vm1210, %v1405, 0.0
      %v1526 = vadd.f32 %v1524, %v1525
      %v1527 = vsel %vm1210, %v1406, 0.0
      %v1528 = vadd.f32 %v1526, %v1527
      %v1529 = vsel %vm1210, %v1407, 0.0
      %v1530 = vadd.f32 %v1528, %v1529
      %v1531 = vsel %vm1210, %v1408, 0.0
      %v1532 = vadd.f32 %v1530, %v1531
      %v1533 = vsel %vm1210, %v1409, 0.0
      %v1534 = vadd.f32 %v1532, %v1533
      %v1535 = vsel %vm1210, %v1410, 0.0
      %v1536 = vadd.f32 %v1534, %v1535
      %v1537 = vsel %vm1210, %v1411, 0.0
      %v1538 = vadd.f32 %v1536, %v1537
      %v1539 = vrot.slane %v1538, 4
      %v1540 = vadd.f32 %v1538, %v1539
      %v1541 = vrot.slane %v1540, 2
      %v1542 = vadd.f32 %v1540, %v1541
      %v1543 = vrot.slane %v1542, 1
      %v1544 = vadd.f32 %v1542, %v1543
      %v1545 = vadd.f32 %v1347, %v1544
      %1546 = vst.msk [vmem:[%s4] sm:$0x1] %vm1345, %v1545
      %s1547 = smul.u32 64, %s21
      %p1548 = scmp.lt.s32.totalorder %s20, 3
      %s1549 = scalar_select %p1548, %s20, 3
      %p1550 = scmp.lt.s32.totalorder %s1547, 63
      %s1551 = scalar_select %p1550, %s1547, 63
      %s1552 = smul.addr %s1549, 64
      %s1553 = sadd.s32 %s1551, %s1552
      %s1554 = smul.addr %s1553, 4
      %s1555 = scalar_lea.vmem %s2, %s1554
      // Predicated region
      $region33: #{_lambda_.15} parent=27 // pred_check
        %p1556 = pneg %p102
      $region34: #{_lambda_.15} parent=27 // pred_check_branch
        %1558 = sbr.rel (%p1556) target = $region36
      $region35: #{_lambda_.15} parent=27 // pred_region
        %s1559 = smul.u32 64, %s21
      $region36: #{_lambda_.15} parent=27 // pred_fallthru
        _
      // Predicated region
      $region37: #{_lambda_.15} parent=27 // pred_check
        %p1560 = pneg %p123
      $region38: #{_lambda_.15} parent=27 // pred_check_branch
        %1562 = sbr.rel (%p1560) target = $region40
      $region39: #{_lambda_.15} parent=27 // pred_region
        _
      $region40: #{_lambda_.15} parent=27 // pred_fallthru
        _
      // Predicated region
      $region41: #{_lambda_.15} parent=27 // pred_check
        %p1563 = pneg %p144
      $region42: #{_lambda_.15} parent=27 // pred_check_branch
        %1565 = sbr.rel (%p1563) target = $region44
      $region43: #{_lambda_.15} parent=27 // pred_region
        _
      $region44: #{_lambda_.15} parent=27 // pred_fallthru
        _
      // Predicated region
      $region45: #{_lambda_.15} parent=27 // pred_check
        %p1566 = pneg %p123
      $region46: #{_lambda_.15} parent=27 // pred_check_branch
        %1568 = sbr.rel (%p1566) target = $region48
      $region47: #{_lambda_.15} parent=27 // pred_region
        _
      $region48: #{_lambda_.15} parent=27 // pred_fallthru
        _
      // Predicated region
      $region49: #{_lambda_.15} parent=27 // pred_check
        %p1569 = pneg %p144
      $region50: #{_lambda_.15} parent=27 // pred_check_branch
        %1571 = sbr.rel (%p1569) target = $region52
      $region51: #{_lambda_.15} parent=27 // pred_region
        _
      $region52: #{_lambda_.15} parent=27 // pred_fallthru
        _
    $region28: #{_lambda_.15} parent=5 // pred_fallthru
      _
    %p1572 = scmp.le.s32.totalorder 2, %s11
    // Predicated region
    $region53: #{_lambda_.15} parent=5 // pred_check
      %p1573 = pneg %p1572
    $region54: #{_lambda_.15} parent=5 // pred_check_branch
      %1575 = sbr.rel (%p1573) target = $region56
    $region55: #{_lambda_.15} parent=5 // pred_region
      %s1576 = ssub.s32 %s11, 2
      // Predicated region
      $region57: #{_lambda_.15} parent=55 // pred_check
        %p1577 = pneg %p108
      $region58: #{_lambda_.15} parent=55 // pred_check_branch
        %1579 = sbr.rel (%p1577) target = $region60
      $region59: #{_lambda_.15} parent=55 // pred_region
        %s1580 = smul.u32 64, %s23
        %p1581 = scmp.lt.s32.totalorder %s22, 3
        %s1582 = scalar_select %p1581, %s22, 3
        %p1583 = scmp.lt.s32.totalorder %s1580, 63
        %s1584 = scalar_select %p1583, %s1580, 63
        %s1585 = smul.addr %s1582, 64
        %s1586 = sadd.s32 %s1584, %s1585
        %s1587 = smul.addr %s1586, 4
        %s1588 = scalar_lea.vmem %s2, %s1587
      $region60: #{_lambda_.15} parent=55 // pred_fallthru
        _
    $region56: #{_lambda_.15} parent=5 // pred_fallthru
      _
  $region6: #{_lambda_.15} parent=0 // loop_footer
    %s15 = sadd.s32 1, %s11
  $region7: #{_lambda_.15} parent=0 // loop_footer_branch
    %10 = sbr.rel target = $region3
  $region8: #{_lambda_.15} parent=0 // loop_exit
    _

// kernel: _lambda_.16
$region0: #{_lambda_.16}
  #allocation0 [shape = 'u32[]', space=smem, size = 0x4, offset = 0x4, fixed_abs, tag = 'smem constant byte address 0x4 - core index']
  #allocation1 [shape = 'u32[144,128]{1,0:T(1,128)}', space=vmem, size = 0x12000, scoped, tag = 'internal scratch']
  %s0 = inlined_call_operand.vmem [shape: bf16[4,512,4], index: 0, kind: input, shape index: {}]
  %s1 = inlined_call_operand.vmem [shape: f32[1,4], index: 1, kind: input, shape index: {}]
  %s2 = inlined_call_operand.vmem [shape: f32[1,4], index: 2, kind: input, shape index: {}]
  %s3 = inlined_call_operand.vmem [shape: bf16[4,512,4], index: 3, kind: output, shape index: {}]
  %s4 = sld [smem:[#allocation0]]
  $region45: #{_lambda_.16} parent=0
    _
  %s6 = ssub.s32 1, %s4
  %s7 = scalar_select 0, %s6, %s4
  loop: start=0, step=1, limit=6
  $region2: #{_lambda_.16} parent=0 // loop_pre_header
    _
  $region3: #{_lambda_.16} parent=0 // loop_header
    %s9 = sphi 0, %s13
    %p10 = scmp.ge.s32.totalorder %s9, 6
    %s16 = sphi 0, %s28
    %s17 = sphi 0, %s24
    %s18 = sphi 0, %s16
    %s19 = sphi 0, %s17
    %s20 = sphi 0, %s18
    %s21 = sphi 0, %s19
    %s33 = sphi 0, %s35
    %s36 = sphi 0, %s33
    %s37 = sphi 0, %s36
    %s53 = sphi 0, %s37
    %s57 = sphi 0, %s57
    %s59 = sphi 0, %s57
    %s60 = sphi 0, %s59
    %s74 = sphi 0, %s60
    %s78 = sphi 0, %s78
    %s80 = sphi 0, %s78
    %s81 = sphi 0, %s80
    %s95 = sphi 0, %s81
    %s103 = sphi 0, %s105
    %s106 = sphi 0, %s103
    %s107 = sphi 0, %s106
    %s123 = sphi 0, %s107
  $region4: #{_lambda_.16} parent=0 // loop_header_branch
    %12 = sbr.rel (%p10) target = $region8
  $region5: #{_lambda_.16} parent=0 // loop_body
    %s14 = ssub.s32 %s9, 1
    %s15 = ssub.s32 %s9, 2
    %s22 = sadd.s32 1, %s17
    %p23 = scmp.ge.s32.totalorder %s22, 1
    %s24 = scalar_select %p23, 0, %s22
    %s25 = sadd.s32 1, %s16
    %s26 = scalar_select %p23, %s25, %s16
    %p27 = scmp.ge.s32.totalorder %s26, 4
    %s28 = scalar_select %p27, 0, %s26
    %s29 = ssub.s32 %s16, %s28
    %s30 = ssub.s32 %s17, %s24
    %s31 = sor.u32 %s29, %s30
    %p32 = scmp.eq.s32.totalorder %s31, 0
    %s34 = sadd.s32 %s33, 1
    %s35 = scalar_select %p32, %s33, %s34
    %p38 = pneg %p32
    %p39 = scmp.eq.s32.totalorder %s9, 3
    %p40 = por %p38, %p39
    %p41 = scmp.ne.s32.totalorder %s33, %s36
    %p42 = scmp.eq.s32.totalorder %s9, 0
    %p43 = por %p41, %p42
    %p44 = scmp.ne.s32.totalorder %s33, %s36
    %p45 = scmp.eq.s32.totalorder %s14, 3
    %p46 = por %p44, %p45
    %p47 = scmp.ne.s32.totalorder %s36, %s37
    %p48 = scmp.eq.s32.totalorder %s14, 0
    %p49 = por %p47, %p48
    %p50 = scmp.ne.s32.totalorder %s36, %s37
    %p51 = scmp.eq.s32.totalorder %s15, 3
    %p52 = por %p50, %p51
    %p54 = scmp.ne.s32.totalorder %s37, %s53
    %p55 = scmp.eq.s32.totalorder %s15, 0
    %p56 = por %p54, %p55
    %s58 = sadd.s32 %s57, 1
    %p61 = scmp.eq.s32.totalorder %s9, 3
    %p62 = scmp.ne.s32.totalorder %s57, %s59
    %p63 = scmp.eq.s32.totalorder %s9, 0
    %p64 = por %p62, %p63
    %p65 = scmp.ne.s32.totalorder %s57, %s59
    %p66 = scmp.eq.s32.totalorder %s14, 3
    %p67 = por %p65, %p66
    %p68 = scmp.ne.s32.totalorder %s59, %s60
    %p69 = scmp.eq.s32.totalorder %s14, 0
    %p70 = por %p68, %p69
    %p71 = scmp.ne.s32.totalorder %s59, %s60
    %p72 = scmp.eq.s32.totalorder %s15, 3
    %p73 = por %p71, %p72
    %p75 = scmp.ne.s32.totalorder %s60, %s74
    %p76 = scmp.eq.s32.totalorder %s15, 0
    %p77 = por %p75, %p76
    %s79 = sadd.s32 %s78, 1
    %p82 = scmp.eq.s32.totalorder %s9, 3
    %p83 = scmp.ne.s32.totalorder %s78, %s80
    %p84 = scmp.eq.s32.totalorder %s9, 0
    %p85 = por %p83, %p84
    %p86 = scmp.ne.s32.totalorder %s78, %s80
    %p87 = scmp.eq.s32.totalorder %s14, 3
    %p88 = por %p86, %p87
    %p89 = scmp.ne.s32.totalorder %s80, %s81
    %p90 = scmp.eq.s32.totalorder %s14, 0
    %p91 = por %p89, %p90
    %p92 = scmp.ne.s32.totalorder %s80, %s81
    %p93 = scmp.eq.s32.totalorder %s15, 3
    %p94 = por %p92, %p93
    %p96 = scmp.ne.s32.totalorder %s81, %s95
    %p97 = scmp.eq.s32.totalorder %s15, 0
    %p98 = por %p96, %p97
    %s99 = ssub.s32 %s16, %s28
    %s100 = ssub.s32 %s17, %s24
    %s101 = sor.u32 %s99, %s100
    %p102 = scmp.eq.s32.totalorder %s101, 0
    %s104 = sadd.s32 %s103, 1
    %s105 = scalar_select %p102, %s103, %s104
    %p108 = pneg %p102
    %p109 = scmp.eq.s32.totalorder %s9, 3
    %p110 = por %p108, %p109
    %p111 = scmp.ne.s32.totalorder %s103, %s106
    %p112 = scmp.eq.s32.totalorder %s9, 0
    %p113 = por %p111, %p112
    %p114 = scmp.ne.s32.totalorder %s103, %s106
    %p115 = scmp.eq.s32.totalorder %s14, 3
    %p116 = por %p114, %p115
    %p117 = scmp.ne.s32.totalorder %s106, %s107
    %p118 = scmp.eq.s32.totalorder %s14, 0
    %p119 = por %p117, %p118
    %p120 = scmp.ne.s32.totalorder %s106, %s107
    %p121 = scmp.eq.s32.totalorder %s15, 3
    %p122 = por %p120, %p121
    %p124 = scmp.ne.s32.totalorder %s107, %s123
    %p125 = scmp.eq.s32.totalorder %s15, 0
    %p126 = por %p124, %p125
    %p127 = scmp.le.s32.totalorder 1, %s9
    %p128 = scmp.lt.s32.totalorder %s9, 5
    %p129 = pnand %p127, %p128
    %p130 = pneg %p129
    // Predicated region
    $region9: #{_lambda_.16} parent=5 // pred_check
      _
    $region10: #{_lambda_.16} parent=5 // pred_check_branch
      %132 = sbr.rel (%p129) target = $region12
    $region11: #{_lambda_.16} parent=5 // pred_region
      %s133 = ssub.s32 %s9, 1
      // Predicated region
      $region13: #{_lambda_.16} parent=11 // pred_check
        %p134 = pneg %p70
      $region14: #{_lambda_.16} parent=11 // pred_check_branch
        %136 = sbr.rel (%p134) target = $region16
      $region15: #{_lambda_.16} parent=11 // pred_region
        _
      $region16: #{_lambda_.16} parent=11 // pred_fallthru
        _
      // Predicated region
      $region17: #{_lambda_.16} parent=11 // pred_check
        %p137 = pneg %p91
      $region18: #{_lambda_.16} parent=11 // pred_check_branch
        %139 = sbr.rel (%p137) target = $region20
      $region19: #{_lambda_.16} parent=11 // pred_region
        _
      $region20: #{_lambda_.16} parent=11 // pred_fallthru
        _
    $region12: #{_lambda_.16} parent=5 // pred_fallthru
      _
    %p140 = scmp.lt.s32.totalorder %s9, 4
    // Predicated region
    $region21: #{_lambda_.16} parent=5 // pred_check
      %p141 = pneg %p140
    $region22: #{_lambda_.16} parent=5 // pred_check_branch
      %143 = sbr.rel (%p141) target = $region24
    $region23: #{_lambda_.16} parent=5 // pred_region
      // Predicated region
      $region25: #{_lambda_.16} parent=23 // pred_check
        %p144 = pneg %p43
      $region26: #{_lambda_.16} parent=23 // pred_check_branch
        %146 = sbr.rel (%p144) target = $region28
      $region27: #{_lambda_.16} parent=23 // pred_region
        %s147 = smul.u32 64, %s17
        %p148 = scmp.lt.s32.totalorder %s16, 3
        %s149 = scalar_select %p148, %s16, 3
        %p150 = scmp.lt.s32.totalorder %s147, 63
        %s151 = scalar_select %p150, %s147, 63
        %s152 = smul.addr %s149, 64
        %s153 = sadd.s32 %s151, %s152
        %s154 = smul.addr %s153, 4
        %s155 = scalar_lea.vmem %s0, %s154
        %s156 = smul.u32 64, %s17
      $region28: #{_lambda_.16} parent=23 // pred_fallthru
        _
    $region24: #{_lambda_.16} parent=5 // pred_fallthru
      _
    %p157 = scmp.le.s32.totalorder 1, %s9
    %p158 = scmp.lt.s32.totalorder %s9, 5
    %p159 = pnand %p157, %p158
    %p160 = pneg %p159
    // Predicated region
    $region29: #{_lambda_.16} parent=5 // pred_check
      _
    $region30: #{_lambda_.16} parent=5 // pred_check_branch
      %162 = sbr.rel (%p159) target = $region32
    $region31: #{_lambda_.16} parent=5 // pred_region
      %s163 = ssub.s32 %s9, 1
      %s164 = smul.u32 64, %s19
      %p165 = scmp.lt.s32.totalorder %s18, 3
      %s166 = scalar_select %p165, %s18, 3
      %p167 = scmp.lt.s32.totalorder %s164, 63
      %s168 = scalar_select %p167, %s164, 63
      %s169 = smul.addr %s166, 64
      %s170 = sadd.s32 %s168, %s169
      %s171 = smul.addr %s170, 4
      %s172 = scalar_lea.vmem %s0, %s171
      %p173 = pneg %p49
      %p174 = pneg %p46
      %p175 = pneg %p70
      %p176 = pneg %p67
      %p177 = pneg %p91
      %p178 = pneg %p88
      %p179 = pneg %p119
      %p180 = pneg %p116
      %s181 = smul.u32 64, %s19
      %p182 = scmp.lt.s32.totalorder %s18, 3
      %s183 = scalar_select %p182, %s18, 3
      %p184 = scmp.lt.s32.totalorder %s181, 63
      %s185 = scalar_select %p184, %s181, 63
      %s186 = smul.addr %s183, 64
      %s187 = sadd.s32 %s185, %s186
      %s188 = smul.addr %s187, 4
      %s189 = scalar_lea.vmem %s3, %s188
      %s190 = smul.u32 64, %s19
      %p191 = scmp.lt.s32.totalorder %s18, 3
      %s192 = scalar_select %p191, %s18, 3
      %p193 = scmp.lt.s32.totalorder %s190, 63
      %s194 = scalar_select %p193, %s190, 63
      %s195 = smul.addr %s192, 64
      %s196 = sadd.s32 %s194, %s195
      %s197 = smul.addr %s196, 4
      %s198 = scalar_lea.vmem %s0, %s197
      %s199 = smul.u32 64, %s19
      %s200 = smul.u32 64, %s19
      %p201 = scmp.lt.s32.totalorder %s18, 3
      %s202 = scalar_select %p201, %s18, 3
      %p203 = scmp.lt.s32.totalorder %s200, 63
      %s204 = scalar_select %p203, %s200, 63
      %s205 = smul.addr %s202, 64
      %s206 = sadd.s32 %s204, %s205
      %s207 = smul.addr %s206, 4
      %s208 = scalar_lea.vmem %s3, %s207
      %s209 = smul.u32 64, %s19
      %v210 = vld [vmem:[%s198] sm:$0xf]
      %v211 = vld [vmem:[%s198 + $0x4] sm:$0xf]
      %v212 = vld [vmem:[%s198 + $0x8] sm:$0xf]
      %v213 = vld [vmem:[%s198 + $0xc] sm:$0xf]
      %v214 = vld [vmem:[%s198 + $0x10] sm:$0xf]
      %v215 = vld [vmem:[%s198 + $0x14] sm:$0xf]
      %v216 = vld [vmem:[%s198 + $0x18] sm:$0xf]
      %v217 = vld [vmem:[%s198 + $0x1c] sm:$0xf]
      %v218 = vld [vmem:[%s198 + $0x20] sm:$0xf]
      %v219 = vld [vmem:[%s198 + $0x24] sm:$0xf]
      %v220 = vld [vmem:[%s198 + $0x28] sm:$0xf]
      %v221 = vld [vmem:[%s198 + $0x2c] sm:$0xf]
      %v222 = vld [vmem:[%s198 + $0x30] sm:$0xf]
      %v223 = vld [vmem:[%s198 + $0x34] sm:$0xf]
      %v224 = vld [vmem:[%s198 + $0x38] sm:$0xf]
      %v225 = vld [vmem:[%s198 + $0x3c] sm:$0xf]
      %v226 = vld [vmem:[%s198 + $0x40] sm:$0xf]
      %v227 = vld [vmem:[%s198 + $0x44] sm:$0xf]
      %v228 = vld [vmem:[%s198 + $0x48] sm:$0xf]
      %v229 = vld [vmem:[%s198 + $0x4c] sm:$0xf]
      %v230 = vld [vmem:[%s198 + $0x50] sm:$0xf]
      %v231 = vld [vmem:[%s198 + $0x54] sm:$0xf]
      %v232 = vld [vmem:[%s198 + $0x58] sm:$0xf]
      %v233 = vld [vmem:[%s198 + $0x5c] sm:$0xf]
      %v234 = vld [vmem:[%s198 + $0x60] sm:$0xf]
      %v235 = vld [vmem:[%s198 + $0x64] sm:$0xf]
      %v236 = vld [vmem:[%s198 + $0x68] sm:$0xf]
      %v237 = vld [vmem:[%s198 + $0x6c] sm:$0xf]
      %v238 = vld [vmem:[%s198 + $0x70] sm:$0xf]
      %v239 = vld [vmem:[%s198 + $0x74] sm:$0xf]
      %v240 = vld [vmem:[%s198 + $0x78] sm:$0xf]
      %v241 = vld [vmem:[%s198 + $0x7c] sm:$0xf]
      %v242 = vld [vmem:[%s198 + $0x80] sm:$0xf]
      %v243 = vld [vmem:[%s198 + $0x84] sm:$0xf]
      %v244 = vld [vmem:[%s198 + $0x88] sm:$0xf]
      %v245 = vld [vmem:[%s198 + $0x8c] sm:$0xf]
      %v246 = vld [vmem:[%s198 + $0x90] sm:$0xf]
      %v247 = vld [vmem:[%s198 + $0x94] sm:$0xf]
      %v248 = vld [vmem:[%s198 + $0x98] sm:$0xf]
      %v249 = vld [vmem:[%s198 + $0x9c] sm:$0xf]
      %v250 = vld [vmem:[%s198 + $0xa0] sm:$0xf]
      %v251 = vld [vmem:[%s198 + $0xa4] sm:$0xf]
      %v252 = vld [vmem:[%s198 + $0xa8] sm:$0xf]
      %v253 = vld [vmem:[%s198 + $0xac] sm:$0xf]
      %v254 = vld [vmem:[%s198 + $0xb0] sm:$0xf]
      %v255 = vld [vmem:[%s198 + $0xb4] sm:$0xf]
      %v256 = vld [vmem:[%s198 + $0xb8] sm:$0xf]
      %v257 = vld [vmem:[%s198 + $0xbc] sm:$0xf]
      %v258 = vld [vmem:[%s198 + $0xc0] sm:$0xf]
      %v259 = vld [vmem:[%s198 + $0xc4] sm:$0xf]
      %v260 = vld [vmem:[%s198 + $0xc8] sm:$0xf]
      %v261 = vld [vmem:[%s198 + $0xcc] sm:$0xf]
      %v262 = vld [vmem:[%s198 + $0xd0] sm:$0xf]
      %v263 = vld [vmem:[%s198 + $0xd4] sm:$0xf]
      %v264 = vld [vmem:[%s198 + $0xd8] sm:$0xf]
      %v265 = vld [vmem:[%s198 + $0xdc] sm:$0xf]
      %v266 = vld [vmem:[%s198 + $0xe0] sm:$0xf]
      %v267 = vld [vmem:[%s198 + $0xe4] sm:$0xf]
      %v268 = vld [vmem:[%s198 + $0xe8] sm:$0xf]
      %v269 = vld [vmem:[%s198 + $0xec] sm:$0xf]
      %v270 = vld [vmem:[%s198 + $0xf0] sm:$0xf]
      %v271 = vld [vmem:[%s198 + $0xf4] sm:$0xf]
      %v272 = vld [vmem:[%s198 + $0xf8] sm:$0xf]
      %v273 = vld [vmem:[%s198 + $0xfc] sm:$0xf]
      %v274 = vunpack.c.l.bf16 %v210
      %v275 = vunpack.c.l.bf16 %v211
      %v276 = vunpack.c.l.bf16 %v212
      %v277 = vunpack.c.l.bf16 %v213
      %v278 = vunpack.c.l.bf16 %v214
      %v279 = vunpack.c.l.bf16 %v215
      %v280 = vunpack.c.l.bf16 %v216
      %v281 = vunpack.c.l.bf16 %v217
      %v282 = vunpack.c.l.bf16 %v218
      %v283 = vunpack.c.l.bf16 %v219
      %v284 = vunpack.c.l.bf16 %v220
      %v285 = vunpack.c.l.bf16 %v221
      %v286 = vunpack.c.l.bf16 %v222
      %v287 = vunpack.c.l.bf16 %v223
      %v288 = vunpack.c.l.bf16 %v224
      %v289 = vunpack.c.l.bf16 %v225
      %v290 = vunpack.c.l.bf16 %v226
      %v291 = vunpack.c.l.bf16 %v227
      %v292 = vunpack.c.l.bf16 %v228
      %v293 = vunpack.c.l.bf16 %v229
      %v294 = vunpack.c.l.bf16 %v230
      %v295 = vunpack.c.l.bf16 %v231
      %v296 = vunpack.c.l.bf16 %v232
      %v297 = vunpack.c.l.bf16 %v233
      %v298 = vunpack.c.l.bf16 %v234
      %v299 = vunpack.c.l.bf16 %v235
      %v300 = vunpack.c.l.bf16 %v236
      %v301 = vunpack.c.l.bf16 %v237
      %v302 = vunpack.c.l.bf16 %v238
      %v303 = vunpack.c.l.bf16 %v239
      %v304 = vunpack.c.l.bf16 %v240
      %v305 = vunpack.c.l.bf16 %v241
      %v306 = vunpack.c.l.bf16 %v242
      %v307 = vunpack.c.l.bf16 %v243
      %v308 = vunpack.c.l.bf16 %v244
      %v309 = vunpack.c.l.bf16 %v245
      %v310 = vunpack.c.l.bf16 %v246
      %v311 = vunpack.c.l.bf16 %v247
      %v312 = vunpack.c.l.bf16 %v248
      %v313 = vunpack.c.l.bf16 %v249
      %v314 = vunpack.c.l.bf16 %v250
      %v315 = vunpack.c.l.bf16 %v251
      %v316 = vunpack.c.l.bf16 %v252
      %v317 = vunpack.c.l.bf16 %v253
      %v318 = vunpack.c.l.bf16 %v254
      %v319 = vunpack.c.l.bf16 %v255
      %v320 = vunpack.c.l.bf16 %v256
      %v321 = vunpack.c.l.bf16 %v257
      %v322 = vunpack.c.l.bf16 %v258
      %v323 = vunpack.c.l.bf16 %v259
      %v324 = vunpack.c.l.bf16 %v260
      %v325 = vunpack.c.l.bf16 %v261
      %v326 = vunpack.c.l.bf16 %v262
      %v327 = vunpack.c.l.bf16 %v263
      %v328 = vunpack.c.l.bf16 %v264
      %v329 = vunpack.c.l.bf16 %v265
      %v330 = vunpack.c.l.bf16 %v266
      %v331 = vunpack.c.l.bf16 %v267
      %v332 = vunpack.c.l.bf16 %v268
      %v333 = vunpack.c.l.bf16 %v269
      %v334 = vunpack.c.l.bf16 %v270
      %v335 = vunpack.c.l.bf16 %v271
      %v336 = vunpack.c.l.bf16 %v272
      %v337 = vunpack.c.l.bf16 %v273
      %v338 = vld [vmem:[%s1] sm:$0x1]
      %v340 = vlaneseq
      %v341 = vshrl.u32 %v340, 7
      %v342 = vsub.s32 0, %v341
      %v343 = vrot.slane %v338, %v342
      %v345 = vmul.f32 %v274, %v343
      %v346 = vmul.f32 %v275, %v343
      %v347 = vmul.f32 %v276, %v343
      %v348 = vmul.f32 %v277, %v343
      %v349 = vmul.f32 %v278, %v343
      %v350 = vmul.f32 %v279, %v343
      %v351 = vmul.f32 %v280, %v343
      %v352 = vmul.f32 %v281, %v343
      %v353 = vmul.f32 %v282, %v343
      %v354 = vmul.f32 %v283, %v343
      %v355 = vmul.f32 %v284, %v343
      %v356 = vmul.f32 %v285, %v343
      %v357 = vmul.f32 %v286, %v343
      %v358 = vmul.f32 %v287, %v343
      %v359 = vmul.f32 %v288, %v343
      %v360 = vmul.f32 %v289, %v343
      %v361 = vmul.f32 %v290, %v343
      %v362 = vmul.f32 %v291, %v343
      %v363 = vmul.f32 %v292, %v343
      %v364 = vmul.f32 %v293, %v343
      %v365 = vmul.f32 %v294, %v343
      %v366 = vmul.f32 %v295, %v343
      %v367 = vmul.f32 %v296, %v343
      %v368 = vmul.f32 %v297, %v343
      %v369 = vmul.f32 %v298, %v343
      %v370 = vmul.f32 %v299, %v343
      %v371 = vmul.f32 %v300, %v343
      %v372 = vmul.f32 %v301, %v343
      %v373 = vmul.f32 %v302, %v343
      %v374 = vmul.f32 %v303, %v343
      %v375 = vmul.f32 %v304, %v343
      %v376 = vmul.f32 %v305, %v343
      %v377 = vmul.f32 %v306, %v343
      %v378 = vmul.f32 %v307, %v343
      %v379 = vmul.f32 %v308, %v343
      %v380 = vmul.f32 %v309, %v343
      %v381 = vmul.f32 %v310, %v343
      %v382 = vmul.f32 %v311, %v343
      %v383 = vmul.f32 %v312, %v343
      %v384 = vmul.f32 %v313, %v343
      %v385 = vmul.f32 %v314, %v343
      %v386 = vmul.f32 %v315, %v343
      %v387 = vmul.f32 %v316, %v343
      %v388 = vmul.f32 %v317, %v343
      %v389 = vmul.f32 %v318, %v343
      %v390 = vmul.f32 %v319, %v343
      %v391 = vmul.f32 %v320, %v343
      %v392 = vmul.f32 %v321, %v343
      %v393 = vmul.f32 %v322, %v343
      %v394 = vmul.f32 %v323, %v343
      %v395 = vmul.f32 %v324, %v343
      %v396 = vmul.f32 %v325, %v343
      %v397 = vmul.f32 %v326, %v343
      %v398 = vmul.f32 %v327, %v343
      %v399 = vmul.f32 %v328, %v343
      %v400 = vmul.f32 %v329, %v343
      %v401 = vmul.f32 %v330, %v343
      %v402 = vmul.f32 %v331, %v343
      %v403 = vmul.f32 %v332, %v343
      %v404 = vmul.f32 %v333, %v343
      %v405 = vmul.f32 %v334, %v343
      %v406 = vmul.f32 %v335, %v343
      %v407 = vmul.f32 %v336, %v343
      %v408 = vmul.f32 %v337, %v343
      %v409 = vld [vmem:[%s2] sm:$0x1]
      %v411 = vlaneseq
      %v412 = vshrl.u32 %v411, 7
      %v413 = vsub.s32 0, %v412
      %v414 = vrot.slane %v409, %v413
      %v416 = vadd.f32 %v345, %v414
      %v417 = vadd.f32 %v346, %v414
      %v418 = vadd.f32 %v347, %v414
      %v419 = vadd.f32 %v348, %v414
      %v420 = vadd.f32 %v349, %v414
      %v421 = vadd.f32 %v350, %v414
      %v422 = vadd.f32 %v351, %v414
      %v423 = vadd.f32 %v352, %v414
      %v424 = vadd.f32 %v353, %v414
      %v425 = vadd.f32 %v354, %v414
      %v426 = vadd.f32 %v355, %v414
      %v427 = vadd.f32 %v356, %v414
      %v428 = vadd.f32 %v357, %v414
      %v429 = vadd.f32 %v358, %v414
      %v430 = vadd.f32 %v359, %v414
      %v431 = vadd.f32 %v360, %v414
      %v432 = vadd.f32 %v361, %v414
      %v433 = vadd.f32 %v362, %v414
      %v434 = vadd.f32 %v363, %v414
      %v435 = vadd.f32 %v364, %v414
      %v436 = vadd.f32 %v365, %v414
      %v437 = vadd.f32 %v366, %v414
      %v438 = vadd.f32 %v367, %v414
      %v439 = vadd.f32 %v368, %v414
      %v440 = vadd.f32 %v369, %v414
      %v441 = vadd.f32 %v370, %v414
      %v442 = vadd.f32 %v371, %v414
      %v443 = vadd.f32 %v372, %v414
      %v444 = vadd.f32 %v373, %v414
      %v445 = vadd.f32 %v374, %v414
      %v446 = vadd.f32 %v375, %v414
      %v447 = vadd.f32 %v376, %v414
      %v448 = vadd.f32 %v377, %v414
      %v449 = vadd.f32 %v378, %v414
      %v450 = vadd.f32 %v379, %v414
      %v451 = vadd.f32 %v380, %v414
      %v452 = vadd.f32 %v381, %v414
      %v453 = vadd.f32 %v382, %v414
      %v454 = vadd.f32 %v383, %v414
      %v455 = vadd.f32 %v384, %v414
      %v456 = vadd.f32 %v385, %v414
      %v457 = vadd.f32 %v386, %v414
      %v458 = vadd.f32 %v387, %v414
      %v459 = vadd.f32 %v388, %v414
      %v460 = vadd.f32 %v389, %v414
      %v461 = vadd.f32 %v390, %v414
      %v462 = vadd.f32 %v391, %v414
      %v463 = vadd.f32 %v392, %v414
      %v464 = vadd.f32 %v393, %v414
      %v465 = vadd.f32 %v394, %v414
      %v466 = vadd.f32 %v395, %v414
      %v467 = vadd.f32 %v396, %v414
      %v468 = vadd.f32 %v397, %v414
      %v469 = vadd.f32 %v398, %v414
      %v470 = vadd.f32 %v399, %v414
      %v471 = vadd.f32 %v400, %v414
      %v472 = vadd.f32 %v401, %v414
      %v473 = vadd.f32 %v402, %v414
      %v474 = vadd.f32 %v403, %v414
      %v475 = vadd.f32 %v404, %v414
      %v476 = vadd.f32 %v405, %v414
      %v477 = vadd.f32 %v406, %v414
      %v478 = vadd.f32 %v407, %v414
      %v479 = vadd.f32 %v408, %v414
      %v480 = vmax.f32 %v416, 0.0
      %v481 = vmax.f32 %v417, 0.0
      %v482 = vmax.f32 %v418, 0.0
      %v483 = vmax.f32 %v419, 0.0
      %v484 = vmax.f32 %v420, 0.0
      %v485 = vmax.f32 %v421, 0.0
      %v486 = vmax.f32 %v422, 0.0
      %v487 = vmax.f32 %v423, 0.0
      %v488 = vmax.f32 %v424, 0.0
      %v489 = vmax.f32 %v425, 0.0
      %v490 = vmax.f32 %v426, 0.0
      %v491 = vmax.f32 %v427, 0.0
      %v492 = vmax.f32 %v428, 0.0
      %v493 = vmax.f32 %v429, 0.0
      %v494 = vmax.f32 %v430, 0.0
      %v495 = vmax.f32 %v431, 0.0
      %v496 = vmax.f32 %v432, 0.0
      %v497 = vmax.f32 %v433, 0.0
      %v498 = vmax.f32 %v434, 0.0
      %v499 = vmax.f32 %v435, 0.0
      %v500 = vmax.f32 %v436, 0.0
      %v501 = vmax.f32 %v437, 0.0
      %v502 = vmax.f32 %v438, 0.0
      %v503 = vmax.f32 %v439, 0.0
      %v504 = vmax.f32 %v440, 0.0
      %v505 = vmax.f32 %v441, 0.0
      %v506 = vmax.f32 %v442, 0.0
      %v507 = vmax.f32 %v443, 0.0
      %v508 = vmax.f32 %v444, 0.0
      %v509 = vmax.f32 %v445, 0.0
      %v510 = vmax.f32 %v446, 0.0
      %v511 = vmax.f32 %v447, 0.0
      %v512 = vmax.f32 %v448, 0.0
      %v513 = vmax.f32 %v449, 0.0
      %v514 = vmax.f32 %v450, 0.0
      %v515 = vmax.f32 %v451, 0.0
      %v516 = vmax.f32 %v452, 0.0
      %v517 = vmax.f32 %v453, 0.0
      %v518 = vmax.f32 %v454, 0.0
      %v519 = vmax.f32 %v455, 0.0
      %v520 = vmax.f32 %v456, 0.0
      %v521 = vmax.f32 %v457, 0.0
      %v522 = vmax.f32 %v458, 0.0
      %v523 = vmax.f32 %v459, 0.0
      %v524 = vmax.f32 %v460, 0.0
      %v525 = vmax.f32 %v461, 0.0
      %v526 = vmax.f32 %v462, 0.0
      %v527 = vmax.f32 %v463, 0.0
      %v528 = vmax.f32 %v464, 0.0
      %v529 = vmax.f32 %v465, 0.0
      %v530 = vmax.f32 %v466, 0.0
      %v531 = vmax.f32 %v467, 0.0
      %v532 = vmax.f32 %v468, 0.0
      %v533 = vmax.f32 %v469, 0.0
      %v534 = vmax.f32 %v470, 0.0
      %v535 = vmax.f32 %v471, 0.0
      %v536 = vmax.f32 %v472, 0.0
      %v537 = vmax.f32 %v473, 0.0
      %v538 = vmax.f32 %v474, 0.0
      %v539 = vmax.f32 %v475, 0.0
      %v540 = vmax.f32 %v476, 0.0
      %v541 = vmax.f32 %v477, 0.0
      %v542 = vmax.f32 %v478, 0.0
      %v543 = vmax.f32 %v479, 0.0
      %v544 = vpack.c.bf16 %v481, %v480
      %v545 = vpack.c.bf16 %v483, %v482
      %v546 = vpack.c.bf16 %v485, %v484
      %v547 = vpack.c.bf16 %v487, %v486
      %v548 = vpack.c.bf16 %v489, %v488
      %v549 = vpack.c.bf16 %v491, %v490
      %v550 = vpack.c.bf16 %v493, %v492
      %v551 = vpack.c.bf16 %v495, %v494
      %v552 = vpack.c.bf16 %v497, %v496
      %v553 = vpack.c.bf16 %v499, %v498
      %v554 = vpack.c.bf16 %v501, %v500
      %v555 = vpack.c.bf16 %v503, %v502
      %v556 = vpack.c.bf16 %v505, %v504
      %v557 = vpack.c.bf16 %v507, %v506
      %v558 = vpack.c.bf16 %v509, %v508
      %v559 = vpack.c.bf16 %v511, %v510
      %v560 = vpack.c.bf16 %v513, %v512
      %v561 = vpack.c.bf16 %v515, %v514
      %v562 = vpack.c.bf16 %v517, %v516
      %v563 = vpack.c.bf16 %v519, %v518
      %v564 = vpack.c.bf16 %v521, %v520
      %v565 = vpack.c.bf16 %v523, %v522
      %v566 = vpack.c.bf16 %v525, %v524
      %v567 = vpack.c.bf16 %v527, %v526
      %v568 = vpack.c.bf16 %v529, %v528
      %v569 = vpack.c.bf16 %v531, %v530
      %v570 = vpack.c.bf16 %v533, %v532
      %v571 = vpack.c.bf16 %v535, %v534
      %v572 = vpack.c.bf16 %v537, %v536
      %v573 = vpack.c.bf16 %v539, %v538
      %v574 = vpack.c.bf16 %v541, %v540
      %v575 = vpack.c.bf16 %v543, %v542
      %v608 = vunpack.c.l.b16 %v544
      %v609 = vunpack.c.h.b16 %v544
      %v610 = vunpack.c.l.b16 %v545
      %v611 = vunpack.c.h.b16 %v545
      %v612 = vunpack.c.l.b16 %v546
      %v613 = vunpack.c.h.b16 %v546
      %v614 = vunpack.c.l.b16 %v547
      %v615 = vunpack.c.h.b16 %v547
      %v616 = vunpack.c.l.b16 %v548
      %v617 = vunpack.c.h.b16 %v548
      %v618 = vunpack.c.l.b16 %v549
      %v619 = vunpack.c.h.b16 %v549
      %v620 = vunpack.c.l.b16 %v550
      %v621 = vunpack.c.h.b16 %v550
      %v622 = vunpack.c.l.b16 %v551
      %v623 = vunpack.c.h.b16 %v551
      %v624 = vunpack.c.l.b16 %v552
      %v625 = vunpack.c.h.b16 %v552
      %v626 = vunpack.c.l.b16 %v553
      %v627 = vunpack.c.h.b16 %v553
      %v628 = vunpack.c.l.b16 %v554
      %v629 = vunpack.c.h.b16 %v554
      %v630 = vunpack.c.l.b16 %v555
      %v631 = vunpack.c.h.b16 %v555
      %v632 = vunpack.c.l.b16 %v556
      %v633 = vunpack.c.h.b16 %v556
      %v634 = vunpack.c.l.b16 %v557
      %v635 = vunpack.c.h.b16 %v557
      %v636 = vunpack.c.l.b16 %v558
      %v637 = vunpack.c.h.b16 %v558
      %v638 = vunpack.c.l.b16 %v559
      %v639 = vunpack.c.h.b16 %v559
      %v640 = vunpack.c.l.b16 %v560
      %v641 = vunpack.c.h.b16 %v560
      %v642 = vunpack.c.l.b16 %v561
      %v643 = vunpack.c.h.b16 %v561
      %v644 = vunpack.c.l.b16 %v562
      %v645 = vunpack.c.h.b16 %v562
      %v646 = vunpack.c.l.b16 %v563
      %v647 = vunpack.c.h.b16 %v563
      %v648 = vunpack.c.l.b16 %v564
      %v649 = vunpack.c.h.b16 %v564
      %v650 = vunpack.c.l.b16 %v565
      %v651 = vunpack.c.h.b16 %v565
      %v652 = vunpack.c.l.b16 %v566
      %v653 = vunpack.c.h.b16 %v566
      %v654 = vunpack.c.l.b16 %v567
      %v655 = vunpack.c.h.b16 %v567
      %v656 = vunpack.c.l.b16 %v568
      %v657 = vunpack.c.h.b16 %v568
      %v658 = vunpack.c.l.b16 %v569
      %v659 = vunpack.c.h.b16 %v569
      %v660 = vunpack.c.l.b16 %v570
      %v661 = vunpack.c.h.b16 %v570
      %v662 = vunpack.c.l.b16 %v571
      %v663 = vunpack.c.h.b16 %v571
      %v664 = vunpack.c.l.b16 %v572
      %v665 = vunpack.c.h.b16 %v572
      %v666 = vunpack.c.l.b16 %v573
      %v667 = vunpack.c.h.b16 %v573
      %v668 = vunpack.c.l.b16 %v574
      %v669 = vunpack.c.h.b16 %v574
      %v670 = vunpack.c.l.b16 %v575
      %v671 = vunpack.c.h.b16 %v575
      %v672 = vpack.c.b16 %v608, %v608
      %v673 = vpack.c.b16 %v609, %v609
      %v674 = vpack.c.b16 %v610, %v610
      %v675 = vpack.c.b16 %v611, %v611
      %v676 = vpack.c.b16 %v612, %v612
      %v677 = vpack.c.b16 %v613, %v613
      %v678 = vpack.c.b16 %v614, %v614
      %v679 = vpack.c.b16 %v615, %v615
      %v680 = vpack.c.b16 %v616, %v616
      %v681 = vpack.c.b16 %v617, %v617
      %v682 = vpack.c.b16 %v618, %v618
      %v683 = vpack.c.b16 %v619, %v619
      %v684 = vpack.c.b16 %v620, %v620
      %v685 = vpack.c.b16 %v621, %v621
      %v686 = vpack.c.b16 %v622, %v622
      %v687 = vpack.c.b16 %v623, %v623
      %v688 = vpack.c.b16 %v624, %v624
      %v689 = vpack.c.b16 %v625, %v625
      %v690 = vpack.c.b16 %v626, %v626
      %v691 = vpack.c.b16 %v627, %v627
      %v692 = vpack.c.b16 %v628, %v628
      %v693 = vpack.c.b16 %v629, %v629
      %v694 = vpack.c.b16 %v630, %v630
      %v695 = vpack.c.b16 %v631, %v631
      %v696 = vpack.c.b16 %v632, %v632
      %v697 = vpack.c.b16 %v633, %v633
      %v698 = vpack.c.b16 %v634, %v634
      %v699 = vpack.c.b16 %v635, %v635
      %v700 = vpack.c.b16 %v636, %v636
      %v701 = vpack.c.b16 %v637, %v637
      %v702 = vpack.c.b16 %v638, %v638
      %v703 = vpack.c.b16 %v639, %v639
      %v704 = vpack.c.b16 %v640, %v640
      %v705 = vpack.c.b16 %v641, %v641
      %v706 = vpack.c.b16 %v642, %v642
      %v707 = vpack.c.b16 %v643, %v643
      %v708 = vpack.c.b16 %v644, %v644
      %v709 = vpack.c.b16 %v645, %v645
      %v710 = vpack.c.b16 %v646, %v646
      %v711 = vpack.c.b16 %v647, %v647
      %v712 = vpack.c.b16 %v648, %v648
      %v713 = vpack.c.b16 %v649, %v649
      %v714 = vpack.c.b16 %v650, %v650
      %v715 = vpack.c.b16 %v651, %v651
      %v716 = vpack.c.b16 %v652, %v652
      %v717 = vpack.c.b16 %v653, %v653
      %v718 = vpack.c.b16 %v654, %v654
      %v719 = vpack.c.b16 %v655, %v655
      %v720 = vpack.c.b16 %v656, %v656
      %v721 = vpack.c.b16 %v657, %v657
      %v722 = vpack.c.b16 %v658, %v658
      %v723 = vpack.c.b16 %v659, %v659
      %v724 = vpack.c.b16 %v660, %v660
      %v725 = vpack.c.b16 %v661, %v661
      %v726 = vpack.c.b16 %v662, %v662
      %v727 = vpack.c.b16 %v663, %v663
      %v728 = vpack.c.b16 %v664, %v664
      %v729 = vpack.c.b16 %v665, %v665
      %v730 = vpack.c.b16 %v666, %v666
      %v731 = vpack.c.b16 %v667, %v667
      %v732 = vpack.c.b16 %v668, %v668
      %v733 = vpack.c.b16 %v669, %v669
      %v734 = vpack.c.b16 %v670, %v670
      %v735 = vpack.c.b16 %v671, %v671
      %vm800 = vcmask 27648
      %801 = vst.msk [vmem:[%s208] sm:$0xf] %vm800, %v672
      %802 = vst.msk [vmem:[%s208 + $0x4] sm:$0xf] %vm800, %v673
      %803 = vst.msk [vmem:[%s208 + $0x8] sm:$0xf] %vm800, %v674
      %804 = vst.msk [vmem:[%s208 + $0xc] sm:$0xf] %vm800, %v675
      %805 = vst.msk [vmem:[%s208 + $0x10] sm:$0xf] %vm800, %v676
      %806 = vst.msk [vmem:[%s208 + $0x14] sm:$0xf] %vm800, %v677
      %807 = vst.msk [vmem:[%s208 + $0x18] sm:$0xf] %vm800, %v678
      %808 = vst.msk [vmem:[%s208 + $0x1c] sm:$0xf] %vm800, %v679
      %809 = vst.msk [vmem:[%s208 + $0x20] sm:$0xf] %vm800, %v680
      %810 = vst.msk [vmem:[%s208 + $0x24] sm:$0xf] %vm800, %v681
      %811 = vst.msk [vmem:[%s208 + $0x28] sm:$0xf] %vm800, %v682
      %812 = vst.msk [vmem:[%s208 + $0x2c] sm:$0xf] %vm800, %v683
      %813 = vst.msk [vmem:[%s208 + $0x30] sm:$0xf] %vm800, %v684
      %814 = vst.msk [vmem:[%s208 + $0x34] sm:$0xf] %vm800, %v685
      %815 = vst.msk [vmem:[%s208 + $0x38] sm:$0xf] %vm800, %v686
      %816 = vst.msk [vmem:[%s208 + $0x3c] sm:$0xf] %vm800, %v687
      %817 = vst.msk [vmem:[%s208 + $0x40] sm:$0xf] %vm800, %v688
      %818 = vst.msk [vmem:[%s208 + $0x44] sm:$0xf] %vm800, %v689
      %819 = vst.msk [vmem:[%s208 + $0x48] sm:$0xf] %vm800, %v690
      %820 = vst.msk [vmem:[%s208 + $0x4c] sm:$0xf] %vm800, %v691
      %821 = vst.msk [vmem:[%s208 + $0x50] sm:$0xf] %vm800, %v692
      %822 = vst.msk [vmem:[%s208 + $0x54] sm:$0xf] %vm800, %v693
      %823 = vst.msk [vmem:[%s208 + $0x58] sm:$0xf] %vm800, %v694
      %824 = vst.msk [vmem:[%s208 + $0x5c] sm:$0xf] %vm800, %v695
      %825 = vst.msk [vmem:[%s208 + $0x60] sm:$0xf] %vm800, %v696
      %826 = vst.msk [vmem:[%s208 + $0x64] sm:$0xf] %vm800, %v697
      %827 = vst.msk [vmem:[%s208 + $0x68] sm:$0xf] %vm800, %v698
      %828 = vst.msk [vmem:[%s208 + $0x6c] sm:$0xf] %vm800, %v699
      %829 = vst.msk [vmem:[%s208 + $0x70] sm:$0xf] %vm800, %v700
      %830 = vst.msk [vmem:[%s208 + $0x74] sm:$0xf] %vm800, %v701
      %831 = vst.msk [vmem:[%s208 + $0x78] sm:$0xf] %vm800, %v702
      %832 = vst.msk [vmem:[%s208 + $0x7c] sm:$0xf] %vm800, %v703
      %833 = vst.msk [vmem:[%s208 + $0x80] sm:$0xf] %vm800, %v704
      %834 = vst.msk [vmem:[%s208 + $0x84] sm:$0xf] %vm800, %v705
      %835 = vst.msk [vmem:[%s208 + $0x88] sm:$0xf] %vm800, %v706
      %836 = vst.msk [vmem:[%s208 + $0x8c] sm:$0xf] %vm800, %v707
      %837 = vst.msk [vmem:[%s208 + $0x90] sm:$0xf] %vm800, %v708
      %838 = vst.msk [vmem:[%s208 + $0x94] sm:$0xf] %vm800, %v709
      %839 = vst.msk [vmem:[%s208 + $0x98] sm:$0xf] %vm800, %v710
      %840 = vst.msk [vmem:[%s208 + $0x9c] sm:$0xf] %vm800, %v711
      %841 = vst.msk [vmem:[%s208 + $0xa0] sm:$0xf] %vm800, %v712
      %842 = vst.msk [vmem:[%s208 + $0xa4] sm:$0xf] %vm800, %v713
      %843 = vst.msk [vmem:[%s208 + $0xa8] sm:$0xf] %vm800, %v714
      %844 = vst.msk [vmem:[%s208 + $0xac] sm:$0xf] %vm800, %v715
      %845 = vst.msk [vmem:[%s208 + $0xb0] sm:$0xf] %vm800, %v716
      %846 = vst.msk [vmem:[%s208 + $0xb4] sm:$0xf] %vm800, %v717
      %847 = vst.msk [vmem:[%s208 + $0xb8] sm:$0xf] %vm800, %v718
      %848 = vst.msk [vmem:[%s208 + $0xbc] sm:$0xf] %vm800, %v719
      %849 = vst.msk [vmem:[%s208 + $0xc0] sm:$0xf] %vm800, %v720
      %850 = vst.msk [vmem:[%s208 + $0xc4] sm:$0xf] %vm800, %v721
      %851 = vst.msk [vmem:[%s208 + $0xc8] sm:$0xf] %vm800, %v722
      %852 = vst.msk [vmem:[%s208 + $0xcc] sm:$0xf] %vm800, %v723
      %853 = vst.msk [vmem:[%s208 + $0xd0] sm:$0xf] %vm800, %v724
      %854 = vst.msk [vmem:[%s208 + $0xd4] sm:$0xf] %vm800, %v725
      %855 = vst.msk [vmem:[%s208 + $0xd8] sm:$0xf] %vm800, %v726
      %856 = vst.msk [vmem:[%s208 + $0xdc] sm:$0xf] %vm800, %v727
      %857 = vst.msk [vmem:[%s208 + $0xe0] sm:$0xf] %vm800, %v728
      %858 = vst.msk [vmem:[%s208 + $0xe4] sm:$0xf] %vm800, %v729
      %859 = vst.msk [vmem:[%s208 + $0xe8] sm:$0xf] %vm800, %v730
      %860 = vst.msk [vmem:[%s208 + $0xec] sm:$0xf] %vm800, %v731
      %861 = vst.msk [vmem:[%s208 + $0xf0] sm:$0xf] %vm800, %v732
      %862 = vst.msk [vmem:[%s208 + $0xf4] sm:$0xf] %vm800, %v733
      %863 = vst.msk [vmem:[%s208 + $0xf8] sm:$0xf] %vm800, %v734
      %864 = vst.msk [vmem:[%s208 + $0xfc] sm:$0xf] %vm800, %v735
      %s865 = smul.u32 64, %s19
      %p866 = scmp.lt.s32.totalorder %s18, 3
      %s867 = scalar_select %p866, %s18, 3
      %p868 = scmp.lt.s32.totalorder %s865, 63
      %s869 = scalar_select %p868, %s865, 63
      %s870 = smul.addr %s867, 64
      %s871 = sadd.s32 %s869, %s870
      %s872 = smul.addr %s871, 4
      %s873 = scalar_lea.vmem %s3, %s872
      // Predicated region
      $region33: #{_lambda_.16} parent=31 // pred_check
        %p874 = pneg %p116
      $region34: #{_lambda_.16} parent=31 // pred_check_branch
        %876 = sbr.rel (%p874) target = $region36
      $region35: #{_lambda_.16} parent=31 // pred_region
        %s877 = smul.u32 64, %s19
      $region36: #{_lambda_.16} parent=31 // pred_fallthru
        _
    $region32: #{_lambda_.16} parent=5 // pred_fallthru
      _
    %p878 = scmp.le.s32.totalorder 2, %s9
    // Predicated region
    $region37: #{_lambda_.16} parent=5 // pred_check
      %p879 = pneg %p878
    $region38: #{_lambda_.16} parent=5 // pred_check_branch
      %881 = sbr.rel (%p879) target = $region40
    $region39: #{_lambda_.16} parent=5 // pred_region
      %s882 = ssub.s32 %s9, 2
      // Predicated region
      $region41: #{_lambda_.16} parent=39 // pred_check
        %p883 = pneg %p122
      $region42: #{_lambda_.16} parent=39 // pred_check_branch
        %885 = sbr.rel (%p883) target = $region44
      $region43: #{_lambda_.16} parent=39 // pred_region
        %s886 = smul.u32 64, %s21
        %p887 = scmp.lt.s32.totalorder %s20, 3
        %s888 = scalar_select %p887, %s20, 3
        %p889 = scmp.lt.s32.totalorder %s886, 63
        %s890 = scalar_select %p889, %s886, 63
        %s891 = smul.addr %s888, 64
        %s892 = sadd.s32 %s890, %s891
        %s893 = smul.addr %s892, 4
        %s894 = scalar_lea.vmem %s3, %s893
      $region44: #{_lambda_.16} parent=39 // pred_fallthru
        _
    $region40: #{_lambda_.16} parent=5 // pred_fallthru
      _
  $region6: #{_lambda_.16} parent=0 // loop_footer
    %s13 = sadd.s32 1, %s9
  $region7: #{_lambda_.16} parent=0 // loop_footer_branch
    %8 = sbr.rel target = $region3
  $region8: #{_lambda_.16} parent=0 // loop_exit
    _

// kernel: _lambda_.17
$region0: #{_lambda_.17}
  #allocation0 [shape = 'u32[]', space=smem, size = 0x4, offset = 0x4, fixed_abs, tag = 'smem constant byte address 0x4 - core index']
  #allocation1 [shape = 'u32[144,128]{1,0:T(1,128)}', space=vmem, size = 0x12000, scoped, tag = 'internal scratch']
  %s0 = inlined_call_operand.vmem [shape: bf16[4,2048,16], index: 0, kind: input, shape index: {}]
  %s1 = inlined_call_operand.vmem [shape: bf16[4,16,128], index: 1, kind: input, shape index: {}]
  %s2 = inlined_call_operand.vmem [shape: f32[4,2048,128], index: 2, kind: output, shape index: {}]
  %s3 = sld [smem:[#allocation0]]
  $region41: #{_lambda_.17} parent=0
    _
  %s5 = ssub.s32 1, %s3
  %s6 = scalar_select 0, %s5, %s3
  loop: start=0, step=1, limit=18
  $region2: #{_lambda_.17} parent=0 // loop_pre_header
    _
  $region3: #{_lambda_.17} parent=0 // loop_header
    %s8 = sphi 0, %s12
    %p9 = scmp.ge.s32.totalorder %s8, 18
    %s15 = sphi 0, %s27
    %s16 = sphi 0, %s23
    %s17 = sphi 0, %s15
    %s18 = sphi 0, %s16
    %s19 = sphi 0, %s17
    %s20 = sphi 0, %s18
    %s32 = sphi 0, %s34
    %s35 = sphi 0, %s32
    %s36 = sphi 0, %s35
    %s52 = sphi 0, %s36
    %s58 = sphi 0, %s60
    %s61 = sphi 0, %s58
    %s62 = sphi 0, %s61
    %s78 = sphi 0, %s62
    %s86 = sphi 0, %s88
    %s89 = sphi 0, %s86
    %s90 = sphi 0, %s89
    %s106 = sphi 0, %s90
  $region4: #{_lambda_.17} parent=0 // loop_header_branch
    %11 = sbr.rel (%p9) target = $region8
  $region5: #{_lambda_.17} parent=0 // loop_body
    %s13 = ssub.s32 %s8, 1
    %s14 = ssub.s32 %s8, 2
    %s21 = sadd.s32 1, %s16
    %p22 = scmp.ge.s32.totalorder %s21, 4
    %s23 = scalar_select %p22, 0, %s21
    %s24 = sadd.s32 1, %s15
    %s25 = scalar_select %p22, %s24, %s15
    %p26 = scmp.ge.s32.totalorder %s25, 4
    %s27 = scalar_select %p26, 0, %s25
    %s28 = ssub.s32 %s15, %s27
    %s29 = ssub.s32 %s16, %s23
    %s30 = sor.u32 %s28, %s29
    %p31 = scmp.eq.s32.totalorder %s30, 0
    %s33 = sadd.s32 %s32, 1
    %s34 = scalar_select %p31, %s32, %s33
    %p37 = pneg %p31
    %p38 = scmp.eq.s32.totalorder %s8, 15
    %p39 = por %p37, %p38
    %p40 = scmp.ne.s32.totalorder %s32, %s35
    %p41 = scmp.eq.s32.totalorder %s8, 0
    %p42 = por %p40, %p41
    %p43 = scmp.ne.s32.totalorder %s32, %s35
    %p44 = scmp.eq.s32.totalorder %s13, 15
    %p45 = por %p43, %p44
    %p46 = scmp.ne.s32.totalorder %s35, %s36
    %p47 = scmp.eq.s32.totalorder %s13, 0
    %p48 = por %p46, %p47
    %p49 = scmp.ne.s32.totalorder %s35, %s36
    %p50 = scmp.eq.s32.totalorder %s14, 15
    %p51 = por %p49, %p50
    %p53 = scmp.ne.s32.totalorder %s36, %s52
    %p54 = scmp.eq.s32.totalorder %s14, 0
    %p55 = por %p53, %p54
    %s56 = ssub.s32 %s15, %s27
    %p57 = scmp.eq.s32.totalorder %s56, 0
    %s59 = sadd.s32 %s58, 1
    %s60 = scalar_select %p57, %s58, %s59
    %p63 = pneg %p57
    %p64 = scmp.eq.s32.totalorder %s8, 15
    %p65 = por %p63, %p64
    %p66 = scmp.ne.s32.totalorder %s58, %s61
    %p67 = scmp.eq.s32.totalorder %s8, 0
    %p68 = por %p66, %p67
    %p69 = scmp.ne.s32.totalorder %s58, %s61
    %p70 = scmp.eq.s32.totalorder %s13, 15
    %p71 = por %p69, %p70
    %p72 = scmp.ne.s32.totalorder %s61, %s62
    %p73 = scmp.eq.s32.totalorder %s13, 0
    %p74 = por %p72, %p73
    %p75 = scmp.ne.s32.totalorder %s61, %s62
    %p76 = scmp.eq.s32.totalorder %s14, 15
    %p77 = por %p75, %p76
    %p79 = scmp.ne.s32.totalorder %s62, %s78
    %p80 = scmp.eq.s32.totalorder %s14, 0
    %p81 = por %p79, %p80
    %s82 = ssub.s32 %s15, %s27
    %s83 = ssub.s32 %s16, %s23
    %s84 = sor.u32 %s82, %s83
    %p85 = scmp.eq.s32.totalorder %s84, 0
    %s87 = sadd.s32 %s86, 1
    %s88 = scalar_select %p85, %s86, %s87
    %p91 = pneg %p85
    %p92 = scmp.eq.s32.totalorder %s8, 15
    %p93 = por %p91, %p92
    %p94 = scmp.ne.s32.totalorder %s86, %s89
    %p95 = scmp.eq.s32.totalorder %s8, 0
    %p96 = por %p94, %p95
    %p97 = scmp.ne.s32.totalorder %s86, %s89
    %p98 = scmp.eq.s32.totalorder %s13, 15
    %p99 = por %p97, %p98
    %p100 = scmp.ne.s32.totalorder %s89, %s90
    %p101 = scmp.eq.s32.totalorder %s13, 0
    %p102 = por %p100, %p101
    %p103 = scmp.ne.s32.totalorder %s89, %s90
    %p104 = scmp.eq.s32.totalorder %s14, 15
    %p105 = por %p103, %p104
    %p107 = scmp.ne.s32.totalorder %s90, %s106
    %p108 = scmp.eq.s32.totalorder %s14, 0
    %p109 = por %p107, %p108
    %p110 = scmp.le.s32.totalorder 1, %s8
    %p111 = scmp.lt.s32.totalorder %s8, 17
    %p112 = pnand %p110, %p111
    %p113 = pneg %p112
    // Predicated region
    $region9: #{_lambda_.17} parent=5 // pred_check
      _
    $region10: #{_lambda_.17} parent=5 // pred_check_branch
      %115 = sbr.rel (%p112) target = $region12
    $region11: #{_lambda_.17} parent=5 // pred_region
      %s116 = ssub.s32 %s8, 1
    $region12: #{_lambda_.17} parent=5 // pred_fallthru
      _
    %p117 = scmp.lt.s32.totalorder %s8, 16
    // Predicated region
    $region13: #{_lambda_.17} parent=5 // pred_check
      %p118 = pneg %p117
    $region14: #{_lambda_.17} parent=5 // pred_check_branch
      %120 = sbr.rel (%p118) target = $region16
    $region15: #{_lambda_.17} parent=5 // pred_region
      // Predicated region
      $region17: #{_lambda_.17} parent=15 // pred_check
        %p121 = pneg %p42
      $region18: #{_lambda_.17} parent=15 // pred_check_branch
        %123 = sbr.rel (%p121) target = $region20
      $region19: #{_lambda_.17} parent=15 // pred_region
        %s124 = smul.u32 64, %s16
        %p125 = scmp.lt.s32.totalorder %s15, 3
        %s126 = scalar_select %p125, %s15, 3
        %p127 = scmp.lt.s32.totalorder %s124, 255
        %s128 = scalar_select %p127, %s124, 255
        %s129 = smul.addr %s126, 256
        %s130 = sadd.s32 %s128, %s129
        %s131 = smul.addr %s130, 4
        %s132 = scalar_lea.vmem %s0, %s131
        %s133 = smul.u32 64, %s16
      $region20: #{_lambda_.17} parent=15 // pred_fallthru
        _
      // Predicated region
      $region21: #{_lambda_.17} parent=15 // pred_check
        %p134 = pneg %p68
      $region22: #{_lambda_.17} parent=15 // pred_check_branch
        %136 = sbr.rel (%p134) target = $region24
      $region23: #{_lambda_.17} parent=15 // pred_region
        %p137 = scmp.lt.s32.totalorder %s15, 3
        %s138 = scalar_select %p137, %s15, 3
        %s139 = smul.addr %s138, 2
        %s140 = smul.addr %s139, 4
        %s141 = scalar_lea.vmem %s1, %s140
      $region24: #{_lambda_.17} parent=15 // pred_fallthru
        _
    $region16: #{_lambda_.17} parent=5 // pred_fallthru
      _
    %p142 = scmp.le.s32.totalorder 1, %s8
    %p143 = scmp.lt.s32.totalorder %s8, 17
    %p144 = pnand %p142, %p143
    %p145 = pneg %p144
    // Predicated region
    $region25: #{_lambda_.17} parent=5 // pred_check
      _
    $region26: #{_lambda_.17} parent=5 // pred_check_branch
      %147 = sbr.rel (%p144) target = $region28
    $region27: #{_lambda_.17} parent=5 // pred_region
      %s148 = ssub.s32 %s8, 1
      %s149 = smul.u32 64, %s18
      %p150 = scmp.lt.s32.totalorder %s17, 3
      %s151 = scalar_select %p150, %s17, 3
      %p152 = scmp.lt.s32.totalorder %s149, 255
      %s153 = scalar_select %p152, %s149, 255
      %s154 = smul.addr %s151, 256
      %s155 = sadd.s32 %s153, %s154
      %s156 = smul.addr %s155, 4
      %s157 = scalar_lea.vmem %s0, %s156
      %p158 = pneg %p48
      %p159 = pneg %p45
      %p160 = scmp.lt.s32.totalorder %s17, 3
      %s161 = scalar_select %p160, %s17, 3
      %s162 = smul.addr %s161, 2
      %s163 = smul.addr %s162, 4
      %s164 = scalar_lea.vmem %s1, %s163
      %p165 = pneg %p74
      %p166 = pneg %p71
      %p167 = pneg %p102
      %p168 = pneg %p99
      %s169 = smul.u32 64, %s18
      %p170 = scmp.lt.s32.totalorder %s17, 3
      %s171 = scalar_select %p170, %s17, 3
      %p172 = scmp.lt.s32.totalorder %s169, 255
      %s173 = scalar_select %p172, %s169, 255
      %s174 = smul.addr %s171, 256
      %s175 = sadd.s32 %s173, %s174
      %s176 = smul.addr %s175, 8
      %s177 = scalar_lea.vmem %s2, %s176
      %s178 = smul.u32 64, %s18
      %p179 = scmp.lt.s32.totalorder %s17, 3
      %s180 = scalar_select %p179, %s17, 3
      %p181 = scmp.lt.s32.totalorder %s178, 255
      %s182 = scalar_select %p181, %s178, 255
      %s183 = smul.addr %s180, 256
      %s184 = sadd.s32 %s182, %s183
      %s185 = smul.addr %s184, 4
      %s186 = scalar_lea.vmem %s0, %s185
      %s187 = smul.u32 64, %s18
      %p188 = scmp.lt.s32.totalorder %s17, 3
      %s189 = scalar_select %p188, %s17, 3
      %s190 = smul.addr %s189, 2
      %s191 = smul.addr %s190, 4
      %s192 = scalar_lea.vmem %s1, %s191
      %s193 = smul.u32 64, %s18
      %p194 = scmp.lt.s32.totalorder %s17, 3
      %s195 = scalar_select %p194, %s17, 3
      %p196 = scmp.lt.s32.totalorder %s193, 255
      %s197 = scalar_select %p196, %s193, 255
      %s198 = smul.addr %s195, 256
      %s199 = sadd.s32 %s197, %s198
      %s200 = smul.addr %s199, 8
      %s201 = scalar_lea.vmem %s2, %s200
      %s202 = smul.u32 64, %s18
      %v204 = vld [vmem:[%s186] sm:$0xf]
      %v205 = vld [vmem:[%s186 + $0x4] sm:$0xf]
      %v206 = vld [vmem:[%s186 + $0x8] sm:$0xf]
      %v207 = vld [vmem:[%s186 + $0xc] sm:$0xf]
      %v208 = vld [vmem:[%s186 + $0x10] sm:$0xf]
      %v209 = vld [vmem:[%s186 + $0x14] sm:$0xf]
      %v210 = vld [vmem:[%s186 + $0x18] sm:$0xf]
      %v211 = vld [vmem:[%s186 + $0x1c] sm:$0xf]
      %v212 = vld [vmem:[%s186 + $0x20] sm:$0xf]
      %v213 = vld [vmem:[%s186 + $0x24] sm:$0xf]
      %v214 = vld [vmem:[%s186 + $0x28] sm:$0xf]
      %v215 = vld [vmem:[%s186 + $0x2c] sm:$0xf]
      %v216 = vld [vmem:[%s186 + $0x30] sm:$0xf]
      %v217 = vld [vmem:[%s186 + $0x34] sm:$0xf]
      %v218 = vld [vmem:[%s186 + $0x38] sm:$0xf]
      %v219 = vld [vmem:[%s186 + $0x3c] sm:$0xf]
      %v220 = vld [vmem:[%s186 + $0x40] sm:$0xf]
      %v221 = vld [vmem:[%s186 + $0x44] sm:$0xf]
      %v222 = vld [vmem:[%s186 + $0x48] sm:$0xf]
      %v223 = vld [vmem:[%s186 + $0x4c] sm:$0xf]
      %v224 = vld [vmem:[%s186 + $0x50] sm:$0xf]
      %v225 = vld [vmem:[%s186 + $0x54] sm:$0xf]
      %v226 = vld [vmem:[%s186 + $0x58] sm:$0xf]
      %v227 = vld [vmem:[%s186 + $0x5c] sm:$0xf]
      %v228 = vld [vmem:[%s186 + $0x60] sm:$0xf]
      %v229 = vld [vmem:[%s186 + $0x64] sm:$0xf]
      %v230 = vld [vmem:[%s186 + $0x68] sm:$0xf]
      %v231 = vld [vmem:[%s186 + $0x6c] sm:$0xf]
      %v232 = vld [vmem:[%s186 + $0x70] sm:$0xf]
      %v233 = vld [vmem:[%s186 + $0x74] sm:$0xf]
      %v234 = vld [vmem:[%s186 + $0x78] sm:$0xf]
      %v235 = vld [vmem:[%s186 + $0x7c] sm:$0xf]
      %v236 = vld [vmem:[%s186 + $0x80] sm:$0xf]
      %v237 = vld [vmem:[%s186 + $0x84] sm:$0xf]
      %v238 = vld [vmem:[%s186 + $0x88] sm:$0xf]
      %v239 = vld [vmem:[%s186 + $0x8c] sm:$0xf]
      %v240 = vld [vmem:[%s186 + $0x90] sm:$0xf]
      %v241 = vld [vmem:[%s186 + $0x94] sm:$0xf]
      %v242 = vld [vmem:[%s186 + $0x98] sm:$0xf]
      %v243 = vld [vmem:[%s186 + $0x9c] sm:$0xf]
      %v244 = vld [vmem:[%s186 + $0xa0] sm:$0xf]
      %v245 = vld [vmem:[%s186 + $0xa4] sm:$0xf]
      %v246 = vld [vmem:[%s186 + $0xa8] sm:$0xf]
      %v247 = vld [vmem:[%s186 + $0xac] sm:$0xf]
      %v248 = vld [vmem:[%s186 + $0xb0] sm:$0xf]
      %v249 = vld [vmem:[%s186 + $0xb4] sm:$0xf]
      %v250 = vld [vmem:[%s186 + $0xb8] sm:$0xf]
      %v251 = vld [vmem:[%s186 + $0xbc] sm:$0xf]
      %v252 = vld [vmem:[%s186 + $0xc0] sm:$0xf]
      %v253 = vld [vmem:[%s186 + $0xc4] sm:$0xf]
      %v254 = vld [vmem:[%s186 + $0xc8] sm:$0xf]
      %v255 = vld [vmem:[%s186 + $0xcc] sm:$0xf]
      %v256 = vld [vmem:[%s186 + $0xd0] sm:$0xf]
      %v257 = vld [vmem:[%s186 + $0xd4] sm:$0xf]
      %v258 = vld [vmem:[%s186 + $0xd8] sm:$0xf]
      %v259 = vld [vmem:[%s186 + $0xdc] sm:$0xf]
      %v260 = vld [vmem:[%s186 + $0xe0] sm:$0xf]
      %v261 = vld [vmem:[%s186 + $0xe4] sm:$0xf]
      %v262 = vld [vmem:[%s186 + $0xe8] sm:$0xf]
      %v263 = vld [vmem:[%s186 + $0xec] sm:$0xf]
      %v264 = vld [vmem:[%s186 + $0xf0] sm:$0xf]
      %v265 = vld [vmem:[%s186 + $0xf4] sm:$0xf]
      %v266 = vld [vmem:[%s186 + $0xf8] sm:$0xf]
      %v267 = vld [vmem:[%s186 + $0xfc] sm:$0xf]
      %v268 = vld [vmem:[%s192] sm:$0xf]
      %v269 = vld [vmem:[%s192 + $0x4] sm:$0xf]
      %v334 = vunpack.c.l.b16 %v204
      %v335 = vunpack.c.l.b16 %v205
      %v336 = vunpack.c.l.b16 %v206
      %v337 = vunpack.c.l.b16 %v207
      %v338 = vunpack.c.l.b16 %v208
      %v339 = vunpack.c.l.b16 %v209
      %v340 = vunpack.c.l.b16 %v210
      %v341 = vunpack.c.l.b16 %v211
      %v342 = vunpack.c.l.b16 %v212
      %v343 = vunpack.c.l.b16 %v213
      %v344 = vunpack.c.l.b16 %v214
      %v345 = vunpack.c.l.b16 %v215
      %v346 = vunpack.c.l.b16 %v216
      %v347 = vunpack.c.l.b16 %v217
      %v348 = vunpack.c.l.b16 %v218
      %v349 = vunpack.c.l.b16 %v219
      %v350 = vunpack.c.l.b16 %v220
      %v351 = vunpack.c.l.b16 %v221
      %v352 = vunpack.c.l.b16 %v222
      %v353 = vunpack.c.l.b16 %v223
      %v354 = vunpack.c.l.b16 %v224
      %v355 = vunpack.c.l.b16 %v225
      %v356 = vunpack.c.l.b16 %v226
      %v357 = vunpack.c.l.b16 %v227
      %v358 = vunpack.c.l.b16 %v228
      %v359 = vunpack.c.l.b16 %v229
      %v360 = vunpack.c.l.b16 %v230
      %v361 = vunpack.c.l.b16 %v231
      %v362 = vunpack.c.l.b16 %v232
      %v363 = vunpack.c.l.b16 %v233
      %v364 = vunpack.c.l.b16 %v234
      %v365 = vunpack.c.l.b16 %v235
      %v366 = vunpack.c.l.b16 %v236
      %v367 = vunpack.c.l.b16 %v237
      %v368 = vunpack.c.l.b16 %v238
      %v369 = vunpack.c.l.b16 %v239
      %v370 = vunpack.c.l.b16 %v240
      %v371 = vunpack.c.l.b16 %v241
      %v372 = vunpack.c.l.b16 %v242
      %v373 = vunpack.c.l.b16 %v243
      %v374 = vunpack.c.l.b16 %v244
      %v375 = vunpack.c.l.b16 %v245
      %v376 = vunpack.c.l.b16 %v246
      %v377 = vunpack.c.l.b16 %v247
      %v378 = vunpack.c.l.b16 %v248
      %v379 = vunpack.c.l.b16 %v249
      %v380 = vunpack.c.l.b16 %v250
      %v381 = vunpack.c.l.b16 %v251
      %v382 = vunpack.c.l.b16 %v252
      %v383 = vunpack.c.l.b16 %v253
      %v384 = vunpack.c.l.b16 %v254
      %v385 = vunpack.c.l.b16 %v255
      %v386 = vunpack.c.l.b16 %v256
      %v387 = vunpack.c.l.b16 %v257
      %v388 = vunpack.c.l.b16 %v258
      %v389 = vunpack.c.l.b16 %v259
      %v390 = vunpack.c.l.b16 %v260
      %v391 = vunpack.c.l.b16 %v261
      %v392 = vunpack.c.l.b16 %v262
      %v393 = vunpack.c.l.b16 %v263
      %v394 = vunpack.c.l.b16 %v264
      %v395 = vunpack.c.l.b16 %v265
      %v396 = vunpack.c.l.b16 %v266
      %v397 = vunpack.c.l.b16 %v267
      %v398 = vpack.c.b16 %v335, %v334
      %v399 = vpack.c.b16 %v337, %v336
      %v400 = vpack.c.b16 %v339, %v338
      %v401 = vpack.c.b16 %v341, %v340
      %v402 = vpack.c.b16 %v343, %v342
      %v403 = vpack.c.b16 %v345, %v344
      %v404 = vpack.c.b16 %v347, %v346
      %v405 = vpack.c.b16 %v349, %v348
      %v406 = vpack.c.b16 %v351, %v350
      %v407 = vpack.c.b16 %v353, %v352
      %v408 = vpack.c.b16 %v355, %v354
      %v409 = vpack.c.b16 %v357, %v356
      %v410 = vpack.c.b16 %v359, %v358
      %v411 = vpack.c.b16 %v361, %v360
      %v412 = vpack.c.b16 %v363, %v362
      %v413 = vpack.c.b16 %v365, %v364
      %v414 = vpack.c.b16 %v367, %v366
      %v415 = vpack.c.b16 %v369, %v368
      %v416 = vpack.c.b16 %v371, %v370
      %v417 = vpack.c.b16 %v373, %v372
      %v418 = vpack.c.b16 %v375, %v374
      %v419 = vpack.c.b16 %v377, %v376
      %v420 = vpack.c.b16 %v379, %v378
      %v421 = vpack.c.b16 %v381, %v380
      %v422 = vpack.c.b16 %v383, %v382
      %v423 = vpack.c.b16 %v385, %v384
      %v424 = vpack.c.b16 %v387, %v386
      %v425 = vpack.c.b16 %v389, %v388
      %v426 = vpack.c.b16 %v391, %v390
      %v427 = vpack.c.b16 %v393, %v392
      %v428 = vpack.c.b16 %v395, %v394
      %v429 = vpack.c.b16 %v397, %v396
      %v432 = vunpack.c.l.b16 %v268
      %v433 = vunpack.c.l.b16 %v269
      %v434 = vpack.c.b16 %v433, %v432
      %vm436 = vcmask 130048
      %v438 = vsel %vm436, %v398, 0
      %v441 = vsel %vm436, %v399, 0
      %v444 = vsel %vm436, %v400, 0
      %v447 = vsel %vm436, %v401, 0
      %v450 = vsel %vm436, %v402, 0
      %v453 = vsel %vm436, %v403, 0
      %v456 = vsel %vm436, %v404, 0
      %v459 = vsel %vm436, %v405, 0
      %v462 = vsel %vm436, %v406, 0
      %v465 = vsel %vm436, %v407, 0
      %v468 = vsel %vm436, %v408, 0
      %v471 = vsel %vm436, %v409, 0
      %v474 = vsel %vm436, %v410, 0
      %v477 = vsel %vm436, %v411, 0
      %v480 = vsel %vm436, %v412, 0
      %v483 = vsel %vm436, %v413, 0
      %v486 = vsel %vm436, %v414, 0
      %v489 = vsel %vm436, %v415, 0
      %v492 = vsel %vm436, %v416, 0
      %v495 = vsel %vm436, %v417, 0
      %v498 = vsel %vm436, %v418, 0
      %v501 = vsel %vm436, %v419, 0
      %v504 = vsel %vm436, %v420, 0
      %v507 = vsel %vm436, %v421, 0
      %v510 = vsel %vm436, %v422, 0
      %v513 = vsel %vm436, %v423, 0
      %v516 = vsel %vm436, %v424, 0
      %v519 = vsel %vm436, %v425, 0
      %v522 = vsel %vm436, %v426, 0
      %v525 = vsel %vm436, %v427, 0
      %v528 = vsel %vm436, %v428, 0
      %v531 = vsel %vm436, %v429, 0
      %533 = vmatprep.subr.bf16.mxu0 0
      %534 = vmatpush1.bf16.msra.mxu0 0
      %535 = vmatprep.subr.bf16.mxu0 0
      %536 = vmatpush1.bf16.msra.mxu0 0
      %537 = vmatprep.subr.bf16.mxu0 0
      %538 = vmatpush1.bf16.msra.mxu0 0
      %539 = vmatprep.subr.bf16.mxu0 0
      %540 = vmatpush1.bf16.msra.mxu0 0
      %541 = vmatprep.subr.bf16.mxu0 0
      %542 = vmatpush1.bf16.msra.mxu0 0
      %543 = vmatprep.subr.bf16.mxu0 0
      %544 = vmatpush1.bf16.msra.mxu0 0
      %545 = vmatprep.subr.bf16.mxu0 0
      %546 = vmatpush1.bf16.msra.mxu0 0
      %547 = vmatprep.subr.bf16.mxu0 0
      %548 = vmatpush1.bf16.msra.mxu0 %v434
      %549 = vmatprep.subr.bf16.mxu0 0
      %550 = vmatpush2.bf16.msra.mxu0 0
      %551 = vmatprep.subr.bf16.mxu0 0
      %552 = vmatpush2.bf16.msra.mxu0 0
      %553 = vmatprep.subr.bf16.mxu0 0
      %554 = vmatpush2.bf16.msra.mxu0 0
      %555 = vmatprep.subr.bf16.mxu0 0
      %556 = vmatpush2.bf16.msra.mxu0 0
      %557 = vmatprep.subr.bf16.mxu0 0
      %558 = vmatpush2.bf16.msra.mxu0 0
      %559 = vmatprep.subr.bf16.mxu0 0
      %560 = vmatpush2.bf16.msra.mxu0 0
      %561 = vmatprep.subr.bf16.mxu0 0
      %562 = vmatpush2.bf16.msra.mxu0 0
      %563 = vmatprep.subr.bf16.mxu0 0
      %564 = vmatpush2.bf16.msra.mxu0 0
      %565 = vmatprep.mubr.bf16.mxu0 0
      %566 = vmatmul.mubr.bf16.gmra.mxu0 %v438
      %v567 = vpop.f32.mrf.mxu0
      %v568 = vadd.f32 0.0, %v567
      %v569 = vpop.f32.mrf.mxu0
      %v570 = vpop.f32.mrf.mxu0
      %v571 = vadd.f32 0.0, %v570
      %v572 = vpop.f32.mrf.mxu0
      %573 = vmatprep.mubr.bf16.mxu0 0
      %574 = vmatmul.mubr.bf16.gmra.mxu0 %v441
      %v575 = vpop.f32.mrf.mxu0
      %v576 = vadd.f32 0.0, %v575
      %v577 = vpop.f32.mrf.mxu0
      %v578 = vpop.f32.mrf.mxu0
      %v579 = vadd.f32 0.0, %v578
      %v580 = vpop.f32.mrf.mxu0
      %581 = vmatprep.mubr.bf16.mxu0 0
      %582 = vmatmul.mubr.bf16.gmra.mxu0 %v444
      %v583 = vpop.f32.mrf.mxu0
      %v584 = vadd.f32 0.0, %v583
      %v585 = vpop.f32.mrf.mxu0
      %v586 = vpop.f32.mrf.mxu0
      %v587 = vadd.f32 0.0, %v586
      %v588 = vpop.f32.mrf.mxu0
      %589 = vmatprep.mubr.bf16.mxu0 0
      %590 = vmatmul.mubr.bf16.gmra.mxu0 %v447
      %v591 = vpop.f32.mrf.mxu0
      %v592 = vadd.f32 0.0, %v591
      %v593 = vpop.f32.mrf.mxu0
      %v594 = vpop.f32.mrf.mxu0
      %v595 = vadd.f32 0.0, %v594
      %v596 = vpop.f32.mrf.mxu0
      %597 = vmatprep.mubr.bf16.mxu0 0
      %598 = vmatmul.mubr.bf16.gmra.mxu0 %v450
      %v599 = vpop.f32.mrf.mxu0
      %v600 = vadd.f32 0.0, %v599
      %v601 = vpop.f32.mrf.mxu0
      %v602 = vpop.f32.mrf.mxu0
      %v603 = vadd.f32 0.0, %v602
      %v604 = vpop.f32.mrf.mxu0
      %605 = vmatprep.mubr.bf16.mxu0 0
      %606 = vmatmul.mubr.bf16.gmra.mxu0 %v453
      %v607 = vpop.f32.mrf.mxu0
      %v608 = vadd.f32 0.0, %v607
      %v609 = vpop.f32.mrf.mxu0
      %v610 = vpop.f32.mrf.mxu0
      %v611 = vadd.f32 0.0, %v610
      %v612 = vpop.f32.mrf.mxu0
      %613 = vmatprep.mubr.bf16.mxu0 0
      %614 = vmatmul.mubr.bf16.gmra.mxu0 %v456
      %v615 = vpop.f32.mrf.mxu0
      %v616 = vadd.f32 0.0, %v615
      %v617 = vpop.f32.mrf.mxu0
      %v618 = vpop.f32.mrf.mxu0
      %v619 = vadd.f32 0.0, %v618
      %v620 = vpop.f32.mrf.mxu0
      %621 = vmatprep.mubr.bf16.mxu0 0
      %622 = vmatmul.mubr.bf16.gmra.mxu0 %v459
      %v623 = vpop.f32.mrf.mxu0
      %v624 = vadd.f32 0.0, %v623
      %v625 = vpop.f32.mrf.mxu0
      %v626 = vpop.f32.mrf.mxu0
      %v627 = vadd.f32 0.0, %v626
      %v628 = vpop.f32.mrf.mxu0
      %629 = vmatprep.mubr.bf16.mxu0 0
      %630 = vmatmul.mubr.bf16.gmra.mxu0 %v462
      %v631 = vpop.f32.mrf.mxu0
      %v632 = vadd.f32 0.0, %v631
      %v633 = vpop.f32.mrf.mxu0
      %v634 = vpop.f32.mrf.mxu0
      %v635 = vadd.f32 0.0, %v634
      %v636 = vpop.f32.mrf.mxu0
      %637 = vmatprep.mubr.bf16.mxu0 0
      %638 = vmatmul.mubr.bf16.gmra.mxu0 %v465
      %v639 = vpop.f32.mrf.mxu0
      %v640 = vadd.f32 0.0, %v639
      %v641 = vpop.f32.mrf.mxu0
      %v642 = vpop.f32.mrf.mxu0
      %v643 = vadd.f32 0.0, %v642
      %v644 = vpop.f32.mrf.mxu0
      %645 = vmatprep.mubr.bf16.mxu0 0
      %646 = vmatmul.mubr.bf16.gmra.mxu0 %v468
      %v647 = vpop.f32.mrf.mxu0
      %v648 = vadd.f32 0.0, %v647
      %v649 = vpop.f32.mrf.mxu0
      %v650 = vpop.f32.mrf.mxu0
      %v651 = vadd.f32 0.0, %v650
      %v652 = vpop.f32.mrf.mxu0
      %653 = vmatprep.mubr.bf16.mxu0 0
      %654 = vmatmul.mubr.bf16.gmra.mxu0 %v471
      %v655 = vpop.f32.mrf.mxu0
      %v656 = vadd.f32 0.0, %v655
      %v657 = vpop.f32.mrf.mxu0
      %v658 = vpop.f32.mrf.mxu0
      %v659 = vadd.f32 0.0, %v658
      %v660 = vpop.f32.mrf.mxu0
      %661 = vmatprep.mubr.bf16.mxu0 0
      %662 = vmatmul.mubr.bf16.gmra.mxu0 %v474
      %v663 = vpop.f32.mrf.mxu0
      %v664 = vadd.f32 0.0, %v663
      %v665 = vpop.f32.mrf.mxu0
      %v666 = vpop.f32.mrf.mxu0
      %v667 = vadd.f32 0.0, %v666
      %v668 = vpop.f32.mrf.mxu0
      %669 = vmatprep.mubr.bf16.mxu0 0
      %670 = vmatmul.mubr.bf16.gmra.mxu0 %v477
      %v671 = vpop.f32.mrf.mxu0
      %v672 = vadd.f32 0.0, %v671
      %v673 = vpop.f32.mrf.mxu0
      %v674 = vpop.f32.mrf.mxu0
      %v675 = vadd.f32 0.0, %v674
      %v676 = vpop.f32.mrf.mxu0
      %677 = vmatprep.mubr.bf16.mxu0 0
      %678 = vmatmul.mubr.bf16.gmra.mxu0 %v480
      %v679 = vpop.f32.mrf.mxu0
      %v680 = vadd.f32 0.0, %v679
      %v681 = vpop.f32.mrf.mxu0
      %v682 = vpop.f32.mrf.mxu0
      %v683 = vadd.f32 0.0, %v682
      %v684 = vpop.f32.mrf.mxu0
      %685 = vmatprep.mubr.bf16.mxu0 0
      %686 = vmatmul.mubr.bf16.gmra.mxu0 %v483
      %v687 = vpop.f32.mrf.mxu0
      %v688 = vadd.f32 0.0, %v687
      %v689 = vpop.f32.mrf.mxu0
      %v690 = vpop.f32.mrf.mxu0
      %v691 = vadd.f32 0.0, %v690
      %v692 = vpop.f32.mrf.mxu0
      %693 = vmatprep.mubr.bf16.mxu0 0
      %694 = vmatmul.mubr.bf16.gmra.mxu0 %v486
      %v695 = vpop.f32.mrf.mxu0
      %v696 = vadd.f32 0.0, %v695
      %v697 = vpop.f32.mrf.mxu0
      %v698 = vpop.f32.mrf.mxu0
      %v699 = vadd.f32 0.0, %v698
      %v700 = vpop.f32.mrf.mxu0
      %701 = vmatprep.mubr.bf16.mxu0 0
      %702 = vmatmul.mubr.bf16.gmra.mxu0 %v489
      %v703 = vpop.f32.mrf.mxu0
      %v704 = vadd.f32 0.0, %v703
      %v705 = vpop.f32.mrf.mxu0
      %v706 = vpop.f32.mrf.mxu0
      %v707 = vadd.f32 0.0, %v706
      %v708 = vpop.f32.mrf.mxu0
      %709 = vmatprep.mubr.bf16.mxu0 0
      %710 = vmatmul.mubr.bf16.gmra.mxu0 %v492
      %v711 = vpop.f32.mrf.mxu0
      %v712 = vadd.f32 0.0, %v711
      %v713 = vpop.f32.mrf.mxu0
      %v714 = vpop.f32.mrf.mxu0
      %v715 = vadd.f32 0.0, %v714
      %v716 = vpop.f32.mrf.mxu0
      %717 = vmatprep.mubr.bf16.mxu0 0
      %718 = vmatmul.mubr.bf16.gmra.mxu0 %v495
      %v719 = vpop.f32.mrf.mxu0
      %v720 = vadd.f32 0.0, %v719
      %v721 = vpop.f32.mrf.mxu0
      %v722 = vpop.f32.mrf.mxu0
      %v723 = vadd.f32 0.0, %v722
      %v724 = vpop.f32.mrf.mxu0
      %725 = vmatprep.mubr.bf16.mxu0 0
      %726 = vmatmul.mubr.bf16.gmra.mxu0 %v498
      %v727 = vpop.f32.mrf.mxu0
      %v728 = vadd.f32 0.0, %v727
      %v729 = vpop.f32.mrf.mxu0
      %v730 = vpop.f32.mrf.mxu0
      %v731 = vadd.f32 0.0, %v730
      %v732 = vpop.f32.mrf.mxu0
      %733 = vmatprep.mubr.bf16.mxu0 0
      %734 = vmatmul.mubr.bf16.gmra.mxu0 %v501
      %v735 = vpop.f32.mrf.mxu0
      %v736 = vadd.f32 0.0, %v735
      %v737 = vpop.f32.mrf.mxu0
      %v738 = vpop.f32.mrf.mxu0
      %v739 = vadd.f32 0.0, %v738
      %v740 = vpop.f32.mrf.mxu0
      %741 = vmatprep.mubr.bf16.mxu0 0
      %742 = vmatmul.mubr.bf16.gmra.mxu0 %v504
      %v743 = vpop.f32.mrf.mxu0
      %v744 = vadd.f32 0.0, %v743
      %v745 = vpop.f32.mrf.mxu0
      %v746 = vpop.f32.mrf.mxu0
      %v747 = vadd.f32 0.0, %v746
      %v748 = vpop.f32.mrf.mxu0
      %749 = vmatprep.mubr.bf16.mxu0 0
      %750 = vmatmul.mubr.bf16.gmra.mxu0 %v507
      %v751 = vpop.f32.mrf.mxu0
      %v752 = vadd.f32 0.0, %v751
      %v753 = vpop.f32.mrf.mxu0
      %v754 = vpop.f32.mrf.mxu0
      %v755 = vadd.f32 0.0, %v754
      %v756 = vpop.f32.mrf.mxu0
      %757 = vmatprep.mubr.bf16.mxu0 0
      %758 = vmatmul.mubr.bf16.gmra.mxu0 %v510
      %v759 = vpop.f32.mrf.mxu0
      %v760 = vadd.f32 0.0, %v759
      %v761 = vpop.f32.mrf.mxu0
      %v762 = vpop.f32.mrf.mxu0
      %v763 = vadd.f32 0.0, %v762
      %v764 = vpop.f32.mrf.mxu0
      %765 = vmatprep.mubr.bf16.mxu0 0
      %766 = vmatmul.mubr.bf16.gmra.mxu0 %v513
      %v767 = vpop.f32.mrf.mxu0
      %v768 = vadd.f32 0.0, %v767
      %v769 = vpop.f32.mrf.mxu0
      %v770 = vpop.f32.mrf.mxu0
      %v771 = vadd.f32 0.0, %v770
      %v772 = vpop.f32.mrf.mxu0
      %773 = vmatprep.mubr.bf16.mxu0 0
      %774 = vmatmul.mubr.bf16.gmra.mxu0 %v516
      %v775 = vpop.f32.mrf.mxu0
      %v776 = vadd.f32 0.0, %v775
      %v777 = vpop.f32.mrf.mxu0
      %v778 = vpop.f32.mrf.mxu0
      %v779 = vadd.f32 0.0, %v778
      %v780 = vpop.f32.mrf.mxu0
      %781 = vmatprep.mubr.bf16.mxu0 0
      %782 = vmatmul.mubr.bf16.gmra.mxu0 %v519
      %v783 = vpop.f32.mrf.mxu0
      %v784 = vadd.f32 0.0, %v783
      %v785 = vpop.f32.mrf.mxu0
      %v786 = vpop.f32.mrf.mxu0
      %v787 = vadd.f32 0.0, %v786
      %v788 = vpop.f32.mrf.mxu0
      %789 = vmatprep.mubr.bf16.mxu0 0
      %790 = vmatmul.mubr.bf16.gmra.mxu0 %v522
      %v791 = vpop.f32.mrf.mxu0
      %v792 = vadd.f32 0.0, %v791
      %v793 = vpop.f32.mrf.mxu0
      %v794 = vpop.f32.mrf.mxu0
      %v795 = vadd.f32 0.0, %v794
      %v796 = vpop.f32.mrf.mxu0
      %797 = vmatprep.mubr.bf16.mxu0 0
      %798 = vmatmul.mubr.bf16.gmra.mxu0 %v525
      %v799 = vpop.f32.mrf.mxu0
      %v800 = vadd.f32 0.0, %v799
      %v801 = vpop.f32.mrf.mxu0
      %v802 = vpop.f32.mrf.mxu0
      %v803 = vadd.f32 0.0, %v802
      %v804 = vpop.f32.mrf.mxu0
      %805 = vmatprep.mubr.bf16.mxu0 0
      %806 = vmatmul.mubr.bf16.gmra.mxu0 %v528
      %v807 = vpop.f32.mrf.mxu0
      %v808 = vadd.f32 0.0, %v807
      %v809 = vpop.f32.mrf.mxu0
      %v810 = vpop.f32.mrf.mxu0
      %v811 = vadd.f32 0.0, %v810
      %v812 = vpop.f32.mrf.mxu0
      %813 = vmatprep.mubr.bf16.mxu0 0
      %814 = vmatmul.mubr.bf16.gmra.mxu0 %v531
      %v815 = vpop.f32.mrf.mxu0
      %v816 = vadd.f32 0.0, %v815
      %v817 = vpop.f32.mrf.mxu0
      %v818 = vpop.f32.mrf.mxu0
      %v819 = vadd.f32 0.0, %v818
      %v820 = vpop.f32.mrf.mxu0
      %821 = vdwg.mxu0
      %v822 = vtanh.pop %v568
      %v823 = vtanh.pop %v571
      %v824 = vtanh.pop %v576
      %v825 = vtanh.pop %v579
      %v826 = vtanh.pop %v584
      %v827 = vtanh.pop %v587
      %v828 = vtanh.pop %v592
      %v829 = vtanh.pop %v595
      %v830 = vtanh.pop %v600
      %v831 = vtanh.pop %v603
      %v832 = vtanh.pop %v608
      %v833 = vtanh.pop %v611
      %v834 = vtanh.pop %v616
      %v835 = vtanh.pop %v619
      %v836 = vtanh.pop %v624
      %v837 = vtanh.pop %v627
      %v838 = vtanh.pop %v632
      %v839 = vtanh.pop %v635
      %v840 = vtanh.pop %v640
      %v841 = vtanh.pop %v643
      %v842 = vtanh.pop %v648
      %v843 = vtanh.pop %v651
      %v844 = vtanh.pop %v656
      %v845 = vtanh.pop %v659
      %v846 = vtanh.pop %v664
      %v847 = vtanh.pop %v667
      %v848 = vtanh.pop %v672
      %v849 = vtanh.pop %v675
      %v850 = vtanh.pop %v680
      %v851 = vtanh.pop %v683
      %v852 = vtanh.pop %v688
      %v853 = vtanh.pop %v691
      %v854 = vtanh.pop %v696
      %v855 = vtanh.pop %v699
      %v856 = vtanh.pop %v704
      %v857 = vtanh.pop %v707
      %v858 = vtanh.pop %v712
      %v859 = vtanh.pop %v715
      %v860 = vtanh.pop %v720
      %v861 = vtanh.pop %v723
      %v862 = vtanh.pop %v728
      %v863 = vtanh.pop %v731
      %v864 = vtanh.pop %v736
      %v865 = vtanh.pop %v739
      %v866 = vtanh.pop %v744
      %v867 = vtanh.pop %v747
      %v868 = vtanh.pop %v752
      %v869 = vtanh.pop %v755
      %v870 = vtanh.pop %v760
      %v871 = vtanh.pop %v763
      %v872 = vtanh.pop %v768
      %v873 = vtanh.pop %v771
      %v874 = vtanh.pop %v776
      %v875 = vtanh.pop %v779
      %v876 = vtanh.pop %v784
      %v877 = vtanh.pop %v787
      %v878 = vtanh.pop %v792
      %v879 = vtanh.pop %v795
      %v880 = vtanh.pop %v800
      %v881 = vtanh.pop %v803
      %v882 = vtanh.pop %v808
      %v883 = vtanh.pop %v811
      %v884 = vtanh.pop %v816
      %v885 = vtanh.pop %v819
      %886 = vst [vmem:[%s201] sm:$0xff] %v822
      %887 = vst [vmem:[%s201 + $0x8] sm:$0xff] %v823
      %888 = vst [vmem:[%s201 + $0x10] sm:$0xff] %v824
      %889 = vst [vmem:[%s201 + $0x18] sm:$0xff] %v825
      %890 = vst [vmem:[%s201 + $0x20] sm:$0xff] %v826
      %891 = vst [vmem:[%s201 + $0x28] sm:$0xff] %v827
      %892 = vst [vmem:[%s201 + $0x30] sm:$0xff] %v828
      %893 = vst [vmem:[%s201 + $0x38] sm:$0xff] %v829
      %894 = vst [vmem:[%s201 + $0x40] sm:$0xff] %v830
      %895 = vst [vmem:[%s201 + $0x48] sm:$0xff] %v831
      %896 = vst [vmem:[%s201 + $0x50] sm:$0xff] %v832
      %897 = vst [vmem:[%s201 + $0x58] sm:$0xff] %v833
      %898 = vst [vmem:[%s201 + $0x60] sm:$0xff] %v834
      %899 = vst [vmem:[%s201 + $0x68] sm:$0xff] %v835
      %900 = vst [vmem:[%s201 + $0x70] sm:$0xff] %v836
      %901 = vst [vmem:[%s201 + $0x78] sm:$0xff] %v837
      %902 = vst [vmem:[%s201 + $0x80] sm:$0xff] %v838
      %903 = vst [vmem:[%s201 + $0x88] sm:$0xff] %v839
      %904 = vst [vmem:[%s201 + $0x90] sm:$0xff] %v840
      %905 = vst [vmem:[%s201 + $0x98] sm:$0xff] %v841
      %906 = vst [vmem:[%s201 + $0xa0] sm:$0xff] %v842
      %907 = vst [vmem:[%s201 + $0xa8] sm:$0xff] %v843
      %908 = vst [vmem:[%s201 + $0xb0] sm:$0xff] %v844
      %909 = vst [vmem:[%s201 + $0xb8] sm:$0xff] %v845
      %910 = vst [vmem:[%s201 + $0xc0] sm:$0xff] %v846
      %911 = vst [vmem:[%s201 + $0xc8] sm:$0xff] %v847
      %912 = vst [vmem:[%s201 + $0xd0] sm:$0xff] %v848
      %913 = vst [vmem:[%s201 + $0xd8] sm:$0xff] %v849
      %914 = vst [vmem:[%s201 + $0xe0] sm:$0xff] %v850
      %915 = vst [vmem:[%s201 + $0xe8] sm:$0xff] %v851
      %916 = vst [vmem:[%s201 + $0xf0] sm:$0xff] %v852
      %917 = vst [vmem:[%s201 + $0xf8] sm:$0xff] %v853
      %918 = vst [vmem:[%s201 + $0x100] sm:$0xff] %v854
      %919 = vst [vmem:[%s201 + $0x108] sm:$0xff] %v855
      %920 = vst [vmem:[%s201 + $0x110] sm:$0xff] %v856
      %921 = vst [vmem:[%s201 + $0x118] sm:$0xff] %v857
      %922 = vst [vmem:[%s201 + $0x120] sm:$0xff] %v858
      %923 = vst [vmem:[%s201 + $0x128] sm:$0xff] %v859
      %924 = vst [vmem:[%s201 + $0x130] sm:$0xff] %v860
      %925 = vst [vmem:[%s201 + $0x138] sm:$0xff] %v861
      %926 = vst [vmem:[%s201 + $0x140] sm:$0xff] %v862
      %927 = vst [vmem:[%s201 + $0x148] sm:$0xff] %v863
      %928 = vst [vmem:[%s201 + $0x150] sm:$0xff] %v864
      %929 = vst [vmem:[%s201 + $0x158] sm:$0xff] %v865
      %930 = vst [vmem:[%s201 + $0x160] sm:$0xff] %v866
      %931 = vst [vmem:[%s201 + $0x168] sm:$0xff] %v867
      %932 = vst [vmem:[%s201 + $0x170] sm:$0xff] %v868
      %933 = vst [vmem:[%s201 + $0x178] sm:$0xff] %v869
      %934 = vst [vmem:[%s201 + $0x180] sm:$0xff] %v870
      %935 = vst [vmem:[%s201 + $0x188] sm:$0xff] %v871
      %936 = vst [vmem:[%s201 + $0x190] sm:$0xff] %v872
      %937 = vst [vmem:[%s201 + $0x198] sm:$0xff] %v873
      %938 = vst [vmem:[%s201 + $0x1a0] sm:$0xff] %v874
      %939 = vst [vmem:[%s201 + $0x1a8] sm:$0xff] %v875
      %940 = vst [vmem:[%s201 + $0x1b0] sm:$0xff] %v876
      %941 = vst [vmem:[%s201 + $0x1b8] sm:$0xff] %v877
      %942 = vst [vmem:[%s201 + $0x1c0] sm:$0xff] %v878
      %943 = vst [vmem:[%s201 + $0x1c8] sm:$0xff] %v879
      %944 = vst [vmem:[%s201 + $0x1d0] sm:$0xff] %v880
      %945 = vst [vmem:[%s201 + $0x1d8] sm:$0xff] %v881
      %946 = vst [vmem:[%s201 + $0x1e0] sm:$0xff] %v882
      %947 = vst [vmem:[%s201 + $0x1e8] sm:$0xff] %v883
      %948 = vst [vmem:[%s201 + $0x1f0] sm:$0xff] %v884
      %949 = vst [vmem:[%s201 + $0x1f8] sm:$0xff] %v885
      %s950 = smul.u32 64, %s18
      %p951 = scmp.lt.s32.totalorder %s17, 3
      %s952 = scalar_select %p951, %s17, 3
      %p953 = scmp.lt.s32.totalorder %s950, 255
      %s954 = scalar_select %p953, %s950, 255
      %s955 = smul.addr %s952, 256
      %s956 = sadd.s32 %s954, %s955
      %s957 = smul.addr %s956, 8
      %s958 = scalar_lea.vmem %s2, %s957
      // Predicated region
      $region29: #{_lambda_.17} parent=27 // pred_check
        %p959 = pneg %p99
      $region30: #{_lambda_.17} parent=27 // pred_check_branch
        %961 = sbr.rel (%p959) target = $region32
      $region31: #{_lambda_.17} parent=27 // pred_region
        %s962 = smul.u32 64, %s18
      $region32: #{_lambda_.17} parent=27 // pred_fallthru
        _
    $region28: #{_lambda_.17} parent=5 // pred_fallthru
      _
    %p963 = scmp.le.s32.totalorder 2, %s8
    // Predicated region
    $region33: #{_lambda_.17} parent=5 // pred_check
      %p964 = pneg %p963
    $region34: #{_lambda_.17} parent=5 // pred_check_branch
      %966 = sbr.rel (%p964) target = $region36
    $region35: #{_lambda_.17} parent=5 // pred_region
      %s967 = ssub.s32 %s8, 2
      // Predicated region
      $region37: #{_lambda_.17} parent=35 // pred_check
        %p968 = pneg %p105
      $region38: #{_lambda_.17} parent=35 // pred_check_branch
        %970 = sbr.rel (%p968) target = $region40
      $region39: #{_lambda_.17} parent=35 // pred_region
        %s971 = smul.u32 64, %s20
        %p972 = scmp.lt.s32.totalorder %s19, 3
        %s973 = scalar_select %p972, %s19, 3
        %p974 = scmp.lt.s32.totalorder %s971, 255
        %s975 = scalar_select %p974, %s971, 255
        %s976 = smul.addr %s973, 256
        %s977 = sadd.s32 %s975, %s976
        %s978 = smul.addr %s977, 8
        %s979 = scalar_lea.vmem %s2, %s978
      $region40: #{_lambda_.17} parent=35 // pred_fallthru
        _
    $region36: #{_lambda_.17} parent=5 // pred_fallthru
      _
  $region6: #{_lambda_.17} parent=0 // loop_footer
    %s12 = sadd.s32 1, %s8
  $region7: #{_lambda_.17} parent=0 // loop_footer_branch
    %7 = sbr.rel target = $region3
  $region8: #{_lambda_.17} parent=0 // loop_exit
    _

</llo_original>
